<compile_context>
chip_gen: v7x
topology: tpu7x:2x2x1
jax: 0.10.0
libtpu: 0.0.40
codegen_flags: <defaults>
</compile_context>

<pallas_src>
import functools
from types import SimpleNamespace

import jax
import jax.numpy as jnp
from jax.experimental import pallas as pl
from jax.experimental.pallas import tpu as pltpu

F32 = jnp.float32
BF16 = jnp.bfloat16
HIDDEN_PAD = 128          # MLP hidden width 100 -> 128 (zero padded, no-op)
REDUCE_PAD = 128          # match-reduce width 100 -> 128 (zero padded, no-op)
VMEM_LIMIT_BYTES = 32 * 1024 * 1024


def _round_up(x, m):
    return ((x + m - 1) // m) * m


def _cparams(grid_rank):
    return pltpu.CompilerParams(
        dimension_semantics=("parallel",) * grid_rank,
        vmem_limit_bytes=VMEM_LIMIT_BYTES)


# ----------------------------------------------------------------------------
# Pallas kernels
# ----------------------------------------------------------------------------
def _linear_kernel(x_ref, w_ref, b_ref, o_ref, *, act):
    y = jnp.dot(x_ref[...], w_ref[...], preferred_element_type=jnp.float32)
    y = y + b_ref[...]
    if act == "tanh":
        y = jnp.tanh(y)
    elif act == "relu":
        y = jnp.maximum(y, 0.0)
    o_ref[...] = y.astype(o_ref.dtype)


def pallas_linear(x, w, b, act=None):
    """out = act(x @ w + b); x: (M, K), w: (K, N), b: (N,).  bf16 MXU, f32 acc."""
    M, K = x.shape
    N = w.shape[1]
    tm = min(512, _round_up(max(M, 8), 8))
    Mp = _round_up(M, tm)
    xp = x.astype(BF16)
    if Mp != M:
        xp = jnp.pad(xp, ((0, Mp - M), (0, 0)))
    out = pl.pallas_call(
        functools.partial(_linear_kernel, act=act),
        out_shape=jax.ShapeDtypeStruct((Mp, N), F32),
        grid=(Mp // tm,),
        in_specs=[
            pl.BlockSpec((tm, K), lambda i: (i, 0)),
            pl.BlockSpec((K, N), lambda i: (0, 0)),
            pl.BlockSpec((1, N), lambda i: (0, 0)),
        ],
        out_specs=pl.BlockSpec((tm, N), lambda i: (i, 0)),
        compiler_params=_cparams(1),
    )(xp, w.astype(BF16), b.reshape(1, N).astype(F32))
    return out[:M]


def _mlp_score_kernel(x_ref, w1_ref, b1_ref, w2_ref, b2_ref, s_ref):
    x = x_ref[...]
    h = jnp.dot(x, w1_ref[...], preferred_element_type=jnp.float32) + b1_ref[...]
    h = jnp.tanh(h)
    s = jnp.dot(h.astype(jnp.bfloat16), w2_ref[...],
                preferred_element_type=jnp.float32) + b2_ref[...]
    s_ref[...] = s.astype(s_ref.dtype)


def pallas_mlp_score(x, p):
    """Fused Linear(K,H1)+Tanh+Linear(H1,1).  Returns (M,) scores."""
    M, K = x.shape
    w1, b1 = p["l1"]["w"], p["l1"]["b"]
    w2, b2 = p["l2"]["w"], p["l2"]["b"]
    Hh = w1.shape[1]
    tm = min(512, _round_up(max(M, 8), 8))
    Mp = _round_up(M, tm)
    xp = x.astype(BF16)
    if Mp != M:
        xp = jnp.pad(xp, ((0, Mp - M), (0, 0)))
    s = pl.pallas_call(
        _mlp_score_kernel,
        out_shape=jax.ShapeDtypeStruct((Mp, 1), F32),
        grid=(Mp // tm,),
        in_specs=[
            pl.BlockSpec((tm, K), lambda i: (i, 0)),
            pl.BlockSpec((K, Hh), lambda i: (0, 0)),
            pl.BlockSpec((1, Hh), lambda i: (0, 0)),
            pl.BlockSpec((Hh, 1), lambda i: (0, 0)),
            pl.BlockSpec((1, 1), lambda i: (0, 0)),
        ],
        out_specs=pl.BlockSpec((tm, 1), lambda i: (i, 0)),
        compiler_params=_cparams(1),
    )(xp, w1.astype(BF16), b1.reshape(1, Hh).astype(F32),
      w2.astype(BF16), b2.reshape(1, 1).astype(F32))
    return s[:M, 0]


def _score_reduce_kernel(x_ref, w1_ref, b1_ref, w2_ref, b2_ref, wr_ref, br_ref,
                         s_ref, r_ref):
    x = x_ref[...]
    h = jnp.dot(x, w1_ref[...], preferred_element_type=jnp.float32) + b1_ref[...]
    h = jnp.tanh(h)
    s = jnp.dot(h.astype(jnp.bfloat16), w2_ref[...],
                preferred_element_type=jnp.float32) + b2_ref[...]
    r = jnp.dot(x, wr_ref[...], preferred_element_type=jnp.float32) + br_ref[...]
    s_ref[...] = s.astype(s_ref.dtype)
    r_ref[...] = r.astype(r_ref.dtype)


def pallas_score_reduce(x, mlp_p, red_p):
    """Fused: score = Linear(K,H1)+Tanh+Linear(H1,1); red = Linear(K, 128pad).
    Returns (score (M,), reduce (M, 128))."""
    M, K = x.shape
    w1, b1 = mlp_p["l1"]["w"], mlp_p["l1"]["b"]
    w2, b2 = mlp_p["l2"]["w"], mlp_p["l2"]["b"]
    wr, br = red_p["w"], red_p["b"]
    Hh = w1.shape[1]
    Nr = wr.shape[1]
    tm = min(512, _round_up(max(M, 8), 8))
    Mp = _round_up(M, tm)
    xp = x.astype(BF16)
    if Mp != M:
        xp = jnp.pad(xp, ((0, Mp - M), (0, 0)))
    s, r = pl.pallas_call(
        _score_reduce_kernel,
        out_shape=(jax.ShapeDtypeStruct((Mp, 1), F32),
                   jax.ShapeDtypeStruct((Mp, Nr), F32)),
        grid=(Mp // tm,),
        in_specs=[
            pl.BlockSpec((tm, K), lambda i: (i, 0)),
            pl.BlockSpec((K, Hh), lambda i: (0, 0)),
            pl.BlockSpec((1, Hh), lambda i: (0, 0)),
            pl.BlockSpec((Hh, 1), lambda i: (0, 0)),
            pl.BlockSpec((1, 1), lambda i: (0, 0)),
            pl.BlockSpec((K, Nr), lambda i: (0, 0)),
            pl.BlockSpec((1, Nr), lambda i: (0, 0)),
        ],
        out_specs=(pl.BlockSpec((tm, 1), lambda i: (i, 0)),
                   pl.BlockSpec((tm, Nr), lambda i: (i, 0))),
        compiler_params=_cparams(1),
    )(xp, w1.astype(BF16), b1.reshape(1, Hh).astype(F32),
      w2.astype(BF16), b2.reshape(1, 1).astype(F32),
      wr.astype(BF16), br.reshape(1, Nr).astype(F32))
    return s[:M, 0], r[:M]


def _sws_kernel(s_ref, v_ref, o_ref):
    s = s_ref[...]                                        # (GB, 1, n)
    s = s - jnp.max(s, axis=-1, keepdims=True)
    e = jnp.exp(s)
    att = e / jnp.sum(e, axis=-1, keepdims=True)
    out = jnp.einsum('gqn,gnd->gqd', att, v_ref[...],
                     preferred_element_type=jnp.float32)  # (GB, 1, D)
    o_ref[...] = out.astype(o_ref.dtype)


def pallas_softmax_weighted_sum(scores, values):
    """softmax(scores, -1) @ values, batched over groups.
    scores: (G, n), values: (G, n, D) -> (G, D)."""
    G, n = scores.shape
    D = values.shape[-1]
    GB = min(256, _round_up(max(G, 8), 8))
    Gp = _round_up(G, GB)
    s3 = scores.reshape(G, 1, n).astype(F32)
    v3 = values.astype(F32)
    if Gp != G:
        pad = ((0, Gp - G), (0, 0), (0, 0))
        s3 = jnp.pad(s3, pad)
        v3 = jnp.pad(v3, pad)
    out = pl.pallas_call(
        _sws_kernel,
        out_shape=jax.ShapeDtypeStruct((Gp, 1, D), F32),
        grid=(Gp // GB,),
        in_specs=[
            pl.BlockSpec((GB, 1, n), lambda g: (g, 0, 0)),
            pl.BlockSpec((GB, n, D), lambda g: (g, 0, 0)),
        ],
        out_specs=pl.BlockSpec((GB, 1, D), lambda g: (g, 0, 0)),
        compiler_params=_cparams(1),
    )(s3, v3)
    return out.reshape(Gp, D)[:G]


def _cross_attend_kernel(uatt_ref, cs_ref, uvec_ref, cvec_ref, val_ref, o_ref):
    gb, n, kc = uvec_ref.shape
    uv = uvec_ref[...]                                    # (GB, n, Kc)
    cv = jnp.broadcast_to(cvec_ref[...], (gb, n, kc))     # candi vec repeated n x
    # literal bmm(user_vecs, candi_vecs^T) -> (GB, n, n)
    s = jnp.einsum('gik,gjk->gij', uv, cv, preferred_element_type=jnp.float32)
    s = s - jnp.max(s, axis=-1, keepdims=True)
    p = jnp.exp(s)
    p = p / jnp.sum(p, axis=-1, keepdims=True)            # softmax(dim=-1)
    catt = jnp.broadcast_to(cs_ref[...], (gb, 1, n))      # candi att score repeated
    # cross[g,0,i] = sum_j p[g,i,j] * catt[g,0,j]   (== bmm(P, catt^T)^T)
    cross = jnp.einsum('gqj,gij->gqi', catt, p, preferred_element_type=jnp.float32)
    att = uatt_ref[...] + 0.01 * cross                    # (GB, 1, n)
    att = att - jnp.max(att, axis=-1, keepdims=True)
    e = jnp.exp(att)
    att = e / jnp.sum(e, axis=-1, keepdims=True)
    out = jnp.einsum('gqn,gnd->gqd', att, val_ref[...],
                     preferred_element_type=jnp.float32)  # (GB, 1, D)
    o_ref[...] = out.astype(o_ref.dtype)


def pallas_fused_cross_attend(uatt, cscore, uvec, cvec, vals):
    """Fused per-group: bmm(uvec, cvec^T) -> softmax -> bmm with candi att ->
    att = softmax(uatt + 0.01*cross) -> weighted sum of vals.  Batched over
    groups (GB per grid step).  The candidate vector / score are passed once
    per group and broadcast in-kernel (faithful to the torch repeat()).
      uatt: (G, n), cscore: (G,), uvec: (G, n, Kc), cvec: (G, Kc),
      vals: (G, n, D) -> (G, D)."""
    G, n = uatt.shape
    Kc = uvec.shape[-1]
    D = vals.shape[-1]
    GB = min(256, _round_up(max(G, 8), 8))
    Gp = _round_up(G, GB)
    ua = uatt.reshape(G, 1, n).astype(F32)
    cs = cscore.reshape(G, 1, 1).astype(F32)
    uv = uvec.astype(F32)
    cv = cvec.reshape(G, 1, Kc).astype(F32)
    va = vals.astype(F32)
    if Gp != G:
        pad = ((0, Gp - G), (0, 0), (0, 0))
        ua = jnp.pad(ua, pad)
        cs = jnp.pad(cs, pad)
        uv = jnp.pad(uv, pad)
        cv = jnp.pad(cv, pad)
        va = jnp.pad(va, pad)
    out = pl.pallas_call(
        _cross_attend_kernel,
        out_shape=jax.ShapeDtypeStruct((Gp, 1, D), F32),
        grid=(Gp // GB,),
        in_specs=[
            pl.BlockSpec((GB, 1, n), lambda g: (g, 0, 0)),
            pl.BlockSpec((GB, 1, 1), lambda g: (g, 0, 0)),
            pl.BlockSpec((GB, n, Kc), lambda g: (g, 0, 0)),
            pl.BlockSpec((GB, 1, Kc), lambda g: (g, 0, 0)),
            pl.BlockSpec((GB, n, D), lambda g: (g, 0, 0)),
        ],
        out_specs=pl.BlockSpec((GB, 1, D), lambda g: (g, 0, 0)),
        compiler_params=_cparams(1),
    )(ua, cs, uv, cv, va)
    return out.reshape(Gp, D)[:G]


# ----------------------------------------------------------------------------
# Module building blocks
# ----------------------------------------------------------------------------
# TODO(synk): NewsEncoder definition not provided; synthesized as token-mean
# embeddings + Linear(2H->H)+ReLU (shapes consistent with HCURec usage).
def news_encoder_fwd(p, title_ids, entity_ids):
    t = p["word_emb"][title_ids].mean(axis=1)
    e = p["ent_emb"][entity_ids].mean(axis=1)
    return pallas_linear(jnp.concatenate([t, e], axis=-1),
                         p["proj"]["w"], p["proj"]["b"], act="relu")


# TODO(synk): PoEncoder definition not provided; synthesized symmetrically.
def po_encoder_fwd(p, entity_ids, title_ids):
    e = p["ent_emb"][entity_ids].mean(axis=1)
    t = p["word_emb"][title_ids].mean(axis=1)
    return pallas_linear(jnp.concatenate([e, t], axis=-1),
                         p["proj"]["w"], p["proj"]["b"], act="relu")


# TODO(synk): Attend definition not provided; synthesized as additive attention
# over the `n` axis returning (G, input_dim).
def attend_fwd(p, x, n):
    dim = x.shape[-1]
    xf = x.reshape(-1, n, dim)
    scores = pallas_mlp_score(xf.reshape(-1, dim), p).reshape(-1, n)
    return pallas_softmax_weighted_sum(scores, xf)


# ----------------------------------------------------------------------------
# HCURec user encoder forward
# ----------------------------------------------------------------------------
def hcurec_forward(params, cfg, data, start_point, user_sub_num, user_cate_num, news_num):
    B = data.shape[0]
    H = cfg.hidden_size
    UC, US, UN = cfg.ucatgeory_number, cfg.usubcate_number, cfg.usubcate_news
    Lt, Le = cfg.max_title_len, cfg.max_entity_len

    user_emb = data[:, news_num * 5:]
    user_news_id = user_emb[:, UC + UC * US:].reshape(B, UC, US, UN)
    user_news_title = params["news_title_indexes"][user_news_id]          # (B,UC,US,UN,Lt)
    user_news_entity = params["news_entity_indexes"][user_news_id]
    user_news = news_encoder_fwd(params["news_encoder"],
                                 user_news_title.reshape(-1, Lt),
                                 user_news_entity.reshape(-1, Le)).reshape(B, UC, US, UN, H)
    user_categories = params["category_emb"][user_emb[:, :UC]]            # (B, UC, H)
    user_subcategories = params["subcategory_emb"][
        user_emb[:, UC:UC + UC * US].reshape(B, UC, US)]                  # (B, UC, US, H)

    news_subcategory_index = start_point * UC * US + data[:, news_num * 2:news_num * 3]
    news_category_index = start_point * UC + data[:, news_num:news_num * 2]
    news_id = data[:, :news_num]
    target_news = news_encoder_fwd(params["news_encoder"],
                                   params["news_title_indexes"][news_id].reshape(-1, Lt),
                                   params["news_entity_indexes"][news_id].reshape(-1, Le)
                                   ).reshape(B, news_num, H)

    # ---------------- loop-invariant (hoisted) user-side work ----------------
    user = user_news.reshape(-1, H)                                       # (B*UC*US*UN, H)

    # subcategory-level user scores + match-reduce vectors (one fused kernel)
    u_sub_score, u_sub_red = pallas_score_reduce(
        user, params["sub_h1"], params["sub_match_reduce"])
    KR = u_sub_red.shape[-1]
    user_sub_att = u_sub_score.reshape(-1, UN)                            # (B*UC*US, UN)
    cross_user_sub_vecs = u_sub_red.reshape(-1, UN, KR)

    # positional (po) encoder path -- candidate independent
    user_subcate_po = po_encoder_fwd(params["po_encoder"],
                                     user_news_entity.reshape(-1, Le),
                                     user_news_title.reshape(-1, Lt)
                                     ).reshape(B, UC, US, UN, H)
    user_subcategories_flat = user_subcategories.reshape(B, -1)
    # literal torch repeat(1, UN).view(...) -- NOT a plain broadcast in general
    sub_ctx = jnp.tile(user_subcategories_flat, (1, UN)).reshape(B, UC, US, UN, H)
    user_sub_po_att = jnp.concatenate([user_subcate_po, sub_ctx], axis=-1)
    user_subcate_po = attend_fwd(params["sub_attention"], user_sub_po_att, UN)  # (B*UC*US, 2H)
    user_subcate_po = pallas_linear(user_subcate_po,
                                    params["sub_d"]["w"], params["sub_d"]["b"])  # (B*UC*US, H)

    user_categories_flat = user_categories.reshape(-1, H)                  # (B*UC, H)
    cate_ctx = jnp.broadcast_to(user_categories_flat[:, None, :],
                                (B * UC, US, H)).reshape(B, UC, US, H)
    user_cate_po_att = jnp.concatenate(
        [user_subcate_po.reshape(B, UC, US, H), cate_ctx], axis=-1)
    user_cate_po = attend_fwd(params["cate_attention"], user_cate_po_att, US)   # (B*UC, 2H)
    user_cate_po = pallas_linear(user_cate_po,
                                 params["cate_d"]["w"], params["cate_d"]["b"])  # (B*UC, H)

    user_sub_num_emb = params["sub_num_emb"][user_sub_num]                 # (B,UC,US,H)
    user_sub_num_score = pallas_linear(
        user_sub_num_emb.reshape(-1, H),
        params["sub_num_tran"]["w"], params["sub_num_tran"]["b"]).reshape(-1, US)   # (B*UC, US)
    user_cate_num_emb = params["cate_num_emb"][user_cate_num]              # (B,UC,H)
    user_cate_num_score = pallas_linear(
        user_cate_num_emb.reshape(-1, H),
        params["cate_num_tran"]["w"], params["cate_num_tran"]["b"]).reshape(-1, UC)  # (B, UC)

    # candidate-side projections for ALL candidates at once (batched matmuls)
    cand = target_news.reshape(B * news_num, H)
    c_sub_score, c_sub_red = pallas_score_reduce(
        cand, params["sub_h1"], params["sub_match_reduce"])
    c_cate_score, c_cate_red = pallas_score_reduce(
        cand, params["cate_h1"], params["cate_match_reduce"])
    c_glob_score, c_glob_red = pallas_score_reduce(
        cand, params["global_h1"], params["global_match_reduce"])
    c_sub_score = c_sub_score.reshape(B, news_num)
    c_sub_red = c_sub_red.reshape(B, news_num, KR)
    c_cate_score = c_cate_score.reshape(B, news_num)
    c_cate_red = c_cate_red.reshape(B, news_num, KR)
    c_glob_score = c_glob_score.reshape(B, news_num)
    c_glob_red = c_glob_red.reshape(B, news_num, KR)

    user_vals_sub = user_news.reshape(-1, UN, H)                           # (B*UC*US, UN, H)

    sub_list, cate_list, glob_list = [], [], []
    for i in range(news_num):
        # ---------------- subcategory level ----------------
        cs = jnp.broadcast_to(c_sub_score[:, i][:, None], (B, UC * US)).reshape(-1)
        cv = jnp.broadcast_to(c_sub_red[:, i][:, None, :], (B, UC * US, KR)).reshape(-1, KR)
        user_subcate_rep0 = pallas_fused_cross_attend(
            user_sub_att, cs, cross_user_sub_vecs, cv, user_vals_sub)      # (B*UC*US, H)
        user_subcate_rep0 = user_subcate_rep0 + user_subcate_po
        sub_list.append(user_subcate_rep0[news_subcategory_index[:, i]])   # (B, H)

        # ---------------- category level ----------------
        us_score, us_red = pallas_score_reduce(
            user_subcate_rep0, params["cate_h1"], params["cate_match_reduce"])
        user_cate_att = us_score.reshape(-1, US) + user_sub_num_score      # (B*UC, US)
        cs = jnp.broadcast_to(c_cate_score[:, i][:, None], (B, UC)).reshape(-1)
        cv = jnp.broadcast_to(c_cate_red[:, i][:, None, :], (B, UC, KR)).reshape(-1, KR)
        user_cate_rep0 = pallas_fused_cross_attend(
            user_cate_att, cs, us_red.reshape(-1, US, KR), cv,
            user_subcate_rep0.reshape(-1, US, H))                          # (B*UC, H)
        user_cate_rep0 = user_cate_rep0 + user_cate_po
        cate_list.append(user_cate_rep0[news_category_index[:, i]])        # (B, H)

        # ---------------- global level ----------------
        ug_score, ug_red = pallas_score_reduce(
            user_cate_rep0, params["global_h1"], params["global_match_reduce"])
        user_global_att = ug_score.reshape(-1, UC) + user_cate_num_score   # (B, UC)
        user_global_rep0 = pallas_fused_cross_attend(
            user_global_att, c_glob_score[:, i], ug_red.reshape(-1, UC, KR),
            c_glob_red[:, i], user_cate_rep0.reshape(-1, UC, H))           # (B, H)
        glob_list.append(user_global_rep0)

    user_subcate_rep = jnp.stack(sub_list, axis=1)                         # (B, news_num, H)
    user_cate_rep = jnp.stack(cate_list, axis=1)
    user_global_rep = jnp.stack(glob_list, axis=1)
    return user_subcate_rep, user_cate_rep, user_global_rep, target_news


# ----------------------------------------------------------------------------
# create_model forward (scoring)
# ----------------------------------------------------------------------------
def create_model_forward(params, cfg, data, start_point, mask_key, test_mode=False):
    news_num = 1 if test_mode else cfg.neg_count + 1
    B = data.shape[0]
    UC, US, UN = cfg.ucatgeory_number, cfg.usubcate_number, cfg.usubcate_news

    user_emb = data[:, news_num * 5:]
    user_news_id = user_emb[:, UC + UC * US:].reshape(B, UC, US, UN)
    news_coefficient_category = data[:, news_num * 3:news_num * 4].astype(F32)
    news_coefficient_subcategory = data[:, news_num * 4:news_num * 5].astype(F32)
    news_subcategory_index = start_point * UC * US + data[:, news_num * 2:news_num * 3]
    news_category_index = start_point * UC + data[:, news_num:news_num * 2]

    if test_mode:
        train_mask = jnp.ones((B, 1), F32)
    else:
        # torch.rand(...) > mask_prob, made deterministic via PRNG key
        train_mask = (jax.random.uniform(mask_key, (B, 1)) > cfg.mask_prob).astype(F32)

    user_sub_num = UN - (user_news_id == 1).sum(axis=-1)                   # (B,UC,US)
    denom = user_sub_num.reshape(B, -1).sum(axis=-1).reshape(-1, 1)        # (B,1)
    rw_subcate = user_sub_num.astype(F32) / (
        jnp.tile(denom, (1, UC)).reshape(-1, UC, 1).astype(F32) + 1e-8)
    rw_subcate = rw_subcate.reshape(-1, 1)[news_subcategory_index].reshape(-1, news_num)
    rw_subcate = rw_subcate * train_mask
    user_cate_num = user_sub_num.sum(axis=-1)                              # (B,UC)
    rw_cate = user_cate_num.astype(F32) / (denom.astype(F32) + 1e-8)
    rw_cate = rw_cate.reshape(-1, 1)[news_category_index].reshape(-1, news_num)

    user_subcate_rep, user_cate_rep, user_global_rep, target_news = hcurec_forward(
        params, cfg, data, start_point, user_sub_num, user_cate_num, news_num)

    subcate_score = jnp.sum(user_subcate_rep * target_news, axis=-1)
    subcate_score = subcate_score * rw_subcate * cfg.lambda_s * news_coefficient_subcategory
    cate_score = jnp.sum(user_cate_rep * target_news, axis=-1)
    cate_score = cate_score * rw_cate * cfg.lambda_t * news_coefficient_category
    user_score = jnp.sum(user_global_rep * target_news, axis=-1) * cfg.lambda_g
    return user_score + cate_score + subcate_score


# ----------------------------------------------------------------------------
# Deterministic parameter initialization (hidden / reduce widths zero-padded
# to 128 lanes; padding with zeros is mathematically a no-op).
# ----------------------------------------------------------------------------
def init_params(cfg, key):
    H = cfg.hidden_size
    keys = iter(jax.random.split(key, 64))

    def dense(kin, kout, pad_out=None):
        k1, k2 = jax.random.split(next(keys))
        w = 0.1 * jax.random.normal(k1, (kin, kout), F32)
        b = 0.1 * jax.random.normal(k2, (kout,), F32)
        if pad_out is not None and pad_out > kout:
            w = jnp.pad(w, ((0, 0), (0, pad_out - kout)))
            b = jnp.pad(b, (0, pad_out - kout))
        return {"w": w, "b": b}

    def emb(num, dim):
        return 0.1 * jax.random.normal(next(keys), (num, dim), F32)

    def mlp_h1(kin):
        # nn.Sequential(Linear(kin,100), Tanh(), Linear(100,1)); hidden 100
        # zero-padded to 128 so the fused kernel tiles are lane-dense.
        l1 = dense(kin, 100, pad_out=HIDDEN_PAD)
        l2 = dense(100, 1)
        l2 = {"w": jnp.pad(l2["w"], ((0, HIDDEN_PAD - 100), (0, 0))), "b": l2["b"]}
        return {"l1": l1, "l2": l2}

    def reduce_layer(kin):
        # nn.Linear(kin, 100) zero-padded to 128 output lanes.
        return dense(kin, 100, pad_out=REDUCE_PAD)

    def encoder_p():
        return {"word_emb": emb(cfg.word_vocab, H),
                "ent_emb": emb(cfg.entity_vocab, H),
                "proj": dense(2 * H, H)}

    return {
        "news_encoder": encoder_p(),
        "po_encoder": encoder_p(),
        "category_emb": emb(cfg.cate_num, H),
        "subcategory_emb": emb(cfg.subcate_num, H),
        "cate_num_emb": emb(cfg.cate_num, H),
        "sub_num_emb": emb(cfg.subcate_num, H),
        "sub_attention": mlp_h1(2 * H),
        "cate_attention": mlp_h1(2 * H),
        "sub_d": dense(2 * H, H),
        "cate_d": dense(2 * H, H),
        "sub_h1": mlp_h1(H),
        "cate_h1": mlp_h1(H),
        "global_h1": mlp_h1(H),
        "sub_match_reduce": reduce_layer(H),
        "cate_match_reduce": reduce_layer(H),
        "global_match_reduce": reduce_layer(H),
        "sub_num_tran": dense(H, 1),
        "cate_num_tran": dense(H, 1),
    }


# ----------------------------------------------------------------------------
if __name__ == "__main__":
    cfg = SimpleNamespace(
        neg_count=1, hidden_size=32,
        ucatgeory_number=2, usubcate_number=2, usubcate_news=4,
        cate_num=12, subcate_num=16,
        max_title_len=8, max_entity_len=4,
        word_vocab=50, entity_vocab=30,
        mask_prob=0.5, lambda_s=1.0, lambda_t=1.0, lambda_g=1.0,
        num_news=20,
    )

    key = jax.random.PRNGKey(0)
    kp, kt, ke, km, kd = jax.random.split(key, 5)
    params = init_params(cfg, kp)
    params["news_title_indexes"] = jax.random.randint(
        kt, (cfg.num_news, cfg.max_title_len), 0, cfg.word_vocab, dtype=jnp.int32)
    params["news_entity_indexes"] = jax.random.randint(
        ke, (cfg.num_news, cfg.max_entity_len), 0, cfg.entity_vocab, dtype=jnp.int32)

    B = 2
    news_num = cfg.neg_count + 1
    UC, US, UN = cfg.ucatgeory_number, cfg.usubcate_number, cfg.usubcate_news
    dkeys = jax.random.split(kd, 7)
    news_id = jax.random.randint(dkeys[0], (B, news_num), 0, cfg.num_news, dtype=jnp.int32)
    cate_idx = jax.random.randint(dkeys[1], (B, news_num), 0, UC, dtype=jnp.int32)
    sub_idx = jax.random.randint(dkeys[2], (B, news_num), 0, UC * US, dtype=jnp.int32)
    coef_c = jnp.ones((B, news_num), jnp.int32)
    coef_s = jnp.ones((B, news_num), jnp.int32)
    u_cate = jax.random.randint(dkeys[3], (B, UC), 0, cfg.cate_num, dtype=jnp.int32)
    u_sub = jax.random.randint(dkeys[4], (B, UC * US), 0, cfg.subcate_num, dtype=jnp.int32)
    u_news = jax.random.randint(dkeys[5], (B, UC * US * UN), 0, cfg.num_news, dtype=jnp.int32)
    data = jnp.concatenate(
        [news_id, cate_idx, sub_idx, coef_c, coef_s, u_cate, u_sub, u_news], axis=1)  # (2, 32)
    start_point = jnp.arange(B, dtype=jnp.int32).reshape(B, 1)

    run = jax.jit(lambda p, d, sp, k: create_model_forward(p, cfg, d, sp, k, test_mode=False))
    final_score = run(params, data, start_point, km)
    jax.block_until_ready(final_score)
    assert final_score.shape == (B, news_num)
    print("KERNEL_OK")
</pallas_src>

<mosaic_0001>
module attributes {stable_mosaic.version = 11 : i64} {
  func.func @_linear_kernel(%arg0: i32, %arg1: memref<32x64xbf16, #tpu.memory_space<vmem>>, %arg2: memref<64x32xbf16, #tpu.memory_space<vmem>>, %arg3: memref<1x32xf32, #tpu.memory_space<vmem>>, %arg4: memref<32x32xf32, #tpu.memory_space<vmem>>) attributes {dimension_semantics = [#tpu.dimension_semantics<parallel>], iteration_bounds = array<i64: 1>, scalar_prefetch = 0 : i64, scratch_operands = 0 : i64, tpu.core_type = #tpu.core_type<tc>, window_params = [{transform_indices = @transform_0, window_bounds = array<i64: 32, 64>}, {pipeline_mode = #tpu.pipeline_mode<synchronous>, transform_indices = @transform_1, window_bounds = array<i64: 64, 32>}, {pipeline_mode = #tpu.pipeline_mode<synchronous>, transform_indices = @transform_2, window_bounds = array<i64: 1, 32>}, {transform_indices = @transform_3, window_bounds = array<i64: 32, 32>}]} {
    %c0 = arith.constant 0 : index
    %c0_0 = arith.constant 0 : index
    %0 = vector.load %arg1[%c0, %c0_0] : memref<32x64xbf16, #tpu.memory_space<vmem>>, vector<32x64xbf16>
    %c0_1 = arith.constant 0 : index
    %c0_2 = arith.constant 0 : index
    %1 = vector.load %arg2[%c0_1, %c0_2] : memref<64x32xbf16, #tpu.memory_space<vmem>>, vector<64x32xbf16>
    %cst = arith.constant dense<0.000000e+00> : vector<32x32xf32>
    %2 = tpu.matmul %0, %1, %cst {dimension_numbers = #tpu.dot_dimension_numbers<[1], [0], [0], [1], [0, 0, 1, 1], [], []>} : vector<32x64xbf16>, vector<64x32xbf16>, vector<32x32xf32> -> vector<32x32xf32>
    %c0_3 = arith.constant 0 : index
    %c0_4 = arith.constant 0 : index
    %3 = vector.load %arg3[%c0_3, %c0_4] : memref<1x32xf32, #tpu.memory_space<vmem>>, vector<1x32xf32>
    %4 = vector.broadcast %3 : vector<1x32xf32> to vector<32x32xf32>
    %5 = arith.addf %2, %4 : vector<32x32xf32>
    %cst_5 = arith.constant 0.000000e+00 : f32
    %6 = vector.broadcast %cst_5 : f32 to vector<32x32xf32>
    %7 = arith.maximumf %5, %6 : vector<32x32xf32>
    %c0_6 = arith.constant 0 : index
    %c0_7 = arith.constant 0 : index
    %8 = vector.load %arg4[%c0_6, %c0_7] : memref<32x32xf32, #tpu.memory_space<vmem>>, vector<32x32xf32>
    tpu.vector_store %arg4[%c0_6, %c0_7], %7 {strides = array<i32>} : memref<32x32xf32, #tpu.memory_space<vmem>>, vector<32x32xf32>,
    return
  }
  func.func @transform_0(%arg0: i32) -> (i32, i32) {
    %c0_i32 = arith.constant 0 : i32
    %c0_i32_0 = arith.constant 0 : i32
    return %arg0, %c0_i32 : i32, i32
  }
  func.func @transform_1(%arg0: i32) -> (i32, i32) {
    %c0_i32 = arith.constant 0 : i32
    %c0_i32_0 = arith.constant 0 : i32
    %c0_i32_1 = arith.constant 0 : i32
    return %c0_i32, %c0_i32_0 : i32, i32
  }
  func.func @transform_2(%arg0: i32) -> (i32, i32) {
    %c0_i32 = arith.constant 0 : i32
    %c0_i32_0 = arith.constant 0 : i32
    %c0_i32_1 = arith.constant 0 : i32
    return %c0_i32, %c0_i32_0 : i32, i32
  }
  func.func @transform_3(%arg0: i32) -> (i32, i32) {
    %c0_i32 = arith.constant 0 : i32
    %c0_i32_0 = arith.constant 0 : i32
    return %arg0, %c0_i32 : i32, i32
  }
}

module attributes {stable_mosaic.version = 11 : i64} {
  func.func @_score_reduce_kernel(%arg0: i32, %arg1: memref<32x32xbf16, #tpu.memory_space<vmem>>, %arg2: memref<32x128xbf16, #tpu.memory_space<vmem>>, %arg3: memref<1x128xf32, #tpu.memory_space<vmem>>, %arg4: memref<128x1xbf16, #tpu.memory_space<vmem>>, %arg5: memref<1x1xf32, #tpu.memory_space<vmem>>, %arg6: memref<32x128xbf16, #tpu.memory_space<vmem>>, %arg7: memref<1x128xf32, #tpu.memory_space<vmem>>, %arg8: memref<32x1xf32, #tpu.memory_space<vmem>>, %arg9: memref<32x128xf32, #tpu.memory_space<vmem>>) attributes {dimension_semantics = [#tpu.dimension_semantics<parallel>], iteration_bounds = array<i64: 1>, scalar_prefetch = 0 : i64, scratch_operands = 0 : i64, tpu.core_type = #tpu.core_type<tc>, window_params = [{transform_indices = @transform_0, window_bounds = array<i64: 32, 32>}, {pipeline_mode = #tpu.pipeline_mode<synchronous>, transform_indices = @transform_1, window_bounds = array<i64: 32, 128>}, {pipeline_mode = #tpu.pipeline_mode<synchronous>, transform_indices = @transform_2, window_bounds = array<i64: 1, 128>}, {pipeline_mode = #tpu.pipeline_mode<synchronous>, transform_indices = @transform_3, window_bounds = array<i64: 128, 1>}, {pipeline_mode = #tpu.pipeline_mode<synchronous>, transform_indices = @transform_4, window_bounds = array<i64: 1, 1>}, {pipeline_mode = #tpu.pipeline_mode<synchronous>, transform_indices = @transform_5, window_bounds = array<i64: 32, 128>}, {pipeline_mode = #tpu.pipeline_mode<synchronous>, transform_indices = @transform_6, window_bounds = array<i64: 1, 128>}, {transform_indices = @transform_7, window_bounds = array<i64: 32, 1>}, {transform_indices = @transform_8, window_bounds = array<i64: 32, 128>}]} {
    %c0 = arith.constant 0 : index
    %c0_0 = arith.constant 0 : index
    %0 = vector.load %arg1[%c0, %c0_0] : memref<32x32xbf16, #tpu.memory_space<vmem>>, vector<32x32xbf16>
    %c0_1 = arith.constant 0 : index
    %c0_2 = arith.constant 0 : index
    %1 = vector.load %arg2[%c0_1, %c0_2] : memref<32x128xbf16, #tpu.memory_space<vmem>>, vector<32x128xbf16>
    %cst = arith.constant dense<0.000000e+00> : vector<32x128xf32>
    %2 = tpu.matmul %0, %1, %cst {dimension_numbers = #tpu.dot_dimension_numbers<[1], [0], [0], [1], [0, 0, 1, 1], [], []>} : vector<32x32xbf16>, vector<32x128xbf16>, vector<32x128xf32> -> vector<32x128xf32>
    %c0_3 = arith.constant 0 : index
    %c0_4 = arith.constant 0 : index
    %3 = vector.load %arg3[%c0_3, %c0_4] : memref<1x128xf32, #tpu.memory_space<vmem>>, vector<1x128xf32>
    %4 = vector.broadcast %3 : vector<1x128xf32> to vector<32x128xf32>
    %5 = arith.addf %2, %4 : vector<32x128xf32>
    %6 = math.tanh %5 : vector<32x128xf32>
    %7 = arith.truncf %6 : vector<32x128xf32> to vector<32x128xbf16>
    %c0_5 = arith.constant 0 : index
    %c0_6 = arith.constant 0 : index
    %8 = vector.load %arg4[%c0_5, %c0_6] : memref<128x1xbf16, #tpu.memory_space<vmem>>, vector<128x1xbf16>
    %cst_7 = arith.constant dense<0.000000e+00> : vector<32x1xf32>
    %9 = tpu.matmul %7, %8, %cst_7 {dimension_numbers = #tpu.dot_dimension_numbers<[1], [0], [0], [1], [0, 0, 1, 1], [], []>} : vector<32x128xbf16>, vector<128x1xbf16>, vector<32x1xf32> -> vector<32x1xf32>
    %c0_8 = arith.constant 0 : index
    %c0_9 = arith.constant 0 : index
    %10 = vector.load %arg5[%c0_8, %c0_9] : memref<1x1xf32, #tpu.memory_space<vmem>>, vector<1x1xf32>
    %11 = vector.broadcast %10 : vector<1x1xf32> to vector<32x1xf32>
    %12 = arith.addf %9, %11 : vector<32x1xf32>
    %c0_10 = arith.constant 0 : index
    %c0_11 = arith.constant 0 : index
    %13 = vector.load %arg6[%c0_10, %c0_11] : memref<32x128xbf16, #tpu.memory_space<vmem>>, vector<32x128xbf16>
    %cst_12 = arith.constant dense<0.000000e+00> : vector<32x128xf32>
    %14 = tpu.matmul %0, %13, %cst_12 {dimension_numbers = #tpu.dot_dimension_numbers<[1], [0], [0], [1], [0, 0, 1, 1], [], []>} : vector<32x32xbf16>, vector<32x128xbf16>, vector<32x128xf32> -> vector<32x128xf32>
    %c0_13 = arith.constant 0 : index
    %c0_14 = arith.constant 0 : index
    %15 = vector.load %arg7[%c0_13, %c0_14] : memref<1x128xf32, #tpu.memory_space<vmem>>, vector<1x128xf32>
    %16 = vector.broadcast %15 : vector<1x128xf32> to vector<32x128xf32>
    %17 = arith.addf %14, %16 : vector<32x128xf32>
    %c0_15 = arith.constant 0 : index
    %c0_16 = arith.constant 0 : index
    %18 = vector.load %arg8[%c0_15, %c0_16] : memref<32x1xf32, #tpu.memory_space<vmem>>, vector<32x1xf32>
    tpu.vector_store %arg8[%c0_15, %c0_16], %12 {strides = array<i32>} : memref<32x1xf32, #tpu.memory_space<vmem>>, vector<32x1xf32>,
    %c0_17 = arith.constant 0 : index
    %c0_18 = arith.constant 0 : index
    %19 = vector.load %arg9[%c0_17, %c0_18] : memref<32x128xf32, #tpu.memory_space<vmem>>, vector<32x128xf32>
    tpu.vector_store %arg9[%c0_17, %c0_18], %17 {strides = array<i32>} : memref<32x128xf32, #tpu.memory_space<vmem>>, vector<32x128xf32>,
    return
  }
  func.func @transform_0(%arg0: i32) -> (i32, i32) {
    %c0_i32 = arith.constant 0 : i32
    %c0_i32_0 = arith.constant 0 : i32
    return %arg0, %c0_i32 : i32, i32
  }
  func.func @transform_1(%arg0: i32) -> (i32, i32) {
    %c0_i32 = arith.constant 0 : i32
    %c0_i32_0 = arith.constant 0 : i32
    %c0_i32_1 = arith.constant 0 : i32
    return %c0_i32, %c0_i32_0 : i32, i32
  }
  func.func @transform_2(%arg0: i32) -> (i32, i32) {
    %c0_i32 = arith.constant 0 : i32
    %c0_i32_0 = arith.constant 0 : i32
    %c0_i32_1 = arith.constant 0 : i32
    return %c0_i32, %c0_i32_0 : i32, i32
  }
  func.func @transform_3(%arg0: i32) -> (i32, i32) {
    %c0_i32 = arith.constant 0 : i32
    %c0_i32_0 = arith.constant 0 : i32
    %c0_i32_1 = arith.constant 0 : i32
    return %c0_i32, %c0_i32_0 : i32, i32
  }
  func.func @transform_4(%arg0: i32) -> (i32, i32) {
    %c0_i32 = arith.constant 0 : i32
    %c0_i32_0 = arith.constant 0 : i32
    %c0_i32_1 = arith.constant 0 : i32
    return %c0_i32, %c0_i32_0 : i32, i32
  }
  func.func @transform_5(%arg0: i32) -> (i32, i32) {
    %c0_i32 = arith.constant 0 : i32
    %c0_i32_0 = arith.constant 0 : i32
    %c0_i32_1 = arith.constant 0 : i32
    return %c0_i32, %c0_i32_0 : i32, i32
  }
  func.func @transform_6(%arg0: i32) -> (i32, i32) {
    %c0_i32 = arith.constant 0 : i32
    %c0_i32_0 = arith.constant 0 : i32
    %c0_i32_1 = arith.constant 0 : i32
    return %c0_i32, %c0_i32_0 : i32, i32
  }
  func.func @transform_7(%arg0: i32) -> (i32, i32) {
    %c0_i32 = arith.constant 0 : i32
    %c0_i32_0 = arith.constant 0 : i32
    return %arg0, %c0_i32 : i32, i32
  }
  func.func @transform_8(%arg0: i32) -> (i32, i32) {
    %c0_i32 = arith.constant 0 : i32
    %c0_i32_0 = arith.constant 0 : i32
    return %arg0, %c0_i32 : i32, i32
  }
}

module attributes {stable_mosaic.version = 11 : i64} {
  func.func @_linear_kernel(%arg0: i32, %arg1: memref<8x64xbf16, #tpu.memory_space<vmem>>, %arg2: memref<64x32xbf16, #tpu.memory_space<vmem>>, %arg3: memref<1x32xf32, #tpu.memory_space<vmem>>, %arg4: memref<8x32xf32, #tpu.memory_space<vmem>>) attributes {dimension_semantics = [#tpu.dimension_semantics<parallel>], iteration_bounds = array<i64: 1>, scalar_prefetch = 0 : i64, scratch_operands = 0 : i64, tpu.core_type = #tpu.core_type<tc>, window_params = [{transform_indices = @transform_0, window_bounds = array<i64: 8, 64>}, {pipeline_mode = #tpu.pipeline_mode<synchronous>, transform_indices = @transform_1, window_bounds = array<i64: 64, 32>}, {pipeline_mode = #tpu.pipeline_mode<synchronous>, transform_indices = @transform_2, window_bounds = array<i64: 1, 32>}, {transform_indices = @transform_3, window_bounds = array<i64: 8, 32>}]} {
    %c0 = arith.constant 0 : index
    %c0_0 = arith.constant 0 : index
    %0 = vector.load %arg1[%c0, %c0_0] : memref<8x64xbf16, #tpu.memory_space<vmem>>, vector<8x64xbf16>
    %c0_1 = arith.constant 0 : index
    %c0_2 = arith.constant 0 : index
    %1 = vector.load %arg2[%c0_1, %c0_2] : memref<64x32xbf16, #tpu.memory_space<vmem>>, vector<64x32xbf16>
    %cst = arith.constant dense<0.000000e+00> : vector<8x32xf32>
    %2 = tpu.matmul %0, %1, %cst {dimension_numbers = #tpu.dot_dimension_numbers<[1], [0], [0], [1], [0, 0, 1, 1], [], []>} : vector<8x64xbf16>, vector<64x32xbf16>, vector<8x32xf32> -> vector<8x32xf32>
    %c0_3 = arith.constant 0 : index
    %c0_4 = arith.constant 0 : index
    %3 = vector.load %arg3[%c0_3, %c0_4] : memref<1x32xf32, #tpu.memory_space<vmem>>, vector<1x32xf32>
    %4 = vector.broadcast %3 : vector<1x32xf32> to vector<8x32xf32>
    %5 = arith.addf %2, %4 : vector<8x32xf32>
    %cst_5 = arith.constant 0.000000e+00 : f32
    %6 = vector.broadcast %cst_5 : f32 to vector<8x32xf32>
    %7 = arith.maximumf %5, %6 : vector<8x32xf32>
    %c0_6 = arith.constant 0 : index
    %c0_7 = arith.constant 0 : index
    %8 = vector.load %arg4[%c0_6, %c0_7] : memref<8x32xf32, #tpu.memory_space<vmem>>, vector<8x32xf32>
    tpu.vector_store %arg4[%c0_6, %c0_7], %7 {strides = array<i32>} : memref<8x32xf32, #tpu.memory_space<vmem>>, vector<8x32xf32>,
    return
  }
  func.func @transform_0(%arg0: i32) -> (i32, i32) {
    %c0_i32 = arith.constant 0 : i32
    %c0_i32_0 = arith.constant 0 : i32
    return %arg0, %c0_i32 : i32, i32
  }
  func.func @transform_1(%arg0: i32) -> (i32, i32) {
    %c0_i32 = arith.constant 0 : i32
    %c0_i32_0 = arith.constant 0 : i32
    %c0_i32_1 = arith.constant 0 : i32
    return %c0_i32, %c0_i32_0 : i32, i32
  }
  func.func @transform_2(%arg0: i32) -> (i32, i32) {
    %c0_i32 = arith.constant 0 : i32
    %c0_i32_0 = arith.constant 0 : i32
    %c0_i32_1 = arith.constant 0 : i32
    return %c0_i32, %c0_i32_0 : i32, i32
  }
  func.func @transform_3(%arg0: i32) -> (i32, i32) {
    %c0_i32 = arith.constant 0 : i32
    %c0_i32_0 = arith.constant 0 : i32
    return %arg0, %c0_i32 : i32, i32
  }
}

module attributes {stable_mosaic.version = 11 : i64} {
  func.func @_score_reduce_kernel(%arg0: i32, %arg1: memref<8x32xbf16, #tpu.memory_space<vmem>>, %arg2: memref<32x128xbf16, #tpu.memory_space<vmem>>, %arg3: memref<1x128xf32, #tpu.memory_space<vmem>>, %arg4: memref<128x1xbf16, #tpu.memory_space<vmem>>, %arg5: memref<1x1xf32, #tpu.memory_space<vmem>>, %arg6: memref<32x128xbf16, #tpu.memory_space<vmem>>, %arg7: memref<1x128xf32, #tpu.memory_space<vmem>>, %arg8: memref<8x1xf32, #tpu.memory_space<vmem>>, %arg9: memref<8x128xf32, #tpu.memory_space<vmem>>) attributes {dimension_semantics = [#tpu.dimension_semantics<parallel>], iteration_bounds = array<i64: 1>, scalar_prefetch = 0 : i64, scratch_operands = 0 : i64, tpu.core_type = #tpu.core_type<tc>, window_params = [{transform_indices = @transform_0, window_bounds = array<i64: 8, 32>}, {pipeline_mode = #tpu.pipeline_mode<synchronous>, transform_indices = @transform_1, window_bounds = array<i64: 32, 128>}, {pipeline_mode = #tpu.pipeline_mode<synchronous>, transform_indices = @transform_2, window_bounds = array<i64: 1, 128>}, {pipeline_mode = #tpu.pipeline_mode<synchronous>, transform_indices = @transform_3, window_bounds = array<i64: 128, 1>}, {pipeline_mode = #tpu.pipeline_mode<synchronous>, transform_indices = @transform_4, window_bounds = array<i64: 1, 1>}, {pipeline_mode = #tpu.pipeline_mode<synchronous>, transform_indices = @transform_5, window_bounds = array<i64: 32, 128>}, {pipeline_mode = #tpu.pipeline_mode<synchronous>, transform_indices = @transform_6, window_bounds = array<i64: 1, 128>}, {transform_indices = @transform_7, window_bounds = array<i64: 8, 1>}, {transform_indices = @transform_8, window_bounds = array<i64: 8, 128>}]} {
    %c0 = arith.constant 0 : index
    %c0_0 = arith.constant 0 : index
    %0 = vector.load %arg1[%c0, %c0_0] : memref<8x32xbf16, #tpu.memory_space<vmem>>, vector<8x32xbf16>
    %c0_1 = arith.constant 0 : index
    %c0_2 = arith.constant 0 : index
    %1 = vector.load %arg2[%c0_1, %c0_2] : memref<32x128xbf16, #tpu.memory_space<vmem>>, vector<32x128xbf16>
    %cst = arith.constant dense<0.000000e+00> : vector<8x128xf32>
    %2 = tpu.matmul %0, %1, %cst {dimension_numbers = #tpu.dot_dimension_numbers<[1], [0], [0], [1], [0, 0, 1, 1], [], []>} : vector<8x32xbf16>, vector<32x128xbf16>, vector<8x128xf32> -> vector<8x128xf32>
    %c0_3 = arith.constant 0 : index
    %c0_4 = arith.constant 0 : index
    %3 = vector.load %arg3[%c0_3, %c0_4] : memref<1x128xf32, #tpu.memory_space<vmem>>, vector<1x128xf32>
    %4 = vector.broadcast %3 : vector<1x128xf32> to vector<8x128xf32>
    %5 = arith.addf %2, %4 : vector<8x128xf32>
    %6 = math.tanh %5 : vector<8x128xf32>
    %7 = arith.truncf %6 : vector<8x128xf32> to vector<8x128xbf16>
    %c0_5 = arith.constant 0 : index
    %c0_6 = arith.constant 0 : index
    %8 = vector.load %arg4[%c0_5, %c0_6] : memref<128x1xbf16, #tpu.memory_space<vmem>>, vector<128x1xbf16>
    %cst_7 = arith.constant dense<0.000000e+00> : vector<8x1xf32>
    %9 = tpu.matmul %7, %8, %cst_7 {dimension_numbers = #tpu.dot_dimension_numbers<[1], [0], [0], [1], [0, 0, 1, 1], [], []>} : vector<8x128xbf16>, vector<128x1xbf16>, vector<8x1xf32> -> vector<8x1xf32>
    %c0_8 = arith.constant 0 : index
    %c0_9 = arith.constant 0 : index
    %10 = vector.load %arg5[%c0_8, %c0_9] : memref<1x1xf32, #tpu.memory_space<vmem>>, vector<1x1xf32>
    %11 = vector.broadcast %10 : vector<1x1xf32> to vector<8x1xf32>
    %12 = arith.addf %9, %11 : vector<8x1xf32>
    %c0_10 = arith.constant 0 : index
    %c0_11 = arith.constant 0 : index
    %13 = vector.load %arg6[%c0_10, %c0_11] : memref<32x128xbf16, #tpu.memory_space<vmem>>, vector<32x128xbf16>
    %cst_12 = arith.constant dense<0.000000e+00> : vector<8x128xf32>
    %14 = tpu.matmul %0, %13, %cst_12 {dimension_numbers = #tpu.dot_dimension_numbers<[1], [0], [0], [1], [0, 0, 1, 1], [], []>} : vector<8x32xbf16>, vector<32x128xbf16>, vector<8x128xf32> -> vector<8x128xf32>
    %c0_13 = arith.constant 0 : index
    %c0_14 = arith.constant 0 : index
    %15 = vector.load %arg7[%c0_13, %c0_14] : memref<1x128xf32, #tpu.memory_space<vmem>>, vector<1x128xf32>
    %16 = vector.broadcast %15 : vector<1x128xf32> to vector<8x128xf32>
    %17 = arith.addf %14, %16 : vector<8x128xf32>
    %c0_15 = arith.constant 0 : index
    %c0_16 = arith.constant 0 : index
    %18 = vector.load %arg8[%c0_15, %c0_16] : memref<8x1xf32, #tpu.memory_space<vmem>>, vector<8x1xf32>
    tpu.vector_store %arg8[%c0_15, %c0_16], %12 {strides = array<i32>} : memref<8x1xf32, #tpu.memory_space<vmem>>, vector<8x1xf32>,
    %c0_17 = arith.constant 0 : index
    %c0_18 = arith.constant 0 : index
    %19 = vector.load %arg9[%c0_17, %c0_18] : memref<8x128xf32, #tpu.memory_space<vmem>>, vector<8x128xf32>
    tpu.vector_store %arg9[%c0_17, %c0_18], %17 {strides = array<i32>} : memref<8x128xf32, #tpu.memory_space<vmem>>, vector<8x128xf32>,
    return
  }
  func.func @transform_0(%arg0: i32) -> (i32, i32) {
    %c0_i32 = arith.constant 0 : i32
    %c0_i32_0 = arith.constant 0 : i32
    return %arg0, %c0_i32 : i32, i32
  }
  func.func @transform_1(%arg0: i32) -> (i32, i32) {
    %c0_i32 = arith.constant 0 : i32
    %c0_i32_0 = arith.constant 0 : i32
    %c0_i32_1 = arith.constant 0 : i32
    return %c0_i32, %c0_i32_0 : i32, i32
  }
  func.func @transform_2(%arg0: i32) -> (i32, i32) {
    %c0_i32 = arith.constant 0 : i32
    %c0_i32_0 = arith.constant 0 : i32
    %c0_i32_1 = arith.constant 0 : i32
    return %c0_i32, %c0_i32_0 : i32, i32
  }
  func.func @transform_3(%arg0: i32) -> (i32, i32) {
    %c0_i32 = arith.constant 0 : i32
    %c0_i32_0 = arith.constant 0 : i32
    %c0_i32_1 = arith.constant 0 : i32
    return %c0_i32, %c0_i32_0 : i32, i32
  }
  func.func @transform_4(%arg0: i32) -> (i32, i32) {
    %c0_i32 = arith.constant 0 : i32
    %c0_i32_0 = arith.constant 0 : i32
    %c0_i32_1 = arith.constant 0 : i32
    return %c0_i32, %c0_i32_0 : i32, i32
  }
  func.func @transform_5(%arg0: i32) -> (i32, i32) {
    %c0_i32 = arith.constant 0 : i32
    %c0_i32_0 = arith.constant 0 : i32
    %c0_i32_1 = arith.constant 0 : i32
    return %c0_i32, %c0_i32_0 : i32, i32
  }
  func.func @transform_6(%arg0: i32) -> (i32, i32) {
    %c0_i32 = arith.constant 0 : i32
    %c0_i32_0 = arith.constant 0 : i32
    %c0_i32_1 = arith.constant 0 : i32
    return %c0_i32, %c0_i32_0 : i32, i32
  }
  func.func @transform_7(%arg0: i32) -> (i32, i32) {
    %c0_i32 = arith.constant 0 : i32
    %c0_i32_0 = arith.constant 0 : i32
    return %arg0, %c0_i32 : i32, i32
  }
  func.func @transform_8(%arg0: i32) -> (i32, i32) {
    %c0_i32 = arith.constant 0 : i32
    %c0_i32_0 = arith.constant 0 : i32
    return %arg0, %c0_i32 : i32, i32
  }
}

module attributes {stable_mosaic.version = 11 : i64} {
  func.func @_cross_attend_kernel(%arg0: i32, %arg1: memref<8x1x4xf32, #tpu.memory_space<vmem>>, %arg2: memref<8x1x1xf32, #tpu.memory_space<vmem>>, %arg3: memref<8x4x128xf32, #tpu.memory_space<vmem>>, %arg4: memref<8x1x128xf32, #tpu.memory_space<vmem>>, %arg5: memref<8x4x32xf32, #tpu.memory_space<vmem>>, %arg6: memref<8x1x32xf32, #tpu.memory_space<vmem>>) attributes {dimension_semantics = [#tpu.dimension_semantics<parallel>], iteration_bounds = array<i64: 1>, scalar_prefetch = 0 : i64, scratch_operands = 0 : i64, tpu.core_type = #tpu.core_type<tc>, window_params = [{transform_indices = @transform_0, window_bounds = array<i64: 8, 1, 4>}, {transform_indices = @transform_1, window_bounds = array<i64: 8, 1, 1>}, {transform_indices = @transform_2, window_bounds = array<i64: 8, 4, 128>}, {transform_indices = @transform_3, window_bounds = array<i64: 8, 1, 128>}, {transform_indices = @transform_4, window_bounds = array<i64: 8, 4, 32>}, {transform_indices = @transform_5, window_bounds = array<i64: 8, 1, 32>}]} {
    %c0 = arith.constant 0 : index
    %c0_0 = arith.constant 0 : index
    %c0_1 = arith.constant 0 : index
    %0 = vector.load %arg3[%c0, %c0_0, %c0_1] : memref<8x4x128xf32, #tpu.memory_space<vmem>>, vector<8x4x128xf32>
    %c0_2 = arith.constant 0 : index
    %c0_3 = arith.constant 0 : index
    %c0_4 = arith.constant 0 : index
    %1 = vector.load %arg4[%c0_2, %c0_3, %c0_4] : memref<8x1x128xf32, #tpu.memory_space<vmem>>, vector<8x1x128xf32>
    %2 = vector.shape_cast %1 : vector<8x1x128xf32> to vector<8x1x128xf32>
    %3 = vector.broadcast %2 : vector<8x1x128xf32> to vector<8x4x128xf32>
    "tpu.trace_start"() <{level = 10 : i32, message = "gik,gjk->gij"}> : () -> ()
    %cst = arith.constant dense<0.000000e+00> : vector<8x4x4xf32>
    %4 = tpu.matmul %0, %3, %cst {dimension_numbers = #tpu.dot_dimension_numbers<[2], [2], [1], [1], [0, 0, 0, 1, 1, 1], [0], [0]>} : vector<8x4x128xf32>, vector<8x4x128xf32>, vector<8x4x4xf32> -> vector<8x4x4xf32>
    "tpu.trace_stop"() : () -> ()
    %cst_5 = arith.constant dense<0xFF800000> : vector<8x4xf32>
    %5 = vector.multi_reduction <maximumf>, %4, %cst_5 [2] : vector<8x4x4xf32> to vector<8x4xf32>
    %6 = vector.shape_cast %5 : vector<8x4xf32> to vector<8x4x1xf32>
    %7 = vector.broadcast %6 : vector<8x4x1xf32> to vector<8x4x4xf32>
    %8 = arith.subf %4, %7 : vector<8x4x4xf32>
    %9 = math.exp %8 : vector<8x4x4xf32>
    %cst_6 = arith.constant dense<0.000000e+00> : vector<8x4xf32>
    %10 = vector.multi_reduction <add>, %9, %cst_6 [2] : vector<8x4x4xf32> to vector<8x4xf32>
    %11 = vector.shape_cast %10 : vector<8x4xf32> to vector<8x4x1xf32>
    %12 = vector.broadcast %11 : vector<8x4x1xf32> to vector<8x4x4xf32>
    %13 = arith.divf %9, %12 : vector<8x4x4xf32>
    %c0_7 = arith.constant 0 : index
    %c0_8 = arith.constant 0 : index
    %c0_9 = arith.constant 0 : index
    %14 = vector.load %arg2[%c0_7, %c0_8, %c0_9] : memref<8x1x1xf32, #tpu.memory_space<vmem>>, vector<8x1x1xf32>
    %15 = vector.shape_cast %14 : vector<8x1x1xf32> to vector<8x1x1xf32>
    %16 = vector.broadcast %15 : vector<8x1x1xf32> to vector<8x1x4xf32>
    "tpu.trace_start"() <{level = 10 : i32, message = "gqj,gij->gqi"}> : () -> ()
    %cst_10 = arith.constant dense<0.000000e+00> : vector<8x1x4xf32>
    %17 = tpu.matmul %16, %13, %cst_10 {dimension_numbers = #tpu.dot_dimension_numbers<[2], [2], [1], [1], [0, 0, 0, 1, 1, 1], [0], [0]>} : vector<8x1x4xf32>, vector<8x4x4xf32>, vector<8x1x4xf32> -> vector<8x1x4xf32>
    "tpu.trace_stop"() : () -> ()
    %c0_11 = arith.constant 0 : index
    %c0_12 = arith.constant 0 : index
    %c0_13 = arith.constant 0 : index
    %18 = vector.load %arg1[%c0_11, %c0_12, %c0_13] : memref<8x1x4xf32, #tpu.memory_space<vmem>>, vector<8x1x4xf32>
    %cst_14 = arith.constant 0.00999999977 : f32
    %19 = vector.broadcast %cst_14 : f32 to vector<8x1x4xf32>
    %20 = arith.mulf %19, %17 : vector<8x1x4xf32>
    %21 = arith.addf %18, %20 : vector<8x1x4xf32>
    %cst_15 = arith.constant dense<0xFF800000> : vector<8x1xf32>
    %22 = vector.multi_reduction <maximumf>, %21, %cst_15 [2] : vector<8x1x4xf32> to vector<8x1xf32>
    %23 = vector.shape_cast %22 : vector<8x1xf32> to vector<8x1x1xf32>
    %24 = vector.broadcast %23 : vector<8x1x1xf32> to vector<8x1x4xf32>
    %25 = arith.subf %21, %24 : vector<8x1x4xf32>
    %26 = math.exp %25 : vector<8x1x4xf32>
    %cst_16 = arith.constant dense<0.000000e+00> : vector<8x1xf32>
    %27 = vector.multi_reduction <add>, %26, %cst_16 [2] : vector<8x1x4xf32> to vector<8x1xf32>
    %28 = vector.shape_cast %27 : vector<8x1xf32> to vector<8x1x1xf32>
    %29 = vector.broadcast %28 : vector<8x1x1xf32> to vector<8x1x4xf32>
    %30 = arith.divf %26, %29 : vector<8x1x4xf32>
    %c0_17 = arith.constant 0 : index
    %c0_18 = arith.constant 0 : index
    %c0_19 = arith.constant 0 : index
    %31 = vector.load %arg5[%c0_17, %c0_18, %c0_19] : memref<8x4x32xf32, #tpu.memory_space<vmem>>, vector<8x4x32xf32>
    "tpu.trace_start"() <{level = 10 : i32, message = "gqn,gnd->gqd"}> : () -> ()
    %cst_20 = arith.constant dense<0.000000e+00> : vector<8x1x32xf32>
    %32 = tpu.matmul %30, %31, %cst_20 {dimension_numbers = #tpu.dot_dimension_numbers<[2], [1], [1], [2], [0, 0, 0, 1, 1, 2], [0], [0]>} : vector<8x1x4xf32>, vector<8x4x32xf32>, vector<8x1x32xf32> -> vector<8x1x32xf32>
    "tpu.trace_stop"() : () -> ()
    %c0_21 = arith.constant 0 : index
    %c0_22 = arith.constant 0 : index
    %c0_23 = arith.constant 0 : index
    %33 = vector.load %arg6[%c0_21, %c0_22, %c0_23] : memref<8x1x32xf32, #tpu.memory_space<vmem>>, vector<8x1x32xf32>
    tpu.vector_store %arg6[%c0_21, %c0_22, %c0_23], %32 {strides = array<i32>} : memref<8x1x32xf32, #tpu.memory_space<vmem>>, vector<8x1x32xf32>,
    return
  }
  func.func @transform_0(%arg0: i32) -> (i32, i32, i32) {
    %c0_i32 = arith.constant 0 : i32
    %c0_i32_0 = arith.constant 0 : i32
    %c0_i32_1 = arith.constant 0 : i32
    return %arg0, %c0_i32, %c0_i32_0 : i32, i32, i32
  }
  func.func @transform_1(%arg0: i32) -> (i32, i32, i32) {
    %c0_i32 = arith.constant 0 : i32
    %c0_i32_0 = arith.constant 0 : i32
    %c0_i32_1 = arith.constant 0 : i32
    return %arg0, %c0_i32, %c0_i32_0 : i32, i32, i32
  }
  func.func @transform_2(%arg0: i32) -> (i32, i32, i32) {
    %c0_i32 = arith.constant 0 : i32
    %c0_i32_0 = arith.constant 0 : i32
    %c0_i32_1 = arith.constant 0 : i32
    return %arg0, %c0_i32, %c0_i32_0 : i32, i32, i32
  }
  func.func @transform_3(%arg0: i32) -> (i32, i32, i32) {
    %c0_i32 = arith.constant 0 : i32
    %c0_i32_0 = arith.constant 0 : i32
    %c0_i32_1 = arith.constant 0 : i32
    return %arg0, %c0_i32, %c0_i32_0 : i32, i32, i32
  }
  func.func @transform_4(%arg0: i32) -> (i32, i32, i32) {
    %c0_i32 = arith.constant 0 : i32
    %c0_i32_0 = arith.constant 0 : i32
    %c0_i32_1 = arith.constant 0 : i32
    return %arg0, %c0_i32, %c0_i32_0 : i32, i32, i32
  }
  func.func @transform_5(%arg0: i32) -> (i32, i32, i32) {
    %c0_i32 = arith.constant 0 : i32
    %c0_i32_0 = arith.constant 0 : i32
    %c0_i32_1 = arith.constant 0 : i32
    return %arg0, %c0_i32, %c0_i32_0 : i32, i32, i32
  }
}

module attributes {stable_mosaic.version = 11 : i64} {
  func.func @_mlp_score_kernel(%arg0: i32, %arg1: memref<32x64xbf16, #tpu.memory_space<vmem>>, %arg2: memref<64x128xbf16, #tpu.memory_space<vmem>>, %arg3: memref<1x128xf32, #tpu.memory_space<vmem>>, %arg4: memref<128x1xbf16, #tpu.memory_space<vmem>>, %arg5: memref<1x1xf32, #tpu.memory_space<vmem>>, %arg6: memref<32x1xf32, #tpu.memory_space<vmem>>) attributes {dimension_semantics = [#tpu.dimension_semantics<parallel>], iteration_bounds = array<i64: 1>, scalar_prefetch = 0 : i64, scratch_operands = 0 : i64, tpu.core_type = #tpu.core_type<tc>, window_params = [{transform_indices = @transform_0, window_bounds = array<i64: 32, 64>}, {pipeline_mode = #tpu.pipeline_mode<synchronous>, transform_indices = @transform_1, window_bounds = array<i64: 64, 128>}, {pipeline_mode = #tpu.pipeline_mode<synchronous>, transform_indices = @transform_2, window_bounds = array<i64: 1, 128>}, {pipeline_mode = #tpu.pipeline_mode<synchronous>, transform_indices = @transform_3, window_bounds = array<i64: 128, 1>}, {pipeline_mode = #tpu.pipeline_mode<synchronous>, transform_indices = @transform_4, window_bounds = array<i64: 1, 1>}, {transform_indices = @transform_5, window_bounds = array<i64: 32, 1>}]} {
    %c0 = arith.constant 0 : index
    %c0_0 = arith.constant 0 : index
    %0 = vector.load %arg1[%c0, %c0_0] : memref<32x64xbf16, #tpu.memory_space<vmem>>, vector<32x64xbf16>
    %c0_1 = arith.constant 0 : index
    %c0_2 = arith.constant 0 : index
    %1 = vector.load %arg2[%c0_1, %c0_2] : memref<64x128xbf16, #tpu.memory_space<vmem>>, vector<64x128xbf16>
    %cst = arith.constant dense<0.000000e+00> : vector<32x128xf32>
    %2 = tpu.matmul %0, %1, %cst {dimension_numbers = #tpu.dot_dimension_numbers<[1], [0], [0], [1], [0, 0, 1, 1], [], []>} : vector<32x64xbf16>, vector<64x128xbf16>, vector<32x128xf32> -> vector<32x128xf32>
    %c0_3 = arith.constant 0 : index
    %c0_4 = arith.constant 0 : index
    %3 = vector.load %arg3[%c0_3, %c0_4] : memref<1x128xf32, #tpu.memory_space<vmem>>, vector<1x128xf32>
    %4 = vector.broadcast %3 : vector<1x128xf32> to vector<32x128xf32>
    %5 = arith.addf %2, %4 : vector<32x128xf32>
    %6 = math.tanh %5 : vector<32x128xf32>
    %7 = arith.truncf %6 : vector<32x128xf32> to vector<32x128xbf16>
    %c0_5 = arith.constant 0 : index
    %c0_6 = arith.constant 0 : index
    %8 = vector.load %arg4[%c0_5, %c0_6] : memref<128x1xbf16, #tpu.memory_space<vmem>>, vector<128x1xbf16>
    %cst_7 = arith.constant dense<0.000000e+00> : vector<32x1xf32>
    %9 = tpu.matmul %7, %8, %cst_7 {dimension_numbers = #tpu.dot_dimension_numbers<[1], [0], [0], [1], [0, 0, 1, 1], [], []>} : vector<32x128xbf16>, vector<128x1xbf16>, vector<32x1xf32> -> vector<32x1xf32>
    %c0_8 = arith.constant 0 : index
    %c0_9 = arith.constant 0 : index
    %10 = vector.load %arg5[%c0_8, %c0_9] : memref<1x1xf32, #tpu.memory_space<vmem>>, vector<1x1xf32>
    %11 = vector.broadcast %10 : vector<1x1xf32> to vector<32x1xf32>
    %12 = arith.addf %9, %11 : vector<32x1xf32>
    %c0_10 = arith.constant 0 : index
    %c0_11 = arith.constant 0 : index
    %13 = vector.load %arg6[%c0_10, %c0_11] : memref<32x1xf32, #tpu.memory_space<vmem>>, vector<32x1xf32>
    tpu.vector_store %arg6[%c0_10, %c0_11], %12 {strides = array<i32>} : memref<32x1xf32, #tpu.memory_space<vmem>>, vector<32x1xf32>,
    return
  }
  func.func @transform_0(%arg0: i32) -> (i32, i32) {
    %c0_i32 = arith.constant 0 : i32
    %c0_i32_0 = arith.constant 0 : i32
    return %arg0, %c0_i32 : i32, i32
  }
  func.func @transform_1(%arg0: i32) -> (i32, i32) {
    %c0_i32 = arith.constant 0 : i32
    %c0_i32_0 = arith.constant 0 : i32
    %c0_i32_1 = arith.constant 0 : i32
    return %c0_i32, %c0_i32_0 : i32, i32
  }
  func.func @transform_2(%arg0: i32) -> (i32, i32) {
    %c0_i32 = arith.constant 0 : i32
    %c0_i32_0 = arith.constant 0 : i32
    %c0_i32_1 = arith.constant 0 : i32
    return %c0_i32, %c0_i32_0 : i32, i32
  }
  func.func @transform_3(%arg0: i32) -> (i32, i32) {
    %c0_i32 = arith.constant 0 : i32
    %c0_i32_0 = arith.constant 0 : i32
    %c0_i32_1 = arith.constant 0 : i32
    return %c0_i32, %c0_i32_0 : i32, i32
  }
  func.func @transform_4(%arg0: i32) -> (i32, i32) {
    %c0_i32 = arith.constant 0 : i32
    %c0_i32_0 = arith.constant 0 : i32
    %c0_i32_1 = arith.constant 0 : i32
    return %c0_i32, %c0_i32_0 : i32, i32
  }
  func.func @transform_5(%arg0: i32) -> (i32, i32) {
    %c0_i32 = arith.constant 0 : i32
    %c0_i32_0 = arith.constant 0 : i32
    return %arg0, %c0_i32 : i32, i32
  }
}

module attributes {stable_mosaic.version = 11 : i64} {
  func.func @_sws_kernel(%arg0: i32, %arg1: memref<8x1x4xf32, #tpu.memory_space<vmem>>, %arg2: memref<8x4x64xf32, #tpu.memory_space<vmem>>, %arg3: memref<8x1x64xf32, #tpu.memory_space<vmem>>) attributes {dimension_semantics = [#tpu.dimension_semantics<parallel>], iteration_bounds = array<i64: 1>, scalar_prefetch = 0 : i64, scratch_operands = 0 : i64, tpu.core_type = #tpu.core_type<tc>, window_params = [{transform_indices = @transform_0, window_bounds = array<i64: 8, 1, 4>}, {transform_indices = @transform_1, window_bounds = array<i64: 8, 4, 64>}, {transform_indices = @transform_2, window_bounds = array<i64: 8, 1, 64>}]} {
    %c0 = arith.constant 0 : index
    %c0_0 = arith.constant 0 : index
    %c0_1 = arith.constant 0 : index
    %0 = vector.load %arg1[%c0, %c0_0, %c0_1] : memref<8x1x4xf32, #tpu.memory_space<vmem>>, vector<8x1x4xf32>
    %cst = arith.constant dense<0xFF800000> : vector<8x1xf32>
    %1 = vector.multi_reduction <maximumf>, %0, %cst [2] : vector<8x1x4xf32> to vector<8x1xf32>
    %2 = vector.shape_cast %1 : vector<8x1xf32> to vector<8x1x1xf32>
    %3 = vector.broadcast %2 : vector<8x1x1xf32> to vector<8x1x4xf32>
    %4 = arith.subf %0, %3 : vector<8x1x4xf32>
    %5 = math.exp %4 : vector<8x1x4xf32>
    %cst_2 = arith.constant dense<0.000000e+00> : vector<8x1xf32>
    %6 = vector.multi_reduction <add>, %5, %cst_2 [2] : vector<8x1x4xf32> to vector<8x1xf32>
    %7 = vector.shape_cast %6 : vector<8x1xf32> to vector<8x1x1xf32>
    %8 = vector.broadcast %7 : vector<8x1x1xf32> to vector<8x1x4xf32>
    %9 = arith.divf %5, %8 : vector<8x1x4xf32>
    %c0_3 = arith.constant 0 : index
    %c0_4 = arith.constant 0 : index
    %c0_5 = arith.constant 0 : index
    %10 = vector.load %arg2[%c0_3, %c0_4, %c0_5] : memref<8x4x64xf32, #tpu.memory_space<vmem>>, vector<8x4x64xf32>
    "tpu.trace_start"() <{level = 10 : i32, message = "gqn,gnd->gqd"}> : () -> ()
    %cst_6 = arith.constant dense<0.000000e+00> : vector<8x1x64xf32>
    %11 = tpu.matmul %9, %10, %cst_6 {dimension_numbers = #tpu.dot_dimension_numbers<[2], [1], [1], [2], [0, 0, 0, 1, 1, 2], [0], [0]>} : vector<8x1x4xf32>, vector<8x4x64xf32>, vector<8x1x64xf32> -> vector<8x1x64xf32>
    "tpu.trace_stop"() : () -> ()
    %c0_7 = arith.constant 0 : index
    %c0_8 = arith.constant 0 : index
    %c0_9 = arith.constant 0 : index
    %12 = vector.load %arg3[%c0_7, %c0_8, %c0_9] : memref<8x1x64xf32, #tpu.memory_space<vmem>>, vector<8x1x64xf32>
    tpu.vector_store %arg3[%c0_7, %c0_8, %c0_9], %11 {strides = array<i32>} : memref<8x1x64xf32, #tpu.memory_space<vmem>>, vector<8x1x64xf32>,
    return
  }
  func.func @transform_0(%arg0: i32) -> (i32, i32, i32) {
    %c0_i32 = arith.constant 0 : i32
    %c0_i32_0 = arith.constant 0 : i32
    %c0_i32_1 = arith.constant 0 : i32
    return %arg0, %c0_i32, %c0_i32_0 : i32, i32, i32
  }
  func.func @transform_1(%arg0: i32) -> (i32, i32, i32) {
    %c0_i32 = arith.constant 0 : i32
    %c0_i32_0 = arith.constant 0 : i32
    %c0_i32_1 = arith.constant 0 : i32
    return %arg0, %c0_i32, %c0_i32_0 : i32, i32, i32
  }
  func.func @transform_2(%arg0: i32) -> (i32, i32, i32) {
    %c0_i32 = arith.constant 0 : i32
    %c0_i32_0 = arith.constant 0 : i32
    %c0_i32_1 = arith.constant 0 : i32
    return %arg0, %c0_i32, %c0_i32_0 : i32, i32, i32
  }
}

module attributes {stable_mosaic.version = 11 : i64} {
  func.func @_linear_kernel(%arg0: i32, %arg1: memref<8x64xbf16, #tpu.memory_space<vmem>>, %arg2: memref<64x32xbf16, #tpu.memory_space<vmem>>, %arg3: memref<1x32xf32, #tpu.memory_space<vmem>>, %arg4: memref<8x32xf32, #tpu.memory_space<vmem>>) attributes {dimension_semantics = [#tpu.dimension_semantics<parallel>], iteration_bounds = array<i64: 1>, scalar_prefetch = 0 : i64, scratch_operands = 0 : i64, tpu.core_type = #tpu.core_type<tc>, window_params = [{transform_indices = @transform_0, window_bounds = array<i64: 8, 64>}, {pipeline_mode = #tpu.pipeline_mode<synchronous>, transform_indices = @transform_1, window_bounds = array<i64: 64, 32>}, {pipeline_mode = #tpu.pipeline_mode<synchronous>, transform_indices = @transform_2, window_bounds = array<i64: 1, 32>}, {transform_indices = @transform_3, window_bounds = array<i64: 8, 32>}]} {
    %c0 = arith.constant 0 : index
    %c0_0 = arith.constant 0 : index
    %0 = vector.load %arg1[%c0, %c0_0] : memref<8x64xbf16, #tpu.memory_space<vmem>>, vector<8x64xbf16>
    %c0_1 = arith.constant 0 : index
    %c0_2 = arith.constant 0 : index
    %1 = vector.load %arg2[%c0_1, %c0_2] : memref<64x32xbf16, #tpu.memory_space<vmem>>, vector<64x32xbf16>
    %cst = arith.constant dense<0.000000e+00> : vector<8x32xf32>
    %2 = tpu.matmul %0, %1, %cst {dimension_numbers = #tpu.dot_dimension_numbers<[1], [0], [0], [1], [0, 0, 1, 1], [], []>} : vector<8x64xbf16>, vector<64x32xbf16>, vector<8x32xf32> -> vector<8x32xf32>
    %c0_3 = arith.constant 0 : index
    %c0_4 = arith.constant 0 : index
    %3 = vector.load %arg3[%c0_3, %c0_4] : memref<1x32xf32, #tpu.memory_space<vmem>>, vector<1x32xf32>
    %4 = vector.broadcast %3 : vector<1x32xf32> to vector<8x32xf32>
    %5 = arith.addf %2, %4 : vector<8x32xf32>
    %c0_5 = arith.constant 0 : index
    %c0_6 = arith.constant 0 : index
    %6 = vector.load %arg4[%c0_5, %c0_6] : memref<8x32xf32, #tpu.memory_space<vmem>>, vector<8x32xf32>
    tpu.vector_store %arg4[%c0_5, %c0_6], %5 {strides = array<i32>} : memref<8x32xf32, #tpu.memory_space<vmem>>, vector<8x32xf32>,
    return
  }
  func.func @transform_0(%arg0: i32) -> (i32, i32) {
    %c0_i32 = arith.constant 0 : i32
    %c0_i32_0 = arith.constant 0 : i32
    return %arg0, %c0_i32 : i32, i32
  }
  func.func @transform_1(%arg0: i32) -> (i32, i32) {
    %c0_i32 = arith.constant 0 : i32
    %c0_i32_0 = arith.constant 0 : i32
    %c0_i32_1 = arith.constant 0 : i32
    return %c0_i32, %c0_i32_0 : i32, i32
  }
  func.func @transform_2(%arg0: i32) -> (i32, i32) {
    %c0_i32 = arith.constant 0 : i32
    %c0_i32_0 = arith.constant 0 : i32
    %c0_i32_1 = arith.constant 0 : i32
    return %c0_i32, %c0_i32_0 : i32, i32
  }
  func.func @transform_3(%arg0: i32) -> (i32, i32) {
    %c0_i32 = arith.constant 0 : i32
    %c0_i32_0 = arith.constant 0 : i32
    return %arg0, %c0_i32 : i32, i32
  }
}

module attributes {stable_mosaic.version = 11 : i64} {
  func.func @_linear_kernel(%arg0: i32, %arg1: memref<8x32xbf16, #tpu.memory_space<vmem>>, %arg2: memref<32x1xbf16, #tpu.memory_space<vmem>>, %arg3: memref<1x1xf32, #tpu.memory_space<vmem>>, %arg4: memref<8x1xf32, #tpu.memory_space<vmem>>) attributes {dimension_semantics = [#tpu.dimension_semantics<parallel>], iteration_bounds = array<i64: 1>, scalar_prefetch = 0 : i64, scratch_operands = 0 : i64, tpu.core_type = #tpu.core_type<tc>, window_params = [{transform_indices = @transform_0, window_bounds = array<i64: 8, 32>}, {pipeline_mode = #tpu.pipeline_mode<synchronous>, transform_indices = @transform_1, window_bounds = array<i64: 32, 1>}, {pipeline_mode = #tpu.pipeline_mode<synchronous>, transform_indices = @transform_2, window_bounds = array<i64: 1, 1>}, {transform_indices = @transform_3, window_bounds = array<i64: 8, 1>}]} {
    %c0 = arith.constant 0 : index
    %c0_0 = arith.constant 0 : index
    %0 = vector.load %arg1[%c0, %c0_0] : memref<8x32xbf16, #tpu.memory_space<vmem>>, vector<8x32xbf16>
    %c0_1 = arith.constant 0 : index
    %c0_2 = arith.constant 0 : index
    %1 = vector.load %arg2[%c0_1, %c0_2] : memref<32x1xbf16, #tpu.memory_space<vmem>>, vector<32x1xbf16>
    %cst = arith.constant dense<0.000000e+00> : vector<8x1xf32>
    %2 = tpu.matmul %0, %1, %cst {dimension_numbers = #tpu.dot_dimension_numbers<[1], [0], [0], [1], [0, 0, 1, 1], [], []>} : vector<8x32xbf16>, vector<32x1xbf16>, vector<8x1xf32> -> vector<8x1xf32>
    %c0_3 = arith.constant 0 : index
    %c0_4 = arith.constant 0 : index
    %3 = vector.load %arg3[%c0_3, %c0_4] : memref<1x1xf32, #tpu.memory_space<vmem>>, vector<1x1xf32>
    %4 = vector.broadcast %3 : vector<1x1xf32> to vector<8x1xf32>
    %5 = arith.addf %2, %4 : vector<8x1xf32>
    %c0_5 = arith.constant 0 : index
    %c0_6 = arith.constant 0 : index
    %6 = vector.load %arg4[%c0_5, %c0_6] : memref<8x1xf32, #tpu.memory_space<vmem>>, vector<8x1xf32>
    tpu.vector_store %arg4[%c0_5, %c0_6], %5 {strides = array<i32>} : memref<8x1xf32, #tpu.memory_space<vmem>>, vector<8x1xf32>,
    return
  }
  func.func @transform_0(%arg0: i32) -> (i32, i32) {
    %c0_i32 = arith.constant 0 : i32
    %c0_i32_0 = arith.constant 0 : i32
    return %arg0, %c0_i32 : i32, i32
  }
  func.func @transform_1(%arg0: i32) -> (i32, i32) {
    %c0_i32 = arith.constant 0 : i32
    %c0_i32_0 = arith.constant 0 : i32
    %c0_i32_1 = arith.constant 0 : i32
    return %c0_i32, %c0_i32_0 : i32, i32
  }
  func.func @transform_2(%arg0: i32) -> (i32, i32) {
    %c0_i32 = arith.constant 0 : i32
    %c0_i32_0 = arith.constant 0 : i32
    %c0_i32_1 = arith.constant 0 : i32
    return %c0_i32, %c0_i32_0 : i32, i32
  }
  func.func @transform_3(%arg0: i32) -> (i32, i32) {
    %c0_i32 = arith.constant 0 : i32
    %c0_i32_0 = arith.constant 0 : i32
    return %arg0, %c0_i32 : i32, i32
  }
}

module attributes {stable_mosaic.version = 11 : i64} {
  func.func @_cross_attend_kernel(%arg0: i32, %arg1: memref<8x1x2xf32, #tpu.memory_space<vmem>>, %arg2: memref<8x1x1xf32, #tpu.memory_space<vmem>>, %arg3: memref<8x2x128xf32, #tpu.memory_space<vmem>>, %arg4: memref<8x1x128xf32, #tpu.memory_space<vmem>>, %arg5: memref<8x2x32xf32, #tpu.memory_space<vmem>>, %arg6: memref<8x1x32xf32, #tpu.memory_space<vmem>>) attributes {dimension_semantics = [#tpu.dimension_semantics<parallel>], iteration_bounds = array<i64: 1>, scalar_prefetch = 0 : i64, scratch_operands = 0 : i64, tpu.core_type = #tpu.core_type<tc>, window_params = [{transform_indices = @transform_0, window_bounds = array<i64: 8, 1, 2>}, {transform_indices = @transform_1, window_bounds = array<i64: 8, 1, 1>}, {transform_indices = @transform_2, window_bounds = array<i64: 8, 2, 128>}, {transform_indices = @transform_3, window_bounds = array<i64: 8, 1, 128>}, {transform_indices = @transform_4, window_bounds = array<i64: 8, 2, 32>}, {transform_indices = @transform_5, window_bounds = array<i64: 8, 1, 32>}]} {
    %c0 = arith.constant 0 : index
    %c0_0 = arith.constant 0 : index
    %c0_1 = arith.constant 0 : index
    %0 = vector.load %arg3[%c0, %c0_0, %c0_1] : memref<8x2x128xf32, #tpu.memory_space<vmem>>, vector<8x2x128xf32>
    %c0_2 = arith.constant 0 : index
    %c0_3 = arith.constant 0 : index
    %c0_4 = arith.constant 0 : index
    %1 = vector.load %arg4[%c0_2, %c0_3, %c0_4] : memref<8x1x128xf32, #tpu.memory_space<vmem>>, vector<8x1x128xf32>
    %2 = vector.shape_cast %1 : vector<8x1x128xf32> to vector<8x1x128xf32>
    %3 = vector.broadcast %2 : vector<8x1x128xf32> to vector<8x2x128xf32>
    "tpu.trace_start"() <{level = 10 : i32, message = "gik,gjk->gij"}> : () -> ()
    %cst = arith.constant dense<0.000000e+00> : vector<8x2x2xf32>
    %4 = tpu.matmul %0, %3, %cst {dimension_numbers = #tpu.dot_dimension_numbers<[2], [2], [1], [1], [0, 0, 0, 1, 1, 1], [0], [0]>} : vector<8x2x128xf32>, vector<8x2x128xf32>, vector<8x2x2xf32> -> vector<8x2x2xf32>
    "tpu.trace_stop"() : () -> ()
    %cst_5 = arith.constant dense<0xFF800000> : vector<8x2xf32>
    %5 = vector.multi_reduction <maximumf>, %4, %cst_5 [2] : vector<8x2x2xf32> to vector<8x2xf32>
    %6 = vector.shape_cast %5 : vector<8x2xf32> to vector<8x2x1xf32>
    %7 = vector.broadcast %6 : vector<8x2x1xf32> to vector<8x2x2xf32>
    %8 = arith.subf %4, %7 : vector<8x2x2xf32>
    %9 = math.exp %8 : vector<8x2x2xf32>
    %cst_6 = arith.constant dense<0.000000e+00> : vector<8x2xf32>
    %10 = vector.multi_reduction <add>, %9, %cst_6 [2] : vector<8x2x2xf32> to vector<8x2xf32>
    %11 = vector.shape_cast %10 : vector<8x2xf32> to vector<8x2x1xf32>
    %12 = vector.broadcast %11 : vector<8x2x1xf32> to vector<8x2x2xf32>
    %13 = arith.divf %9, %12 : vector<8x2x2xf32>
    %c0_7 = arith.constant 0 : index
    %c0_8 = arith.constant 0 : index
    %c0_9 = arith.constant 0 : index
    %14 = vector.load %arg2[%c0_7, %c0_8, %c0_9] : memref<8x1x1xf32, #tpu.memory_space<vmem>>, vector<8x1x1xf32>
    %15 = vector.shape_cast %14 : vector<8x1x1xf32> to vector<8x1x1xf32>
    %16 = vector.broadcast %15 : vector<8x1x1xf32> to vector<8x1x2xf32>
    "tpu.trace_start"() <{level = 10 : i32, message = "gqj,gij->gqi"}> : () -> ()
    %cst_10 = arith.constant dense<0.000000e+00> : vector<8x1x2xf32>
    %17 = tpu.matmul %16, %13, %cst_10 {dimension_numbers = #tpu.dot_dimension_numbers<[2], [2], [1], [1], [0, 0, 0, 1, 1, 1], [0], [0]>} : vector<8x1x2xf32>, vector<8x2x2xf32>, vector<8x1x2xf32> -> vector<8x1x2xf32>
    "tpu.trace_stop"() : () -> ()
    %c0_11 = arith.constant 0 : index
    %c0_12 = arith.constant 0 : index
    %c0_13 = arith.constant 0 : index
    %18 = vector.load %arg1[%c0_11, %c0_12, %c0_13] : memref<8x1x2xf32, #tpu.memory_space<vmem>>, vector<8x1x2xf32>
    %cst_14 = arith.constant 0.00999999977 : f32
    %19 = vector.broadcast %cst_14 : f32 to vector<8x1x2xf32>
    %20 = arith.mulf %19, %17 : vector<8x1x2xf32>
    %21 = arith.addf %18, %20 : vector<8x1x2xf32>
    %cst_15 = arith.constant dense<0xFF800000> : vector<8x1xf32>
    %22 = vector.multi_reduction <maximumf>, %21, %cst_15 [2] : vector<8x1x2xf32> to vector<8x1xf32>
    %23 = vector.shape_cast %22 : vector<8x1xf32> to vector<8x1x1xf32>
    %24 = vector.broadcast %23 : vector<8x1x1xf32> to vector<8x1x2xf32>
    %25 = arith.subf %21, %24 : vector<8x1x2xf32>
    %26 = math.exp %25 : vector<8x1x2xf32>
    %cst_16 = arith.constant dense<0.000000e+00> : vector<8x1xf32>
    %27 = vector.multi_reduction <add>, %26, %cst_16 [2] : vector<8x1x2xf32> to vector<8x1xf32>
    %28 = vector.shape_cast %27 : vector<8x1xf32> to vector<8x1x1xf32>
    %29 = vector.broadcast %28 : vector<8x1x1xf32> to vector<8x1x2xf32>
    %30 = arith.divf %26, %29 : vector<8x1x2xf32>
    %c0_17 = arith.constant 0 : index
    %c0_18 = arith.constant 0 : index
    %c0_19 = arith.constant 0 : index
    %31 = vector.load %arg5[%c0_17, %c0_18, %c0_19] : memref<8x2x32xf32, #tpu.memory_space<vmem>>, vector<8x2x32xf32>
    "tpu.trace_start"() <{level = 10 : i32, message = "gqn,gnd->gqd"}> : () -> ()
    %cst_20 = arith.constant dense<0.000000e+00> : vector<8x1x32xf32>
    %32 = tpu.matmul %30, %31, %cst_20 {dimension_numbers = #tpu.dot_dimension_numbers<[2], [1], [1], [2], [0, 0, 0, 1, 1, 2], [0], [0]>} : vector<8x1x2xf32>, vector<8x2x32xf32>, vector<8x1x32xf32> -> vector<8x1x32xf32>
    "tpu.trace_stop"() : () -> ()
    %c0_21 = arith.constant 0 : index
    %c0_22 = arith.constant 0 : index
    %c0_23 = arith.constant 0 : index
    %33 = vector.load %arg6[%c0_21, %c0_22, %c0_23] : memref<8x1x32xf32, #tpu.memory_space<vmem>>, vector<8x1x32xf32>
    tpu.vector_store %arg6[%c0_21, %c0_22, %c0_23], %32 {strides = array<i32>} : memref<8x1x32xf32, #tpu.memory_space<vmem>>, vector<8x1x32xf32>,
    return
  }
  func.func @transform_0(%arg0: i32) -> (i32, i32, i32) {
    %c0_i32 = arith.constant 0 : i32
    %c0_i32_0 = arith.constant 0 : i32
    %c0_i32_1 = arith.constant 0 : i32
    return %arg0, %c0_i32, %c0_i32_0 : i32, i32, i32
  }
  func.func @transform_1(%arg0: i32) -> (i32, i32, i32) {
    %c0_i32 = arith.constant 0 : i32
    %c0_i32_0 = arith.constant 0 : i32
    %c0_i32_1 = arith.constant 0 : i32
    return %arg0, %c0_i32, %c0_i32_0 : i32, i32, i32
  }
  func.func @transform_2(%arg0: i32) -> (i32, i32, i32) {
    %c0_i32 = arith.constant 0 : i32
    %c0_i32_0 = arith.constant 0 : i32
    %c0_i32_1 = arith.constant 0 : i32
    return %arg0, %c0_i32, %c0_i32_0 : i32, i32, i32
  }
  func.func @transform_3(%arg0: i32) -> (i32, i32, i32) {
    %c0_i32 = arith.constant 0 : i32
    %c0_i32_0 = arith.constant 0 : i32
    %c0_i32_1 = arith.constant 0 : i32
    return %arg0, %c0_i32, %c0_i32_0 : i32, i32, i32
  }
  func.func @transform_4(%arg0: i32) -> (i32, i32, i32) {
    %c0_i32 = arith.constant 0 : i32
    %c0_i32_0 = arith.constant 0 : i32
    %c0_i32_1 = arith.constant 0 : i32
    return %arg0, %c0_i32, %c0_i32_0 : i32, i32, i32
  }
  func.func @transform_5(%arg0: i32) -> (i32, i32, i32) {
    %c0_i32 = arith.constant 0 : i32
    %c0_i32_0 = arith.constant 0 : i32
    %c0_i32_1 = arith.constant 0 : i32
    return %arg0, %c0_i32, %c0_i32_0 : i32, i32, i32
  }
}

module attributes {stable_mosaic.version = 11 : i64} {
  func.func @_mlp_score_kernel(%arg0: i32, %arg1: memref<8x64xbf16, #tpu.memory_space<vmem>>, %arg2: memref<64x128xbf16, #tpu.memory_space<vmem>>, %arg3: memref<1x128xf32, #tpu.memory_space<vmem>>, %arg4: memref<128x1xbf16, #tpu.memory_space<vmem>>, %arg5: memref<1x1xf32, #tpu.memory_space<vmem>>, %arg6: memref<8x1xf32, #tpu.memory_space<vmem>>) attributes {dimension_semantics = [#tpu.dimension_semantics<parallel>], iteration_bounds = array<i64: 1>, scalar_prefetch = 0 : i64, scratch_operands = 0 : i64, tpu.core_type = #tpu.core_type<tc>, window_params = [{transform_indices = @transform_0, window_bounds = array<i64: 8, 64>}, {pipeline_mode = #tpu.pipeline_mode<synchronous>, transform_indices = @transform_1, window_bounds = array<i64: 64, 128>}, {pipeline_mode = #tpu.pipeline_mode<synchronous>, transform_indices = @transform_2, window_bounds = array<i64: 1, 128>}, {pipeline_mode = #tpu.pipeline_mode<synchronous>, transform_indices = @transform_3, window_bounds = array<i64: 128, 1>}, {pipeline_mode = #tpu.pipeline_mode<synchronous>, transform_indices = @transform_4, window_bounds = array<i64: 1, 1>}, {transform_indices = @transform_5, window_bounds = array<i64: 8, 1>}]} {
    %c0 = arith.constant 0 : index
    %c0_0 = arith.constant 0 : index
    %0 = vector.load %arg1[%c0, %c0_0] : memref<8x64xbf16, #tpu.memory_space<vmem>>, vector<8x64xbf16>
    %c0_1 = arith.constant 0 : index
    %c0_2 = arith.constant 0 : index
    %1 = vector.load %arg2[%c0_1, %c0_2] : memref<64x128xbf16, #tpu.memory_space<vmem>>, vector<64x128xbf16>
    %cst = arith.constant dense<0.000000e+00> : vector<8x128xf32>
    %2 = tpu.matmul %0, %1, %cst {dimension_numbers = #tpu.dot_dimension_numbers<[1], [0], [0], [1], [0, 0, 1, 1], [], []>} : vector<8x64xbf16>, vector<64x128xbf16>, vector<8x128xf32> -> vector<8x128xf32>
    %c0_3 = arith.constant 0 : index
    %c0_4 = arith.constant 0 : index
    %3 = vector.load %arg3[%c0_3, %c0_4] : memref<1x128xf32, #tpu.memory_space<vmem>>, vector<1x128xf32>
    %4 = vector.broadcast %3 : vector<1x128xf32> to vector<8x128xf32>
    %5 = arith.addf %2, %4 : vector<8x128xf32>
    %6 = math.tanh %5 : vector<8x128xf32>
    %7 = arith.truncf %6 : vector<8x128xf32> to vector<8x128xbf16>
    %c0_5 = arith.constant 0 : index
    %c0_6 = arith.constant 0 : index
    %8 = vector.load %arg4[%c0_5, %c0_6] : memref<128x1xbf16, #tpu.memory_space<vmem>>, vector<128x1xbf16>
    %cst_7 = arith.constant dense<0.000000e+00> : vector<8x1xf32>
    %9 = tpu.matmul %7, %8, %cst_7 {dimension_numbers = #tpu.dot_dimension_numbers<[1], [0], [0], [1], [0, 0, 1, 1], [], []>} : vector<8x128xbf16>, vector<128x1xbf16>, vector<8x1xf32> -> vector<8x1xf32>
    %c0_8 = arith.constant 0 : index
    %c0_9 = arith.constant 0 : index
    %10 = vector.load %arg5[%c0_8, %c0_9] : memref<1x1xf32, #tpu.memory_space<vmem>>, vector<1x1xf32>
    %11 = vector.broadcast %10 : vector<1x1xf32> to vector<8x1xf32>
    %12 = arith.addf %9, %11 : vector<8x1xf32>
    %c0_10 = arith.constant 0 : index
    %c0_11 = arith.constant 0 : index
    %13 = vector.load %arg6[%c0_10, %c0_11] : memref<8x1xf32, #tpu.memory_space<vmem>>, vector<8x1xf32>
    tpu.vector_store %arg6[%c0_10, %c0_11], %12 {strides = array<i32>} : memref<8x1xf32, #tpu.memory_space<vmem>>, vector<8x1xf32>,
    return
  }
  func.func @transform_0(%arg0: i32) -> (i32, i32) {
    %c0_i32 = arith.constant 0 : i32
    %c0_i32_0 = arith.constant 0 : i32
    return %arg0, %c0_i32 : i32, i32
  }
  func.func @transform_1(%arg0: i32) -> (i32, i32) {
    %c0_i32 = arith.constant 0 : i32
    %c0_i32_0 = arith.constant 0 : i32
    %c0_i32_1 = arith.constant 0 : i32
    return %c0_i32, %c0_i32_0 : i32, i32
  }
  func.func @transform_2(%arg0: i32) -> (i32, i32) {
    %c0_i32 = arith.constant 0 : i32
    %c0_i32_0 = arith.constant 0 : i32
    %c0_i32_1 = arith.constant 0 : i32
    return %c0_i32, %c0_i32_0 : i32, i32
  }
  func.func @transform_3(%arg0: i32) -> (i32, i32) {
    %c0_i32 = arith.constant 0 : i32
    %c0_i32_0 = arith.constant 0 : i32
    %c0_i32_1 = arith.constant 0 : i32
    return %c0_i32, %c0_i32_0 : i32, i32
  }
  func.func @transform_4(%arg0: i32) -> (i32, i32) {
    %c0_i32 = arith.constant 0 : i32
    %c0_i32_0 = arith.constant 0 : i32
    %c0_i32_1 = arith.constant 0 : i32
    return %c0_i32, %c0_i32_0 : i32, i32
  }
  func.func @transform_5(%arg0: i32) -> (i32, i32) {
    %c0_i32 = arith.constant 0 : i32
    %c0_i32_0 = arith.constant 0 : i32
    return %arg0, %c0_i32 : i32, i32
  }
}

module attributes {stable_mosaic.version = 11 : i64} {
  func.func @_sws_kernel(%arg0: i32, %arg1: memref<8x1x2xf32, #tpu.memory_space<vmem>>, %arg2: memref<8x2x64xf32, #tpu.memory_space<vmem>>, %arg3: memref<8x1x64xf32, #tpu.memory_space<vmem>>) attributes {dimension_semantics = [#tpu.dimension_semantics<parallel>], iteration_bounds = array<i64: 1>, scalar_prefetch = 0 : i64, scratch_operands = 0 : i64, tpu.core_type = #tpu.core_type<tc>, window_params = [{transform_indices = @transform_0, window_bounds = array<i64: 8, 1, 2>}, {transform_indices = @transform_1, window_bounds = array<i64: 8, 2, 64>}, {transform_indices = @transform_2, window_bounds = array<i64: 8, 1, 64>}]} {
    %c0 = arith.constant 0 : index
    %c0_0 = arith.constant 0 : index
    %c0_1 = arith.constant 0 : index
    %0 = vector.load %arg1[%c0, %c0_0, %c0_1] : memref<8x1x2xf32, #tpu.memory_space<vmem>>, vector<8x1x2xf32>
    %cst = arith.constant dense<0xFF800000> : vector<8x1xf32>
    %1 = vector.multi_reduction <maximumf>, %0, %cst [2] : vector<8x1x2xf32> to vector<8x1xf32>
    %2 = vector.shape_cast %1 : vector<8x1xf32> to vector<8x1x1xf32>
    %3 = vector.broadcast %2 : vector<8x1x1xf32> to vector<8x1x2xf32>
    %4 = arith.subf %0, %3 : vector<8x1x2xf32>
    %5 = math.exp %4 : vector<8x1x2xf32>
    %cst_2 = arith.constant dense<0.000000e+00> : vector<8x1xf32>
    %6 = vector.multi_reduction <add>, %5, %cst_2 [2] : vector<8x1x2xf32> to vector<8x1xf32>
    %7 = vector.shape_cast %6 : vector<8x1xf32> to vector<8x1x1xf32>
    %8 = vector.broadcast %7 : vector<8x1x1xf32> to vector<8x1x2xf32>
    %9 = arith.divf %5, %8 : vector<8x1x2xf32>
    %c0_3 = arith.constant 0 : index
    %c0_4 = arith.constant 0 : index
    %c0_5 = arith.constant 0 : index
    %10 = vector.load %arg2[%c0_3, %c0_4, %c0_5] : memref<8x2x64xf32, #tpu.memory_space<vmem>>, vector<8x2x64xf32>
    "tpu.trace_start"() <{level = 10 : i32, message = "gqn,gnd->gqd"}> : () -> ()
    %cst_6 = arith.constant dense<0.000000e+00> : vector<8x1x64xf32>
    %11 = tpu.matmul %9, %10, %cst_6 {dimension_numbers = #tpu.dot_dimension_numbers<[2], [1], [1], [2], [0, 0, 0, 1, 1, 2], [0], [0]>} : vector<8x1x2xf32>, vector<8x2x64xf32>, vector<8x1x64xf32> -> vector<8x1x64xf32>
    "tpu.trace_stop"() : () -> ()
    %c0_7 = arith.constant 0 : index
    %c0_8 = arith.constant 0 : index
    %c0_9 = arith.constant 0 : index
    %12 = vector.load %arg3[%c0_7, %c0_8, %c0_9] : memref<8x1x64xf32, #tpu.memory_space<vmem>>, vector<8x1x64xf32>
    tpu.vector_store %arg3[%c0_7, %c0_8, %c0_9], %11 {strides = array<i32>} : memref<8x1x64xf32, #tpu.memory_space<vmem>>, vector<8x1x64xf32>,
    return
  }
  func.func @transform_0(%arg0: i32) -> (i32, i32, i32) {
    %c0_i32 = arith.constant 0 : i32
    %c0_i32_0 = arith.constant 0 : i32
    %c0_i32_1 = arith.constant 0 : i32
    return %arg0, %c0_i32, %c0_i32_0 : i32, i32, i32
  }
  func.func @transform_1(%arg0: i32) -> (i32, i32, i32) {
    %c0_i32 = arith.constant 0 : i32
    %c0_i32_0 = arith.constant 0 : i32
    %c0_i32_1 = arith.constant 0 : i32
    return %arg0, %c0_i32, %c0_i32_0 : i32, i32, i32
  }
  func.func @transform_2(%arg0: i32) -> (i32, i32, i32) {
    %c0_i32 = arith.constant 0 : i32
    %c0_i32_0 = arith.constant 0 : i32
    %c0_i32_1 = arith.constant 0 : i32
    return %arg0, %c0_i32, %c0_i32_0 : i32, i32, i32
  }
}

</mosaic_0001>

<llo_original>
// kernel: squeeze.26
$region0: #{squeeze.26}
  %s0 = inlined_call_operand.vmem [shape: f32[32], index: 0, kind: input, shape index: {}]
  %s1 = inlined_call_operand.vmem [shape: f32[8,1,4], index: 1, kind: output, shape index: {}]
  $region1: #{squeeze.26} parent=0
    #allocation0 [shape = 'u8[4096]{0}', space=vmem, size = 0x1000, scoped, tag = 'scoped mem for input reshape']
    %s3 = sshllo.u32 0, 1
    %v4 = vld [vmem:[%s0] sm:%s3]
    %5 = vst [vmem:[#allocation0] sm:%s3] %v4
    %v6 = vld [vmem:[#allocation0] sm:$0x1]
    %vm7 = vcmask 31744
    %8 = vst.msk [vmem:[%s1] sm:$0x1] %vm7, %v6
    %v9 = vld [vmem:[#allocation0] sm:$0x1]
    %10 = vrot.lane.b32.xlu0 %v9, 124
    %v11 = vpop.permute.xlu0 %10
    %vm12 = vcmask 31744
    %s13 = scalar_lea.vmem %s1, 1
    %14 = vst.msk [vmem:[%s13] sm:$0x1] %vm12, %v11
    %v15 = vld [vmem:[#allocation0] sm:$0x1]
    %16 = vrot.lane.b32.xlu0 %v15, 120
    %v17 = vpop.permute.xlu0 %16
    %vm18 = vcmask 31744
    %s19 = scalar_lea.vmem %s1, 2
    %20 = vst.msk [vmem:[%s19] sm:$0x1] %vm18, %v17
    %v21 = vld [vmem:[#allocation0] sm:$0x1]
    %22 = vrot.lane.b32.xlu0 %v21, 116
    %v23 = vpop.permute.xlu0 %22
    %vm24 = vcmask 31744
    %s25 = scalar_lea.vmem %s1, 3
    %26 = vst.msk [vmem:[%s25] sm:$0x1] %vm24, %v23
    %v27 = vld [vmem:[#allocation0] sm:$0x1]
    %28 = vrot.lane.b32.xlu0 %v27, 112
    %v29 = vpop.permute.xlu0 %28
    %vm30 = vcmask 31744
    %s31 = scalar_lea.vmem %s1, 4
    %32 = vst.msk [vmem:[%s31] sm:$0x1] %vm30, %v29
    %v33 = vld [vmem:[#allocation0] sm:$0x1]
    %34 = vrot.lane.b32.xlu0 %v33, 108
    %v35 = vpop.permute.xlu0 %34
    %vm36 = vcmask 31744
    %s37 = scalar_lea.vmem %s1, 5
    %38 = vst.msk [vmem:[%s37] sm:$0x1] %vm36, %v35
    %v39 = vld [vmem:[#allocation0] sm:$0x1]
    %40 = vrot.lane.b32.xlu0 %v39, 104
    %v41 = vpop.permute.xlu0 %40
    %vm42 = vcmask 31744
    %s43 = scalar_lea.vmem %s1, 6
    %44 = vst.msk [vmem:[%s43] sm:$0x1] %vm42, %v41
    %v45 = vld [vmem:[#allocation0] sm:$0x1]
    %46 = vrot.lane.b32.xlu0 %v45, 100
    %v47 = vpop.permute.xlu0 %46
    %vm48 = vcmask 31744
    %s49 = scalar_lea.vmem %s1, 7
    %50 = vst.msk [vmem:[%s49] sm:$0x1] %vm48, %v47

// kernel: _lambda_.25
$region0: #{_lambda_.25}
  #allocation0 [shape = 'u32[]', space=smem, size = 0x4, offset = 0x4, fixed_abs, tag = 'smem constant byte address 0x4 - core index']
  #allocation1 [shape = 'u32[144,128]{1,0:T(1,128)}', space=vmem, size = 0x12000, scoped, tag = 'internal scratch']
  %s0 = inlined_call_operand.vmem [shape: bf16[32,64], index: 0, kind: input, shape index: {}]
  %s1 = inlined_call_operand.vmem [shape: bf16[64,32], index: 1, kind: input, shape index: {}]
  %s2 = inlined_call_operand.vmem [shape: f32[1,32], index: 2, kind: input, shape index: {}]
  %s3 = inlined_call_operand.vmem [shape: f32[32,32], index: 3, kind: output, shape index: {}]
  %s4 = sld [smem:[#allocation0]]
  $region22: #{_lambda_.25} parent=0
    _
  %s6 = ssub.s32 1, %s4
  %s7 = scalar_select 0, %s6, %s4
  // Predicated region
  $region2: #{_lambda_.25} parent=0 // pred_check
    _
  $region3: #{_lambda_.25} parent=0 // pred_check_branch
    %9 = sbr.rel (0) target = $region5
  $region4: #{_lambda_.25} parent=0 // pred_region
    _
  $region5: #{_lambda_.25} parent=0 // pred_fallthru
    _
  // Predicated region
  $region6: #{_lambda_.25} parent=0 // pred_check
    _
  $region7: #{_lambda_.25} parent=0 // pred_check_branch
    %11 = sbr.rel (0) target = $region9
  $region8: #{_lambda_.25} parent=0 // pred_region
    _
  $region9: #{_lambda_.25} parent=0 // pred_fallthru
    _
  // Predicated region
  $region10: #{_lambda_.25} parent=0 // pred_check
    _
  $region11: #{_lambda_.25} parent=0 // pred_check_branch
    %13 = sbr.rel (0) target = $region13
  $region12: #{_lambda_.25} parent=0 // pred_region
    _
  $region13: #{_lambda_.25} parent=0 // pred_fallthru
    _
  %v15 = vld [vmem:[%s0] sm:$0xf]
  %v16 = vld [vmem:[%s0 + $0x4] sm:$0xf]
  %v17 = vld [vmem:[%s0 + $0x8] sm:$0xf]
  %v18 = vld [vmem:[%s0 + $0xc] sm:$0xf]
  %v19 = vld [vmem:[%s1] sm:$0xf]
  %v20 = vld [vmem:[%s1 + $0x4] sm:$0xf]
  %v21 = vld [vmem:[%s1 + $0x8] sm:$0xf]
  %v22 = vld [vmem:[%s1 + $0xc] sm:$0xf]
  %v23 = vld [vmem:[%s1 + $0x10] sm:$0xf]
  %v24 = vld [vmem:[%s1 + $0x14] sm:$0xf]
  %v25 = vld [vmem:[%s1 + $0x18] sm:$0xf]
  %v26 = vld [vmem:[%s1 + $0x1c] sm:$0xf]
  %v27 = vld [vmem:[%s2] sm:$0x1]
  %v29 = vlaneseq
  %v30 = vshrl.u32 %v29, 7
  %v31 = vsub.s32 0, %v30
  %v32 = vrot.slane %v27, %v31
  %v38 = vunpack.c.l.b16 %v15
  %v39 = vunpack.c.l.b16 %v16
  %v40 = vunpack.c.l.b16 %v17
  %v41 = vunpack.c.l.b16 %v18
  %v42 = vpack.c.b16 %v39, %v38
  %v43 = vpack.c.b16 %v41, %v40
  %v52 = vunpack.c.l.b16 %v19
  %v53 = vunpack.c.l.b16 %v20
  %v54 = vunpack.c.l.b16 %v21
  %v55 = vunpack.c.l.b16 %v22
  %v56 = vunpack.c.l.b16 %v23
  %v57 = vunpack.c.l.b16 %v24
  %v58 = vunpack.c.l.b16 %v25
  %v59 = vunpack.c.l.b16 %v26
  %v60 = vpack.c.b16 %v53, %v52
  %v61 = vpack.c.b16 %v55, %v54
  %v62 = vpack.c.b16 %v57, %v56
  %v63 = vpack.c.b16 %v59, %v58
  %vm68 = vcmask 523264
  %v70 = vsel %vm68, %v42, 0
  %v73 = vsel %vm68, %v43, 0
  %75 = vmatprep.subr.bf16.mxu0 0
  %76 = vmatpush1.bf16.msra.mxu0 %v60
  %77 = vmatprep.subr.bf16.mxu0 0
  %78 = vmatpush1.bf16.msra.mxu0 %v61
  %79 = vmatprep.subr.bf16.mxu0 0
  %80 = vmatpush1.bf16.msra.mxu0 %v62
  %81 = vmatprep.subr.bf16.mxu0 0
  %82 = vmatpush1.bf16.msra.mxu0 %v63
  %83 = vmatprep.subr.bf16.mxu0 0
  %84 = vmatpush1.bf16.msra.mxu0 0
  %85 = vmatprep.subr.bf16.mxu0 0
  %86 = vmatpush1.bf16.msra.mxu0 0
  %87 = vmatprep.subr.bf16.mxu0 0
  %88 = vmatpush1.bf16.msra.mxu0 0
  %89 = vmatprep.subr.bf16.mxu0 0
  %90 = vmatpush1.bf16.msra.mxu0 0
  %91 = vmatprep.subr.bf16.mxu0 0
  %92 = vmatpush1.bf16.msra.mxu0 0
  %93 = vmatprep.subr.bf16.mxu0 0
  %94 = vmatpush1.bf16.msra.mxu0 0
  %95 = vmatprep.subr.bf16.mxu0 0
  %96 = vmatpush1.bf16.msra.mxu0 0
  %97 = vmatprep.subr.bf16.mxu0 0
  %98 = vmatpush1.bf16.msra.mxu0 0
  %99 = vmatprep.subr.bf16.mxu0 0
  %100 = vmatpush1.bf16.msra.mxu0 0
  %101 = vmatprep.subr.bf16.mxu0 0
  %102 = vmatpush1.bf16.msra.mxu0 0
  %103 = vmatprep.subr.bf16.mxu0 0
  %104 = vmatpush1.bf16.msra.mxu0 0
  %105 = vmatprep.subr.bf16.mxu0 0
  %106 = vmatpush1.bf16.msra.mxu0 0
  %107 = vmatprep.mubr.bf16.mxu0 0
  %108 = vmatmul.mubr.bf16.gmra.mrb[0].mxu0 %v70
  %v109 = vpop.f32.mrb[0].mxu0
  %v110 = vadd.f32 %v32, %v109
  %v111 = vpop.f32.mrb[0].mxu0
  %v112 = vpop.f32.mrb[0].mxu0
  %v113 = vadd.f32 %v32, %v112
  %v114 = vpop.f32.mrb[0].mxu0
  %115 = vmatprep.mubr.bf16.mxu0 0
  %116 = vmatmul.mubr.bf16.gmra.mrb[0].mxu0 %v73
  %v117 = vpop.f32.mrb[0].mxu0
  %v118 = vadd.f32 %v32, %v117
  %v119 = vpop.f32.mrb[0].mxu0
  %v120 = vpop.f32.mrb[0].mxu0
  %v121 = vadd.f32 %v32, %v120
  %v122 = vpop.f32.mrb[0].mxu0
  %123 = vdwg.mxu0
  %v124 = vmax.f32 %v110, 0.0
  %v125 = vmax.f32 %v113, 0.0
  %v126 = vmax.f32 %v118, 0.0
  %v127 = vmax.f32 %v121, 0.0
  %vm128 = vcmask 261120
  %129 = vst.msk [vmem:[%s3] sm:$0xff] %vm128, %v124
  %130 = vst.msk [vmem:[%s3 + $0x8] sm:$0xff] %vm128, %v125
  %131 = vst.msk [vmem:[%s3 + $0x10] sm:$0xff] %vm128, %v126
  %132 = vst.msk [vmem:[%s3 + $0x18] sm:$0xff] %vm128, %v127
  // Predicated region
  $region14: #{_lambda_.25} parent=0 // pred_check
    _
  $region15: #{_lambda_.25} parent=0 // pred_check_branch
    %134 = sbr.rel (0) target = $region17
  $region16: #{_lambda_.25} parent=0 // pred_region
    _
  $region17: #{_lambda_.25} parent=0 // pred_fallthru
    _
  // Predicated region
  $region18: #{_lambda_.25} parent=0 // pred_check
    _
  $region19: #{_lambda_.25} parent=0 // pred_check_branch
    %136 = sbr.rel (0) target = $region21
  $region20: #{_lambda_.25} parent=0 // pred_region
    _
  $region21: #{_lambda_.25} parent=0 // pred_fallthru
    _

// kernel: _lambda_.26
$region0: #{_lambda_.26}
  #allocation0 [shape = 'u32[]', space=smem, size = 0x4, offset = 0x4, fixed_abs, tag = 'smem constant byte address 0x4 - core index']
  #allocation1 [shape = 'u32[144,128]{1,0:T(1,128)}', space=vmem, size = 0x12000, scoped, tag = 'internal scratch']
  #allocation2 [shape = 'f32[1,1]{1,0:T(1,128)S(1)}', space=vmem, size = 0x200, scoped, tag = 'scoped memory for _lambda_.26']
  %s0 = inlined_call_operand.vmem [shape: bf16[32,32], index: 0, kind: input, shape index: {}]
  %s1 = inlined_call_operand.vmem [shape: bf16[32,128], index: 1, kind: input, shape index: {}]
  %s2 = inlined_call_operand.vmem [shape: f32[1,128], index: 2, kind: input, shape index: {}]
  %s3 = inlined_call_operand.vmem [shape: bf16[128,1], index: 3, kind: input, shape index: {}]
  %s4 = inlined_call_operand.<no memory space> [shape: f32[1,1], index: 4, kind: input, shape index: {}]
  %s5 = inlined_call_operand.vmem [shape: bf16[32,128], index: 5, kind: input, shape index: {}]
  %s6 = inlined_call_operand.vmem [shape: f32[1,128], index: 6, kind: input, shape index: {}]
  %s7 = inlined_call_operand.vmem [shape: f32[32,1], index: 7, kind: output, shape index: {0}]
  %s8 = inlined_call_operand.vmem [shape: f32[32,128], index: 8, kind: output, shape index: {1}]
  %9 = xla_tuple %s7, %s8
  %s10 = sld [smem:[#allocation0]]
  $region46: #{_lambda_.26} parent=0
    _
  %s12 = ssub.s32 1, %s10
  %s13 = scalar_select 0, %s12, %s10
  %v14 = vstv %s4
  %15 = vst [vmem:[#allocation2] sm:$0x1] %v14
  // Predicated region
  $region2: #{_lambda_.26} parent=0 // pred_check
    _
  $region3: #{_lambda_.26} parent=0 // pred_check_branch
    %17 = sbr.rel (0) target = $region5
  $region4: #{_lambda_.26} parent=0 // pred_region
    _
  $region5: #{_lambda_.26} parent=0 // pred_fallthru
    _
  // Predicated region
  $region6: #{_lambda_.26} parent=0 // pred_check
    _
  $region7: #{_lambda_.26} parent=0 // pred_check_branch
    %19 = sbr.rel (0) target = $region9
  $region8: #{_lambda_.26} parent=0 // pred_region
    _
  $region9: #{_lambda_.26} parent=0 // pred_fallthru
    _
  // Predicated region
  $region10: #{_lambda_.26} parent=0 // pred_check
    _
  $region11: #{_lambda_.26} parent=0 // pred_check_branch
    %21 = sbr.rel (0) target = $region13
  $region12: #{_lambda_.26} parent=0 // pred_region
    _
  $region13: #{_lambda_.26} parent=0 // pred_fallthru
    _
  // Predicated region
  $region14: #{_lambda_.26} parent=0 // pred_check
    _
  $region15: #{_lambda_.26} parent=0 // pred_check_branch
    %23 = sbr.rel (0) target = $region17
  $region16: #{_lambda_.26} parent=0 // pred_region
    _
  $region17: #{_lambda_.26} parent=0 // pred_fallthru
    _
  // Predicated region
  $region18: #{_lambda_.26} parent=0 // pred_check
    _
  $region19: #{_lambda_.26} parent=0 // pred_check_branch
    %25 = sbr.rel (0) target = $region21
  $region20: #{_lambda_.26} parent=0 // pred_region
    _
  $region21: #{_lambda_.26} parent=0 // pred_fallthru
    _
  // Predicated region
  $region22: #{_lambda_.26} parent=0 // pred_check
    _
  $region23: #{_lambda_.26} parent=0 // pred_check_branch
    %27 = sbr.rel (0) target = $region25
  $region24: #{_lambda_.26} parent=0 // pred_region
    _
  $region25: #{_lambda_.26} parent=0 // pred_fallthru
    _
  // Predicated region
  $region26: #{_lambda_.26} parent=0 // pred_check
    _
  $region27: #{_lambda_.26} parent=0 // pred_check_branch
    %29 = sbr.rel (0) target = $region29
  $region28: #{_lambda_.26} parent=0 // pred_region
    _
  $region29: #{_lambda_.26} parent=0 // pred_fallthru
    _
  %v31 = vld [vmem:[%s0] sm:$0xf]
  %v32 = vld [vmem:[%s0 + $0x4] sm:$0xf]
  %v33 = vld [vmem:[%s0 + $0x8] sm:$0xf]
  %v34 = vld [vmem:[%s0 + $0xc] sm:$0xf]
  %v35 = vld [vmem:[%s1] sm:$0xf]
  %v36 = vld [vmem:[%s1 + $0x4] sm:$0xf]
  %v37 = vld [vmem:[%s1 + $0x8] sm:$0xf]
  %v38 = vld [vmem:[%s1 + $0xc] sm:$0xf]
  %v39 = vld [vmem:[%s2] sm:$0x1]
  %v41 = vlaneseq
  %v42 = vshrl.u32 %v41, 7
  %v43 = vsub.s32 0, %v42
  %v44 = vrot.slane %v39, %v43
  %v50 = vunpack.c.l.b16 %v31
  %v51 = vunpack.c.l.b16 %v32
  %v52 = vunpack.c.l.b16 %v33
  %v53 = vunpack.c.l.b16 %v34
  %v54 = vpack.c.b16 %v51, %v50
  %v55 = vpack.c.b16 %v53, %v52
  %v60 = vunpack.c.l.b16 %v35
  %v61 = vunpack.c.l.b16 %v36
  %v62 = vunpack.c.l.b16 %v37
  %v63 = vunpack.c.l.b16 %v38
  %v64 = vpack.c.b16 %v61, %v60
  %v65 = vpack.c.b16 %v63, %v62
  %vm68 = vcmask 261120
  %v70 = vsel %vm68, %v54, 0
  %v73 = vsel %vm68, %v55, 0
  %75 = vmatprep.subr.bf16.mxu0 0
  %76 = vmatpush1.bf16.msra.mxu0 %v64
  %77 = vmatprep.subr.bf16.mxu0 0
  %78 = vmatpush1.bf16.msra.mxu0 %v65
  %79 = vmatprep.subr.bf16.mxu0 0
  %80 = vmatpush1.bf16.msra.mxu0 0
  %81 = vmatprep.subr.bf16.mxu0 0
  %82 = vmatpush1.bf16.msra.mxu0 0
  %83 = vmatprep.subr.bf16.mxu0 0
  %84 = vmatpush1.bf16.msra.mxu0 0
  %85 = vmatprep.subr.bf16.mxu0 0
  %86 = vmatpush1.bf16.msra.mxu0 0
  %87 = vmatprep.subr.bf16.mxu0 0
  %88 = vmatpush1.bf16.msra.mxu0 0
  %89 = vmatprep.subr.bf16.mxu0 0
  %90 = vmatpush1.bf16.msra.mxu0 0
  %91 = vmatprep.subr.bf16.mxu0 0
  %92 = vmatpush1.bf16.msra.mxu0 0
  %93 = vmatprep.subr.bf16.mxu0 0
  %94 = vmatpush1.bf16.msra.mxu0 0
  %95 = vmatprep.subr.bf16.mxu0 0
  %96 = vmatpush1.bf16.msra.mxu0 0
  %97 = vmatprep.subr.bf16.mxu0 0
  %98 = vmatpush1.bf16.msra.mxu0 0
  %99 = vmatprep.subr.bf16.mxu0 0
  %100 = vmatpush1.bf16.msra.mxu0 0
  %101 = vmatprep.subr.bf16.mxu0 0
  %102 = vmatpush1.bf16.msra.mxu0 0
  %103 = vmatprep.subr.bf16.mxu0 0
  %104 = vmatpush1.bf16.msra.mxu0 0
  %105 = vmatprep.subr.bf16.mxu0 0
  %106 = vmatpush1.bf16.msra.mxu0 0
  %107 = vmatprep.mubr.bf16.mxu0 0
  %108 = vmatmul.mubr.bf16.gmra.mrb[0].mxu0 %v70
  %v109 = vpop.f32.mrb[0].mxu0
  %v110 = vadd.f32 %v44, %v109
  %v111 = vpop.f32.mrb[0].mxu0
  %v112 = vpop.f32.mrb[0].mxu0
  %v113 = vadd.f32 %v44, %v112
  %v114 = vpop.f32.mrb[0].mxu0
  %115 = vmatprep.mubr.bf16.mxu0 0
  %116 = vmatmul.mubr.bf16.gmra.mrb[0].mxu0 %v73
  %v117 = vpop.f32.mrb[0].mxu0
  %v118 = vadd.f32 %v44, %v117
  %v119 = vpop.f32.mrb[0].mxu0
  %v120 = vpop.f32.mrb[0].mxu0
  %v121 = vadd.f32 %v44, %v120
  %v122 = vpop.f32.mrb[0].mxu0
  %123 = vdwg.mxu0
  %v124 = vtanh.pop %v110
  %v125 = vtanh.pop %v113
  %v126 = vtanh.pop %v118
  %v127 = vtanh.pop %v121
  %v128 = vpack.c.bf16 %v125, %v124
  %v129 = vpack.c.bf16 %v127, %v126
  %v130 = vld [vmem:[%s3] sm:$0xf]
  %v131 = vld [vmem:[%s3 + $0x4] sm:$0xf]
  %v132 = vld [vmem:[%s3 + $0x8] sm:$0xf]
  %v133 = vld [vmem:[%s3 + $0xc] sm:$0xf]
  %v134 = vld [vmem:[%s3 + $0x10] sm:$0xf]
  %v135 = vld [vmem:[%s3 + $0x14] sm:$0xf]
  %v136 = vld [vmem:[%s3 + $0x18] sm:$0xf]
  %v137 = vld [vmem:[%s3 + $0x1c] sm:$0xf]
  %v138 = vld [vmem:[%s3 + $0x20] sm:$0xf]
  %v139 = vld [vmem:[%s3 + $0x24] sm:$0xf]
  %v140 = vld [vmem:[%s3 + $0x28] sm:$0xf]
  %v141 = vld [vmem:[%s3 + $0x2c] sm:$0xf]
  %v142 = vld [vmem:[%s3 + $0x30] sm:$0xf]
  %v143 = vld [vmem:[%s3 + $0x34] sm:$0xf]
  %v144 = vld [vmem:[%s3 + $0x38] sm:$0xf]
  %v145 = vld [vmem:[%s3 + $0x3c] sm:$0xf]
  %v146 = vld [vmem:[#allocation2] sm:$0x1]
  %v148 = vlaneseq
  %v149 = vshrl.u32 %v148, 7
  %v150 = vsub.s32 0, %v149
  %v151 = vrot.slane %v146, %v150
  %v169 = vunpack.c.l.b16 %v130
  %v170 = vunpack.c.l.b16 %v131
  %v171 = vunpack.c.l.b16 %v132
  %v172 = vunpack.c.l.b16 %v133
  %v173 = vunpack.c.l.b16 %v134
  %v174 = vunpack.c.l.b16 %v135
  %v175 = vunpack.c.l.b16 %v136
  %v176 = vunpack.c.l.b16 %v137
  %v177 = vunpack.c.l.b16 %v138
  %v178 = vunpack.c.l.b16 %v139
  %v179 = vunpack.c.l.b16 %v140
  %v180 = vunpack.c.l.b16 %v141
  %v181 = vunpack.c.l.b16 %v142
  %v182 = vunpack.c.l.b16 %v143
  %v183 = vunpack.c.l.b16 %v144
  %v184 = vunpack.c.l.b16 %v145
  %v185 = vpack.c.b16 %v170, %v169
  %v186 = vpack.c.b16 %v172, %v171
  %v187 = vpack.c.b16 %v174, %v173
  %v188 = vpack.c.b16 %v176, %v175
  %v189 = vpack.c.b16 %v178, %v177
  %v190 = vpack.c.b16 %v180, %v179
  %v191 = vpack.c.b16 %v182, %v181
  %v192 = vpack.c.b16 %v184, %v183
  %201 = vmatprep.subr.bf16.mxu0 0
  %202 = vmatpush1.bf16.msra.mxu0 %v185
  %203 = vmatprep.subr.bf16.mxu0 0
  %204 = vmatpush1.bf16.msra.mxu0 %v186
  %205 = vmatprep.subr.bf16.mxu0 0
  %206 = vmatpush1.bf16.msra.mxu0 %v187
  %207 = vmatprep.subr.bf16.mxu0 0
  %208 = vmatpush1.bf16.msra.mxu0 %v188
  %209 = vmatprep.subr.bf16.mxu0 0
  %210 = vmatpush1.bf16.msra.mxu0 %v189
  %211 = vmatprep.subr.bf16.mxu0 0
  %212 = vmatpush1.bf16.msra.mxu0 %v190
  %213 = vmatprep.subr.bf16.mxu0 0
  %214 = vmatpush1.bf16.msra.mxu0 %v191
  %215 = vmatprep.subr.bf16.mxu0 0
  %216 = vmatpush1.bf16.msra.mxu0 %v192
  %217 = vmatprep.subr.bf16.mxu0 0
  %218 = vmatpush1.bf16.msra.mxu0 0
  %219 = vmatprep.subr.bf16.mxu0 0
  %220 = vmatpush1.bf16.msra.mxu0 0
  %221 = vmatprep.subr.bf16.mxu0 0
  %222 = vmatpush1.bf16.msra.mxu0 0
  %223 = vmatprep.subr.bf16.mxu0 0
  %224 = vmatpush1.bf16.msra.mxu0 0
  %225 = vmatprep.subr.bf16.mxu0 0
  %226 = vmatpush1.bf16.msra.mxu0 0
  %227 = vmatprep.subr.bf16.mxu0 0
  %228 = vmatpush1.bf16.msra.mxu0 0
  %229 = vmatprep.subr.bf16.mxu0 0
  %230 = vmatpush1.bf16.msra.mxu0 0
  %231 = vmatprep.subr.bf16.mxu0 0
  %232 = vmatpush1.bf16.msra.mxu0 0
  %233 = vmatprep.mubr.bf16.mxu0 0
  %234 = vmatmul.mubr.bf16.gmra.mrb[0].mxu0 %v128
  %v235 = vpop.f32.mrb[0].mxu0
  %v236 = vadd.f32 %v151, %v235
  %v237 = vpop.f32.mrb[0].mxu0
  %v238 = vpop.f32.mrb[0].mxu0
  %v239 = vadd.f32 %v151, %v238
  %v240 = vpop.f32.mrb[0].mxu0
  %241 = vmatprep.mubr.bf16.mxu0 0
  %242 = vmatmul.mubr.bf16.gmra.mrb[0].mxu0 %v129
  %v243 = vpop.f32.mrb[0].mxu0
  %v244 = vadd.f32 %v151, %v243
  %v245 = vpop.f32.mrb[0].mxu0
  %v246 = vpop.f32.mrb[0].mxu0
  %v247 = vadd.f32 %v151, %v246
  %v248 = vpop.f32.mrb[0].mxu0
  %249 = vdwg.mxu0
  %v250 = vld [vmem:[%s5] sm:$0xf]
  %v251 = vld [vmem:[%s5 + $0x4] sm:$0xf]
  %v252 = vld [vmem:[%s5 + $0x8] sm:$0xf]
  %v253 = vld [vmem:[%s5 + $0xc] sm:$0xf]
  %v254 = vld [vmem:[%s6] sm:$0x1]
  %v256 = vlaneseq
  %v257 = vshrl.u32 %v256, 7
  %v258 = vsub.s32 0, %v257
  %v259 = vrot.slane %v254, %v258
  %v265 = vunpack.c.l.b16 %v250
  %v266 = vunpack.c.l.b16 %v251
  %v267 = vunpack.c.l.b16 %v252
  %v268 = vunpack.c.l.b16 %v253
  %v269 = vpack.c.b16 %v266, %v265
  %v270 = vpack.c.b16 %v268, %v267
  %273 = vmatprep.subr.bf16.mxu0 0
  %274 = vmatpush1.bf16.msra.mxu0 %v269
  %275 = vmatprep.subr.bf16.mxu0 0
  %276 = vmatpush1.bf16.msra.mxu0 %v270
  %277 = vmatprep.subr.bf16.mxu0 0
  %278 = vmatpush1.bf16.msra.mxu0 0
  %279 = vmatprep.subr.bf16.mxu0 0
  %280 = vmatpush1.bf16.msra.mxu0 0
  %281 = vmatprep.subr.bf16.mxu0 0
  %282 = vmatpush1.bf16.msra.mxu0 0
  %283 = vmatprep.subr.bf16.mxu0 0
  %284 = vmatpush1.bf16.msra.mxu0 0
  %285 = vmatprep.subr.bf16.mxu0 0
  %286 = vmatpush1.bf16.msra.mxu0 0
  %287 = vmatprep.subr.bf16.mxu0 0
  %288 = vmatpush1.bf16.msra.mxu0 0
  %289 = vmatprep.subr.bf16.mxu0 0
  %290 = vmatpush1.bf16.msra.mxu0 0
  %291 = vmatprep.subr.bf16.mxu0 0
  %292 = vmatpush1.bf16.msra.mxu0 0
  %293 = vmatprep.subr.bf16.mxu0 0
  %294 = vmatpush1.bf16.msra.mxu0 0
  %295 = vmatprep.subr.bf16.mxu0 0
  %296 = vmatpush1.bf16.msra.mxu0 0
  %297 = vmatprep.subr.bf16.mxu0 0
  %298 = vmatpush1.bf16.msra.mxu0 0
  %299 = vmatprep.subr.bf16.mxu0 0
  %300 = vmatpush1.bf16.msra.mxu0 0
  %301 = vmatprep.subr.bf16.mxu0 0
  %302 = vmatpush1.bf16.msra.mxu0 0
  %303 = vmatprep.subr.bf16.mxu0 0
  %304 = vmatpush1.bf16.msra.mxu0 0
  %305 = vmatprep.mubr.bf16.mxu0 0
  %306 = vmatmul.mubr.bf16.gmra.mrb[0].mxu0 %v70
  %v307 = vpop.f32.mrb[0].mxu0
  %v308 = vadd.f32 %v259, %v307
  %v309 = vpop.f32.mrb[0].mxu0
  %v310 = vpop.f32.mrb[0].mxu0
  %v311 = vadd.f32 %v259, %v310
  %v312 = vpop.f32.mrb[0].mxu0
  %313 = vmatprep.mubr.bf16.mxu0 0
  %314 = vmatmul.mubr.bf16.gmra.mrb[0].mxu0 %v73
  %v315 = vpop.f32.mrb[0].mxu0
  %v316 = vadd.f32 %v259, %v315
  %v317 = vpop.f32.mrb[0].mxu0
  %v318 = vpop.f32.mrb[0].mxu0
  %v319 = vadd.f32 %v259, %v318
  %v320 = vpop.f32.mrb[0].mxu0
  %321 = vdwg.mxu0
  %vm322 = vcmask 7168
  %323 = vst.msk [vmem:[%s7] sm:$0xff] %vm322, %v236
  %324 = vst.msk [vmem:[%s7 + $0x8] sm:$0xff] %vm322, %v239
  %325 = vst.msk [vmem:[%s7 + $0x10] sm:$0xff] %vm322, %v244
  %326 = vst.msk [vmem:[%s7 + $0x18] sm:$0xff] %vm322, %v247
  %327 = vst [vmem:[%s8] sm:$0xff] %v308
  %328 = vst [vmem:[%s8 + $0x8] sm:$0xff] %v311
  %329 = vst [vmem:[%s8 + $0x10] sm:$0xff] %v316
  %330 = vst [vmem:[%s8 + $0x18] sm:$0xff] %v319
  // Predicated region
  $region30: #{_lambda_.26} parent=0 // pred_check
    _
  $region31: #{_lambda_.26} parent=0 // pred_check_branch
    %332 = sbr.rel (0) target = $region33
  $region32: #{_lambda_.26} parent=0 // pred_region
    _
  $region33: #{_lambda_.26} parent=0 // pred_fallthru
    _
  // Predicated region
  $region34: #{_lambda_.26} parent=0 // pred_check
    _
  $region35: #{_lambda_.26} parent=0 // pred_check_branch
    %334 = sbr.rel (0) target = $region37
  $region36: #{_lambda_.26} parent=0 // pred_region
    _
  $region37: #{_lambda_.26} parent=0 // pred_fallthru
    _
  // Predicated region
  $region38: #{_lambda_.26} parent=0 // pred_check
    _
  $region39: #{_lambda_.26} parent=0 // pred_check_branch
    %336 = sbr.rel (0) target = $region41
  $region40: #{_lambda_.26} parent=0 // pred_region
    _
  $region41: #{_lambda_.26} parent=0 // pred_fallthru
    _
  // Predicated region
  $region42: #{_lambda_.26} parent=0 // pred_check
    _
  $region43: #{_lambda_.26} parent=0 // pred_check_branch
    %338 = sbr.rel (0) target = $region45
  $region44: #{_lambda_.26} parent=0 // pred_region
    _
  $region45: #{_lambda_.26} parent=0 // pred_fallthru
    _

// kernel: squeeze.23
$region0: #{squeeze.23}
  %s0 = inlined_call_operand.vmem [shape: f32[4], index: 0, kind: input, shape index: {}]
  %s1 = inlined_call_operand.vmem [shape: f32[2,2], index: 1, kind: output, shape index: {}]
  $region1: #{squeeze.23} parent=0
    #allocation0 [shape = 'u8[4096]{0}', space=vmem, size = 0x1000, scoped, tag = 'scoped mem for output reshape']
    #allocation1 [shape = 'u8[4096]{0}', space=vmem, size = 0x1000, scoped, tag = 'scoped mem for input reshape']
    %s3 = sshllo.u32 0, 1
    %v4 = vld [vmem:[%s0] sm:%s3]
    %5 = vst [vmem:[#allocation1] sm:%s3] %v4
    %v6 = vld [vmem:[#allocation1] sm:$0x1]
    %vm7 = vcmask 15360
    %8 = vst.msk [vmem:[#allocation0] sm:$0x1] %vm7, %v6
    %v9 = vld [vmem:[#allocation1] sm:$0x1]
    %10 = vrot.lane.b32.xlu0 %v9, 126
    %v11 = vpop.permute.xlu0 %10
    %vm12 = vcmask 15360
    %s13 = scalar_lea.vmem [#allocation0], 1
    %14 = vst.msk [vmem:[%s13] sm:$0x1] %vm12, %v11
    %s16 = sshllo.u32 0, 2
    %v18 = vld [vmem:[#allocation0] sm:%s16]
    %s19 = sshllo.u32 0, 2
    %20 = vst [vmem:[%s1] sm:%s19] %v18

// kernel: _lambda_.27
$region0: #{_lambda_.27}
  #allocation0 [shape = 'u32[]', space=smem, size = 0x4, offset = 0x4, fixed_abs, tag = 'smem constant byte address 0x4 - core index']
  #allocation1 [shape = 'u32[144,128]{1,0:T(1,128)}', space=vmem, size = 0x12000, scoped, tag = 'internal scratch']
  %s0 = inlined_call_operand.vmem [shape: bf16[8,64], index: 0, kind: input, shape index: {}]
  %s1 = inlined_call_operand.vmem [shape: bf16[64,32], index: 1, kind: input, shape index: {}]
  %s2 = inlined_call_operand.vmem [shape: f32[1,32], index: 2, kind: input, shape index: {}]
  %s3 = inlined_call_operand.vmem [shape: f32[8,32], index: 3, kind: output, shape index: {}]
  %s4 = sld [smem:[#allocation0]]
  $region22: #{_lambda_.27} parent=0
    _
  %s6 = ssub.s32 1, %s4
  %s7 = scalar_select 0, %s6, %s4
  // Predicated region
  $region2: #{_lambda_.27} parent=0 // pred_check
    _
  $region3: #{_lambda_.27} parent=0 // pred_check_branch
    %9 = sbr.rel (0) target = $region5
  $region4: #{_lambda_.27} parent=0 // pred_region
    _
  $region5: #{_lambda_.27} parent=0 // pred_fallthru
    _
  // Predicated region
  $region6: #{_lambda_.27} parent=0 // pred_check
    _
  $region7: #{_lambda_.27} parent=0 // pred_check_branch
    %11 = sbr.rel (0) target = $region9
  $region8: #{_lambda_.27} parent=0 // pred_region
    _
  $region9: #{_lambda_.27} parent=0 // pred_fallthru
    _
  // Predicated region
  $region10: #{_lambda_.27} parent=0 // pred_check
    _
  $region11: #{_lambda_.27} parent=0 // pred_check_branch
    %13 = sbr.rel (0) target = $region13
  $region12: #{_lambda_.27} parent=0 // pred_region
    _
  $region13: #{_lambda_.27} parent=0 // pred_fallthru
    _
  %v15 = vld [vmem:[%s0] sm:$0xf]
  %v16 = vld [vmem:[%s1] sm:$0xf]
  %v17 = vld [vmem:[%s1 + $0x4] sm:$0xf]
  %v18 = vld [vmem:[%s1 + $0x8] sm:$0xf]
  %v19 = vld [vmem:[%s1 + $0xc] sm:$0xf]
  %v20 = vld [vmem:[%s1 + $0x10] sm:$0xf]
  %v21 = vld [vmem:[%s1 + $0x14] sm:$0xf]
  %v22 = vld [vmem:[%s1 + $0x18] sm:$0xf]
  %v23 = vld [vmem:[%s1 + $0x1c] sm:$0xf]
  %v24 = vld [vmem:[%s2] sm:$0x1]
  %v26 = vlaneseq
  %v27 = vshrl.u32 %v26, 7
  %v28 = vsub.s32 0, %v27
  %v29 = vrot.slane %v24, %v28
  %v39 = vunpack.c.l.b16 %v16
  %v40 = vunpack.c.l.b16 %v17
  %v41 = vunpack.c.l.b16 %v18
  %v42 = vunpack.c.l.b16 %v19
  %v43 = vunpack.c.l.b16 %v20
  %v44 = vunpack.c.l.b16 %v21
  %v45 = vunpack.c.l.b16 %v22
  %v46 = vunpack.c.l.b16 %v23
  %v47 = vpack.c.b16 %v40, %v39
  %v48 = vpack.c.b16 %v42, %v41
  %v49 = vpack.c.b16 %v44, %v43
  %v50 = vpack.c.b16 %v46, %v45
  %vm55 = vcmask 523264
  %v57 = vsel %vm55, %v15, 0
  %59 = vmatprep.subr.bf16.mxu0 0
  %60 = vmatpush1.bf16.msra.mxu0 %v47
  %61 = vmatprep.subr.bf16.mxu0 0
  %62 = vmatpush1.bf16.msra.mxu0 %v48
  %63 = vmatprep.subr.bf16.mxu0 0
  %64 = vmatpush1.bf16.msra.mxu0 %v49
  %65 = vmatprep.subr.bf16.mxu0 0
  %66 = vmatpush1.bf16.msra.mxu0 %v50
  %67 = vmatprep.subr.bf16.mxu0 0
  %68 = vmatpush1.bf16.msra.mxu0 0
  %69 = vmatprep.subr.bf16.mxu0 0
  %70 = vmatpush1.bf16.msra.mxu0 0
  %71 = vmatprep.subr.bf16.mxu0 0
  %72 = vmatpush1.bf16.msra.mxu0 0
  %73 = vmatprep.subr.bf16.mxu0 0
  %74 = vmatpush1.bf16.msra.mxu0 0
  %75 = vmatprep.subr.bf16.mxu0 0
  %76 = vmatpush1.bf16.msra.mxu0 0
  %77 = vmatprep.subr.bf16.mxu0 0
  %78 = vmatpush1.bf16.msra.mxu0 0
  %79 = vmatprep.subr.bf16.mxu0 0
  %80 = vmatpush1.bf16.msra.mxu0 0
  %81 = vmatprep.subr.bf16.mxu0 0
  %82 = vmatpush1.bf16.msra.mxu0 0
  %83 = vmatprep.subr.bf16.mxu0 0
  %84 = vmatpush1.bf16.msra.mxu0 0
  %85 = vmatprep.subr.bf16.mxu0 0
  %86 = vmatpush1.bf16.msra.mxu0 0
  %87 = vmatprep.subr.bf16.mxu0 0
  %88 = vmatpush1.bf16.msra.mxu0 0
  %89 = vmatprep.subr.bf16.mxu0 0
  %90 = vmatpush1.bf16.msra.mxu0 0
  %91 = vmatprep.mubr.bf16.mxu0 0
  %92 = vmatmul.mubr.bf16.gmra.mrb[0].mxu0 %v57
  %v93 = vpop.f32.mrb[0].mxu0
  %v94 = vadd.f32 %v29, %v93
  %v95 = vpop.f32.mrb[0].mxu0
  %v96 = vpop.f32.mrb[0].mxu0
  %v97 = vpop.f32.mrb[0].mxu0
  %98 = vdwg.mxu0
  %v99 = vmax.f32 %v94, 0.0
  %vm100 = vcmask 261120
  %101 = vst.msk [vmem:[%s3] sm:$0xff] %vm100, %v99
  // Predicated region
  $region14: #{_lambda_.27} parent=0 // pred_check
    _
  $region15: #{_lambda_.27} parent=0 // pred_check_branch
    %103 = sbr.rel (0) target = $region17
  $region16: #{_lambda_.27} parent=0 // pred_region
    _
  $region17: #{_lambda_.27} parent=0 // pred_fallthru
    _
  // Predicated region
  $region18: #{_lambda_.27} parent=0 // pred_check
    _
  $region19: #{_lambda_.27} parent=0 // pred_check_branch
    %105 = sbr.rel (0) target = $region21
  $region20: #{_lambda_.27} parent=0 // pred_region
    _
  $region21: #{_lambda_.27} parent=0 // pred_fallthru
    _

// kernel: _lambda_.28
$region0: #{_lambda_.28}
  #allocation0 [shape = 'u32[]', space=smem, size = 0x4, offset = 0x4, fixed_abs, tag = 'smem constant byte address 0x4 - core index']
  #allocation1 [shape = 'u32[144,128]{1,0:T(1,128)}', space=vmem, size = 0x12000, scoped, tag = 'internal scratch']
  #allocation2 [shape = 'f32[1,1]{1,0:T(1,128)S(1)}', space=vmem, size = 0x200, scoped, tag = 'scoped memory for _lambda_.28']
  %s0 = inlined_call_operand.vmem [shape: bf16[8,32], index: 0, kind: input, shape index: {}]
  %s1 = inlined_call_operand.vmem [shape: bf16[32,128], index: 1, kind: input, shape index: {}]
  %s2 = inlined_call_operand.vmem [shape: f32[1,128], index: 2, kind: input, shape index: {}]
  %s3 = inlined_call_operand.vmem [shape: bf16[128,1], index: 3, kind: input, shape index: {}]
  %s4 = inlined_call_operand.<no memory space> [shape: f32[1,1], index: 4, kind: input, shape index: {}]
  %s5 = inlined_call_operand.vmem [shape: bf16[32,128], index: 5, kind: input, shape index: {}]
  %s6 = inlined_call_operand.vmem [shape: f32[1,128], index: 6, kind: input, shape index: {}]
  %s7 = inlined_call_operand.vmem [shape: f32[8,1], index: 7, kind: output, shape index: {0}]
  %s8 = inlined_call_operand.vmem [shape: f32[8,128], index: 8, kind: output, shape index: {1}]
  %9 = xla_tuple %s7, %s8
  %s10 = sld [smem:[#allocation0]]
  $region46: #{_lambda_.28} parent=0
    _
  %s12 = ssub.s32 1, %s10
  %s13 = scalar_select 0, %s12, %s10
  %v14 = vstv %s4
  %15 = vst [vmem:[#allocation2] sm:$0x1] %v14
  // Predicated region
  $region2: #{_lambda_.28} parent=0 // pred_check
    _
  $region3: #{_lambda_.28} parent=0 // pred_check_branch
    %17 = sbr.rel (0) target = $region5
  $region4: #{_lambda_.28} parent=0 // pred_region
    _
  $region5: #{_lambda_.28} parent=0 // pred_fallthru
    _
  // Predicated region
  $region6: #{_lambda_.28} parent=0 // pred_check
    _
  $region7: #{_lambda_.28} parent=0 // pred_check_branch
    %19 = sbr.rel (0) target = $region9
  $region8: #{_lambda_.28} parent=0 // pred_region
    _
  $region9: #{_lambda_.28} parent=0 // pred_fallthru
    _
  // Predicated region
  $region10: #{_lambda_.28} parent=0 // pred_check
    _
  $region11: #{_lambda_.28} parent=0 // pred_check_branch
    %21 = sbr.rel (0) target = $region13
  $region12: #{_lambda_.28} parent=0 // pred_region
    _
  $region13: #{_lambda_.28} parent=0 // pred_fallthru
    _
  // Predicated region
  $region14: #{_lambda_.28} parent=0 // pred_check
    _
  $region15: #{_lambda_.28} parent=0 // pred_check_branch
    %23 = sbr.rel (0) target = $region17
  $region16: #{_lambda_.28} parent=0 // pred_region
    _
  $region17: #{_lambda_.28} parent=0 // pred_fallthru
    _
  // Predicated region
  $region18: #{_lambda_.28} parent=0 // pred_check
    _
  $region19: #{_lambda_.28} parent=0 // pred_check_branch
    %25 = sbr.rel (0) target = $region21
  $region20: #{_lambda_.28} parent=0 // pred_region
    _
  $region21: #{_lambda_.28} parent=0 // pred_fallthru
    _
  // Predicated region
  $region22: #{_lambda_.28} parent=0 // pred_check
    _
  $region23: #{_lambda_.28} parent=0 // pred_check_branch
    %27 = sbr.rel (0) target = $region25
  $region24: #{_lambda_.28} parent=0 // pred_region
    _
  $region25: #{_lambda_.28} parent=0 // pred_fallthru
    _
  // Predicated region
  $region26: #{_lambda_.28} parent=0 // pred_check
    _
  $region27: #{_lambda_.28} parent=0 // pred_check_branch
    %29 = sbr.rel (0) target = $region29
  $region28: #{_lambda_.28} parent=0 // pred_region
    _
  $region29: #{_lambda_.28} parent=0 // pred_fallthru
    _
  %v31 = vld [vmem:[%s0] sm:$0xf]
  %v32 = vld [vmem:[%s1] sm:$0xf]
  %v33 = vld [vmem:[%s1 + $0x4] sm:$0xf]
  %v34 = vld [vmem:[%s1 + $0x8] sm:$0xf]
  %v35 = vld [vmem:[%s1 + $0xc] sm:$0xf]
  %v36 = vld [vmem:[%s2] sm:$0x1]
  %v38 = vlaneseq
  %v39 = vshrl.u32 %v38, 7
  %v40 = vsub.s32 0, %v39
  %v41 = vrot.slane %v36, %v40
  %v47 = vunpack.c.l.b16 %v32
  %v48 = vunpack.c.l.b16 %v33
  %v49 = vunpack.c.l.b16 %v34
  %v50 = vunpack.c.l.b16 %v35
  %v51 = vpack.c.b16 %v48, %v47
  %v52 = vpack.c.b16 %v50, %v49
  %vm55 = vcmask 261120
  %v57 = vsel %vm55, %v31, 0
  %59 = vmatprep.subr.bf16.mxu0 0
  %60 = vmatpush1.bf16.msra.mxu0 %v51
  %61 = vmatprep.subr.bf16.mxu0 0
  %62 = vmatpush1.bf16.msra.mxu0 %v52
  %63 = vmatprep.subr.bf16.mxu0 0
  %64 = vmatpush1.bf16.msra.mxu0 0
  %65 = vmatprep.subr.bf16.mxu0 0
  %66 = vmatpush1.bf16.msra.mxu0 0
  %67 = vmatprep.subr.bf16.mxu0 0
  %68 = vmatpush1.bf16.msra.mxu0 0
  %69 = vmatprep.subr.bf16.mxu0 0
  %70 = vmatpush1.bf16.msra.mxu0 0
  %71 = vmatprep.subr.bf16.mxu0 0
  %72 = vmatpush1.bf16.msra.mxu0 0
  %73 = vmatprep.subr.bf16.mxu0 0
  %74 = vmatpush1.bf16.msra.mxu0 0
  %75 = vmatprep.subr.bf16.mxu0 0
  %76 = vmatpush1.bf16.msra.mxu0 0
  %77 = vmatprep.subr.bf16.mxu0 0
  %78 = vmatpush1.bf16.msra.mxu0 0
  %79 = vmatprep.subr.bf16.mxu0 0
  %80 = vmatpush1.bf16.msra.mxu0 0
  %81 = vmatprep.subr.bf16.mxu0 0
  %82 = vmatpush1.bf16.msra.mxu0 0
  %83 = vmatprep.subr.bf16.mxu0 0
  %84 = vmatpush1.bf16.msra.mxu0 0
  %85 = vmatprep.subr.bf16.mxu0 0
  %86 = vmatpush1.bf16.msra.mxu0 0
  %87 = vmatprep.subr.bf16.mxu0 0
  %88 = vmatpush1.bf16.msra.mxu0 0
  %89 = vmatprep.subr.bf16.mxu0 0
  %90 = vmatpush1.bf16.msra.mxu0 0
  %91 = vmatprep.mubr.bf16.mxu0 0
  %92 = vmatmul.mubr.bf16.gmra.mrb[0].mxu0 %v57
  %v93 = vpop.f32.mrb[0].mxu0
  %v94 = vadd.f32 %v41, %v93
  %v95 = vpop.f32.mrb[0].mxu0
  %v96 = vpop.f32.mrb[0].mxu0
  %v97 = vpop.f32.mrb[0].mxu0
  %98 = vdwg.mxu0
  %v99 = vtanh.pop %v94
  %v100 = vpack.c.bf16 %v99, %v99
  %v101 = vld [vmem:[%s3] sm:$0xf]
  %v102 = vld [vmem:[%s3 + $0x4] sm:$0xf]
  %v103 = vld [vmem:[%s3 + $0x8] sm:$0xf]
  %v104 = vld [vmem:[%s3 + $0xc] sm:$0xf]
  %v105 = vld [vmem:[%s3 + $0x10] sm:$0xf]
  %v106 = vld [vmem:[%s3 + $0x14] sm:$0xf]
  %v107 = vld [vmem:[%s3 + $0x18] sm:$0xf]
  %v108 = vld [vmem:[%s3 + $0x1c] sm:$0xf]
  %v109 = vld [vmem:[%s3 + $0x20] sm:$0xf]
  %v110 = vld [vmem:[%s3 + $0x24] sm:$0xf]
  %v111 = vld [vmem:[%s3 + $0x28] sm:$0xf]
  %v112 = vld [vmem:[%s3 + $0x2c] sm:$0xf]
  %v113 = vld [vmem:[%s3 + $0x30] sm:$0xf]
  %v114 = vld [vmem:[%s3 + $0x34] sm:$0xf]
  %v115 = vld [vmem:[%s3 + $0x38] sm:$0xf]
  %v116 = vld [vmem:[%s3 + $0x3c] sm:$0xf]
  %v117 = vld [vmem:[#allocation2] sm:$0x1]
  %v119 = vlaneseq
  %v120 = vshrl.u32 %v119, 7
  %v121 = vsub.s32 0, %v120
  %v122 = vrot.slane %v117, %v121
  %v140 = vunpack.c.l.b16 %v101
  %v141 = vunpack.c.l.b16 %v102
  %v142 = vunpack.c.l.b16 %v103
  %v143 = vunpack.c.l.b16 %v104
  %v144 = vunpack.c.l.b16 %v105
  %v145 = vunpack.c.l.b16 %v106
  %v146 = vunpack.c.l.b16 %v107
  %v147 = vunpack.c.l.b16 %v108
  %v148 = vunpack.c.l.b16 %v109
  %v149 = vunpack.c.l.b16 %v110
  %v150 = vunpack.c.l.b16 %v111
  %v151 = vunpack.c.l.b16 %v112
  %v152 = vunpack.c.l.b16 %v113
  %v153 = vunpack.c.l.b16 %v114
  %v154 = vunpack.c.l.b16 %v115
  %v155 = vunpack.c.l.b16 %v116
  %v156 = vpack.c.b16 %v141, %v140
  %v157 = vpack.c.b16 %v143, %v142
  %v158 = vpack.c.b16 %v145, %v144
  %v159 = vpack.c.b16 %v147, %v146
  %v160 = vpack.c.b16 %v149, %v148
  %v161 = vpack.c.b16 %v151, %v150
  %v162 = vpack.c.b16 %v153, %v152
  %v163 = vpack.c.b16 %v155, %v154
  %172 = vmatprep.subr.bf16.mxu0 0
  %173 = vmatpush1.bf16.msra.mxu0 %v156
  %174 = vmatprep.subr.bf16.mxu0 0
  %175 = vmatpush1.bf16.msra.mxu0 %v157
  %176 = vmatprep.subr.bf16.mxu0 0
  %177 = vmatpush1.bf16.msra.mxu0 %v158
  %178 = vmatprep.subr.bf16.mxu0 0
  %179 = vmatpush1.bf16.msra.mxu0 %v159
  %180 = vmatprep.subr.bf16.mxu0 0
  %181 = vmatpush1.bf16.msra.mxu0 %v160
  %182 = vmatprep.subr.bf16.mxu0 0
  %183 = vmatpush1.bf16.msra.mxu0 %v161
  %184 = vmatprep.subr.bf16.mxu0 0
  %185 = vmatpush1.bf16.msra.mxu0 %v162
  %186 = vmatprep.subr.bf16.mxu0 0
  %187 = vmatpush1.bf16.msra.mxu0 %v163
  %188 = vmatprep.subr.bf16.mxu0 0
  %189 = vmatpush1.bf16.msra.mxu0 0
  %190 = vmatprep.subr.bf16.mxu0 0
  %191 = vmatpush1.bf16.msra.mxu0 0
  %192 = vmatprep.subr.bf16.mxu0 0
  %193 = vmatpush1.bf16.msra.mxu0 0
  %194 = vmatprep.subr.bf16.mxu0 0
  %195 = vmatpush1.bf16.msra.mxu0 0
  %196 = vmatprep.subr.bf16.mxu0 0
  %197 = vmatpush1.bf16.msra.mxu0 0
  %198 = vmatprep.subr.bf16.mxu0 0
  %199 = vmatpush1.bf16.msra.mxu0 0
  %200 = vmatprep.subr.bf16.mxu0 0
  %201 = vmatpush1.bf16.msra.mxu0 0
  %202 = vmatprep.subr.bf16.mxu0 0
  %203 = vmatpush1.bf16.msra.mxu0 0
  %204 = vmatprep.mubr.bf16.mxu0 0
  %205 = vmatmul.mubr.bf16.gmra.mrb[0].mxu0 %v100
  %v206 = vpop.f32.mrb[0].mxu0
  %v207 = vadd.f32 %v122, %v206
  %v208 = vpop.f32.mrb[0].mxu0
  %v209 = vpop.f32.mrb[0].mxu0
  %v210 = vpop.f32.mrb[0].mxu0
  %211 = vdwg.mxu0
  %v212 = vld [vmem:[%s5] sm:$0xf]
  %v213 = vld [vmem:[%s5 + $0x4] sm:$0xf]
  %v214 = vld [vmem:[%s5 + $0x8] sm:$0xf]
  %v215 = vld [vmem:[%s5 + $0xc] sm:$0xf]
  %v216 = vld [vmem:[%s6] sm:$0x1]
  %v218 = vlaneseq
  %v219 = vshrl.u32 %v218, 7
  %v220 = vsub.s32 0, %v219
  %v221 = vrot.slane %v216, %v220
  %v227 = vunpack.c.l.b16 %v212
  %v228 = vunpack.c.l.b16 %v213
  %v229 = vunpack.c.l.b16 %v214
  %v230 = vunpack.c.l.b16 %v215
  %v231 = vpack.c.b16 %v228, %v227
  %v232 = vpack.c.b16 %v230, %v229
  %235 = vmatprep.subr.bf16.mxu0 0
  %236 = vmatpush1.bf16.msra.mxu0 %v231
  %237 = vmatprep.subr.bf16.mxu0 0
  %238 = vmatpush1.bf16.msra.mxu0 %v232
  %239 = vmatprep.subr.bf16.mxu0 0
  %240 = vmatpush1.bf16.msra.mxu0 0
  %241 = vmatprep.subr.bf16.mxu0 0
  %242 = vmatpush1.bf16.msra.mxu0 0
  %243 = vmatprep.subr.bf16.mxu0 0
  %244 = vmatpush1.bf16.msra.mxu0 0
  %245 = vmatprep.subr.bf16.mxu0 0
  %246 = vmatpush1.bf16.msra.mxu0 0
  %247 = vmatprep.subr.bf16.mxu0 0
  %248 = vmatpush1.bf16.msra.mxu0 0
  %249 = vmatprep.subr.bf16.mxu0 0
  %250 = vmatpush1.bf16.msra.mxu0 0
  %251 = vmatprep.subr.bf16.mxu0 0
  %252 = vmatpush1.bf16.msra.mxu0 0
  %253 = vmatprep.subr.bf16.mxu0 0
  %254 = vmatpush1.bf16.msra.mxu0 0
  %255 = vmatprep.subr.bf16.mxu0 0
  %256 = vmatpush1.bf16.msra.mxu0 0
  %257 = vmatprep.subr.bf16.mxu0 0
  %258 = vmatpush1.bf16.msra.mxu0 0
  %259 = vmatprep.subr.bf16.mxu0 0
  %260 = vmatpush1.bf16.msra.mxu0 0
  %261 = vmatprep.subr.bf16.mxu0 0
  %262 = vmatpush1.bf16.msra.mxu0 0
  %263 = vmatprep.subr.bf16.mxu0 0
  %264 = vmatpush1.bf16.msra.mxu0 0
  %265 = vmatprep.subr.bf16.mxu0 0
  %266 = vmatpush1.bf16.msra.mxu0 0
  %267 = vmatprep.mubr.bf16.mxu0 0
  %268 = vmatmul.mubr.bf16.gmra.mrb[0].mxu0 %v57
  %v269 = vpop.f32.mrb[0].mxu0
  %v270 = vadd.f32 %v221, %v269
  %v271 = vpop.f32.mrb[0].mxu0
  %v272 = vpop.f32.mrb[0].mxu0
  %v273 = vpop.f32.mrb[0].mxu0
  %274 = vdwg.mxu0
  %vm275 = vcmask 7168
  %276 = vst.msk [vmem:[%s7] sm:$0xff] %vm275, %v207
  %277 = vst [vmem:[%s8] sm:$0xff] %v270
  // Predicated region
  $region30: #{_lambda_.28} parent=0 // pred_check
    _
  $region31: #{_lambda_.28} parent=0 // pred_check_branch
    %279 = sbr.rel (0) target = $region33
  $region32: #{_lambda_.28} parent=0 // pred_region
    _
  $region33: #{_lambda_.28} parent=0 // pred_fallthru
    _
  // Predicated region
  $region34: #{_lambda_.28} parent=0 // pred_check
    _
  $region35: #{_lambda_.28} parent=0 // pred_check_branch
    %281 = sbr.rel (0) target = $region37
  $region36: #{_lambda_.28} parent=0 // pred_region
    _
  $region37: #{_lambda_.28} parent=0 // pred_fallthru
    _
  // Predicated region
  $region38: #{_lambda_.28} parent=0 // pred_check
    _
  $region39: #{_lambda_.28} parent=0 // pred_check_branch
    %283 = sbr.rel (0) target = $region41
  $region40: #{_lambda_.28} parent=0 // pred_region
    _
  $region41: #{_lambda_.28} parent=0 // pred_fallthru
    _
  // Predicated region
  $region42: #{_lambda_.28} parent=0 // pred_check
    _
  $region43: #{_lambda_.28} parent=0 // pred_check_branch
    %285 = sbr.rel (0) target = $region45
  $region44: #{_lambda_.28} parent=0 // pred_region
    _
  $region45: #{_lambda_.28} parent=0 // pred_fallthru
    _

// kernel: _lambda_.31
$region0: #{_lambda_.31}
  #allocation0 [shape = 'u32[]', space=smem, size = 0x4, offset = 0x4, fixed_abs, tag = 'smem constant byte address 0x4 - core index']
  #allocation1 [shape = 'u32[144,128]{1,0:T(1,128)}', space=vmem, size = 0x12000, scoped, tag = 'internal scratch']
  #allocation2 [shape = 'f32[1,1]{1,0:T(1,128)S(1)}', space=vmem, size = 0x200, scoped, tag = 'scoped memory for _lambda_.31']
  %s0 = inlined_call_operand.vmem [shape: bf16[32,64], index: 0, kind: input, shape index: {}]
  %s1 = inlined_call_operand.vmem [shape: bf16[64,128], index: 1, kind: input, shape index: {}]
  %s2 = inlined_call_operand.vmem [shape: f32[1,128], index: 2, kind: input, shape index: {}]
  %s3 = inlined_call_operand.vmem [shape: bf16[128,1], index: 3, kind: input, shape index: {}]
  %s4 = inlined_call_operand.<no memory space> [shape: f32[1,1], index: 4, kind: input, shape index: {}]
  %s5 = inlined_call_operand.vmem [shape: f32[32,1], index: 5, kind: output, shape index: {}]
  %s6 = sld [smem:[#allocation0]]
  $region30: #{_lambda_.31} parent=0
    _
  %s8 = ssub.s32 1, %s6
  %s9 = scalar_select 0, %s8, %s6
  %v10 = vstv %s4
  %11 = vst [vmem:[#allocation2] sm:$0x1] %v10
  // Predicated region
  $region2: #{_lambda_.31} parent=0 // pred_check
    _
  $region3: #{_lambda_.31} parent=0 // pred_check_branch
    %13 = sbr.rel (0) target = $region5
  $region4: #{_lambda_.31} parent=0 // pred_region
    _
  $region5: #{_lambda_.31} parent=0 // pred_fallthru
    _
  // Predicated region
  $region6: #{_lambda_.31} parent=0 // pred_check
    _
  $region7: #{_lambda_.31} parent=0 // pred_check_branch
    %15 = sbr.rel (0) target = $region9
  $region8: #{_lambda_.31} parent=0 // pred_region
    _
  $region9: #{_lambda_.31} parent=0 // pred_fallthru
    _
  // Predicated region
  $region10: #{_lambda_.31} parent=0 // pred_check
    _
  $region11: #{_lambda_.31} parent=0 // pred_check_branch
    %17 = sbr.rel (0) target = $region13
  $region12: #{_lambda_.31} parent=0 // pred_region
    _
  $region13: #{_lambda_.31} parent=0 // pred_fallthru
    _
  // Predicated region
  $region14: #{_lambda_.31} parent=0 // pred_check
    _
  $region15: #{_lambda_.31} parent=0 // pred_check_branch
    %19 = sbr.rel (0) target = $region17
  $region16: #{_lambda_.31} parent=0 // pred_region
    _
  $region17: #{_lambda_.31} parent=0 // pred_fallthru
    _
  // Predicated region
  $region18: #{_lambda_.31} parent=0 // pred_check
    _
  $region19: #{_lambda_.31} parent=0 // pred_check_branch
    %21 = sbr.rel (0) target = $region21
  $region20: #{_lambda_.31} parent=0 // pred_region
    _
  $region21: #{_lambda_.31} parent=0 // pred_fallthru
    _
  %v23 = vld [vmem:[%s0] sm:$0xf]
  %v24 = vld [vmem:[%s0 + $0x4] sm:$0xf]
  %v25 = vld [vmem:[%s0 + $0x8] sm:$0xf]
  %v26 = vld [vmem:[%s0 + $0xc] sm:$0xf]
  %v27 = vld [vmem:[%s1] sm:$0xf]
  %v28 = vld [vmem:[%s1 + $0x4] sm:$0xf]
  %v29 = vld [vmem:[%s1 + $0x8] sm:$0xf]
  %v30 = vld [vmem:[%s1 + $0xc] sm:$0xf]
  %v31 = vld [vmem:[%s1 + $0x10] sm:$0xf]
  %v32 = vld [vmem:[%s1 + $0x14] sm:$0xf]
  %v33 = vld [vmem:[%s1 + $0x18] sm:$0xf]
  %v34 = vld [vmem:[%s1 + $0x1c] sm:$0xf]
  %v35 = vld [vmem:[%s2] sm:$0x1]
  %v37 = vlaneseq
  %v38 = vshrl.u32 %v37, 7
  %v39 = vsub.s32 0, %v38
  %v40 = vrot.slane %v35, %v39
  %v46 = vunpack.c.l.b16 %v23
  %v47 = vunpack.c.l.b16 %v24
  %v48 = vunpack.c.l.b16 %v25
  %v49 = vunpack.c.l.b16 %v26
  %v50 = vpack.c.b16 %v47, %v46
  %v51 = vpack.c.b16 %v49, %v48
  %v60 = vunpack.c.l.b16 %v27
  %v61 = vunpack.c.l.b16 %v28
  %v62 = vunpack.c.l.b16 %v29
  %v63 = vunpack.c.l.b16 %v30
  %v64 = vunpack.c.l.b16 %v31
  %v65 = vunpack.c.l.b16 %v32
  %v66 = vunpack.c.l.b16 %v33
  %v67 = vunpack.c.l.b16 %v34
  %v68 = vpack.c.b16 %v61, %v60
  %v69 = vpack.c.b16 %v63, %v62
  %v70 = vpack.c.b16 %v65, %v64
  %v71 = vpack.c.b16 %v67, %v66
  %vm76 = vcmask 523264
  %v78 = vsel %vm76, %v50, 0
  %v81 = vsel %vm76, %v51, 0
  %83 = vmatprep.subr.bf16.mxu0 0
  %84 = vmatpush1.bf16.msra.mxu0 %v68
  %85 = vmatprep.subr.bf16.mxu0 0
  %86 = vmatpush1.bf16.msra.mxu0 %v69
  %87 = vmatprep.subr.bf16.mxu0 0
  %88 = vmatpush1.bf16.msra.mxu0 %v70
  %89 = vmatprep.subr.bf16.mxu0 0
  %90 = vmatpush1.bf16.msra.mxu0 %v71
  %91 = vmatprep.subr.bf16.mxu0 0
  %92 = vmatpush1.bf16.msra.mxu0 0
  %93 = vmatprep.subr.bf16.mxu0 0
  %94 = vmatpush1.bf16.msra.mxu0 0
  %95 = vmatprep.subr.bf16.mxu0 0
  %96 = vmatpush1.bf16.msra.mxu0 0
  %97 = vmatprep.subr.bf16.mxu0 0
  %98 = vmatpush1.bf16.msra.mxu0 0
  %99 = vmatprep.subr.bf16.mxu0 0
  %100 = vmatpush1.bf16.msra.mxu0 0
  %101 = vmatprep.subr.bf16.mxu0 0
  %102 = vmatpush1.bf16.msra.mxu0 0
  %103 = vmatprep.subr.bf16.mxu0 0
  %104 = vmatpush1.bf16.msra.mxu0 0
  %105 = vmatprep.subr.bf16.mxu0 0
  %106 = vmatpush1.bf16.msra.mxu0 0
  %107 = vmatprep.subr.bf16.mxu0 0
  %108 = vmatpush1.bf16.msra.mxu0 0
  %109 = vmatprep.subr.bf16.mxu0 0
  %110 = vmatpush1.bf16.msra.mxu0 0
  %111 = vmatprep.subr.bf16.mxu0 0
  %112 = vmatpush1.bf16.msra.mxu0 0
  %113 = vmatprep.subr.bf16.mxu0 0
  %114 = vmatpush1.bf16.msra.mxu0 0
  %115 = vmatprep.mubr.bf16.mxu0 0
  %116 = vmatmul.mubr.bf16.gmra.mrb[0].mxu0 %v78
  %v117 = vpop.f32.mrb[0].mxu0
  %v118 = vadd.f32 %v40, %v117
  %v119 = vpop.f32.mrb[0].mxu0
  %v120 = vpop.f32.mrb[0].mxu0
  %v121 = vadd.f32 %v40, %v120
  %v122 = vpop.f32.mrb[0].mxu0
  %123 = vmatprep.mubr.bf16.mxu0 0
  %124 = vmatmul.mubr.bf16.gmra.mrb[0].mxu0 %v81
  %v125 = vpop.f32.mrb[0].mxu0
  %v126 = vadd.f32 %v40, %v125
  %v127 = vpop.f32.mrb[0].mxu0
  %v128 = vpop.f32.mrb[0].mxu0
  %v129 = vadd.f32 %v40, %v128
  %v130 = vpop.f32.mrb[0].mxu0
  %131 = vdwg.mxu0
  %v132 = vtanh.pop %v118
  %v133 = vtanh.pop %v121
  %v134 = vtanh.pop %v126
  %v135 = vtanh.pop %v129
  %v136 = vpack.c.bf16 %v133, %v132
  %v137 = vpack.c.bf16 %v135, %v134
  %v138 = vld [vmem:[%s3] sm:$0xf]
  %v139 = vld [vmem:[%s3 + $0x4] sm:$0xf]
  %v140 = vld [vmem:[%s3 + $0x8] sm:$0xf]
  %v141 = vld [vmem:[%s3 + $0xc] sm:$0xf]
  %v142 = vld [vmem:[%s3 + $0x10] sm:$0xf]
  %v143 = vld [vmem:[%s3 + $0x14] sm:$0xf]
  %v144 = vld [vmem:[%s3 + $0x18] sm:$0xf]
  %v145 = vld [vmem:[%s3 + $0x1c] sm:$0xf]
  %v146 = vld [vmem:[%s3 + $0x20] sm:$0xf]
  %v147 = vld [vmem:[%s3 + $0x24] sm:$0xf]
  %v148 = vld [vmem:[%s3 + $0x28] sm:$0xf]
  %v149 = vld [vmem:[%s3 + $0x2c] sm:$0xf]
  %v150 = vld [vmem:[%s3 + $0x30] sm:$0xf]
  %v151 = vld [vmem:[%s3 + $0x34] sm:$0xf]
  %v152 = vld [vmem:[%s3 + $0x38] sm:$0xf]
  %v153 = vld [vmem:[%s3 + $0x3c] sm:$0xf]
  %v154 = vld [vmem:[#allocation2] sm:$0x1]
  %v156 = vlaneseq
  %v157 = vshrl.u32 %v156, 7
  %v158 = vsub.s32 0, %v157
  %v159 = vrot.slane %v154, %v158
  %v177 = vunpack.c.l.b16 %v138
  %v178 = vunpack.c.l.b16 %v139
  %v179 = vunpack.c.l.b16 %v140
  %v180 = vunpack.c.l.b16 %v141
  %v181 = vunpack.c.l.b16 %v142
  %v182 = vunpack.c.l.b16 %v143
  %v183 = vunpack.c.l.b16 %v144
  %v184 = vunpack.c.l.b16 %v145
  %v185 = vunpack.c.l.b16 %v146
  %v186 = vunpack.c.l.b16 %v147
  %v187 = vunpack.c.l.b16 %v148
  %v188 = vunpack.c.l.b16 %v149
  %v189 = vunpack.c.l.b16 %v150
  %v190 = vunpack.c.l.b16 %v151
  %v191 = vunpack.c.l.b16 %v152
  %v192 = vunpack.c.l.b16 %v153
  %v193 = vpack.c.b16 %v178, %v177
  %v194 = vpack.c.b16 %v180, %v179
  %v195 = vpack.c.b16 %v182, %v181
  %v196 = vpack.c.b16 %v184, %v183
  %v197 = vpack.c.b16 %v186, %v185
  %v198 = vpack.c.b16 %v188, %v187
  %v199 = vpack.c.b16 %v190, %v189
  %v200 = vpack.c.b16 %v192, %v191
  %209 = vmatprep.subr.bf16.mxu0 0
  %210 = vmatpush1.bf16.msra.mxu0 %v193
  %211 = vmatprep.subr.bf16.mxu0 0
  %212 = vmatpush1.bf16.msra.mxu0 %v194
  %213 = vmatprep.subr.bf16.mxu0 0
  %214 = vmatpush1.bf16.msra.mxu0 %v195
  %215 = vmatprep.subr.bf16.mxu0 0
  %216 = vmatpush1.bf16.msra.mxu0 %v196
  %217 = vmatprep.subr.bf16.mxu0 0
  %218 = vmatpush1.bf16.msra.mxu0 %v197
  %219 = vmatprep.subr.bf16.mxu0 0
  %220 = vmatpush1.bf16.msra.mxu0 %v198
  %221 = vmatprep.subr.bf16.mxu0 0
  %222 = vmatpush1.bf16.msra.mxu0 %v199
  %223 = vmatprep.subr.bf16.mxu0 0
  %224 = vmatpush1.bf16.msra.mxu0 %v200
  %225 = vmatprep.subr.bf16.mxu0 0
  %226 = vmatpush1.bf16.msra.mxu0 0
  %227 = vmatprep.subr.bf16.mxu0 0
  %228 = vmatpush1.bf16.msra.mxu0 0
  %229 = vmatprep.subr.bf16.mxu0 0
  %230 = vmatpush1.bf16.msra.mxu0 0
  %231 = vmatprep.subr.bf16.mxu0 0
  %232 = vmatpush1.bf16.msra.mxu0 0
  %233 = vmatprep.subr.bf16.mxu0 0
  %234 = vmatpush1.bf16.msra.mxu0 0
  %235 = vmatprep.subr.bf16.mxu0 0
  %236 = vmatpush1.bf16.msra.mxu0 0
  %237 = vmatprep.subr.bf16.mxu0 0
  %238 = vmatpush1.bf16.msra.mxu0 0
  %239 = vmatprep.subr.bf16.mxu0 0
  %240 = vmatpush1.bf16.msra.mxu0 0
  %241 = vmatprep.mubr.bf16.mxu0 0
  %242 = vmatmul.mubr.bf16.gmra.mrb[0].mxu0 %v136
  %v243 = vpop.f32.mrb[0].mxu0
  %v244 = vadd.f32 %v159, %v243
  %v245 = vpop.f32.mrb[0].mxu0
  %v246 = vpop.f32.mrb[0].mxu0
  %v247 = vadd.f32 %v159, %v246
  %v248 = vpop.f32.mrb[0].mxu0
  %249 = vmatprep.mubr.bf16.mxu0 0
  %250 = vmatmul.mubr.bf16.gmra.mrb[0].mxu0 %v137
  %v251 = vpop.f32.mrb[0].mxu0
  %v252 = vadd.f32 %v159, %v251
  %v253 = vpop.f32.mrb[0].mxu0
  %v254 = vpop.f32.mrb[0].mxu0
  %v255 = vadd.f32 %v159, %v254
  %v256 = vpop.f32.mrb[0].mxu0
  %257 = vdwg.mxu0
  %vm258 = vcmask 7168
  %259 = vst.msk [vmem:[%s5] sm:$0xff] %vm258, %v244
  %260 = vst.msk [vmem:[%s5 + $0x8] sm:$0xff] %vm258, %v247
  %261 = vst.msk [vmem:[%s5 + $0x10] sm:$0xff] %vm258, %v252
  %262 = vst.msk [vmem:[%s5 + $0x18] sm:$0xff] %vm258, %v255
  // Predicated region
  $region22: #{_lambda_.31} parent=0 // pred_check
    _
  $region23: #{_lambda_.31} parent=0 // pred_check_branch
    %264 = sbr.rel (0) target = $region25
  $region24: #{_lambda_.31} parent=0 // pred_region
    _
  $region25: #{_lambda_.31} parent=0 // pred_fallthru
    _
  // Predicated region
  $region26: #{_lambda_.31} parent=0 // pred_check
    _
  $region27: #{_lambda_.31} parent=0 // pred_check_branch
    %266 = sbr.rel (0) target = $region29
  $region28: #{_lambda_.31} parent=0 // pred_region
    _
  $region29: #{_lambda_.31} parent=0 // pred_fallthru
    _

// kernel: _lambda_.33
$region0: #{_lambda_.33}
  #allocation0 [shape = 'u32[]', space=smem, size = 0x4, offset = 0x4, fixed_abs, tag = 'smem constant byte address 0x4 - core index']
  #allocation1 [shape = 'u32[144,128]{1,0:T(1,128)}', space=vmem, size = 0x12000, scoped, tag = 'internal scratch']
  %s0 = inlined_call_operand.vmem [shape: bf16[8,64], index: 0, kind: input, shape index: {}]
  %s1 = inlined_call_operand.vmem [shape: bf16[64,32], index: 1, kind: input, shape index: {}]
  %s2 = inlined_call_operand.vmem [shape: f32[1,32], index: 2, kind: input, shape index: {}]
  %s3 = inlined_call_operand.vmem [shape: f32[8,32], index: 3, kind: output, shape index: {}]
  %s4 = sld [smem:[#allocation0]]
  $region22: #{_lambda_.33} parent=0
    _
  %s6 = ssub.s32 1, %s4
  %s7 = scalar_select 0, %s6, %s4
  // Predicated region
  $region2: #{_lambda_.33} parent=0 // pred_check
    _
  $region3: #{_lambda_.33} parent=0 // pred_check_branch
    %9 = sbr.rel (0) target = $region5
  $region4: #{_lambda_.33} parent=0 // pred_region
    _
  $region5: #{_lambda_.33} parent=0 // pred_fallthru
    _
  // Predicated region
  $region6: #{_lambda_.33} parent=0 // pred_check
    _
  $region7: #{_lambda_.33} parent=0 // pred_check_branch
    %11 = sbr.rel (0) target = $region9
  $region8: #{_lambda_.33} parent=0 // pred_region
    _
  $region9: #{_lambda_.33} parent=0 // pred_fallthru
    _
  // Predicated region
  $region10: #{_lambda_.33} parent=0 // pred_check
    _
  $region11: #{_lambda_.33} parent=0 // pred_check_branch
    %13 = sbr.rel (0) target = $region13
  $region12: #{_lambda_.33} parent=0 // pred_region
    _
  $region13: #{_lambda_.33} parent=0 // pred_fallthru
    _
  %v15 = vld [vmem:[%s0] sm:$0xf]
  %v16 = vld [vmem:[%s1] sm:$0xf]
  %v17 = vld [vmem:[%s1 + $0x4] sm:$0xf]
  %v18 = vld [vmem:[%s1 + $0x8] sm:$0xf]
  %v19 = vld [vmem:[%s1 + $0xc] sm:$0xf]
  %v20 = vld [vmem:[%s1 + $0x10] sm:$0xf]
  %v21 = vld [vmem:[%s1 + $0x14] sm:$0xf]
  %v22 = vld [vmem:[%s1 + $0x18] sm:$0xf]
  %v23 = vld [vmem:[%s1 + $0x1c] sm:$0xf]
  %v24 = vld [vmem:[%s2] sm:$0x1]
  %v26 = vlaneseq
  %v27 = vshrl.u32 %v26, 7
  %v28 = vsub.s32 0, %v27
  %v29 = vrot.slane %v24, %v28
  %v39 = vunpack.c.l.b16 %v16
  %v40 = vunpack.c.l.b16 %v17
  %v41 = vunpack.c.l.b16 %v18
  %v42 = vunpack.c.l.b16 %v19
  %v43 = vunpack.c.l.b16 %v20
  %v44 = vunpack.c.l.b16 %v21
  %v45 = vunpack.c.l.b16 %v22
  %v46 = vunpack.c.l.b16 %v23
  %v47 = vpack.c.b16 %v40, %v39
  %v48 = vpack.c.b16 %v42, %v41
  %v49 = vpack.c.b16 %v44, %v43
  %v50 = vpack.c.b16 %v46, %v45
  %vm55 = vcmask 523264
  %v57 = vsel %vm55, %v15, 0
  %59 = vmatprep.subr.bf16.mxu0 0
  %60 = vmatpush1.bf16.msra.mxu0 %v47
  %61 = vmatprep.subr.bf16.mxu0 0
  %62 = vmatpush1.bf16.msra.mxu0 %v48
  %63 = vmatprep.subr.bf16.mxu0 0
  %64 = vmatpush1.bf16.msra.mxu0 %v49
  %65 = vmatprep.subr.bf16.mxu0 0
  %66 = vmatpush1.bf16.msra.mxu0 %v50
  %67 = vmatprep.subr.bf16.mxu0 0
  %68 = vmatpush1.bf16.msra.mxu0 0
  %69 = vmatprep.subr.bf16.mxu0 0
  %70 = vmatpush1.bf16.msra.mxu0 0
  %71 = vmatprep.subr.bf16.mxu0 0
  %72 = vmatpush1.bf16.msra.mxu0 0
  %73 = vmatprep.subr.bf16.mxu0 0
  %74 = vmatpush1.bf16.msra.mxu0 0
  %75 = vmatprep.subr.bf16.mxu0 0
  %76 = vmatpush1.bf16.msra.mxu0 0
  %77 = vmatprep.subr.bf16.mxu0 0
  %78 = vmatpush1.bf16.msra.mxu0 0
  %79 = vmatprep.subr.bf16.mxu0 0
  %80 = vmatpush1.bf16.msra.mxu0 0
  %81 = vmatprep.subr.bf16.mxu0 0
  %82 = vmatpush1.bf16.msra.mxu0 0
  %83 = vmatprep.subr.bf16.mxu0 0
  %84 = vmatpush1.bf16.msra.mxu0 0
  %85 = vmatprep.subr.bf16.mxu0 0
  %86 = vmatpush1.bf16.msra.mxu0 0
  %87 = vmatprep.subr.bf16.mxu0 0
  %88 = vmatpush1.bf16.msra.mxu0 0
  %89 = vmatprep.subr.bf16.mxu0 0
  %90 = vmatpush1.bf16.msra.mxu0 0
  %91 = vmatprep.mubr.bf16.mxu0 0
  %92 = vmatmul.mubr.bf16.gmra.mrb[0].mxu0 %v57
  %v93 = vpop.f32.mrb[0].mxu0
  %v94 = vadd.f32 %v29, %v93
  %v95 = vpop.f32.mrb[0].mxu0
  %v96 = vpop.f32.mrb[0].mxu0
  %v97 = vpop.f32.mrb[0].mxu0
  %98 = vdwg.mxu0
  %vm99 = vcmask 261120
  %100 = vst.msk [vmem:[%s3] sm:$0xff] %vm99, %v94
  // Predicated region
  $region14: #{_lambda_.33} parent=0 // pred_check
    _
  $region15: #{_lambda_.33} parent=0 // pred_check_branch
    %102 = sbr.rel (0) target = $region17
  $region16: #{_lambda_.33} parent=0 // pred_region
    _
  $region17: #{_lambda_.33} parent=0 // pred_fallthru
    _
  // Predicated region
  $region18: #{_lambda_.33} parent=0 // pred_check
    _
  $region19: #{_lambda_.33} parent=0 // pred_check_branch
    %104 = sbr.rel (0) target = $region21
  $region20: #{_lambda_.33} parent=0 // pred_region
    _
  $region21: #{_lambda_.33} parent=0 // pred_fallthru
    _

// kernel: _lambda_.32
$region0: #{_lambda_.32}
  #allocation0 [shape = 'u32[]', space=smem, size = 0x4, offset = 0x4, fixed_abs, tag = 'smem constant byte address 0x4 - core index']
  #allocation1 [shape = 'u32[144,128]{1,0:T(1,128)}', space=vmem, size = 0x12000, scoped, tag = 'internal scratch']
  %s0 = inlined_call_operand.vmem [shape: f32[8,1,4], index: 0, kind: input, shape index: {}]
  %s1 = inlined_call_operand.vmem [shape: f32[8,4,64], index: 1, kind: input, shape index: {}]
  %s2 = inlined_call_operand.vmem [shape: f32[8,1,64], index: 2, kind: output, shape index: {}]
  %s3 = sld [smem:[#allocation0]]
  $region18: #{_lambda_.32} parent=0
    _
  %s5 = ssub.s32 1, %s3
  %s6 = scalar_select 0, %s5, %s3
  // Predicated region
  $region2: #{_lambda_.32} parent=0 // pred_check
    _
  $region3: #{_lambda_.32} parent=0 // pred_check_branch
    %8 = sbr.rel (0) target = $region5
  $region4: #{_lambda_.32} parent=0 // pred_region
    _
  $region5: #{_lambda_.32} parent=0 // pred_fallthru
    _
  // Predicated region
  $region6: #{_lambda_.32} parent=0 // pred_check
    _
  $region7: #{_lambda_.32} parent=0 // pred_check_branch
    %10 = sbr.rel (0) target = $region9
  $region8: #{_lambda_.32} parent=0 // pred_region
    _
  $region9: #{_lambda_.32} parent=0 // pred_fallthru
    _
  %v11 = vld [vmem:[%s0] sm:$0x1]
  %v12 = vld [vmem:[%s0 + $0x1] sm:$0x1]
  %v13 = vld [vmem:[%s0 + $0x2] sm:$0x1]
  %v14 = vld [vmem:[%s0 + $0x3] sm:$0x1]
  %v15 = vld [vmem:[%s0 + $0x4] sm:$0x1]
  %v16 = vld [vmem:[%s0 + $0x5] sm:$0x1]
  %v17 = vld [vmem:[%s0 + $0x6] sm:$0x1]
  %v18 = vld [vmem:[%s0 + $0x7] sm:$0x1]
  %vm19 = vcmask 24576
  %v20 = vsel %vm19, %v11, -inf
  %21 = vmax.xlane.f32.xlu0 %v20
  %v22 = vpop.xlane.xlu0 %21
  %v23 = vsel %vm19, %v12, -inf
  %24 = vmax.xlane.f32.xlu0 %v23
  %v25 = vpop.xlane.xlu0 %24
  %v26 = vsel %vm19, %v13, -inf
  %27 = vmax.xlane.f32.xlu0 %v26
  %v28 = vpop.xlane.xlu0 %27
  %v29 = vsel %vm19, %v14, -inf
  %30 = vmax.xlane.f32.xlu0 %v29
  %v31 = vpop.xlane.xlu0 %30
  %v32 = vsel %vm19, %v15, -inf
  %33 = vmax.xlane.f32.xlu0 %v32
  %v34 = vpop.xlane.xlu0 %33
  %v35 = vsel %vm19, %v16, -inf
  %36 = vmax.xlane.f32.xlu0 %v35
  %v37 = vpop.xlane.xlu0 %36
  %v38 = vsel %vm19, %v17, -inf
  %39 = vmax.xlane.f32.xlu0 %v38
  %v40 = vpop.xlane.xlu0 %39
  %v41 = vsel %vm19, %v18, -inf
  %42 = vmax.xlane.f32.xlu0 %v41
  %v43 = vpop.xlane.xlu0 %42
  %v44 = vsub.f32 %v11, %v22
  %v45 = vsub.f32 %v12, %v25
  %v46 = vsub.f32 %v13, %v28
  %v47 = vsub.f32 %v14, %v31
  %v48 = vsub.f32 %v15, %v34
  %v49 = vsub.f32 %v16, %v37
  %v50 = vsub.f32 %v17, %v40
  %v51 = vsub.f32 %v18, %v43
  %v52 = vmul.f32 %v44, 1.442695
  %v53 = vpow.pop %v52
  %v54 = vmul.f32 %v45, 1.442695
  %v55 = vpow.pop %v54
  %v56 = vmul.f32 %v46, 1.442695
  %v57 = vpow.pop %v56
  %v58 = vmul.f32 %v47, 1.442695
  %v59 = vpow.pop %v58
  %v60 = vmul.f32 %v48, 1.442695
  %v61 = vpow.pop %v60
  %v62 = vmul.f32 %v49, 1.442695
  %v63 = vpow.pop %v62
  %v64 = vmul.f32 %v50, 1.442695
  %v65 = vpow.pop %v64
  %v66 = vmul.f32 %v51, 1.442695
  %v67 = vpow.pop %v66
  %v68 = vsel %vm19, %v53, 0.0
  %69 = vadd.xlane.f32.xlu0 %v68
  %v70 = vpop.xlane.xlu0 %69
  %v71 = vsel %vm19, %v55, 0.0
  %72 = vadd.xlane.f32.xlu0 %v71
  %v73 = vpop.xlane.xlu0 %72
  %v74 = vsel %vm19, %v57, 0.0
  %75 = vadd.xlane.f32.xlu0 %v74
  %v76 = vpop.xlane.xlu0 %75
  %v77 = vsel %vm19, %v59, 0.0
  %78 = vadd.xlane.f32.xlu0 %v77
  %v79 = vpop.xlane.xlu0 %78
  %v80 = vsel %vm19, %v61, 0.0
  %81 = vadd.xlane.f32.xlu0 %v80
  %v82 = vpop.xlane.xlu0 %81
  %v83 = vsel %vm19, %v63, 0.0
  %84 = vadd.xlane.f32.xlu0 %v83
  %v85 = vpop.xlane.xlu0 %84
  %v86 = vsel %vm19, %v65, 0.0
  %87 = vadd.xlane.f32.xlu0 %v86
  %v88 = vpop.xlane.xlu0 %87
  %v89 = vsel %vm19, %v67, 0.0
  %90 = vadd.xlane.f32.xlu0 %v89
  %v91 = vpop.xlane.xlu0 %90
  %v92 = vrcp.pop %v70
  %v93 = vmul.f32 %v53, %v92
  %v94 = vrcp.pop %v73
  %v95 = vmul.f32 %v55, %v94
  %v96 = vrcp.pop %v76
  %v97 = vmul.f32 %v57, %v96
  %v98 = vrcp.pop %v79
  %v99 = vmul.f32 %v59, %v98
  %v100 = vrcp.pop %v82
  %v101 = vmul.f32 %v61, %v100
  %v102 = vrcp.pop %v85
  %v103 = vmul.f32 %v63, %v102
  %v104 = vrcp.pop %v88
  %v105 = vmul.f32 %v65, %v104
  %v106 = vrcp.pop %v91
  %v107 = vmul.f32 %v67, %v106
  %v108 = vld [vmem:[%s1] sm:$0xf]
  %v109 = vld [vmem:[%s1 + $0x4] sm:$0xf]
  %v110 = vld [vmem:[%s1 + $0x8] sm:$0xf]
  %v111 = vld [vmem:[%s1 + $0xc] sm:$0xf]
  %v112 = vld [vmem:[%s1 + $0x10] sm:$0xf]
  %v113 = vld [vmem:[%s1 + $0x14] sm:$0xf]
  %v114 = vld [vmem:[%s1 + $0x18] sm:$0xf]
  %v115 = vld [vmem:[%s1 + $0x1c] sm:$0xf]
  %vm116 = vcmask 31744
  %v118 = vsel %vm116, %v93, 0
  %vm120 = vcmask 1043456
  %v122 = vsel %vm120, %v108, 0
  %124 = vmatprep.subr.mxu0 0.0
  %125 = vmatpush1.msra.mxu0 %v122
  %126 = vmatprep.subr.mxu0 0.0
  %127 = vmatpush1.msra.mxu0 0.0
  %128 = vmatprep.subr.mxu0 0.0
  %129 = vmatpush1.msra.mxu0 0.0
  %130 = vmatprep.subr.mxu0 0.0
  %131 = vmatpush1.msra.mxu0 0.0
  %132 = vmatprep.subr.mxu0 0.0
  %133 = vmatpush1.msra.mxu0 0.0
  %134 = vmatprep.subr.mxu0 0.0
  %135 = vmatpush1.msra.mxu0 0.0
  %136 = vmatprep.subr.mxu0 0.0
  %137 = vmatpush1.msra.mxu0 0.0
  %138 = vmatprep.subr.mxu0 0.0
  %139 = vmatpush1.msra.mxu0 0.0
  %140 = vmatprep.subr.mxu0 0.0
  %141 = vmatpush1.msra.mxu0 0.0
  %142 = vmatprep.subr.mxu0 0.0
  %143 = vmatpush1.msra.mxu0 0.0
  %144 = vmatprep.subr.mxu0 0.0
  %145 = vmatpush1.msra.mxu0 0.0
  %146 = vmatprep.subr.mxu0 0.0
  %147 = vmatpush1.msra.mxu0 0.0
  %148 = vmatprep.subr.mxu0 0.0
  %149 = vmatpush1.msra.mxu0 0.0
  %150 = vmatprep.subr.mxu0 0.0
  %151 = vmatpush1.msra.mxu0 0.0
  %152 = vmatprep.subr.mxu0 0.0
  %153 = vmatpush1.msra.mxu0 0.0
  %154 = vmatprep.subr.mxu0 0.0
  %155 = vmatpush1.msra.mxu0 0.0
  %156 = vmatprep.subr.mxu0 0.0
  %157 = vmatpush1.msra.mxu0 0.0
  %158 = vmatprep.subr.mxu0 0.0
  %159 = vmatpush1.msra.mxu0 0.0
  %160 = vmatprep.subr.mxu0 0.0
  %161 = vmatpush1.msra.mxu0 0.0
  %162 = vmatprep.subr.mxu0 0.0
  %163 = vmatpush1.msra.mxu0 0.0
  %164 = vmatprep.subr.mxu0 0.0
  %165 = vmatpush1.msra.mxu0 0.0
  %166 = vmatprep.subr.mxu0 0.0
  %167 = vmatpush1.msra.mxu0 0.0
  %168 = vmatprep.subr.mxu0 0.0
  %169 = vmatpush1.msra.mxu0 0.0
  %170 = vmatprep.subr.mxu0 0.0
  %171 = vmatpush1.msra.mxu0 0.0
  %172 = vmatprep.subr.mxu0 0.0
  %173 = vmatpush1.msra.mxu0 0.0
  %174 = vmatprep.subr.mxu0 0.0
  %175 = vmatpush1.msra.mxu0 0.0
  %176 = vmatprep.subr.mxu0 0.0
  %177 = vmatpush1.msra.mxu0 0.0
  %178 = vmatprep.subr.mxu0 0.0
  %179 = vmatpush1.msra.mxu0 0.0
  %180 = vmatprep.subr.mxu0 0.0
  %181 = vmatpush1.msra.mxu0 0.0
  %182 = vmatprep.subr.mxu0 0.0
  %183 = vmatpush1.msra.mxu0 0.0
  %184 = vmatprep.subr.mxu0 0.0
  %185 = vmatpush1.msra.mxu0 0.0
  %186 = vmatprep.subr.mxu0 0.0
  %187 = vmatpush1.msra.mxu0 0.0
  %188 = vmatprep.mubr.f32.mxu0 0.0
  %189 = vmatmul.mubr.f32.gmra.mrb[0].mxu0 %v118
  %v190 = vpop.f32.mrb[0].mxu0
  %v191 = vadd.f32 0.0, %v190
  %v192 = vpop.f32.mrb[0].mxu0
  %193 = vdwg.mxu0
  %v195 = vsel %vm116, %v95, 0
  %v198 = vsel %vm120, %v109, 0
  %200 = vmatprep.subr.mxu0 0.0
  %201 = vmatpush1.msra.mxu0 %v198
  %202 = vmatprep.subr.mxu0 0.0
  %203 = vmatpush1.msra.mxu0 0.0
  %204 = vmatprep.subr.mxu0 0.0
  %205 = vmatpush1.msra.mxu0 0.0
  %206 = vmatprep.subr.mxu0 0.0
  %207 = vmatpush1.msra.mxu0 0.0
  %208 = vmatprep.subr.mxu0 0.0
  %209 = vmatpush1.msra.mxu0 0.0
  %210 = vmatprep.subr.mxu0 0.0
  %211 = vmatpush1.msra.mxu0 0.0
  %212 = vmatprep.subr.mxu0 0.0
  %213 = vmatpush1.msra.mxu0 0.0
  %214 = vmatprep.subr.mxu0 0.0
  %215 = vmatpush1.msra.mxu0 0.0
  %216 = vmatprep.subr.mxu0 0.0
  %217 = vmatpush1.msra.mxu0 0.0
  %218 = vmatprep.subr.mxu0 0.0
  %219 = vmatpush1.msra.mxu0 0.0
  %220 = vmatprep.subr.mxu0 0.0
  %221 = vmatpush1.msra.mxu0 0.0
  %222 = vmatprep.subr.mxu0 0.0
  %223 = vmatpush1.msra.mxu0 0.0
  %224 = vmatprep.subr.mxu0 0.0
  %225 = vmatpush1.msra.mxu0 0.0
  %226 = vmatprep.subr.mxu0 0.0
  %227 = vmatpush1.msra.mxu0 0.0
  %228 = vmatprep.subr.mxu0 0.0
  %229 = vmatpush1.msra.mxu0 0.0
  %230 = vmatprep.subr.mxu0 0.0
  %231 = vmatpush1.msra.mxu0 0.0
  %232 = vmatprep.subr.mxu0 0.0
  %233 = vmatpush1.msra.mxu0 0.0
  %234 = vmatprep.subr.mxu0 0.0
  %235 = vmatpush1.msra.mxu0 0.0
  %236 = vmatprep.subr.mxu0 0.0
  %237 = vmatpush1.msra.mxu0 0.0
  %238 = vmatprep.subr.mxu0 0.0
  %239 = vmatpush1.msra.mxu0 0.0
  %240 = vmatprep.subr.mxu0 0.0
  %241 = vmatpush1.msra.mxu0 0.0
  %242 = vmatprep.subr.mxu0 0.0
  %243 = vmatpush1.msra.mxu0 0.0
  %244 = vmatprep.subr.mxu0 0.0
  %245 = vmatpush1.msra.mxu0 0.0
  %246 = vmatprep.subr.mxu0 0.0
  %247 = vmatpush1.msra.mxu0 0.0
  %248 = vmatprep.subr.mxu0 0.0
  %249 = vmatpush1.msra.mxu0 0.0
  %250 = vmatprep.subr.mxu0 0.0
  %251 = vmatpush1.msra.mxu0 0.0
  %252 = vmatprep.subr.mxu0 0.0
  %253 = vmatpush1.msra.mxu0 0.0
  %254 = vmatprep.subr.mxu0 0.0
  %255 = vmatpush1.msra.mxu0 0.0
  %256 = vmatprep.subr.mxu0 0.0
  %257 = vmatpush1.msra.mxu0 0.0
  %258 = vmatprep.subr.mxu0 0.0
  %259 = vmatpush1.msra.mxu0 0.0
  %260 = vmatprep.subr.mxu0 0.0
  %261 = vmatpush1.msra.mxu0 0.0
  %262 = vmatprep.subr.mxu0 0.0
  %263 = vmatpush1.msra.mxu0 0.0
  %264 = vmatprep.mubr.f32.mxu0 0.0
  %265 = vmatmul.mubr.f32.gmra.mrb[0].mxu0 %v195
  %v266 = vpop.f32.mrb[0].mxu0
  %v267 = vadd.f32 0.0, %v266
  %v268 = vpop.f32.mrb[0].mxu0
  %269 = vdwg.mxu0
  %v271 = vsel %vm116, %v97, 0
  %v274 = vsel %vm120, %v110, 0
  %276 = vmatprep.subr.mxu0 0.0
  %277 = vmatpush1.msra.mxu0 %v274
  %278 = vmatprep.subr.mxu0 0.0
  %279 = vmatpush1.msra.mxu0 0.0
  %280 = vmatprep.subr.mxu0 0.0
  %281 = vmatpush1.msra.mxu0 0.0
  %282 = vmatprep.subr.mxu0 0.0
  %283 = vmatpush1.msra.mxu0 0.0
  %284 = vmatprep.subr.mxu0 0.0
  %285 = vmatpush1.msra.mxu0 0.0
  %286 = vmatprep.subr.mxu0 0.0
  %287 = vmatpush1.msra.mxu0 0.0
  %288 = vmatprep.subr.mxu0 0.0
  %289 = vmatpush1.msra.mxu0 0.0
  %290 = vmatprep.subr.mxu0 0.0
  %291 = vmatpush1.msra.mxu0 0.0
  %292 = vmatprep.subr.mxu0 0.0
  %293 = vmatpush1.msra.mxu0 0.0
  %294 = vmatprep.subr.mxu0 0.0
  %295 = vmatpush1.msra.mxu0 0.0
  %296 = vmatprep.subr.mxu0 0.0
  %297 = vmatpush1.msra.mxu0 0.0
  %298 = vmatprep.subr.mxu0 0.0
  %299 = vmatpush1.msra.mxu0 0.0
  %300 = vmatprep.subr.mxu0 0.0
  %301 = vmatpush1.msra.mxu0 0.0
  %302 = vmatprep.subr.mxu0 0.0
  %303 = vmatpush1.msra.mxu0 0.0
  %304 = vmatprep.subr.mxu0 0.0
  %305 = vmatpush1.msra.mxu0 0.0
  %306 = vmatprep.subr.mxu0 0.0
  %307 = vmatpush1.msra.mxu0 0.0
  %308 = vmatprep.subr.mxu0 0.0
  %309 = vmatpush1.msra.mxu0 0.0
  %310 = vmatprep.subr.mxu0 0.0
  %311 = vmatpush1.msra.mxu0 0.0
  %312 = vmatprep.subr.mxu0 0.0
  %313 = vmatpush1.msra.mxu0 0.0
  %314 = vmatprep.subr.mxu0 0.0
  %315 = vmatpush1.msra.mxu0 0.0
  %316 = vmatprep.subr.mxu0 0.0
  %317 = vmatpush1.msra.mxu0 0.0
  %318 = vmatprep.subr.mxu0 0.0
  %319 = vmatpush1.msra.mxu0 0.0
  %320 = vmatprep.subr.mxu0 0.0
  %321 = vmatpush1.msra.mxu0 0.0
  %322 = vmatprep.subr.mxu0 0.0
  %323 = vmatpush1.msra.mxu0 0.0
  %324 = vmatprep.subr.mxu0 0.0
  %325 = vmatpush1.msra.mxu0 0.0
  %326 = vmatprep.subr.mxu0 0.0
  %327 = vmatpush1.msra.mxu0 0.0
  %328 = vmatprep.subr.mxu0 0.0
  %329 = vmatpush1.msra.mxu0 0.0
  %330 = vmatprep.subr.mxu0 0.0
  %331 = vmatpush1.msra.mxu0 0.0
  %332 = vmatprep.subr.mxu0 0.0
  %333 = vmatpush1.msra.mxu0 0.0
  %334 = vmatprep.subr.mxu0 0.0
  %335 = vmatpush1.msra.mxu0 0.0
  %336 = vmatprep.subr.mxu0 0.0
  %337 = vmatpush1.msra.mxu0 0.0
  %338 = vmatprep.subr.mxu0 0.0
  %339 = vmatpush1.msra.mxu0 0.0
  %340 = vmatprep.mubr.f32.mxu0 0.0
  %341 = vmatmul.mubr.f32.gmra.mrb[0].mxu0 %v271
  %v342 = vpop.f32.mrb[0].mxu0
  %v343 = vadd.f32 0.0, %v342
  %v344 = vpop.f32.mrb[0].mxu0
  %345 = vdwg.mxu0
  %v347 = vsel %vm116, %v99, 0
  %v350 = vsel %vm120, %v111, 0
  %352 = vmatprep.subr.mxu0 0.0
  %353 = vmatpush1.msra.mxu0 %v350
  %354 = vmatprep.subr.mxu0 0.0
  %355 = vmatpush1.msra.mxu0 0.0
  %356 = vmatprep.subr.mxu0 0.0
  %357 = vmatpush1.msra.mxu0 0.0
  %358 = vmatprep.subr.mxu0 0.0
  %359 = vmatpush1.msra.mxu0 0.0
  %360 = vmatprep.subr.mxu0 0.0
  %361 = vmatpush1.msra.mxu0 0.0
  %362 = vmatprep.subr.mxu0 0.0
  %363 = vmatpush1.msra.mxu0 0.0
  %364 = vmatprep.subr.mxu0 0.0
  %365 = vmatpush1.msra.mxu0 0.0
  %366 = vmatprep.subr.mxu0 0.0
  %367 = vmatpush1.msra.mxu0 0.0
  %368 = vmatprep.subr.mxu0 0.0
  %369 = vmatpush1.msra.mxu0 0.0
  %370 = vmatprep.subr.mxu0 0.0
  %371 = vmatpush1.msra.mxu0 0.0
  %372 = vmatprep.subr.mxu0 0.0
  %373 = vmatpush1.msra.mxu0 0.0
  %374 = vmatprep.subr.mxu0 0.0
  %375 = vmatpush1.msra.mxu0 0.0
  %376 = vmatprep.subr.mxu0 0.0
  %377 = vmatpush1.msra.mxu0 0.0
  %378 = vmatprep.subr.mxu0 0.0
  %379 = vmatpush1.msra.mxu0 0.0
  %380 = vmatprep.subr.mxu0 0.0
  %381 = vmatpush1.msra.mxu0 0.0
  %382 = vmatprep.subr.mxu0 0.0
  %383 = vmatpush1.msra.mxu0 0.0
  %384 = vmatprep.subr.mxu0 0.0
  %385 = vmatpush1.msra.mxu0 0.0
  %386 = vmatprep.subr.mxu0 0.0
  %387 = vmatpush1.msra.mxu0 0.0
  %388 = vmatprep.subr.mxu0 0.0
  %389 = vmatpush1.msra.mxu0 0.0
  %390 = vmatprep.subr.mxu0 0.0
  %391 = vmatpush1.msra.mxu0 0.0
  %392 = vmatprep.subr.mxu0 0.0
  %393 = vmatpush1.msra.mxu0 0.0
  %394 = vmatprep.subr.mxu0 0.0
  %395 = vmatpush1.msra.mxu0 0.0
  %396 = vmatprep.subr.mxu0 0.0
  %397 = vmatpush1.msra.mxu0 0.0
  %398 = vmatprep.subr.mxu0 0.0
  %399 = vmatpush1.msra.mxu0 0.0
  %400 = vmatprep.subr.mxu0 0.0
  %401 = vmatpush1.msra.mxu0 0.0
  %402 = vmatprep.subr.mxu0 0.0
  %403 = vmatpush1.msra.mxu0 0.0
  %404 = vmatprep.subr.mxu0 0.0
  %405 = vmatpush1.msra.mxu0 0.0
  %406 = vmatprep.subr.mxu0 0.0
  %407 = vmatpush1.msra.mxu0 0.0
  %408 = vmatprep.subr.mxu0 0.0
  %409 = vmatpush1.msra.mxu0 0.0
  %410 = vmatprep.subr.mxu0 0.0
  %411 = vmatpush1.msra.mxu0 0.0
  %412 = vmatprep.subr.mxu0 0.0
  %413 = vmatpush1.msra.mxu0 0.0
  %414 = vmatprep.subr.mxu0 0.0
  %415 = vmatpush1.msra.mxu0 0.0
  %416 = vmatprep.mubr.f32.mxu0 0.0
  %417 = vmatmul.mubr.f32.gmra.mrb[0].mxu0 %v347
  %v418 = vpop.f32.mrb[0].mxu0
  %v419 = vadd.f32 0.0, %v418
  %v420 = vpop.f32.mrb[0].mxu0
  %421 = vdwg.mxu0
  %v423 = vsel %vm116, %v101, 0
  %v426 = vsel %vm120, %v112, 0
  %428 = vmatprep.subr.mxu0 0.0
  %429 = vmatpush1.msra.mxu0 %v426
  %430 = vmatprep.subr.mxu0 0.0
  %431 = vmatpush1.msra.mxu0 0.0
  %432 = vmatprep.subr.mxu0 0.0
  %433 = vmatpush1.msra.mxu0 0.0
  %434 = vmatprep.subr.mxu0 0.0
  %435 = vmatpush1.msra.mxu0 0.0
  %436 = vmatprep.subr.mxu0 0.0
  %437 = vmatpush1.msra.mxu0 0.0
  %438 = vmatprep.subr.mxu0 0.0
  %439 = vmatpush1.msra.mxu0 0.0
  %440 = vmatprep.subr.mxu0 0.0
  %441 = vmatpush1.msra.mxu0 0.0
  %442 = vmatprep.subr.mxu0 0.0
  %443 = vmatpush1.msra.mxu0 0.0
  %444 = vmatprep.subr.mxu0 0.0
  %445 = vmatpush1.msra.mxu0 0.0
  %446 = vmatprep.subr.mxu0 0.0
  %447 = vmatpush1.msra.mxu0 0.0
  %448 = vmatprep.subr.mxu0 0.0
  %449 = vmatpush1.msra.mxu0 0.0
  %450 = vmatprep.subr.mxu0 0.0
  %451 = vmatpush1.msra.mxu0 0.0
  %452 = vmatprep.subr.mxu0 0.0
  %453 = vmatpush1.msra.mxu0 0.0
  %454 = vmatprep.subr.mxu0 0.0
  %455 = vmatpush1.msra.mxu0 0.0
  %456 = vmatprep.subr.mxu0 0.0
  %457 = vmatpush1.msra.mxu0 0.0
  %458 = vmatprep.subr.mxu0 0.0
  %459 = vmatpush1.msra.mxu0 0.0
  %460 = vmatprep.subr.mxu0 0.0
  %461 = vmatpush1.msra.mxu0 0.0
  %462 = vmatprep.subr.mxu0 0.0
  %463 = vmatpush1.msra.mxu0 0.0
  %464 = vmatprep.subr.mxu0 0.0
  %465 = vmatpush1.msra.mxu0 0.0
  %466 = vmatprep.subr.mxu0 0.0
  %467 = vmatpush1.msra.mxu0 0.0
  %468 = vmatprep.subr.mxu0 0.0
  %469 = vmatpush1.msra.mxu0 0.0
  %470 = vmatprep.subr.mxu0 0.0
  %471 = vmatpush1.msra.mxu0 0.0
  %472 = vmatprep.subr.mxu0 0.0
  %473 = vmatpush1.msra.mxu0 0.0
  %474 = vmatprep.subr.mxu0 0.0
  %475 = vmatpush1.msra.mxu0 0.0
  %476 = vmatprep.subr.mxu0 0.0
  %477 = vmatpush1.msra.mxu0 0.0
  %478 = vmatprep.subr.mxu0 0.0
  %479 = vmatpush1.msra.mxu0 0.0
  %480 = vmatprep.subr.mxu0 0.0
  %481 = vmatpush1.msra.mxu0 0.0
  %482 = vmatprep.subr.mxu0 0.0
  %483 = vmatpush1.msra.mxu0 0.0
  %484 = vmatprep.subr.mxu0 0.0
  %485 = vmatpush1.msra.mxu0 0.0
  %486 = vmatprep.subr.mxu0 0.0
  %487 = vmatpush1.msra.mxu0 0.0
  %488 = vmatprep.subr.mxu0 0.0
  %489 = vmatpush1.msra.mxu0 0.0
  %490 = vmatprep.subr.mxu0 0.0
  %491 = vmatpush1.msra.mxu0 0.0
  %492 = vmatprep.mubr.f32.mxu0 0.0
  %493 = vmatmul.mubr.f32.gmra.mrb[0].mxu0 %v423
  %v494 = vpop.f32.mrb[0].mxu0
  %v495 = vadd.f32 0.0, %v494
  %v496 = vpop.f32.mrb[0].mxu0
  %497 = vdwg.mxu0
  %v499 = vsel %vm116, %v103, 0
  %v502 = vsel %vm120, %v113, 0
  %504 = vmatprep.subr.mxu0 0.0
  %505 = vmatpush1.msra.mxu0 %v502
  %506 = vmatprep.subr.mxu0 0.0
  %507 = vmatpush1.msra.mxu0 0.0
  %508 = vmatprep.subr.mxu0 0.0
  %509 = vmatpush1.msra.mxu0 0.0
  %510 = vmatprep.subr.mxu0 0.0
  %511 = vmatpush1.msra.mxu0 0.0
  %512 = vmatprep.subr.mxu0 0.0
  %513 = vmatpush1.msra.mxu0 0.0
  %514 = vmatprep.subr.mxu0 0.0
  %515 = vmatpush1.msra.mxu0 0.0
  %516 = vmatprep.subr.mxu0 0.0
  %517 = vmatpush1.msra.mxu0 0.0
  %518 = vmatprep.subr.mxu0 0.0
  %519 = vmatpush1.msra.mxu0 0.0
  %520 = vmatprep.subr.mxu0 0.0
  %521 = vmatpush1.msra.mxu0 0.0
  %522 = vmatprep.subr.mxu0 0.0
  %523 = vmatpush1.msra.mxu0 0.0
  %524 = vmatprep.subr.mxu0 0.0
  %525 = vmatpush1.msra.mxu0 0.0
  %526 = vmatprep.subr.mxu0 0.0
  %527 = vmatpush1.msra.mxu0 0.0
  %528 = vmatprep.subr.mxu0 0.0
  %529 = vmatpush1.msra.mxu0 0.0
  %530 = vmatprep.subr.mxu0 0.0
  %531 = vmatpush1.msra.mxu0 0.0
  %532 = vmatprep.subr.mxu0 0.0
  %533 = vmatpush1.msra.mxu0 0.0
  %534 = vmatprep.subr.mxu0 0.0
  %535 = vmatpush1.msra.mxu0 0.0
  %536 = vmatprep.subr.mxu0 0.0
  %537 = vmatpush1.msra.mxu0 0.0
  %538 = vmatprep.subr.mxu0 0.0
  %539 = vmatpush1.msra.mxu0 0.0
  %540 = vmatprep.subr.mxu0 0.0
  %541 = vmatpush1.msra.mxu0 0.0
  %542 = vmatprep.subr.mxu0 0.0
  %543 = vmatpush1.msra.mxu0 0.0
  %544 = vmatprep.subr.mxu0 0.0
  %545 = vmatpush1.msra.mxu0 0.0
  %546 = vmatprep.subr.mxu0 0.0
  %547 = vmatpush1.msra.mxu0 0.0
  %548 = vmatprep.subr.mxu0 0.0
  %549 = vmatpush1.msra.mxu0 0.0
  %550 = vmatprep.subr.mxu0 0.0
  %551 = vmatpush1.msra.mxu0 0.0
  %552 = vmatprep.subr.mxu0 0.0
  %553 = vmatpush1.msra.mxu0 0.0
  %554 = vmatprep.subr.mxu0 0.0
  %555 = vmatpush1.msra.mxu0 0.0
  %556 = vmatprep.subr.mxu0 0.0
  %557 = vmatpush1.msra.mxu0 0.0
  %558 = vmatprep.subr.mxu0 0.0
  %559 = vmatpush1.msra.mxu0 0.0
  %560 = vmatprep.subr.mxu0 0.0
  %561 = vmatpush1.msra.mxu0 0.0
  %562 = vmatprep.subr.mxu0 0.0
  %563 = vmatpush1.msra.mxu0 0.0
  %564 = vmatprep.subr.mxu0 0.0
  %565 = vmatpush1.msra.mxu0 0.0
  %566 = vmatprep.subr.mxu0 0.0
  %567 = vmatpush1.msra.mxu0 0.0
  %568 = vmatprep.mubr.f32.mxu0 0.0
  %569 = vmatmul.mubr.f32.gmra.mrb[0].mxu0 %v499
  %v570 = vpop.f32.mrb[0].mxu0
  %v571 = vadd.f32 0.0, %v570
  %v572 = vpop.f32.mrb[0].mxu0
  %573 = vdwg.mxu0
  %v575 = vsel %vm116, %v105, 0
  %v578 = vsel %vm120, %v114, 0
  %580 = vmatprep.subr.mxu0 0.0
  %581 = vmatpush1.msra.mxu0 %v578
  %582 = vmatprep.subr.mxu0 0.0
  %583 = vmatpush1.msra.mxu0 0.0
  %584 = vmatprep.subr.mxu0 0.0
  %585 = vmatpush1.msra.mxu0 0.0
  %586 = vmatprep.subr.mxu0 0.0
  %587 = vmatpush1.msra.mxu0 0.0
  %588 = vmatprep.subr.mxu0 0.0
  %589 = vmatpush1.msra.mxu0 0.0
  %590 = vmatprep.subr.mxu0 0.0
  %591 = vmatpush1.msra.mxu0 0.0
  %592 = vmatprep.subr.mxu0 0.0
  %593 = vmatpush1.msra.mxu0 0.0
  %594 = vmatprep.subr.mxu0 0.0
  %595 = vmatpush1.msra.mxu0 0.0
  %596 = vmatprep.subr.mxu0 0.0
  %597 = vmatpush1.msra.mxu0 0.0
  %598 = vmatprep.subr.mxu0 0.0
  %599 = vmatpush1.msra.mxu0 0.0
  %600 = vmatprep.subr.mxu0 0.0
  %601 = vmatpush1.msra.mxu0 0.0
  %602 = vmatprep.subr.mxu0 0.0
  %603 = vmatpush1.msra.mxu0 0.0
  %604 = vmatprep.subr.mxu0 0.0
  %605 = vmatpush1.msra.mxu0 0.0
  %606 = vmatprep.subr.mxu0 0.0
  %607 = vmatpush1.msra.mxu0 0.0
  %608 = vmatprep.subr.mxu0 0.0
  %609 = vmatpush1.msra.mxu0 0.0
  %610 = vmatprep.subr.mxu0 0.0
  %611 = vmatpush1.msra.mxu0 0.0
  %612 = vmatprep.subr.mxu0 0.0
  %613 = vmatpush1.msra.mxu0 0.0
  %614 = vmatprep.subr.mxu0 0.0
  %615 = vmatpush1.msra.mxu0 0.0
  %616 = vmatprep.subr.mxu0 0.0
  %617 = vmatpush1.msra.mxu0 0.0
  %618 = vmatprep.subr.mxu0 0.0
  %619 = vmatpush1.msra.mxu0 0.0
  %620 = vmatprep.subr.mxu0 0.0
  %621 = vmatpush1.msra.mxu0 0.0
  %622 = vmatprep.subr.mxu0 0.0
  %623 = vmatpush1.msra.mxu0 0.0
  %624 = vmatprep.subr.mxu0 0.0
  %625 = vmatpush1.msra.mxu0 0.0
  %626 = vmatprep.subr.mxu0 0.0
  %627 = vmatpush1.msra.mxu0 0.0
  %628 = vmatprep.subr.mxu0 0.0
  %629 = vmatpush1.msra.mxu0 0.0
  %630 = vmatprep.subr.mxu0 0.0
  %631 = vmatpush1.msra.mxu0 0.0
  %632 = vmatprep.subr.mxu0 0.0
  %633 = vmatpush1.msra.mxu0 0.0
  %634 = vmatprep.subr.mxu0 0.0
  %635 = vmatpush1.msra.mxu0 0.0
  %636 = vmatprep.subr.mxu0 0.0
  %637 = vmatpush1.msra.mxu0 0.0
  %638 = vmatprep.subr.mxu0 0.0
  %639 = vmatpush1.msra.mxu0 0.0
  %640 = vmatprep.subr.mxu0 0.0
  %641 = vmatpush1.msra.mxu0 0.0
  %642 = vmatprep.subr.mxu0 0.0
  %643 = vmatpush1.msra.mxu0 0.0
  %644 = vmatprep.mubr.f32.mxu0 0.0
  %645 = vmatmul.mubr.f32.gmra.mrb[0].mxu0 %v575
  %v646 = vpop.f32.mrb[0].mxu0
  %v647 = vadd.f32 0.0, %v646
  %v648 = vpop.f32.mrb[0].mxu0
  %649 = vdwg.mxu0
  %v651 = vsel %vm116, %v107, 0
  %v654 = vsel %vm120, %v115, 0
  %656 = vmatprep.subr.mxu0 0.0
  %657 = vmatpush1.msra.mxu0 %v654
  %658 = vmatprep.subr.mxu0 0.0
  %659 = vmatpush1.msra.mxu0 0.0
  %660 = vmatprep.subr.mxu0 0.0
  %661 = vmatpush1.msra.mxu0 0.0
  %662 = vmatprep.subr.mxu0 0.0
  %663 = vmatpush1.msra.mxu0 0.0
  %664 = vmatprep.subr.mxu0 0.0
  %665 = vmatpush1.msra.mxu0 0.0
  %666 = vmatprep.subr.mxu0 0.0
  %667 = vmatpush1.msra.mxu0 0.0
  %668 = vmatprep.subr.mxu0 0.0
  %669 = vmatpush1.msra.mxu0 0.0
  %670 = vmatprep.subr.mxu0 0.0
  %671 = vmatpush1.msra.mxu0 0.0
  %672 = vmatprep.subr.mxu0 0.0
  %673 = vmatpush1.msra.mxu0 0.0
  %674 = vmatprep.subr.mxu0 0.0
  %675 = vmatpush1.msra.mxu0 0.0
  %676 = vmatprep.subr.mxu0 0.0
  %677 = vmatpush1.msra.mxu0 0.0
  %678 = vmatprep.subr.mxu0 0.0
  %679 = vmatpush1.msra.mxu0 0.0
  %680 = vmatprep.subr.mxu0 0.0
  %681 = vmatpush1.msra.mxu0 0.0
  %682 = vmatprep.subr.mxu0 0.0
  %683 = vmatpush1.msra.mxu0 0.0
  %684 = vmatprep.subr.mxu0 0.0
  %685 = vmatpush1.msra.mxu0 0.0
  %686 = vmatprep.subr.mxu0 0.0
  %687 = vmatpush1.msra.mxu0 0.0
  %688 = vmatprep.subr.mxu0 0.0
  %689 = vmatpush1.msra.mxu0 0.0
  %690 = vmatprep.subr.mxu0 0.0
  %691 = vmatpush1.msra.mxu0 0.0
  %692 = vmatprep.subr.mxu0 0.0
  %693 = vmatpush1.msra.mxu0 0.0
  %694 = vmatprep.subr.mxu0 0.0
  %695 = vmatpush1.msra.mxu0 0.0
  %696 = vmatprep.subr.mxu0 0.0
  %697 = vmatpush1.msra.mxu0 0.0
  %698 = vmatprep.subr.mxu0 0.0
  %699 = vmatpush1.msra.mxu0 0.0
  %700 = vmatprep.subr.mxu0 0.0
  %701 = vmatpush1.msra.mxu0 0.0
  %702 = vmatprep.subr.mxu0 0.0
  %703 = vmatpush1.msra.mxu0 0.0
  %704 = vmatprep.subr.mxu0 0.0
  %705 = vmatpush1.msra.mxu0 0.0
  %706 = vmatprep.subr.mxu0 0.0
  %707 = vmatpush1.msra.mxu0 0.0
  %708 = vmatprep.subr.mxu0 0.0
  %709 = vmatpush1.msra.mxu0 0.0
  %710 = vmatprep.subr.mxu0 0.0
  %711 = vmatpush1.msra.mxu0 0.0
  %712 = vmatprep.subr.mxu0 0.0
  %713 = vmatpush1.msra.mxu0 0.0
  %714 = vmatprep.subr.mxu0 0.0
  %715 = vmatpush1.msra.mxu0 0.0
  %716 = vmatprep.subr.mxu0 0.0
  %717 = vmatpush1.msra.mxu0 0.0
  %718 = vmatprep.subr.mxu0 0.0
  %719 = vmatpush1.msra.mxu0 0.0
  %720 = vmatprep.mubr.f32.mxu0 0.0
  %721 = vmatmul.mubr.f32.gmra.mrb[0].mxu0 %v651
  %v722 = vpop.f32.mrb[0].mxu0
  %v723 = vadd.f32 0.0, %v722
  %v724 = vpop.f32.mrb[0].mxu0
  %725 = vdwg.mxu0
  %vm726 = vcmask 516096
  %727 = vst.msk [vmem:[%s2] sm:$0x1] %vm726, %v191
  %728 = vst.msk [vmem:[%s2 + $0x1] sm:$0x1] %vm726, %v267
  %729 = vst.msk [vmem:[%s2 + $0x2] sm:$0x1] %vm726, %v343
  %730 = vst.msk [vmem:[%s2 + $0x3] sm:$0x1] %vm726, %v419
  %731 = vst.msk [vmem:[%s2 + $0x4] sm:$0x1] %vm726, %v495
  %732 = vst.msk [vmem:[%s2 + $0x5] sm:$0x1] %vm726, %v571
  %733 = vst.msk [vmem:[%s2 + $0x6] sm:$0x1] %vm726, %v647
  %734 = vst.msk [vmem:[%s2 + $0x7] sm:$0x1] %vm726, %v723
  // Predicated region
  $region10: #{_lambda_.32} parent=0 // pred_check
    _
  $region11: #{_lambda_.32} parent=0 // pred_check_branch
    %736 = sbr.rel (0) target = $region13
  $region12: #{_lambda_.32} parent=0 // pred_region
    _
  $region13: #{_lambda_.32} parent=0 // pred_fallthru
    _
  // Predicated region
  $region14: #{_lambda_.32} parent=0 // pred_check
    _
  $region15: #{_lambda_.32} parent=0 // pred_check_branch
    %738 = sbr.rel (0) target = $region17
  $region16: #{_lambda_.32} parent=0 // pred_region
    _
  $region17: #{_lambda_.32} parent=0 // pred_fallthru
    _

// kernel: _lambda_.45
$region0: #{_lambda_.45}
  #allocation0 [shape = 'u32[]', space=smem, size = 0x4, offset = 0x4, fixed_abs, tag = 'smem constant byte address 0x4 - core index']
  #allocation1 [shape = 'u32[144,128]{1,0:T(1,128)}', space=vmem, size = 0x12000, scoped, tag = 'internal scratch']
  %s0 = inlined_call_operand.vmem [shape: f32[8,1,4], index: 0, kind: input, shape index: {}]
  %s1 = inlined_call_operand.vmem [shape: f32[8,1,1], index: 1, kind: input, shape index: {}]
  %s2 = inlined_call_operand.vmem [shape: f32[8,4,128], index: 2, kind: input, shape index: {}]
  %s3 = inlined_call_operand.vmem [shape: f32[8,1,128], index: 3, kind: input, shape index: {}]
  %s4 = inlined_call_operand.vmem [shape: f32[8,4,32], index: 4, kind: input, shape index: {}]
  %s5 = inlined_call_operand.vmem [shape: f32[8,1,32], index: 5, kind: output, shape index: {}]
  %s6 = sld [smem:[#allocation0]]
  $region30: #{_lambda_.45} parent=0
    _
  %s8 = ssub.s32 1, %s6
  %s9 = scalar_select 0, %s8, %s6
  // Predicated region
  $region2: #{_lambda_.45} parent=0 // pred_check
    _
  $region3: #{_lambda_.45} parent=0 // pred_check_branch
    %11 = sbr.rel (0) target = $region5
  $region4: #{_lambda_.45} parent=0 // pred_region
    _
  $region5: #{_lambda_.45} parent=0 // pred_fallthru
    _
  // Predicated region
  $region6: #{_lambda_.45} parent=0 // pred_check
    _
  $region7: #{_lambda_.45} parent=0 // pred_check_branch
    %13 = sbr.rel (0) target = $region9
  $region8: #{_lambda_.45} parent=0 // pred_region
    _
  $region9: #{_lambda_.45} parent=0 // pred_fallthru
    _
  // Predicated region
  $region10: #{_lambda_.45} parent=0 // pred_check
    _
  $region11: #{_lambda_.45} parent=0 // pred_check_branch
    %15 = sbr.rel (0) target = $region13
  $region12: #{_lambda_.45} parent=0 // pred_region
    _
  $region13: #{_lambda_.45} parent=0 // pred_fallthru
    _
  // Predicated region
  $region14: #{_lambda_.45} parent=0 // pred_check
    _
  $region15: #{_lambda_.45} parent=0 // pred_check_branch
    %17 = sbr.rel (0) target = $region17
  $region16: #{_lambda_.45} parent=0 // pred_region
    _
  $region17: #{_lambda_.45} parent=0 // pred_fallthru
    _
  // Predicated region
  $region18: #{_lambda_.45} parent=0 // pred_check
    _
  $region19: #{_lambda_.45} parent=0 // pred_check_branch
    %19 = sbr.rel (0) target = $region21
  $region20: #{_lambda_.45} parent=0 // pred_region
    _
  $region21: #{_lambda_.45} parent=0 // pred_fallthru
    _
  %v20 = vld [vmem:[%s2] sm:$0xf]
  %v21 = vld [vmem:[%s2 + $0x4] sm:$0xf]
  %v22 = vld [vmem:[%s2 + $0x8] sm:$0xf]
  %v23 = vld [vmem:[%s2 + $0xc] sm:$0xf]
  %v24 = vld [vmem:[%s2 + $0x10] sm:$0xf]
  %v25 = vld [vmem:[%s2 + $0x14] sm:$0xf]
  %v26 = vld [vmem:[%s2 + $0x18] sm:$0xf]
  %v27 = vld [vmem:[%s2 + $0x1c] sm:$0xf]
  %v28 = vld [vmem:[%s3] sm:$0x1]
  %v29 = vld [vmem:[%s3 + $0x1] sm:$0x1]
  %v30 = vld [vmem:[%s3 + $0x2] sm:$0x1]
  %v31 = vld [vmem:[%s3 + $0x3] sm:$0x1]
  %v32 = vld [vmem:[%s3 + $0x4] sm:$0x1]
  %v33 = vld [vmem:[%s3 + $0x5] sm:$0x1]
  %v34 = vld [vmem:[%s3 + $0x6] sm:$0x1]
  %v35 = vld [vmem:[%s3 + $0x7] sm:$0x1]
  %v44 = vlaneseq
  %v45 = vshrl.u32 %v44, 7
  %v46 = vsub.s32 0, %v45
  %v47 = vrot.slane %v28, %v46
  %v48 = vlaneseq
  %v49 = vshrl.u32 %v48, 7
  %v50 = vsub.s32 0, %v49
  %v51 = vrot.slane %v29, %v50
  %v52 = vlaneseq
  %v53 = vshrl.u32 %v52, 7
  %v54 = vsub.s32 0, %v53
  %v55 = vrot.slane %v30, %v54
  %v56 = vlaneseq
  %v57 = vshrl.u32 %v56, 7
  %v58 = vsub.s32 0, %v57
  %v59 = vrot.slane %v31, %v58
  %v60 = vlaneseq
  %v61 = vshrl.u32 %v60, 7
  %v62 = vsub.s32 0, %v61
  %v63 = vrot.slane %v32, %v62
  %v64 = vlaneseq
  %v65 = vshrl.u32 %v64, 7
  %v66 = vsub.s32 0, %v65
  %v67 = vrot.slane %v33, %v66
  %v68 = vlaneseq
  %v69 = vshrl.u32 %v68, 7
  %v70 = vsub.s32 0, %v69
  %v71 = vrot.slane %v34, %v70
  %v72 = vlaneseq
  %v73 = vshrl.u32 %v72, 7
  %v74 = vsub.s32 0, %v73
  %v75 = vrot.slane %v35, %v74
  %84 = vmatprep.subr.mxu0 0.0
  %85 = vmatpush1.xpose.msra.mxu0 %v47
  %86 = vmatprep.subr.mxu0 0.0
  %87 = vmatpush1.xpose.msra.mxu0 0.0
  %88 = vmatprep.subr.mxu0 0.0
  %89 = vmatpush1.xpose.msra.mxu0 0.0
  %90 = vmatprep.subr.mxu0 0.0
  %91 = vmatpush1.xpose.msra.mxu0 0.0
  %92 = vmatprep.subr.mxu0 0.0
  %93 = vmatpush1.xpose.msra.mxu0 0.0
  %94 = vmatprep.subr.mxu0 0.0
  %95 = vmatpush1.xpose.msra.mxu0 0.0
  %96 = vmatprep.subr.mxu0 0.0
  %97 = vmatpush1.xpose.msra.mxu0 0.0
  %98 = vmatprep.subr.mxu0 0.0
  %99 = vmatpush1.xpose.msra.mxu0 0.0
  %100 = vmatprep.subr.mxu0 0.0
  %101 = vmatpush1.xpose.msra.mxu0 0.0
  %102 = vmatprep.subr.mxu0 0.0
  %103 = vmatpush1.xpose.msra.mxu0 0.0
  %104 = vmatprep.subr.mxu0 0.0
  %105 = vmatpush1.xpose.msra.mxu0 0.0
  %106 = vmatprep.subr.mxu0 0.0
  %107 = vmatpush1.xpose.msra.mxu0 0.0
  %108 = vmatprep.subr.mxu0 0.0
  %109 = vmatpush1.xpose.msra.mxu0 0.0
  %110 = vmatprep.subr.mxu0 0.0
  %111 = vmatpush1.xpose.msra.mxu0 0.0
  %112 = vmatprep.subr.mxu0 0.0
  %113 = vmatpush1.xpose.msra.mxu0 0.0
  %114 = vmatprep.subr.mxu0 0.0
  %115 = vmatpush1.xpose.msra.mxu0 0.0
  %116 = vmatprep.subr.mxu0 0.0
  %117 = vmatpush1.xpose.msra.mxu0 0.0
  %118 = vmatprep.subr.mxu0 0.0
  %119 = vmatpush1.xpose.msra.mxu0 0.0
  %120 = vmatprep.subr.mxu0 0.0
  %121 = vmatpush1.xpose.msra.mxu0 0.0
  %122 = vmatprep.subr.mxu0 0.0
  %123 = vmatpush1.xpose.msra.mxu0 0.0
  %124 = vmatprep.subr.mxu0 0.0
  %125 = vmatpush1.xpose.msra.mxu0 0.0
  %126 = vmatprep.subr.mxu0 0.0
  %127 = vmatpush1.xpose.msra.mxu0 0.0
  %128 = vmatprep.subr.mxu0 0.0
  %129 = vmatpush1.xpose.msra.mxu0 0.0
  %130 = vmatprep.subr.mxu0 0.0
  %131 = vmatpush1.xpose.msra.mxu0 0.0
  %132 = vmatprep.subr.mxu0 0.0
  %133 = vmatpush1.xpose.msra.mxu0 0.0
  %134 = vmatprep.subr.mxu0 0.0
  %135 = vmatpush1.xpose.msra.mxu0 0.0
  %136 = vmatprep.subr.mxu0 0.0
  %137 = vmatpush1.xpose.msra.mxu0 0.0
  %138 = vmatprep.subr.mxu0 0.0
  %139 = vmatpush1.xpose.msra.mxu0 0.0
  %140 = vmatprep.subr.mxu0 0.0
  %141 = vmatpush1.xpose.msra.mxu0 0.0
  %142 = vmatprep.subr.mxu0 0.0
  %143 = vmatpush1.xpose.msra.mxu0 0.0
  %144 = vmatprep.subr.mxu0 0.0
  %145 = vmatpush1.xpose.msra.mxu0 0.0
  %146 = vmatprep.subr.mxu0 0.0
  %147 = vmatpush1.xpose.msra.mxu0 0.0
  %148 = vmatprep.mubr.f32.mxu0 0.0
  %149 = vmatmul.mubr.f32.gmra.mrb[0].mxu0 %v20
  %v150 = vpop.f32.mrb[0].mxu0
  %v151 = vadd.f32 0.0, %v150
  %v152 = vpop.f32.mrb[0].mxu0
  %153 = vdwg.mxu0
  %154 = vmatprep.subr.mxu0 0.0
  %155 = vmatpush1.xpose.msra.mxu0 %v51
  %156 = vmatprep.subr.mxu0 0.0
  %157 = vmatpush1.xpose.msra.mxu0 0.0
  %158 = vmatprep.subr.mxu0 0.0
  %159 = vmatpush1.xpose.msra.mxu0 0.0
  %160 = vmatprep.subr.mxu0 0.0
  %161 = vmatpush1.xpose.msra.mxu0 0.0
  %162 = vmatprep.subr.mxu0 0.0
  %163 = vmatpush1.xpose.msra.mxu0 0.0
  %164 = vmatprep.subr.mxu0 0.0
  %165 = vmatpush1.xpose.msra.mxu0 0.0
  %166 = vmatprep.subr.mxu0 0.0
  %167 = vmatpush1.xpose.msra.mxu0 0.0
  %168 = vmatprep.subr.mxu0 0.0
  %169 = vmatpush1.xpose.msra.mxu0 0.0
  %170 = vmatprep.subr.mxu0 0.0
  %171 = vmatpush1.xpose.msra.mxu0 0.0
  %172 = vmatprep.subr.mxu0 0.0
  %173 = vmatpush1.xpose.msra.mxu0 0.0
  %174 = vmatprep.subr.mxu0 0.0
  %175 = vmatpush1.xpose.msra.mxu0 0.0
  %176 = vmatprep.subr.mxu0 0.0
  %177 = vmatpush1.xpose.msra.mxu0 0.0
  %178 = vmatprep.subr.mxu0 0.0
  %179 = vmatpush1.xpose.msra.mxu0 0.0
  %180 = vmatprep.subr.mxu0 0.0
  %181 = vmatpush1.xpose.msra.mxu0 0.0
  %182 = vmatprep.subr.mxu0 0.0
  %183 = vmatpush1.xpose.msra.mxu0 0.0
  %184 = vmatprep.subr.mxu0 0.0
  %185 = vmatpush1.xpose.msra.mxu0 0.0
  %186 = vmatprep.subr.mxu0 0.0
  %187 = vmatpush1.xpose.msra.mxu0 0.0
  %188 = vmatprep.subr.mxu0 0.0
  %189 = vmatpush1.xpose.msra.mxu0 0.0
  %190 = vmatprep.subr.mxu0 0.0
  %191 = vmatpush1.xpose.msra.mxu0 0.0
  %192 = vmatprep.subr.mxu0 0.0
  %193 = vmatpush1.xpose.msra.mxu0 0.0
  %194 = vmatprep.subr.mxu0 0.0
  %195 = vmatpush1.xpose.msra.mxu0 0.0
  %196 = vmatprep.subr.mxu0 0.0
  %197 = vmatpush1.xpose.msra.mxu0 0.0
  %198 = vmatprep.subr.mxu0 0.0
  %199 = vmatpush1.xpose.msra.mxu0 0.0
  %200 = vmatprep.subr.mxu0 0.0
  %201 = vmatpush1.xpose.msra.mxu0 0.0
  %202 = vmatprep.subr.mxu0 0.0
  %203 = vmatpush1.xpose.msra.mxu0 0.0
  %204 = vmatprep.subr.mxu0 0.0
  %205 = vmatpush1.xpose.msra.mxu0 0.0
  %206 = vmatprep.subr.mxu0 0.0
  %207 = vmatpush1.xpose.msra.mxu0 0.0
  %208 = vmatprep.subr.mxu0 0.0
  %209 = vmatpush1.xpose.msra.mxu0 0.0
  %210 = vmatprep.subr.mxu0 0.0
  %211 = vmatpush1.xpose.msra.mxu0 0.0
  %212 = vmatprep.subr.mxu0 0.0
  %213 = vmatpush1.xpose.msra.mxu0 0.0
  %214 = vmatprep.subr.mxu0 0.0
  %215 = vmatpush1.xpose.msra.mxu0 0.0
  %216 = vmatprep.subr.mxu0 0.0
  %217 = vmatpush1.xpose.msra.mxu0 0.0
  %218 = vmatprep.mubr.f32.mxu0 0.0
  %219 = vmatmul.mubr.f32.gmra.mrb[0].mxu0 %v21
  %v220 = vpop.f32.mrb[0].mxu0
  %v221 = vadd.f32 0.0, %v220
  %v222 = vpop.f32.mrb[0].mxu0
  %223 = vdwg.mxu0
  %224 = vmatprep.subr.mxu0 0.0
  %225 = vmatpush1.xpose.msra.mxu0 %v55
  %226 = vmatprep.subr.mxu0 0.0
  %227 = vmatpush1.xpose.msra.mxu0 0.0
  %228 = vmatprep.subr.mxu0 0.0
  %229 = vmatpush1.xpose.msra.mxu0 0.0
  %230 = vmatprep.subr.mxu0 0.0
  %231 = vmatpush1.xpose.msra.mxu0 0.0
  %232 = vmatprep.subr.mxu0 0.0
  %233 = vmatpush1.xpose.msra.mxu0 0.0
  %234 = vmatprep.subr.mxu0 0.0
  %235 = vmatpush1.xpose.msra.mxu0 0.0
  %236 = vmatprep.subr.mxu0 0.0
  %237 = vmatpush1.xpose.msra.mxu0 0.0
  %238 = vmatprep.subr.mxu0 0.0
  %239 = vmatpush1.xpose.msra.mxu0 0.0
  %240 = vmatprep.subr.mxu0 0.0
  %241 = vmatpush1.xpose.msra.mxu0 0.0
  %242 = vmatprep.subr.mxu0 0.0
  %243 = vmatpush1.xpose.msra.mxu0 0.0
  %244 = vmatprep.subr.mxu0 0.0
  %245 = vmatpush1.xpose.msra.mxu0 0.0
  %246 = vmatprep.subr.mxu0 0.0
  %247 = vmatpush1.xpose.msra.mxu0 0.0
  %248 = vmatprep.subr.mxu0 0.0
  %249 = vmatpush1.xpose.msra.mxu0 0.0
  %250 = vmatprep.subr.mxu0 0.0
  %251 = vmatpush1.xpose.msra.mxu0 0.0
  %252 = vmatprep.subr.mxu0 0.0
  %253 = vmatpush1.xpose.msra.mxu0 0.0
  %254 = vmatprep.subr.mxu0 0.0
  %255 = vmatpush1.xpose.msra.mxu0 0.0
  %256 = vmatprep.subr.mxu0 0.0
  %257 = vmatpush1.xpose.msra.mxu0 0.0
  %258 = vmatprep.subr.mxu0 0.0
  %259 = vmatpush1.xpose.msra.mxu0 0.0
  %260 = vmatprep.subr.mxu0 0.0
  %261 = vmatpush1.xpose.msra.mxu0 0.0
  %262 = vmatprep.subr.mxu0 0.0
  %263 = vmatpush1.xpose.msra.mxu0 0.0
  %264 = vmatprep.subr.mxu0 0.0
  %265 = vmatpush1.xpose.msra.mxu0 0.0
  %266 = vmatprep.subr.mxu0 0.0
  %267 = vmatpush1.xpose.msra.mxu0 0.0
  %268 = vmatprep.subr.mxu0 0.0
  %269 = vmatpush1.xpose.msra.mxu0 0.0
  %270 = vmatprep.subr.mxu0 0.0
  %271 = vmatpush1.xpose.msra.mxu0 0.0
  %272 = vmatprep.subr.mxu0 0.0
  %273 = vmatpush1.xpose.msra.mxu0 0.0
  %274 = vmatprep.subr.mxu0 0.0
  %275 = vmatpush1.xpose.msra.mxu0 0.0
  %276 = vmatprep.subr.mxu0 0.0
  %277 = vmatpush1.xpose.msra.mxu0 0.0
  %278 = vmatprep.subr.mxu0 0.0
  %279 = vmatpush1.xpose.msra.mxu0 0.0
  %280 = vmatprep.subr.mxu0 0.0
  %281 = vmatpush1.xpose.msra.mxu0 0.0
  %282 = vmatprep.subr.mxu0 0.0
  %283 = vmatpush1.xpose.msra.mxu0 0.0
  %284 = vmatprep.subr.mxu0 0.0
  %285 = vmatpush1.xpose.msra.mxu0 0.0
  %286 = vmatprep.subr.mxu0 0.0
  %287 = vmatpush1.xpose.msra.mxu0 0.0
  %288 = vmatprep.mubr.f32.mxu0 0.0
  %289 = vmatmul.mubr.f32.gmra.mrb[0].mxu0 %v22
  %v290 = vpop.f32.mrb[0].mxu0
  %v291 = vadd.f32 0.0, %v290
  %v292 = vpop.f32.mrb[0].mxu0
  %293 = vdwg.mxu0
  %294 = vmatprep.subr.mxu0 0.0
  %295 = vmatpush1.xpose.msra.mxu0 %v59
  %296 = vmatprep.subr.mxu0 0.0
  %297 = vmatpush1.xpose.msra.mxu0 0.0
  %298 = vmatprep.subr.mxu0 0.0
  %299 = vmatpush1.xpose.msra.mxu0 0.0
  %300 = vmatprep.subr.mxu0 0.0
  %301 = vmatpush1.xpose.msra.mxu0 0.0
  %302 = vmatprep.subr.mxu0 0.0
  %303 = vmatpush1.xpose.msra.mxu0 0.0
  %304 = vmatprep.subr.mxu0 0.0
  %305 = vmatpush1.xpose.msra.mxu0 0.0
  %306 = vmatprep.subr.mxu0 0.0
  %307 = vmatpush1.xpose.msra.mxu0 0.0
  %308 = vmatprep.subr.mxu0 0.0
  %309 = vmatpush1.xpose.msra.mxu0 0.0
  %310 = vmatprep.subr.mxu0 0.0
  %311 = vmatpush1.xpose.msra.mxu0 0.0
  %312 = vmatprep.subr.mxu0 0.0
  %313 = vmatpush1.xpose.msra.mxu0 0.0
  %314 = vmatprep.subr.mxu0 0.0
  %315 = vmatpush1.xpose.msra.mxu0 0.0
  %316 = vmatprep.subr.mxu0 0.0
  %317 = vmatpush1.xpose.msra.mxu0 0.0
  %318 = vmatprep.subr.mxu0 0.0
  %319 = vmatpush1.xpose.msra.mxu0 0.0
  %320 = vmatprep.subr.mxu0 0.0
  %321 = vmatpush1.xpose.msra.mxu0 0.0
  %322 = vmatprep.subr.mxu0 0.0
  %323 = vmatpush1.xpose.msra.mxu0 0.0
  %324 = vmatprep.subr.mxu0 0.0
  %325 = vmatpush1.xpose.msra.mxu0 0.0
  %326 = vmatprep.subr.mxu0 0.0
  %327 = vmatpush1.xpose.msra.mxu0 0.0
  %328 = vmatprep.subr.mxu0 0.0
  %329 = vmatpush1.xpose.msra.mxu0 0.0
  %330 = vmatprep.subr.mxu0 0.0
  %331 = vmatpush1.xpose.msra.mxu0 0.0
  %332 = vmatprep.subr.mxu0 0.0
  %333 = vmatpush1.xpose.msra.mxu0 0.0
  %334 = vmatprep.subr.mxu0 0.0
  %335 = vmatpush1.xpose.msra.mxu0 0.0
  %336 = vmatprep.subr.mxu0 0.0
  %337 = vmatpush1.xpose.msra.mxu0 0.0
  %338 = vmatprep.subr.mxu0 0.0
  %339 = vmatpush1.xpose.msra.mxu0 0.0
  %340 = vmatprep.subr.mxu0 0.0
  %341 = vmatpush1.xpose.msra.mxu0 0.0
  %342 = vmatprep.subr.mxu0 0.0
  %343 = vmatpush1.xpose.msra.mxu0 0.0
  %344 = vmatprep.subr.mxu0 0.0
  %345 = vmatpush1.xpose.msra.mxu0 0.0
  %346 = vmatprep.subr.mxu0 0.0
  %347 = vmatpush1.xpose.msra.mxu0 0.0
  %348 = vmatprep.subr.mxu0 0.0
  %349 = vmatpush1.xpose.msra.mxu0 0.0
  %350 = vmatprep.subr.mxu0 0.0
  %351 = vmatpush1.xpose.msra.mxu0 0.0
  %352 = vmatprep.subr.mxu0 0.0
  %353 = vmatpush1.xpose.msra.mxu0 0.0
  %354 = vmatprep.subr.mxu0 0.0
  %355 = vmatpush1.xpose.msra.mxu0 0.0
  %356 = vmatprep.subr.mxu0 0.0
  %357 = vmatpush1.xpose.msra.mxu0 0.0
  %358 = vmatprep.mubr.f32.mxu0 0.0
  %359 = vmatmul.mubr.f32.gmra.mrb[0].mxu0 %v23
  %v360 = vpop.f32.mrb[0].mxu0
  %v361 = vadd.f32 0.0, %v360
  %v362 = vpop.f32.mrb[0].mxu0
  %363 = vdwg.mxu0
  %364 = vmatprep.subr.mxu0 0.0
  %365 = vmatpush1.xpose.msra.mxu0 %v63
  %366 = vmatprep.subr.mxu0 0.0
  %367 = vmatpush1.xpose.msra.mxu0 0.0
  %368 = vmatprep.subr.mxu0 0.0
  %369 = vmatpush1.xpose.msra.mxu0 0.0
  %370 = vmatprep.subr.mxu0 0.0
  %371 = vmatpush1.xpose.msra.mxu0 0.0
  %372 = vmatprep.subr.mxu0 0.0
  %373 = vmatpush1.xpose.msra.mxu0 0.0
  %374 = vmatprep.subr.mxu0 0.0
  %375 = vmatpush1.xpose.msra.mxu0 0.0
  %376 = vmatprep.subr.mxu0 0.0
  %377 = vmatpush1.xpose.msra.mxu0 0.0
  %378 = vmatprep.subr.mxu0 0.0
  %379 = vmatpush1.xpose.msra.mxu0 0.0
  %380 = vmatprep.subr.mxu0 0.0
  %381 = vmatpush1.xpose.msra.mxu0 0.0
  %382 = vmatprep.subr.mxu0 0.0
  %383 = vmatpush1.xpose.msra.mxu0 0.0
  %384 = vmatprep.subr.mxu0 0.0
  %385 = vmatpush1.xpose.msra.mxu0 0.0
  %386 = vmatprep.subr.mxu0 0.0
  %387 = vmatpush1.xpose.msra.mxu0 0.0
  %388 = vmatprep.subr.mxu0 0.0
  %389 = vmatpush1.xpose.msra.mxu0 0.0
  %390 = vmatprep.subr.mxu0 0.0
  %391 = vmatpush1.xpose.msra.mxu0 0.0
  %392 = vmatprep.subr.mxu0 0.0
  %393 = vmatpush1.xpose.msra.mxu0 0.0
  %394 = vmatprep.subr.mxu0 0.0
  %395 = vmatpush1.xpose.msra.mxu0 0.0
  %396 = vmatprep.subr.mxu0 0.0
  %397 = vmatpush1.xpose.msra.mxu0 0.0
  %398 = vmatprep.subr.mxu0 0.0
  %399 = vmatpush1.xpose.msra.mxu0 0.0
  %400 = vmatprep.subr.mxu0 0.0
  %401 = vmatpush1.xpose.msra.mxu0 0.0
  %402 = vmatprep.subr.mxu0 0.0
  %403 = vmatpush1.xpose.msra.mxu0 0.0
  %404 = vmatprep.subr.mxu0 0.0
  %405 = vmatpush1.xpose.msra.mxu0 0.0
  %406 = vmatprep.subr.mxu0 0.0
  %407 = vmatpush1.xpose.msra.mxu0 0.0
  %408 = vmatprep.subr.mxu0 0.0
  %409 = vmatpush1.xpose.msra.mxu0 0.0
  %410 = vmatprep.subr.mxu0 0.0
  %411 = vmatpush1.xpose.msra.mxu0 0.0
  %412 = vmatprep.subr.mxu0 0.0
  %413 = vmatpush1.xpose.msra.mxu0 0.0
  %414 = vmatprep.subr.mxu0 0.0
  %415 = vmatpush1.xpose.msra.mxu0 0.0
  %416 = vmatprep.subr.mxu0 0.0
  %417 = vmatpush1.xpose.msra.mxu0 0.0
  %418 = vmatprep.subr.mxu0 0.0
  %419 = vmatpush1.xpose.msra.mxu0 0.0
  %420 = vmatprep.subr.mxu0 0.0
  %421 = vmatpush1.xpose.msra.mxu0 0.0
  %422 = vmatprep.subr.mxu0 0.0
  %423 = vmatpush1.xpose.msra.mxu0 0.0
  %424 = vmatprep.subr.mxu0 0.0
  %425 = vmatpush1.xpose.msra.mxu0 0.0
  %426 = vmatprep.subr.mxu0 0.0
  %427 = vmatpush1.xpose.msra.mxu0 0.0
  %428 = vmatprep.mubr.f32.mxu0 0.0
  %429 = vmatmul.mubr.f32.gmra.mrb[0].mxu0 %v24
  %v430 = vpop.f32.mrb[0].mxu0
  %v431 = vadd.f32 0.0, %v430
  %v432 = vpop.f32.mrb[0].mxu0
  %433 = vdwg.mxu0
  %434 = vmatprep.subr.mxu0 0.0
  %435 = vmatpush1.xpose.msra.mxu0 %v67
  %436 = vmatprep.subr.mxu0 0.0
  %437 = vmatpush1.xpose.msra.mxu0 0.0
  %438 = vmatprep.subr.mxu0 0.0
  %439 = vmatpush1.xpose.msra.mxu0 0.0
  %440 = vmatprep.subr.mxu0 0.0
  %441 = vmatpush1.xpose.msra.mxu0 0.0
  %442 = vmatprep.subr.mxu0 0.0
  %443 = vmatpush1.xpose.msra.mxu0 0.0
  %444 = vmatprep.subr.mxu0 0.0
  %445 = vmatpush1.xpose.msra.mxu0 0.0
  %446 = vmatprep.subr.mxu0 0.0
  %447 = vmatpush1.xpose.msra.mxu0 0.0
  %448 = vmatprep.subr.mxu0 0.0
  %449 = vmatpush1.xpose.msra.mxu0 0.0
  %450 = vmatprep.subr.mxu0 0.0
  %451 = vmatpush1.xpose.msra.mxu0 0.0
  %452 = vmatprep.subr.mxu0 0.0
  %453 = vmatpush1.xpose.msra.mxu0 0.0
  %454 = vmatprep.subr.mxu0 0.0
  %455 = vmatpush1.xpose.msra.mxu0 0.0
  %456 = vmatprep.subr.mxu0 0.0
  %457 = vmatpush1.xpose.msra.mxu0 0.0
  %458 = vmatprep.subr.mxu0 0.0
  %459 = vmatpush1.xpose.msra.mxu0 0.0
  %460 = vmatprep.subr.mxu0 0.0
  %461 = vmatpush1.xpose.msra.mxu0 0.0
  %462 = vmatprep.subr.mxu0 0.0
  %463 = vmatpush1.xpose.msra.mxu0 0.0
  %464 = vmatprep.subr.mxu0 0.0
  %465 = vmatpush1.xpose.msra.mxu0 0.0
  %466 = vmatprep.subr.mxu0 0.0
  %467 = vmatpush1.xpose.msra.mxu0 0.0
  %468 = vmatprep.subr.mxu0 0.0
  %469 = vmatpush1.xpose.msra.mxu0 0.0
  %470 = vmatprep.subr.mxu0 0.0
  %471 = vmatpush1.xpose.msra.mxu0 0.0
  %472 = vmatprep.subr.mxu0 0.0
  %473 = vmatpush1.xpose.msra.mxu0 0.0
  %474 = vmatprep.subr.mxu0 0.0
  %475 = vmatpush1.xpose.msra.mxu0 0.0
  %476 = vmatprep.subr.mxu0 0.0
  %477 = vmatpush1.xpose.msra.mxu0 0.0
  %478 = vmatprep.subr.mxu0 0.0
  %479 = vmatpush1.xpose.msra.mxu0 0.0
  %480 = vmatprep.subr.mxu0 0.0
  %481 = vmatpush1.xpose.msra.mxu0 0.0
  %482 = vmatprep.subr.mxu0 0.0
  %483 = vmatpush1.xpose.msra.mxu0 0.0
  %484 = vmatprep.subr.mxu0 0.0
  %485 = vmatpush1.xpose.msra.mxu0 0.0
  %486 = vmatprep.subr.mxu0 0.0
  %487 = vmatpush1.xpose.msra.mxu0 0.0
  %488 = vmatprep.subr.mxu0 0.0
  %489 = vmatpush1.xpose.msra.mxu0 0.0
  %490 = vmatprep.subr.mxu0 0.0
  %491 = vmatpush1.xpose.msra.mxu0 0.0
  %492 = vmatprep.subr.mxu0 0.0
  %493 = vmatpush1.xpose.msra.mxu0 0.0
  %494 = vmatprep.subr.mxu0 0.0
  %495 = vmatpush1.xpose.msra.mxu0 0.0
  %496 = vmatprep.subr.mxu0 0.0
  %497 = vmatpush1.xpose.msra.mxu0 0.0
  %498 = vmatprep.mubr.f32.mxu0 0.0
  %499 = vmatmul.mubr.f32.gmra.mrb[0].mxu0 %v25
  %v500 = vpop.f32.mrb[0].mxu0
  %v501 = vadd.f32 0.0, %v500
  %v502 = vpop.f32.mrb[0].mxu0
  %503 = vdwg.mxu0
  %504 = vmatprep.subr.mxu0 0.0
  %505 = vmatpush1.xpose.msra.mxu0 %v71
  %506 = vmatprep.subr.mxu0 0.0
  %507 = vmatpush1.xpose.msra.mxu0 0.0
  %508 = vmatprep.subr.mxu0 0.0
  %509 = vmatpush1.xpose.msra.mxu0 0.0
  %510 = vmatprep.subr.mxu0 0.0
  %511 = vmatpush1.xpose.msra.mxu0 0.0
  %512 = vmatprep.subr.mxu0 0.0
  %513 = vmatpush1.xpose.msra.mxu0 0.0
  %514 = vmatprep.subr.mxu0 0.0
  %515 = vmatpush1.xpose.msra.mxu0 0.0
  %516 = vmatprep.subr.mxu0 0.0
  %517 = vmatpush1.xpose.msra.mxu0 0.0
  %518 = vmatprep.subr.mxu0 0.0
  %519 = vmatpush1.xpose.msra.mxu0 0.0
  %520 = vmatprep.subr.mxu0 0.0
  %521 = vmatpush1.xpose.msra.mxu0 0.0
  %522 = vmatprep.subr.mxu0 0.0
  %523 = vmatpush1.xpose.msra.mxu0 0.0
  %524 = vmatprep.subr.mxu0 0.0
  %525 = vmatpush1.xpose.msra.mxu0 0.0
  %526 = vmatprep.subr.mxu0 0.0
  %527 = vmatpush1.xpose.msra.mxu0 0.0
  %528 = vmatprep.subr.mxu0 0.0
  %529 = vmatpush1.xpose.msra.mxu0 0.0
  %530 = vmatprep.subr.mxu0 0.0
  %531 = vmatpush1.xpose.msra.mxu0 0.0
  %532 = vmatprep.subr.mxu0 0.0
  %533 = vmatpush1.xpose.msra.mxu0 0.0
  %534 = vmatprep.subr.mxu0 0.0
  %535 = vmatpush1.xpose.msra.mxu0 0.0
  %536 = vmatprep.subr.mxu0 0.0
  %537 = vmatpush1.xpose.msra.mxu0 0.0
  %538 = vmatprep.subr.mxu0 0.0
  %539 = vmatpush1.xpose.msra.mxu0 0.0
  %540 = vmatprep.subr.mxu0 0.0
  %541 = vmatpush1.xpose.msra.mxu0 0.0
  %542 = vmatprep.subr.mxu0 0.0
  %543 = vmatpush1.xpose.msra.mxu0 0.0
  %544 = vmatprep.subr.mxu0 0.0
  %545 = vmatpush1.xpose.msra.mxu0 0.0
  %546 = vmatprep.subr.mxu0 0.0
  %547 = vmatpush1.xpose.msra.mxu0 0.0
  %548 = vmatprep.subr.mxu0 0.0
  %549 = vmatpush1.xpose.msra.mxu0 0.0
  %550 = vmatprep.subr.mxu0 0.0
  %551 = vmatpush1.xpose.msra.mxu0 0.0
  %552 = vmatprep.subr.mxu0 0.0
  %553 = vmatpush1.xpose.msra.mxu0 0.0
  %554 = vmatprep.subr.mxu0 0.0
  %555 = vmatpush1.xpose.msra.mxu0 0.0
  %556 = vmatprep.subr.mxu0 0.0
  %557 = vmatpush1.xpose.msra.mxu0 0.0
  %558 = vmatprep.subr.mxu0 0.0
  %559 = vmatpush1.xpose.msra.mxu0 0.0
  %560 = vmatprep.subr.mxu0 0.0
  %561 = vmatpush1.xpose.msra.mxu0 0.0
  %562 = vmatprep.subr.mxu0 0.0
  %563 = vmatpush1.xpose.msra.mxu0 0.0
  %564 = vmatprep.subr.mxu0 0.0
  %565 = vmatpush1.xpose.msra.mxu0 0.0
  %566 = vmatprep.subr.mxu0 0.0
  %567 = vmatpush1.xpose.msra.mxu0 0.0
  %568 = vmatprep.mubr.f32.mxu0 0.0
  %569 = vmatmul.mubr.f32.gmra.mrb[0].mxu0 %v26
  %v570 = vpop.f32.mrb[0].mxu0
  %v571 = vadd.f32 0.0, %v570
  %v572 = vpop.f32.mrb[0].mxu0
  %573 = vdwg.mxu0
  %574 = vmatprep.subr.mxu0 0.0
  %575 = vmatpush1.xpose.msra.mxu0 %v75
  %576 = vmatprep.subr.mxu0 0.0
  %577 = vmatpush1.xpose.msra.mxu0 0.0
  %578 = vmatprep.subr.mxu0 0.0
  %579 = vmatpush1.xpose.msra.mxu0 0.0
  %580 = vmatprep.subr.mxu0 0.0
  %581 = vmatpush1.xpose.msra.mxu0 0.0
  %582 = vmatprep.subr.mxu0 0.0
  %583 = vmatpush1.xpose.msra.mxu0 0.0
  %584 = vmatprep.subr.mxu0 0.0
  %585 = vmatpush1.xpose.msra.mxu0 0.0
  %586 = vmatprep.subr.mxu0 0.0
  %587 = vmatpush1.xpose.msra.mxu0 0.0
  %588 = vmatprep.subr.mxu0 0.0
  %589 = vmatpush1.xpose.msra.mxu0 0.0
  %590 = vmatprep.subr.mxu0 0.0
  %591 = vmatpush1.xpose.msra.mxu0 0.0
  %592 = vmatprep.subr.mxu0 0.0
  %593 = vmatpush1.xpose.msra.mxu0 0.0
  %594 = vmatprep.subr.mxu0 0.0
  %595 = vmatpush1.xpose.msra.mxu0 0.0
  %596 = vmatprep.subr.mxu0 0.0
  %597 = vmatpush1.xpose.msra.mxu0 0.0
  %598 = vmatprep.subr.mxu0 0.0
  %599 = vmatpush1.xpose.msra.mxu0 0.0
  %600 = vmatprep.subr.mxu0 0.0
  %601 = vmatpush1.xpose.msra.mxu0 0.0
  %602 = vmatprep.subr.mxu0 0.0
  %603 = vmatpush1.xpose.msra.mxu0 0.0
  %604 = vmatprep.subr.mxu0 0.0
  %605 = vmatpush1.xpose.msra.mxu0 0.0
  %606 = vmatprep.subr.mxu0 0.0
  %607 = vmatpush1.xpose.msra.mxu0 0.0
  %608 = vmatprep.subr.mxu0 0.0
  %609 = vmatpush1.xpose.msra.mxu0 0.0
  %610 = vmatprep.subr.mxu0 0.0
  %611 = vmatpush1.xpose.msra.mxu0 0.0
  %612 = vmatprep.subr.mxu0 0.0
  %613 = vmatpush1.xpose.msra.mxu0 0.0
  %614 = vmatprep.subr.mxu0 0.0
  %615 = vmatpush1.xpose.msra.mxu0 0.0
  %616 = vmatprep.subr.mxu0 0.0
  %617 = vmatpush1.xpose.msra.mxu0 0.0
  %618 = vmatprep.subr.mxu0 0.0
  %619 = vmatpush1.xpose.msra.mxu0 0.0
  %620 = vmatprep.subr.mxu0 0.0
  %621 = vmatpush1.xpose.msra.mxu0 0.0
  %622 = vmatprep.subr.mxu0 0.0
  %623 = vmatpush1.xpose.msra.mxu0 0.0
  %624 = vmatprep.subr.mxu0 0.0
  %625 = vmatpush1.xpose.msra.mxu0 0.0
  %626 = vmatprep.subr.mxu0 0.0
  %627 = vmatpush1.xpose.msra.mxu0 0.0
  %628 = vmatprep.subr.mxu0 0.0
  %629 = vmatpush1.xpose.msra.mxu0 0.0
  %630 = vmatprep.subr.mxu0 0.0
  %631 = vmatpush1.xpose.msra.mxu0 0.0
  %632 = vmatprep.subr.mxu0 0.0
  %633 = vmatpush1.xpose.msra.mxu0 0.0
  %634 = vmatprep.subr.mxu0 0.0
  %635 = vmatpush1.xpose.msra.mxu0 0.0
  %636 = vmatprep.subr.mxu0 0.0
  %637 = vmatpush1.xpose.msra.mxu0 0.0
  %638 = vmatprep.mubr.f32.mxu0 0.0
  %639 = vmatmul.mubr.f32.gmra.mrb[0].mxu0 %v27
  %v640 = vpop.f32.mrb[0].mxu0
  %v641 = vadd.f32 0.0, %v640
  %v642 = vpop.f32.mrb[0].mxu0
  %643 = vdwg.mxu0
  %vm644 = vcmask 27648
  %v645 = vsel %vm644, %v151, -inf
  %646 = vmax.xlane.f32.xlu0 %v645
  %v647 = vpop.xlane.xlu0 %646
  %v648 = vsel %vm644, %v221, -inf
  %649 = vmax.xlane.f32.xlu0 %v648
  %v650 = vpop.xlane.xlu0 %649
  %v651 = vsel %vm644, %v291, -inf
  %652 = vmax.xlane.f32.xlu0 %v651
  %v653 = vpop.xlane.xlu0 %652
  %v654 = vsel %vm644, %v361, -inf
  %655 = vmax.xlane.f32.xlu0 %v654
  %v656 = vpop.xlane.xlu0 %655
  %v657 = vsel %vm644, %v431, -inf
  %658 = vmax.xlane.f32.xlu0 %v657
  %v659 = vpop.xlane.xlu0 %658
  %v660 = vsel %vm644, %v501, -inf
  %661 = vmax.xlane.f32.xlu0 %v660
  %v662 = vpop.xlane.xlu0 %661
  %v663 = vsel %vm644, %v571, -inf
  %664 = vmax.xlane.f32.xlu0 %v663
  %v665 = vpop.xlane.xlu0 %664
  %v666 = vsel %vm644, %v641, -inf
  %667 = vmax.xlane.f32.xlu0 %v666
  %v668 = vpop.xlane.xlu0 %667
  %v669 = vsub.f32 %v151, %v647
  %v670 = vsub.f32 %v221, %v650
  %v671 = vsub.f32 %v291, %v653
  %v672 = vsub.f32 %v361, %v656
  %v673 = vsub.f32 %v431, %v659
  %v674 = vsub.f32 %v501, %v662
  %v675 = vsub.f32 %v571, %v665
  %v676 = vsub.f32 %v641, %v668
  %v677 = vmul.f32 %v669, 1.442695
  %v678 = vpow.pop %v677
  %v679 = vmul.f32 %v670, 1.442695
  %v680 = vpow.pop %v679
  %v681 = vmul.f32 %v671, 1.442695
  %v682 = vpow.pop %v681
  %v683 = vmul.f32 %v672, 1.442695
  %v684 = vpow.pop %v683
  %v685 = vmul.f32 %v673, 1.442695
  %v686 = vpow.pop %v685
  %v687 = vmul.f32 %v674, 1.442695
  %v688 = vpow.pop %v687
  %v689 = vmul.f32 %v675, 1.442695
  %v690 = vpow.pop %v689
  %v691 = vmul.f32 %v676, 1.442695
  %v692 = vpow.pop %v691
  %v693 = vsel %vm644, %v678, 0.0
  %694 = vadd.xlane.f32.xlu0 %v693
  %v695 = vpop.xlane.xlu0 %694
  %v696 = vsel %vm644, %v680, 0.0
  %697 = vadd.xlane.f32.xlu0 %v696
  %v698 = vpop.xlane.xlu0 %697
  %v699 = vsel %vm644, %v682, 0.0
  %700 = vadd.xlane.f32.xlu0 %v699
  %v701 = vpop.xlane.xlu0 %700
  %v702 = vsel %vm644, %v684, 0.0
  %703 = vadd.xlane.f32.xlu0 %v702
  %v704 = vpop.xlane.xlu0 %703
  %v705 = vsel %vm644, %v686, 0.0
  %706 = vadd.xlane.f32.xlu0 %v705
  %v707 = vpop.xlane.xlu0 %706
  %v708 = vsel %vm644, %v688, 0.0
  %709 = vadd.xlane.f32.xlu0 %v708
  %v710 = vpop.xlane.xlu0 %709
  %v711 = vsel %vm644, %v690, 0.0
  %712 = vadd.xlane.f32.xlu0 %v711
  %v713 = vpop.xlane.xlu0 %712
  %v714 = vsel %vm644, %v692, 0.0
  %715 = vadd.xlane.f32.xlu0 %v714
  %v716 = vpop.xlane.xlu0 %715
  %v717 = vrcp.pop %v695
  %v718 = vmul.f32 %v678, %v717
  %v719 = vrcp.pop %v698
  %v720 = vmul.f32 %v680, %v719
  %v721 = vrcp.pop %v701
  %v722 = vmul.f32 %v682, %v721
  %v723 = vrcp.pop %v704
  %v724 = vmul.f32 %v684, %v723
  %v725 = vrcp.pop %v707
  %v726 = vmul.f32 %v686, %v725
  %v727 = vrcp.pop %v710
  %v728 = vmul.f32 %v688, %v727
  %v729 = vrcp.pop %v713
  %v730 = vmul.f32 %v690, %v729
  %v731 = vrcp.pop %v716
  %v732 = vmul.f32 %v692, %v731
  %v733 = vld [vmem:[%s1] sm:$0x1]
  %v734 = vld [vmem:[%s1 + $0x1] sm:$0x1]
  %v735 = vld [vmem:[%s1 + $0x2] sm:$0x1]
  %v736 = vld [vmem:[%s1 + $0x3] sm:$0x1]
  %v737 = vld [vmem:[%s1 + $0x4] sm:$0x1]
  %v738 = vld [vmem:[%s1 + $0x5] sm:$0x1]
  %v739 = vld [vmem:[%s1 + $0x6] sm:$0x1]
  %v740 = vld [vmem:[%s1 + $0x7] sm:$0x1]
  %742 = vset.pattern.permute.xlu0 0
  %743 = vperm.xlu0 %742, %v733
  %v744 = vpop.permute.xlu0 %743
  %v746 = vlaneseq
  %v747 = vshrl.u32 %v746, 7
  %v748 = vsub.s32 0, %v747
  %v749 = vrot.slane %v744, %v748
  %751 = vset.pattern.permute.xlu0 0
  %752 = vperm.xlu0 %751, %v734
  %v753 = vpop.permute.xlu0 %752
  %v755 = vlaneseq
  %v756 = vshrl.u32 %v755, 7
  %v757 = vsub.s32 0, %v756
  %v758 = vrot.slane %v753, %v757
  %760 = vset.pattern.permute.xlu0 0
  %761 = vperm.xlu0 %760, %v735
  %v762 = vpop.permute.xlu0 %761
  %v764 = vlaneseq
  %v765 = vshrl.u32 %v764, 7
  %v766 = vsub.s32 0, %v765
  %v767 = vrot.slane %v762, %v766
  %769 = vset.pattern.permute.xlu0 0
  %770 = vperm.xlu0 %769, %v736
  %v771 = vpop.permute.xlu0 %770
  %v773 = vlaneseq
  %v774 = vshrl.u32 %v773, 7
  %v775 = vsub.s32 0, %v774
  %v776 = vrot.slane %v771, %v775
  %778 = vset.pattern.permute.xlu0 0
  %779 = vperm.xlu0 %778, %v737
  %v780 = vpop.permute.xlu0 %779
  %v782 = vlaneseq
  %v783 = vshrl.u32 %v782, 7
  %v784 = vsub.s32 0, %v783
  %v785 = vrot.slane %v780, %v784
  %787 = vset.pattern.permute.xlu0 0
  %788 = vperm.xlu0 %787, %v738
  %v789 = vpop.permute.xlu0 %788
  %v791 = vlaneseq
  %v792 = vshrl.u32 %v791, 7
  %v793 = vsub.s32 0, %v792
  %v794 = vrot.slane %v789, %v793
  %796 = vset.pattern.permute.xlu0 0
  %797 = vperm.xlu0 %796, %v739
  %v798 = vpop.permute.xlu0 %797
  %v800 = vlaneseq
  %v801 = vshrl.u32 %v800, 7
  %v802 = vsub.s32 0, %v801
  %v803 = vrot.slane %v798, %v802
  %805 = vset.pattern.permute.xlu0 0
  %806 = vperm.xlu0 %805, %v740
  %v807 = vpop.permute.xlu0 %806
  %v809 = vlaneseq
  %v810 = vshrl.u32 %v809, 7
  %v811 = vsub.s32 0, %v810
  %v812 = vrot.slane %v807, %v811
  %vm813 = vcmask 31744
  %v815 = vsel %vm813, %v749, 0
  %v818 = vsel %vm813, %v718, 0
  %820 = vmatprep.subr.mxu0 0.0
  %821 = vmatpush1.xpose.msra.mxu0 %v818
  %822 = vmatprep.subr.mxu0 0.0
  %823 = vmatpush1.xpose.msra.mxu0 0.0
  %824 = vmatprep.subr.mxu0 0.0
  %825 = vmatpush1.xpose.msra.mxu0 0.0
  %826 = vmatprep.subr.mxu0 0.0
  %827 = vmatpush1.xpose.msra.mxu0 0.0
  %828 = vmatprep.subr.mxu0 0.0
  %829 = vmatpush1.xpose.msra.mxu0 0.0
  %830 = vmatprep.subr.mxu0 0.0
  %831 = vmatpush1.xpose.msra.mxu0 0.0
  %832 = vmatprep.subr.mxu0 0.0
  %833 = vmatpush1.xpose.msra.mxu0 0.0
  %834 = vmatprep.subr.mxu0 0.0
  %835 = vmatpush1.xpose.msra.mxu0 0.0
  %836 = vmatprep.subr.mxu0 0.0
  %837 = vmatpush1.xpose.msra.mxu0 0.0
  %838 = vmatprep.subr.mxu0 0.0
  %839 = vmatpush1.xpose.msra.mxu0 0.0
  %840 = vmatprep.subr.mxu0 0.0
  %841 = vmatpush1.xpose.msra.mxu0 0.0
  %842 = vmatprep.subr.mxu0 0.0
  %843 = vmatpush1.xpose.msra.mxu0 0.0
  %844 = vmatprep.subr.mxu0 0.0
  %845 = vmatpush1.xpose.msra.mxu0 0.0
  %846 = vmatprep.subr.mxu0 0.0
  %847 = vmatpush1.xpose.msra.mxu0 0.0
  %848 = vmatprep.subr.mxu0 0.0
  %849 = vmatpush1.xpose.msra.mxu0 0.0
  %850 = vmatprep.subr.mxu0 0.0
  %851 = vmatpush1.xpose.msra.mxu0 0.0
  %852 = vmatprep.subr.mxu0 0.0
  %853 = vmatpush1.xpose.msra.mxu0 0.0
  %854 = vmatprep.subr.mxu0 0.0
  %855 = vmatpush1.xpose.msra.mxu0 0.0
  %856 = vmatprep.subr.mxu0 0.0
  %857 = vmatpush1.xpose.msra.mxu0 0.0
  %858 = vmatprep.subr.mxu0 0.0
  %859 = vmatpush1.xpose.msra.mxu0 0.0
  %860 = vmatprep.subr.mxu0 0.0
  %861 = vmatpush1.xpose.msra.mxu0 0.0
  %862 = vmatprep.subr.mxu0 0.0
  %863 = vmatpush1.xpose.msra.mxu0 0.0
  %864 = vmatprep.subr.mxu0 0.0
  %865 = vmatpush1.xpose.msra.mxu0 0.0
  %866 = vmatprep.subr.mxu0 0.0
  %867 = vmatpush1.xpose.msra.mxu0 0.0
  %868 = vmatprep.subr.mxu0 0.0
  %869 = vmatpush1.xpose.msra.mxu0 0.0
  %870 = vmatprep.subr.mxu0 0.0
  %871 = vmatpush1.xpose.msra.mxu0 0.0
  %872 = vmatprep.subr.mxu0 0.0
  %873 = vmatpush1.xpose.msra.mxu0 0.0
  %874 = vmatprep.subr.mxu0 0.0
  %875 = vmatpush1.xpose.msra.mxu0 0.0
  %876 = vmatprep.subr.mxu0 0.0
  %877 = vmatpush1.xpose.msra.mxu0 0.0
  %878 = vmatprep.subr.mxu0 0.0
  %879 = vmatpush1.xpose.msra.mxu0 0.0
  %880 = vmatprep.subr.mxu0 0.0
  %881 = vmatpush1.xpose.msra.mxu0 0.0
  %882 = vmatprep.subr.mxu0 0.0
  %883 = vmatpush1.xpose.msra.mxu0 0.0
  %884 = vmatprep.mubr.f32.mxu0 0.0
  %885 = vmatmul.mubr.f32.gmra.mrb[0].mxu0 %v815
  %v886 = vpop.f32.mrb[0].mxu0
  %v887 = vadd.f32 0.0, %v886
  %v888 = vpop.f32.mrb[0].mxu0
  %889 = vdwg.mxu0
  %v891 = vsel %vm813, %v758, 0
  %v894 = vsel %vm813, %v720, 0
  %896 = vmatprep.subr.mxu0 0.0
  %897 = vmatpush1.xpose.msra.mxu0 %v894
  %898 = vmatprep.subr.mxu0 0.0
  %899 = vmatpush1.xpose.msra.mxu0 0.0
  %900 = vmatprep.subr.mxu0 0.0
  %901 = vmatpush1.xpose.msra.mxu0 0.0
  %902 = vmatprep.subr.mxu0 0.0
  %903 = vmatpush1.xpose.msra.mxu0 0.0
  %904 = vmatprep.subr.mxu0 0.0
  %905 = vmatpush1.xpose.msra.mxu0 0.0
  %906 = vmatprep.subr.mxu0 0.0
  %907 = vmatpush1.xpose.msra.mxu0 0.0
  %908 = vmatprep.subr.mxu0 0.0
  %909 = vmatpush1.xpose.msra.mxu0 0.0
  %910 = vmatprep.subr.mxu0 0.0
  %911 = vmatpush1.xpose.msra.mxu0 0.0
  %912 = vmatprep.subr.mxu0 0.0
  %913 = vmatpush1.xpose.msra.mxu0 0.0
  %914 = vmatprep.subr.mxu0 0.0
  %915 = vmatpush1.xpose.msra.mxu0 0.0
  %916 = vmatprep.subr.mxu0 0.0
  %917 = vmatpush1.xpose.msra.mxu0 0.0
  %918 = vmatprep.subr.mxu0 0.0
  %919 = vmatpush1.xpose.msra.mxu0 0.0
  %920 = vmatprep.subr.mxu0 0.0
  %921 = vmatpush1.xpose.msra.mxu0 0.0
  %922 = vmatprep.subr.mxu0 0.0
  %923 = vmatpush1.xpose.msra.mxu0 0.0
  %924 = vmatprep.subr.mxu0 0.0
  %925 = vmatpush1.xpose.msra.mxu0 0.0
  %926 = vmatprep.subr.mxu0 0.0
  %927 = vmatpush1.xpose.msra.mxu0 0.0
  %928 = vmatprep.subr.mxu0 0.0
  %929 = vmatpush1.xpose.msra.mxu0 0.0
  %930 = vmatprep.subr.mxu0 0.0
  %931 = vmatpush1.xpose.msra.mxu0 0.0
  %932 = vmatprep.subr.mxu0 0.0
  %933 = vmatpush1.xpose.msra.mxu0 0.0
  %934 = vmatprep.subr.mxu0 0.0
  %935 = vmatpush1.xpose.msra.mxu0 0.0
  %936 = vmatprep.subr.mxu0 0.0
  %937 = vmatpush1.xpose.msra.mxu0 0.0
  %938 = vmatprep.subr.mxu0 0.0
  %939 = vmatpush1.xpose.msra.mxu0 0.0
  %940 = vmatprep.subr.mxu0 0.0
  %941 = vmatpush1.xpose.msra.mxu0 0.0
  %942 = vmatprep.subr.mxu0 0.0
  %943 = vmatpush1.xpose.msra.mxu0 0.0
  %944 = vmatprep.subr.mxu0 0.0
  %945 = vmatpush1.xpose.msra.mxu0 0.0
  %946 = vmatprep.subr.mxu0 0.0
  %947 = vmatpush1.xpose.msra.mxu0 0.0
  %948 = vmatprep.subr.mxu0 0.0
  %949 = vmatpush1.xpose.msra.mxu0 0.0
  %950 = vmatprep.subr.mxu0 0.0
  %951 = vmatpush1.xpose.msra.mxu0 0.0
  %952 = vmatprep.subr.mxu0 0.0
  %953 = vmatpush1.xpose.msra.mxu0 0.0
  %954 = vmatprep.subr.mxu0 0.0
  %955 = vmatpush1.xpose.msra.mxu0 0.0
  %956 = vmatprep.subr.mxu0 0.0
  %957 = vmatpush1.xpose.msra.mxu0 0.0
  %958 = vmatprep.subr.mxu0 0.0
  %959 = vmatpush1.xpose.msra.mxu0 0.0
  %960 = vmatprep.mubr.f32.mxu0 0.0
  %961 = vmatmul.mubr.f32.gmra.mrb[0].mxu0 %v891
  %v962 = vpop.f32.mrb[0].mxu0
  %v963 = vadd.f32 0.0, %v962
  %v964 = vpop.f32.mrb[0].mxu0
  %965 = vdwg.mxu0
  %v967 = vsel %vm813, %v767, 0
  %v970 = vsel %vm813, %v722, 0
  %972 = vmatprep.subr.mxu0 0.0
  %973 = vmatpush1.xpose.msra.mxu0 %v970
  %974 = vmatprep.subr.mxu0 0.0
  %975 = vmatpush1.xpose.msra.mxu0 0.0
  %976 = vmatprep.subr.mxu0 0.0
  %977 = vmatpush1.xpose.msra.mxu0 0.0
  %978 = vmatprep.subr.mxu0 0.0
  %979 = vmatpush1.xpose.msra.mxu0 0.0
  %980 = vmatprep.subr.mxu0 0.0
  %981 = vmatpush1.xpose.msra.mxu0 0.0
  %982 = vmatprep.subr.mxu0 0.0
  %983 = vmatpush1.xpose.msra.mxu0 0.0
  %984 = vmatprep.subr.mxu0 0.0
  %985 = vmatpush1.xpose.msra.mxu0 0.0
  %986 = vmatprep.subr.mxu0 0.0
  %987 = vmatpush1.xpose.msra.mxu0 0.0
  %988 = vmatprep.subr.mxu0 0.0
  %989 = vmatpush1.xpose.msra.mxu0 0.0
  %990 = vmatprep.subr.mxu0 0.0
  %991 = vmatpush1.xpose.msra.mxu0 0.0
  %992 = vmatprep.subr.mxu0 0.0
  %993 = vmatpush1.xpose.msra.mxu0 0.0
  %994 = vmatprep.subr.mxu0 0.0
  %995 = vmatpush1.xpose.msra.mxu0 0.0
  %996 = vmatprep.subr.mxu0 0.0
  %997 = vmatpush1.xpose.msra.mxu0 0.0
  %998 = vmatprep.subr.mxu0 0.0
  %999 = vmatpush1.xpose.msra.mxu0 0.0
  %1000 = vmatprep.subr.mxu0 0.0
  %1001 = vmatpush1.xpose.msra.mxu0 0.0
  %1002 = vmatprep.subr.mxu0 0.0
  %1003 = vmatpush1.xpose.msra.mxu0 0.0
  %1004 = vmatprep.subr.mxu0 0.0
  %1005 = vmatpush1.xpose.msra.mxu0 0.0
  %1006 = vmatprep.subr.mxu0 0.0
  %1007 = vmatpush1.xpose.msra.mxu0 0.0
  %1008 = vmatprep.subr.mxu0 0.0
  %1009 = vmatpush1.xpose.msra.mxu0 0.0
  %1010 = vmatprep.subr.mxu0 0.0
  %1011 = vmatpush1.xpose.msra.mxu0 0.0
  %1012 = vmatprep.subr.mxu0 0.0
  %1013 = vmatpush1.xpose.msra.mxu0 0.0
  %1014 = vmatprep.subr.mxu0 0.0
  %1015 = vmatpush1.xpose.msra.mxu0 0.0
  %1016 = vmatprep.subr.mxu0 0.0
  %1017 = vmatpush1.xpose.msra.mxu0 0.0
  %1018 = vmatprep.subr.mxu0 0.0
  %1019 = vmatpush1.xpose.msra.mxu0 0.0
  %1020 = vmatprep.subr.mxu0 0.0
  %1021 = vmatpush1.xpose.msra.mxu0 0.0
  %1022 = vmatprep.subr.mxu0 0.0
  %1023 = vmatpush1.xpose.msra.mxu0 0.0
  %1024 = vmatprep.subr.mxu0 0.0
  %1025 = vmatpush1.xpose.msra.mxu0 0.0
  %1026 = vmatprep.subr.mxu0 0.0
  %1027 = vmatpush1.xpose.msra.mxu0 0.0
  %1028 = vmatprep.subr.mxu0 0.0
  %1029 = vmatpush1.xpose.msra.mxu0 0.0
  %1030 = vmatprep.subr.mxu0 0.0
  %1031 = vmatpush1.xpose.msra.mxu0 0.0
  %1032 = vmatprep.subr.mxu0 0.0
  %1033 = vmatpush1.xpose.msra.mxu0 0.0
  %1034 = vmatprep.subr.mxu0 0.0
  %1035 = vmatpush1.xpose.msra.mxu0 0.0
  %1036 = vmatprep.mubr.f32.mxu0 0.0
  %1037 = vmatmul.mubr.f32.gmra.mrb[0].mxu0 %v967
  %v1038 = vpop.f32.mrb[0].mxu0
  %v1039 = vadd.f32 0.0, %v1038
  %v1040 = vpop.f32.mrb[0].mxu0
  %1041 = vdwg.mxu0
  %v1043 = vsel %vm813, %v776, 0
  %v1046 = vsel %vm813, %v724, 0
  %1048 = vmatprep.subr.mxu0 0.0
  %1049 = vmatpush1.xpose.msra.mxu0 %v1046
  %1050 = vmatprep.subr.mxu0 0.0
  %1051 = vmatpush1.xpose.msra.mxu0 0.0
  %1052 = vmatprep.subr.mxu0 0.0
  %1053 = vmatpush1.xpose.msra.mxu0 0.0
  %1054 = vmatprep.subr.mxu0 0.0
  %1055 = vmatpush1.xpose.msra.mxu0 0.0
  %1056 = vmatprep.subr.mxu0 0.0
  %1057 = vmatpush1.xpose.msra.mxu0 0.0
  %1058 = vmatprep.subr.mxu0 0.0
  %1059 = vmatpush1.xpose.msra.mxu0 0.0
  %1060 = vmatprep.subr.mxu0 0.0
  %1061 = vmatpush1.xpose.msra.mxu0 0.0
  %1062 = vmatprep.subr.mxu0 0.0
  %1063 = vmatpush1.xpose.msra.mxu0 0.0
  %1064 = vmatprep.subr.mxu0 0.0
  %1065 = vmatpush1.xpose.msra.mxu0 0.0
  %1066 = vmatprep.subr.mxu0 0.0
  %1067 = vmatpush1.xpose.msra.mxu0 0.0
  %1068 = vmatprep.subr.mxu0 0.0
  %1069 = vmatpush1.xpose.msra.mxu0 0.0
  %1070 = vmatprep.subr.mxu0 0.0
  %1071 = vmatpush1.xpose.msra.mxu0 0.0
  %1072 = vmatprep.subr.mxu0 0.0
  %1073 = vmatpush1.xpose.msra.mxu0 0.0
  %1074 = vmatprep.subr.mxu0 0.0
  %1075 = vmatpush1.xpose.msra.mxu0 0.0
  %1076 = vmatprep.subr.mxu0 0.0
  %1077 = vmatpush1.xpose.msra.mxu0 0.0
  %1078 = vmatprep.subr.mxu0 0.0
  %1079 = vmatpush1.xpose.msra.mxu0 0.0
  %1080 = vmatprep.subr.mxu0 0.0
  %1081 = vmatpush1.xpose.msra.mxu0 0.0
  %1082 = vmatprep.subr.mxu0 0.0
  %1083 = vmatpush1.xpose.msra.mxu0 0.0
  %1084 = vmatprep.subr.mxu0 0.0
  %1085 = vmatpush1.xpose.msra.mxu0 0.0
  %1086 = vmatprep.subr.mxu0 0.0
  %1087 = vmatpush1.xpose.msra.mxu0 0.0
  %1088 = vmatprep.subr.mxu0 0.0
  %1089 = vmatpush1.xpose.msra.mxu0 0.0
  %1090 = vmatprep.subr.mxu0 0.0
  %1091 = vmatpush1.xpose.msra.mxu0 0.0
  %1092 = vmatprep.subr.mxu0 0.0
  %1093 = vmatpush1.xpose.msra.mxu0 0.0
  %1094 = vmatprep.subr.mxu0 0.0
  %1095 = vmatpush1.xpose.msra.mxu0 0.0
  %1096 = vmatprep.subr.mxu0 0.0
  %1097 = vmatpush1.xpose.msra.mxu0 0.0
  %1098 = vmatprep.subr.mxu0 0.0
  %1099 = vmatpush1.xpose.msra.mxu0 0.0
  %1100 = vmatprep.subr.mxu0 0.0
  %1101 = vmatpush1.xpose.msra.mxu0 0.0
  %1102 = vmatprep.subr.mxu0 0.0
  %1103 = vmatpush1.xpose.msra.mxu0 0.0
  %1104 = vmatprep.subr.mxu0 0.0
  %1105 = vmatpush1.xpose.msra.mxu0 0.0
  %1106 = vmatprep.subr.mxu0 0.0
  %1107 = vmatpush1.xpose.msra.mxu0 0.0
  %1108 = vmatprep.subr.mxu0 0.0
  %1109 = vmatpush1.xpose.msra.mxu0 0.0
  %1110 = vmatprep.subr.mxu0 0.0
  %1111 = vmatpush1.xpose.msra.mxu0 0.0
  %1112 = vmatprep.mubr.f32.mxu0 0.0
  %1113 = vmatmul.mubr.f32.gmra.mrb[0].mxu0 %v1043
  %v1114 = vpop.f32.mrb[0].mxu0
  %v1115 = vadd.f32 0.0, %v1114
  %v1116 = vpop.f32.mrb[0].mxu0
  %1117 = vdwg.mxu0
  %v1119 = vsel %vm813, %v785, 0
  %v1122 = vsel %vm813, %v726, 0
  %1124 = vmatprep.subr.mxu0 0.0
  %1125 = vmatpush1.xpose.msra.mxu0 %v1122
  %1126 = vmatprep.subr.mxu0 0.0
  %1127 = vmatpush1.xpose.msra.mxu0 0.0
  %1128 = vmatprep.subr.mxu0 0.0
  %1129 = vmatpush1.xpose.msra.mxu0 0.0
  %1130 = vmatprep.subr.mxu0 0.0
  %1131 = vmatpush1.xpose.msra.mxu0 0.0
  %1132 = vmatprep.subr.mxu0 0.0
  %1133 = vmatpush1.xpose.msra.mxu0 0.0
  %1134 = vmatprep.subr.mxu0 0.0
  %1135 = vmatpush1.xpose.msra.mxu0 0.0
  %1136 = vmatprep.subr.mxu0 0.0
  %1137 = vmatpush1.xpose.msra.mxu0 0.0
  %1138 = vmatprep.subr.mxu0 0.0
  %1139 = vmatpush1.xpose.msra.mxu0 0.0
  %1140 = vmatprep.subr.mxu0 0.0
  %1141 = vmatpush1.xpose.msra.mxu0 0.0
  %1142 = vmatprep.subr.mxu0 0.0
  %1143 = vmatpush1.xpose.msra.mxu0 0.0
  %1144 = vmatprep.subr.mxu0 0.0
  %1145 = vmatpush1.xpose.msra.mxu0 0.0
  %1146 = vmatprep.subr.mxu0 0.0
  %1147 = vmatpush1.xpose.msra.mxu0 0.0
  %1148 = vmatprep.subr.mxu0 0.0
  %1149 = vmatpush1.xpose.msra.mxu0 0.0
  %1150 = vmatprep.subr.mxu0 0.0
  %1151 = vmatpush1.xpose.msra.mxu0 0.0
  %1152 = vmatprep.subr.mxu0 0.0
  %1153 = vmatpush1.xpose.msra.mxu0 0.0
  %1154 = vmatprep.subr.mxu0 0.0
  %1155 = vmatpush1.xpose.msra.mxu0 0.0
  %1156 = vmatprep.subr.mxu0 0.0
  %1157 = vmatpush1.xpose.msra.mxu0 0.0
  %1158 = vmatprep.subr.mxu0 0.0
  %1159 = vmatpush1.xpose.msra.mxu0 0.0
  %1160 = vmatprep.subr.mxu0 0.0
  %1161 = vmatpush1.xpose.msra.mxu0 0.0
  %1162 = vmatprep.subr.mxu0 0.0
  %1163 = vmatpush1.xpose.msra.mxu0 0.0
  %1164 = vmatprep.subr.mxu0 0.0
  %1165 = vmatpush1.xpose.msra.mxu0 0.0
  %1166 = vmatprep.subr.mxu0 0.0
  %1167 = vmatpush1.xpose.msra.mxu0 0.0
  %1168 = vmatprep.subr.mxu0 0.0
  %1169 = vmatpush1.xpose.msra.mxu0 0.0
  %1170 = vmatprep.subr.mxu0 0.0
  %1171 = vmatpush1.xpose.msra.mxu0 0.0
  %1172 = vmatprep.subr.mxu0 0.0
  %1173 = vmatpush1.xpose.msra.mxu0 0.0
  %1174 = vmatprep.subr.mxu0 0.0
  %1175 = vmatpush1.xpose.msra.mxu0 0.0
  %1176 = vmatprep.subr.mxu0 0.0
  %1177 = vmatpush1.xpose.msra.mxu0 0.0
  %1178 = vmatprep.subr.mxu0 0.0
  %1179 = vmatpush1.xpose.msra.mxu0 0.0
  %1180 = vmatprep.subr.mxu0 0.0
  %1181 = vmatpush1.xpose.msra.mxu0 0.0
  %1182 = vmatprep.subr.mxu0 0.0
  %1183 = vmatpush1.xpose.msra.mxu0 0.0
  %1184 = vmatprep.subr.mxu0 0.0
  %1185 = vmatpush1.xpose.msra.mxu0 0.0
  %1186 = vmatprep.subr.mxu0 0.0
  %1187 = vmatpush1.xpose.msra.mxu0 0.0
  %1188 = vmatprep.mubr.f32.mxu0 0.0
  %1189 = vmatmul.mubr.f32.gmra.mrb[0].mxu0 %v1119
  %v1190 = vpop.f32.mrb[0].mxu0
  %v1191 = vadd.f32 0.0, %v1190
  %v1192 = vpop.f32.mrb[0].mxu0
  %1193 = vdwg.mxu0
  %v1195 = vsel %vm813, %v794, 0
  %v1198 = vsel %vm813, %v728, 0
  %1200 = vmatprep.subr.mxu0 0.0
  %1201 = vmatpush1.xpose.msra.mxu0 %v1198
  %1202 = vmatprep.subr.mxu0 0.0
  %1203 = vmatpush1.xpose.msra.mxu0 0.0
  %1204 = vmatprep.subr.mxu0 0.0
  %1205 = vmatpush1.xpose.msra.mxu0 0.0
  %1206 = vmatprep.subr.mxu0 0.0
  %1207 = vmatpush1.xpose.msra.mxu0 0.0
  %1208 = vmatprep.subr.mxu0 0.0
  %1209 = vmatpush1.xpose.msra.mxu0 0.0
  %1210 = vmatprep.subr.mxu0 0.0
  %1211 = vmatpush1.xpose.msra.mxu0 0.0
  %1212 = vmatprep.subr.mxu0 0.0
  %1213 = vmatpush1.xpose.msra.mxu0 0.0
  %1214 = vmatprep.subr.mxu0 0.0
  %1215 = vmatpush1.xpose.msra.mxu0 0.0
  %1216 = vmatprep.subr.mxu0 0.0
  %1217 = vmatpush1.xpose.msra.mxu0 0.0
  %1218 = vmatprep.subr.mxu0 0.0
  %1219 = vmatpush1.xpose.msra.mxu0 0.0
  %1220 = vmatprep.subr.mxu0 0.0
  %1221 = vmatpush1.xpose.msra.mxu0 0.0
  %1222 = vmatprep.subr.mxu0 0.0
  %1223 = vmatpush1.xpose.msra.mxu0 0.0
  %1224 = vmatprep.subr.mxu0 0.0
  %1225 = vmatpush1.xpose.msra.mxu0 0.0
  %1226 = vmatprep.subr.mxu0 0.0
  %1227 = vmatpush1.xpose.msra.mxu0 0.0
  %1228 = vmatprep.subr.mxu0 0.0
  %1229 = vmatpush1.xpose.msra.mxu0 0.0
  %1230 = vmatprep.subr.mxu0 0.0
  %1231 = vmatpush1.xpose.msra.mxu0 0.0
  %1232 = vmatprep.subr.mxu0 0.0
  %1233 = vmatpush1.xpose.msra.mxu0 0.0
  %1234 = vmatprep.subr.mxu0 0.0
  %1235 = vmatpush1.xpose.msra.mxu0 0.0
  %1236 = vmatprep.subr.mxu0 0.0
  %1237 = vmatpush1.xpose.msra.mxu0 0.0
  %1238 = vmatprep.subr.mxu0 0.0
  %1239 = vmatpush1.xpose.msra.mxu0 0.0
  %1240 = vmatprep.subr.mxu0 0.0
  %1241 = vmatpush1.xpose.msra.mxu0 0.0
  %1242 = vmatprep.subr.mxu0 0.0
  %1243 = vmatpush1.xpose.msra.mxu0 0.0
  %1244 = vmatprep.subr.mxu0 0.0
  %1245 = vmatpush1.xpose.msra.mxu0 0.0
  %1246 = vmatprep.subr.mxu0 0.0
  %1247 = vmatpush1.xpose.msra.mxu0 0.0
  %1248 = vmatprep.subr.mxu0 0.0
  %1249 = vmatpush1.xpose.msra.mxu0 0.0
  %1250 = vmatprep.subr.mxu0 0.0
  %1251 = vmatpush1.xpose.msra.mxu0 0.0
  %1252 = vmatprep.subr.mxu0 0.0
  %1253 = vmatpush1.xpose.msra.mxu0 0.0
  %1254 = vmatprep.subr.mxu0 0.0
  %1255 = vmatpush1.xpose.msra.mxu0 0.0
  %1256 = vmatprep.subr.mxu0 0.0
  %1257 = vmatpush1.xpose.msra.mxu0 0.0
  %1258 = vmatprep.subr.mxu0 0.0
  %1259 = vmatpush1.xpose.msra.mxu0 0.0
  %1260 = vmatprep.subr.mxu0 0.0
  %1261 = vmatpush1.xpose.msra.mxu0 0.0
  %1262 = vmatprep.subr.mxu0 0.0
  %1263 = vmatpush1.xpose.msra.mxu0 0.0
  %1264 = vmatprep.mubr.f32.mxu0 0.0
  %1265 = vmatmul.mubr.f32.gmra.mrb[0].mxu0 %v1195
  %v1266 = vpop.f32.mrb[0].mxu0
  %v1267 = vadd.f32 0.0, %v1266
  %v1268 = vpop.f32.mrb[0].mxu0
  %1269 = vdwg.mxu0
  %v1271 = vsel %vm813, %v803, 0
  %v1274 = vsel %vm813, %v730, 0
  %1276 = vmatprep.subr.mxu0 0.0
  %1277 = vmatpush1.xpose.msra.mxu0 %v1274
  %1278 = vmatprep.subr.mxu0 0.0
  %1279 = vmatpush1.xpose.msra.mxu0 0.0
  %1280 = vmatprep.subr.mxu0 0.0
  %1281 = vmatpush1.xpose.msra.mxu0 0.0
  %1282 = vmatprep.subr.mxu0 0.0
  %1283 = vmatpush1.xpose.msra.mxu0 0.0
  %1284 = vmatprep.subr.mxu0 0.0
  %1285 = vmatpush1.xpose.msra.mxu0 0.0
  %1286 = vmatprep.subr.mxu0 0.0
  %1287 = vmatpush1.xpose.msra.mxu0 0.0
  %1288 = vmatprep.subr.mxu0 0.0
  %1289 = vmatpush1.xpose.msra.mxu0 0.0
  %1290 = vmatprep.subr.mxu0 0.0
  %1291 = vmatpush1.xpose.msra.mxu0 0.0
  %1292 = vmatprep.subr.mxu0 0.0
  %1293 = vmatpush1.xpose.msra.mxu0 0.0
  %1294 = vmatprep.subr.mxu0 0.0
  %1295 = vmatpush1.xpose.msra.mxu0 0.0
  %1296 = vmatprep.subr.mxu0 0.0
  %1297 = vmatpush1.xpose.msra.mxu0 0.0
  %1298 = vmatprep.subr.mxu0 0.0
  %1299 = vmatpush1.xpose.msra.mxu0 0.0
  %1300 = vmatprep.subr.mxu0 0.0
  %1301 = vmatpush1.xpose.msra.mxu0 0.0
  %1302 = vmatprep.subr.mxu0 0.0
  %1303 = vmatpush1.xpose.msra.mxu0 0.0
  %1304 = vmatprep.subr.mxu0 0.0
  %1305 = vmatpush1.xpose.msra.mxu0 0.0
  %1306 = vmatprep.subr.mxu0 0.0
  %1307 = vmatpush1.xpose.msra.mxu0 0.0
  %1308 = vmatprep.subr.mxu0 0.0
  %1309 = vmatpush1.xpose.msra.mxu0 0.0
  %1310 = vmatprep.subr.mxu0 0.0
  %1311 = vmatpush1.xpose.msra.mxu0 0.0
  %1312 = vmatprep.subr.mxu0 0.0
  %1313 = vmatpush1.xpose.msra.mxu0 0.0
  %1314 = vmatprep.subr.mxu0 0.0
  %1315 = vmatpush1.xpose.msra.mxu0 0.0
  %1316 = vmatprep.subr.mxu0 0.0
  %1317 = vmatpush1.xpose.msra.mxu0 0.0
  %1318 = vmatprep.subr.mxu0 0.0
  %1319 = vmatpush1.xpose.msra.mxu0 0.0
  %1320 = vmatprep.subr.mxu0 0.0
  %1321 = vmatpush1.xpose.msra.mxu0 0.0
  %1322 = vmatprep.subr.mxu0 0.0
  %1323 = vmatpush1.xpose.msra.mxu0 0.0
  %1324 = vmatprep.subr.mxu0 0.0
  %1325 = vmatpush1.xpose.msra.mxu0 0.0
  %1326 = vmatprep.subr.mxu0 0.0
  %1327 = vmatpush1.xpose.msra.mxu0 0.0
  %1328 = vmatprep.subr.mxu0 0.0
  %1329 = vmatpush1.xpose.msra.mxu0 0.0
  %1330 = vmatprep.subr.mxu0 0.0
  %1331 = vmatpush1.xpose.msra.mxu0 0.0
  %1332 = vmatprep.subr.mxu0 0.0
  %1333 = vmatpush1.xpose.msra.mxu0 0.0
  %1334 = vmatprep.subr.mxu0 0.0
  %1335 = vmatpush1.xpose.msra.mxu0 0.0
  %1336 = vmatprep.subr.mxu0 0.0
  %1337 = vmatpush1.xpose.msra.mxu0 0.0
  %1338 = vmatprep.subr.mxu0 0.0
  %1339 = vmatpush1.xpose.msra.mxu0 0.0
  %1340 = vmatprep.mubr.f32.mxu0 0.0
  %1341 = vmatmul.mubr.f32.gmra.mrb[0].mxu0 %v1271
  %v1342 = vpop.f32.mrb[0].mxu0
  %v1343 = vadd.f32 0.0, %v1342
  %v1344 = vpop.f32.mrb[0].mxu0
  %1345 = vdwg.mxu0
  %v1347 = vsel %vm813, %v812, 0
  %v1350 = vsel %vm813, %v732, 0
  %1352 = vmatprep.subr.mxu0 0.0
  %1353 = vmatpush1.xpose.msra.mxu0 %v1350
  %1354 = vmatprep.subr.mxu0 0.0
  %1355 = vmatpush1.xpose.msra.mxu0 0.0
  %1356 = vmatprep.subr.mxu0 0.0
  %1357 = vmatpush1.xpose.msra.mxu0 0.0
  %1358 = vmatprep.subr.mxu0 0.0
  %1359 = vmatpush1.xpose.msra.mxu0 0.0
  %1360 = vmatprep.subr.mxu0 0.0
  %1361 = vmatpush1.xpose.msra.mxu0 0.0
  %1362 = vmatprep.subr.mxu0 0.0
  %1363 = vmatpush1.xpose.msra.mxu0 0.0
  %1364 = vmatprep.subr.mxu0 0.0
  %1365 = vmatpush1.xpose.msra.mxu0 0.0
  %1366 = vmatprep.subr.mxu0 0.0
  %1367 = vmatpush1.xpose.msra.mxu0 0.0
  %1368 = vmatprep.subr.mxu0 0.0
  %1369 = vmatpush1.xpose.msra.mxu0 0.0
  %1370 = vmatprep.subr.mxu0 0.0
  %1371 = vmatpush1.xpose.msra.mxu0 0.0
  %1372 = vmatprep.subr.mxu0 0.0
  %1373 = vmatpush1.xpose.msra.mxu0 0.0
  %1374 = vmatprep.subr.mxu0 0.0
  %1375 = vmatpush1.xpose.msra.mxu0 0.0
  %1376 = vmatprep.subr.mxu0 0.0
  %1377 = vmatpush1.xpose.msra.mxu0 0.0
  %1378 = vmatprep.subr.mxu0 0.0
  %1379 = vmatpush1.xpose.msra.mxu0 0.0
  %1380 = vmatprep.subr.mxu0 0.0
  %1381 = vmatpush1.xpose.msra.mxu0 0.0
  %1382 = vmatprep.subr.mxu0 0.0
  %1383 = vmatpush1.xpose.msra.mxu0 0.0
  %1384 = vmatprep.subr.mxu0 0.0
  %1385 = vmatpush1.xpose.msra.mxu0 0.0
  %1386 = vmatprep.subr.mxu0 0.0
  %1387 = vmatpush1.xpose.msra.mxu0 0.0
  %1388 = vmatprep.subr.mxu0 0.0
  %1389 = vmatpush1.xpose.msra.mxu0 0.0
  %1390 = vmatprep.subr.mxu0 0.0
  %1391 = vmatpush1.xpose.msra.mxu0 0.0
  %1392 = vmatprep.subr.mxu0 0.0
  %1393 = vmatpush1.xpose.msra.mxu0 0.0
  %1394 = vmatprep.subr.mxu0 0.0
  %1395 = vmatpush1.xpose.msra.mxu0 0.0
  %1396 = vmatprep.subr.mxu0 0.0
  %1397 = vmatpush1.xpose.msra.mxu0 0.0
  %1398 = vmatprep.subr.mxu0 0.0
  %1399 = vmatpush1.xpose.msra.mxu0 0.0
  %1400 = vmatprep.subr.mxu0 0.0
  %1401 = vmatpush1.xpose.msra.mxu0 0.0
  %1402 = vmatprep.subr.mxu0 0.0
  %1403 = vmatpush1.xpose.msra.mxu0 0.0
  %1404 = vmatprep.subr.mxu0 0.0
  %1405 = vmatpush1.xpose.msra.mxu0 0.0
  %1406 = vmatprep.subr.mxu0 0.0
  %1407 = vmatpush1.xpose.msra.mxu0 0.0
  %1408 = vmatprep.subr.mxu0 0.0
  %1409 = vmatpush1.xpose.msra.mxu0 0.0
  %1410 = vmatprep.subr.mxu0 0.0
  %1411 = vmatpush1.xpose.msra.mxu0 0.0
  %1412 = vmatprep.subr.mxu0 0.0
  %1413 = vmatpush1.xpose.msra.mxu0 0.0
  %1414 = vmatprep.subr.mxu0 0.0
  %1415 = vmatpush1.xpose.msra.mxu0 0.0
  %1416 = vmatprep.mubr.f32.mxu0 0.0
  %1417 = vmatmul.mubr.f32.gmra.mrb[0].mxu0 %v1347
  %v1418 = vpop.f32.mrb[0].mxu0
  %v1419 = vadd.f32 0.0, %v1418
  %v1420 = vpop.f32.mrb[0].mxu0
  %1421 = vdwg.mxu0
  %v1422 = vld [vmem:[%s0] sm:$0x1]
  %v1423 = vld [vmem:[%s0 + $0x1] sm:$0x1]
  %v1424 = vld [vmem:[%s0 + $0x2] sm:$0x1]
  %v1425 = vld [vmem:[%s0 + $0x3] sm:$0x1]
  %v1426 = vld [vmem:[%s0 + $0x4] sm:$0x1]
  %v1427 = vld [vmem:[%s0 + $0x5] sm:$0x1]
  %v1428 = vld [vmem:[%s0 + $0x6] sm:$0x1]
  %v1429 = vld [vmem:[%s0 + $0x7] sm:$0x1]
  %v1430 = vmul.f32 %v887, 0.01
  %v1431 = vmul.f32 %v963, 0.01
  %v1432 = vmul.f32 %v1039, 0.01
  %v1433 = vmul.f32 %v1115, 0.01
  %v1434 = vmul.f32 %v1191, 0.01
  %v1435 = vmul.f32 %v1267, 0.01
  %v1436 = vmul.f32 %v1343, 0.01
  %v1437 = vmul.f32 %v1419, 0.01
  %v1438 = vadd.f32 %v1422, %v1430
  %v1439 = vadd.f32 %v1423, %v1431
  %v1440 = vadd.f32 %v1424, %v1432
  %v1441 = vadd.f32 %v1425, %v1433
  %v1442 = vadd.f32 %v1426, %v1434
  %v1443 = vadd.f32 %v1427, %v1435
  %v1444 = vadd.f32 %v1428, %v1436
  %v1445 = vadd.f32 %v1429, %v1437
  %vm1446 = vcmask 24576
  %v1447 = vsel %vm1446, %v1438, -inf
  %1448 = vmax.xlane.f32.xlu0 %v1447
  %v1449 = vpop.xlane.xlu0 %1448
  %v1450 = vsel %vm1446, %v1439, -inf
  %1451 = vmax.xlane.f32.xlu0 %v1450
  %v1452 = vpop.xlane.xlu0 %1451
  %v1453 = vsel %vm1446, %v1440, -inf
  %1454 = vmax.xlane.f32.xlu0 %v1453
  %v1455 = vpop.xlane.xlu0 %1454
  %v1456 = vsel %vm1446, %v1441, -inf
  %1457 = vmax.xlane.f32.xlu0 %v1456
  %v1458 = vpop.xlane.xlu0 %1457
  %v1459 = vsel %vm1446, %v1442, -inf
  %1460 = vmax.xlane.f32.xlu0 %v1459
  %v1461 = vpop.xlane.xlu0 %1460
  %v1462 = vsel %vm1446, %v1443, -inf
  %1463 = vmax.xlane.f32.xlu0 %v1462
  %v1464 = vpop.xlane.xlu0 %1463
  %v1465 = vsel %vm1446, %v1444, -inf
  %1466 = vmax.xlane.f32.xlu0 %v1465
  %v1467 = vpop.xlane.xlu0 %1466
  %v1468 = vsel %vm1446, %v1445, -inf
  %1469 = vmax.xlane.f32.xlu0 %v1468
  %v1470 = vpop.xlane.xlu0 %1469
  %v1471 = vsub.f32 %v1438, %v1449
  %v1472 = vsub.f32 %v1439, %v1452
  %v1473 = vsub.f32 %v1440, %v1455
  %v1474 = vsub.f32 %v1441, %v1458
  %v1475 = vsub.f32 %v1442, %v1461
  %v1476 = vsub.f32 %v1443, %v1464
  %v1477 = vsub.f32 %v1444, %v1467
  %v1478 = vsub.f32 %v1445, %v1470
  %v1479 = vmul.f32 %v1471, 1.442695
  %v1480 = vpow.pop %v1479
  %v1481 = vmul.f32 %v1472, 1.442695
  %v1482 = vpow.pop %v1481
  %v1483 = vmul.f32 %v1473, 1.442695
  %v1484 = vpow.pop %v1483
  %v1485 = vmul.f32 %v1474, 1.442695
  %v1486 = vpow.pop %v1485
  %v1487 = vmul.f32 %v1475, 1.442695
  %v1488 = vpow.pop %v1487
  %v1489 = vmul.f32 %v1476, 1.442695
  %v1490 = vpow.pop %v1489
  %v1491 = vmul.f32 %v1477, 1.442695
  %v1492 = vpow.pop %v1491
  %v1493 = vmul.f32 %v1478, 1.442695
  %v1494 = vpow.pop %v1493
  %v1495 = vsel %vm1446, %v1480, 0.0
  %1496 = vadd.xlane.f32.xlu0 %v1495
  %v1497 = vpop.xlane.xlu0 %1496
  %v1498 = vsel %vm1446, %v1482, 0.0
  %1499 = vadd.xlane.f32.xlu0 %v1498
  %v1500 = vpop.xlane.xlu0 %1499
  %v1501 = vsel %vm1446, %v1484, 0.0
  %1502 = vadd.xlane.f32.xlu0 %v1501
  %v1503 = vpop.xlane.xlu0 %1502
  %v1504 = vsel %vm1446, %v1486, 0.0
  %1505 = vadd.xlane.f32.xlu0 %v1504
  %v1506 = vpop.xlane.xlu0 %1505
  %v1507 = vsel %vm1446, %v1488, 0.0
  %1508 = vadd.xlane.f32.xlu0 %v1507
  %v1509 = vpop.xlane.xlu0 %1508
  %v1510 = vsel %vm1446, %v1490, 0.0
  %1511 = vadd.xlane.f32.xlu0 %v1510
  %v1512 = vpop.xlane.xlu0 %1511
  %v1513 = vsel %vm1446, %v1492, 0.0
  %1514 = vadd.xlane.f32.xlu0 %v1513
  %v1515 = vpop.xlane.xlu0 %1514
  %v1516 = vsel %vm1446, %v1494, 0.0
  %1517 = vadd.xlane.f32.xlu0 %v1516
  %v1518 = vpop.xlane.xlu0 %1517
  %v1519 = vrcp.pop %v1497
  %v1520 = vmul.f32 %v1480, %v1519
  %v1521 = vrcp.pop %v1500
  %v1522 = vmul.f32 %v1482, %v1521
  %v1523 = vrcp.pop %v1503
  %v1524 = vmul.f32 %v1484, %v1523
  %v1525 = vrcp.pop %v1506
  %v1526 = vmul.f32 %v1486, %v1525
  %v1527 = vrcp.pop %v1509
  %v1528 = vmul.f32 %v1488, %v1527
  %v1529 = vrcp.pop %v1512
  %v1530 = vmul.f32 %v1490, %v1529
  %v1531 = vrcp.pop %v1515
  %v1532 = vmul.f32 %v1492, %v1531
  %v1533 = vrcp.pop %v1518
  %v1534 = vmul.f32 %v1494, %v1533
  %v1535 = vld [vmem:[%s4] sm:$0xf]
  %v1536 = vld [vmem:[%s4 + $0x4] sm:$0xf]
  %v1537 = vld [vmem:[%s4 + $0x8] sm:$0xf]
  %v1538 = vld [vmem:[%s4 + $0xc] sm:$0xf]
  %v1539 = vld [vmem:[%s4 + $0x10] sm:$0xf]
  %v1540 = vld [vmem:[%s4 + $0x14] sm:$0xf]
  %v1541 = vld [vmem:[%s4 + $0x18] sm:$0xf]
  %v1542 = vld [vmem:[%s4 + $0x1c] sm:$0xf]
  %v1544 = vsel %vm813, %v1520, 0
  %vm1546 = vcmask 1043456
  %v1548 = vsel %vm1546, %v1535, 0
  %1550 = vmatprep.subr.mxu0 0.0
  %1551 = vmatpush1.msra.mxu0 %v1548
  %1552 = vmatprep.subr.mxu0 0.0
  %1553 = vmatpush1.msra.mxu0 0.0
  %1554 = vmatprep.subr.mxu0 0.0
  %1555 = vmatpush1.msra.mxu0 0.0
  %1556 = vmatprep.subr.mxu0 0.0
  %1557 = vmatpush1.msra.mxu0 0.0
  %1558 = vmatprep.subr.mxu0 0.0
  %1559 = vmatpush1.msra.mxu0 0.0
  %1560 = vmatprep.subr.mxu0 0.0
  %1561 = vmatpush1.msra.mxu0 0.0
  %1562 = vmatprep.subr.mxu0 0.0
  %1563 = vmatpush1.msra.mxu0 0.0
  %1564 = vmatprep.subr.mxu0 0.0
  %1565 = vmatpush1.msra.mxu0 0.0
  %1566 = vmatprep.subr.mxu0 0.0
  %1567 = vmatpush1.msra.mxu0 0.0
  %1568 = vmatprep.subr.mxu0 0.0
  %1569 = vmatpush1.msra.mxu0 0.0
  %1570 = vmatprep.subr.mxu0 0.0
  %1571 = vmatpush1.msra.mxu0 0.0
  %1572 = vmatprep.subr.mxu0 0.0
  %1573 = vmatpush1.msra.mxu0 0.0
  %1574 = vmatprep.subr.mxu0 0.0
  %1575 = vmatpush1.msra.mxu0 0.0
  %1576 = vmatprep.subr.mxu0 0.0
  %1577 = vmatpush1.msra.mxu0 0.0
  %1578 = vmatprep.subr.mxu0 0.0
  %1579 = vmatpush1.msra.mxu0 0.0
  %1580 = vmatprep.subr.mxu0 0.0
  %1581 = vmatpush1.msra.mxu0 0.0
  %1582 = vmatprep.subr.mxu0 0.0
  %1583 = vmatpush1.msra.mxu0 0.0
  %1584 = vmatprep.subr.mxu0 0.0
  %1585 = vmatpush1.msra.mxu0 0.0
  %1586 = vmatprep.subr.mxu0 0.0
  %1587 = vmatpush1.msra.mxu0 0.0
  %1588 = vmatprep.subr.mxu0 0.0
  %1589 = vmatpush1.msra.mxu0 0.0
  %1590 = vmatprep.subr.mxu0 0.0
  %1591 = vmatpush1.msra.mxu0 0.0
  %1592 = vmatprep.subr.mxu0 0.0
  %1593 = vmatpush1.msra.mxu0 0.0
  %1594 = vmatprep.subr.mxu0 0.0
  %1595 = vmatpush1.msra.mxu0 0.0
  %1596 = vmatprep.subr.mxu0 0.0
  %1597 = vmatpush1.msra.mxu0 0.0
  %1598 = vmatprep.subr.mxu0 0.0
  %1599 = vmatpush1.msra.mxu0 0.0
  %1600 = vmatprep.subr.mxu0 0.0
  %1601 = vmatpush1.msra.mxu0 0.0
  %1602 = vmatprep.subr.mxu0 0.0
  %1603 = vmatpush1.msra.mxu0 0.0
  %1604 = vmatprep.subr.mxu0 0.0
  %1605 = vmatpush1.msra.mxu0 0.0
  %1606 = vmatprep.subr.mxu0 0.0
  %1607 = vmatpush1.msra.mxu0 0.0
  %1608 = vmatprep.subr.mxu0 0.0
  %1609 = vmatpush1.msra.mxu0 0.0
  %1610 = vmatprep.subr.mxu0 0.0
  %1611 = vmatpush1.msra.mxu0 0.0
  %1612 = vmatprep.subr.mxu0 0.0
  %1613 = vmatpush1.msra.mxu0 0.0
  %1614 = vmatprep.mubr.f32.mxu0 0.0
  %1615 = vmatmul.mubr.f32.gmra.mrb[0].mxu0 %v1544
  %v1616 = vpop.f32.mrb[0].mxu0
  %v1617 = vadd.f32 0.0, %v1616
  %v1618 = vpop.f32.mrb[0].mxu0
  %1619 = vdwg.mxu0
  %v1621 = vsel %vm813, %v1522, 0
  %v1624 = vsel %vm1546, %v1536, 0
  %1626 = vmatprep.subr.mxu0 0.0
  %1627 = vmatpush1.msra.mxu0 %v1624
  %1628 = vmatprep.subr.mxu0 0.0
  %1629 = vmatpush1.msra.mxu0 0.0
  %1630 = vmatprep.subr.mxu0 0.0
  %1631 = vmatpush1.msra.mxu0 0.0
  %1632 = vmatprep.subr.mxu0 0.0
  %1633 = vmatpush1.msra.mxu0 0.0
  %1634 = vmatprep.subr.mxu0 0.0
  %1635 = vmatpush1.msra.mxu0 0.0
  %1636 = vmatprep.subr.mxu0 0.0
  %1637 = vmatpush1.msra.mxu0 0.0
  %1638 = vmatprep.subr.mxu0 0.0
  %1639 = vmatpush1.msra.mxu0 0.0
  %1640 = vmatprep.subr.mxu0 0.0
  %1641 = vmatpush1.msra.mxu0 0.0
  %1642 = vmatprep.subr.mxu0 0.0
  %1643 = vmatpush1.msra.mxu0 0.0
  %1644 = vmatprep.subr.mxu0 0.0
  %1645 = vmatpush1.msra.mxu0 0.0
  %1646 = vmatprep.subr.mxu0 0.0
  %1647 = vmatpush1.msra.mxu0 0.0
  %1648 = vmatprep.subr.mxu0 0.0
  %1649 = vmatpush1.msra.mxu0 0.0
  %1650 = vmatprep.subr.mxu0 0.0
  %1651 = vmatpush1.msra.mxu0 0.0
  %1652 = vmatprep.subr.mxu0 0.0
  %1653 = vmatpush1.msra.mxu0 0.0
  %1654 = vmatprep.subr.mxu0 0.0
  %1655 = vmatpush1.msra.mxu0 0.0
  %1656 = vmatprep.subr.mxu0 0.0
  %1657 = vmatpush1.msra.mxu0 0.0
  %1658 = vmatprep.subr.mxu0 0.0
  %1659 = vmatpush1.msra.mxu0 0.0
  %1660 = vmatprep.subr.mxu0 0.0
  %1661 = vmatpush1.msra.mxu0 0.0
  %1662 = vmatprep.subr.mxu0 0.0
  %1663 = vmatpush1.msra.mxu0 0.0
  %1664 = vmatprep.subr.mxu0 0.0
  %1665 = vmatpush1.msra.mxu0 0.0
  %1666 = vmatprep.subr.mxu0 0.0
  %1667 = vmatpush1.msra.mxu0 0.0
  %1668 = vmatprep.subr.mxu0 0.0
  %1669 = vmatpush1.msra.mxu0 0.0
  %1670 = vmatprep.subr.mxu0 0.0
  %1671 = vmatpush1.msra.mxu0 0.0
  %1672 = vmatprep.subr.mxu0 0.0
  %1673 = vmatpush1.msra.mxu0 0.0
  %1674 = vmatprep.subr.mxu0 0.0
  %1675 = vmatpush1.msra.mxu0 0.0
  %1676 = vmatprep.subr.mxu0 0.0
  %1677 = vmatpush1.msra.mxu0 0.0
  %1678 = vmatprep.subr.mxu0 0.0
  %1679 = vmatpush1.msra.mxu0 0.0
  %1680 = vmatprep.subr.mxu0 0.0
  %1681 = vmatpush1.msra.mxu0 0.0
  %1682 = vmatprep.subr.mxu0 0.0
  %1683 = vmatpush1.msra.mxu0 0.0
  %1684 = vmatprep.subr.mxu0 0.0
  %1685 = vmatpush1.msra.mxu0 0.0
  %1686 = vmatprep.subr.mxu0 0.0
  %1687 = vmatpush1.msra.mxu0 0.0
  %1688 = vmatprep.subr.mxu0 0.0
  %1689 = vmatpush1.msra.mxu0 0.0
  %1690 = vmatprep.mubr.f32.mxu0 0.0
  %1691 = vmatmul.mubr.f32.gmra.mrb[0].mxu0 %v1621
  %v1692 = vpop.f32.mrb[0].mxu0
  %v1693 = vadd.f32 0.0, %v1692
  %v1694 = vpop.f32.mrb[0].mxu0
  %1695 = vdwg.mxu0
  %v1697 = vsel %vm813, %v1524, 0
  %v1700 = vsel %vm1546, %v1537, 0
  %1702 = vmatprep.subr.mxu0 0.0
  %1703 = vmatpush1.msra.mxu0 %v1700
  %1704 = vmatprep.subr.mxu0 0.0
  %1705 = vmatpush1.msra.mxu0 0.0
  %1706 = vmatprep.subr.mxu0 0.0
  %1707 = vmatpush1.msra.mxu0 0.0
  %1708 = vmatprep.subr.mxu0 0.0
  %1709 = vmatpush1.msra.mxu0 0.0
  %1710 = vmatprep.subr.mxu0 0.0
  %1711 = vmatpush1.msra.mxu0 0.0
  %1712 = vmatprep.subr.mxu0 0.0
  %1713 = vmatpush1.msra.mxu0 0.0
  %1714 = vmatprep.subr.mxu0 0.0
  %1715 = vmatpush1.msra.mxu0 0.0
  %1716 = vmatprep.subr.mxu0 0.0
  %1717 = vmatpush1.msra.mxu0 0.0
  %1718 = vmatprep.subr.mxu0 0.0
  %1719 = vmatpush1.msra.mxu0 0.0
  %1720 = vmatprep.subr.mxu0 0.0
  %1721 = vmatpush1.msra.mxu0 0.0
  %1722 = vmatprep.subr.mxu0 0.0
  %1723 = vmatpush1.msra.mxu0 0.0
  %1724 = vmatprep.subr.mxu0 0.0
  %1725 = vmatpush1.msra.mxu0 0.0
  %1726 = vmatprep.subr.mxu0 0.0
  %1727 = vmatpush1.msra.mxu0 0.0
  %1728 = vmatprep.subr.mxu0 0.0
  %1729 = vmatpush1.msra.mxu0 0.0
  %1730 = vmatprep.subr.mxu0 0.0
  %1731 = vmatpush1.msra.mxu0 0.0
  %1732 = vmatprep.subr.mxu0 0.0
  %1733 = vmatpush1.msra.mxu0 0.0
  %1734 = vmatprep.subr.mxu0 0.0
  %1735 = vmatpush1.msra.mxu0 0.0
  %1736 = vmatprep.subr.mxu0 0.0
  %1737 = vmatpush1.msra.mxu0 0.0
  %1738 = vmatprep.subr.mxu0 0.0
  %1739 = vmatpush1.msra.mxu0 0.0
  %1740 = vmatprep.subr.mxu0 0.0
  %1741 = vmatpush1.msra.mxu0 0.0
  %1742 = vmatprep.subr.mxu0 0.0
  %1743 = vmatpush1.msra.mxu0 0.0
  %1744 = vmatprep.subr.mxu0 0.0
  %1745 = vmatpush1.msra.mxu0 0.0
  %1746 = vmatprep.subr.mxu0 0.0
  %1747 = vmatpush1.msra.mxu0 0.0
  %1748 = vmatprep.subr.mxu0 0.0
  %1749 = vmatpush1.msra.mxu0 0.0
  %1750 = vmatprep.subr.mxu0 0.0
  %1751 = vmatpush1.msra.mxu0 0.0
  %1752 = vmatprep.subr.mxu0 0.0
  %1753 = vmatpush1.msra.mxu0 0.0
  %1754 = vmatprep.subr.mxu0 0.0
  %1755 = vmatpush1.msra.mxu0 0.0
  %1756 = vmatprep.subr.mxu0 0.0
  %1757 = vmatpush1.msra.mxu0 0.0
  %1758 = vmatprep.subr.mxu0 0.0
  %1759 = vmatpush1.msra.mxu0 0.0
  %1760 = vmatprep.subr.mxu0 0.0
  %1761 = vmatpush1.msra.mxu0 0.0
  %1762 = vmatprep.subr.mxu0 0.0
  %1763 = vmatpush1.msra.mxu0 0.0
  %1764 = vmatprep.subr.mxu0 0.0
  %1765 = vmatpush1.msra.mxu0 0.0
  %1766 = vmatprep.mubr.f32.mxu0 0.0
  %1767 = vmatmul.mubr.f32.gmra.mrb[0].mxu0 %v1697
  %v1768 = vpop.f32.mrb[0].mxu0
  %v1769 = vadd.f32 0.0, %v1768
  %v1770 = vpop.f32.mrb[0].mxu0
  %1771 = vdwg.mxu0
  %v1773 = vsel %vm813, %v1526, 0
  %v1776 = vsel %vm1546, %v1538, 0
  %1778 = vmatprep.subr.mxu0 0.0
  %1779 = vmatpush1.msra.mxu0 %v1776
  %1780 = vmatprep.subr.mxu0 0.0
  %1781 = vmatpush1.msra.mxu0 0.0
  %1782 = vmatprep.subr.mxu0 0.0
  %1783 = vmatpush1.msra.mxu0 0.0
  %1784 = vmatprep.subr.mxu0 0.0
  %1785 = vmatpush1.msra.mxu0 0.0
  %1786 = vmatprep.subr.mxu0 0.0
  %1787 = vmatpush1.msra.mxu0 0.0
  %1788 = vmatprep.subr.mxu0 0.0
  %1789 = vmatpush1.msra.mxu0 0.0
  %1790 = vmatprep.subr.mxu0 0.0
  %1791 = vmatpush1.msra.mxu0 0.0
  %1792 = vmatprep.subr.mxu0 0.0
  %1793 = vmatpush1.msra.mxu0 0.0
  %1794 = vmatprep.subr.mxu0 0.0
  %1795 = vmatpush1.msra.mxu0 0.0
  %1796 = vmatprep.subr.mxu0 0.0
  %1797 = vmatpush1.msra.mxu0 0.0
  %1798 = vmatprep.subr.mxu0 0.0
  %1799 = vmatpush1.msra.mxu0 0.0
  %1800 = vmatprep.subr.mxu0 0.0
  %1801 = vmatpush1.msra.mxu0 0.0
  %1802 = vmatprep.subr.mxu0 0.0
  %1803 = vmatpush1.msra.mxu0 0.0
  %1804 = vmatprep.subr.mxu0 0.0
  %1805 = vmatpush1.msra.mxu0 0.0
  %1806 = vmatprep.subr.mxu0 0.0
  %1807 = vmatpush1.msra.mxu0 0.0
  %1808 = vmatprep.subr.mxu0 0.0
  %1809 = vmatpush1.msra.mxu0 0.0
  %1810 = vmatprep.subr.mxu0 0.0
  %1811 = vmatpush1.msra.mxu0 0.0
  %1812 = vmatprep.subr.mxu0 0.0
  %1813 = vmatpush1.msra.mxu0 0.0
  %1814 = vmatprep.subr.mxu0 0.0
  %1815 = vmatpush1.msra.mxu0 0.0
  %1816 = vmatprep.subr.mxu0 0.0
  %1817 = vmatpush1.msra.mxu0 0.0
  %1818 = vmatprep.subr.mxu0 0.0
  %1819 = vmatpush1.msra.mxu0 0.0
  %1820 = vmatprep.subr.mxu0 0.0
  %1821 = vmatpush1.msra.mxu0 0.0
  %1822 = vmatprep.subr.mxu0 0.0
  %1823 = vmatpush1.msra.mxu0 0.0
  %1824 = vmatprep.subr.mxu0 0.0
  %1825 = vmatpush1.msra.mxu0 0.0
  %1826 = vmatprep.subr.mxu0 0.0
  %1827 = vmatpush1.msra.mxu0 0.0
  %1828 = vmatprep.subr.mxu0 0.0
  %1829 = vmatpush1.msra.mxu0 0.0
  %1830 = vmatprep.subr.mxu0 0.0
  %1831 = vmatpush1.msra.mxu0 0.0
  %1832 = vmatprep.subr.mxu0 0.0
  %1833 = vmatpush1.msra.mxu0 0.0
  %1834 = vmatprep.subr.mxu0 0.0
  %1835 = vmatpush1.msra.mxu0 0.0
  %1836 = vmatprep.subr.mxu0 0.0
  %1837 = vmatpush1.msra.mxu0 0.0
  %1838 = vmatprep.subr.mxu0 0.0
  %1839 = vmatpush1.msra.mxu0 0.0
  %1840 = vmatprep.subr.mxu0 0.0
  %1841 = vmatpush1.msra.mxu0 0.0
  %1842 = vmatprep.mubr.f32.mxu0 0.0
  %1843 = vmatmul.mubr.f32.gmra.mrb[0].mxu0 %v1773
  %v1844 = vpop.f32.mrb[0].mxu0
  %v1845 = vadd.f32 0.0, %v1844
  %v1846 = vpop.f32.mrb[0].mxu0
  %1847 = vdwg.mxu0
  %v1849 = vsel %vm813, %v1528, 0
  %v1852 = vsel %vm1546, %v1539, 0
  %1854 = vmatprep.subr.mxu0 0.0
  %1855 = vmatpush1.msra.mxu0 %v1852
  %1856 = vmatprep.subr.mxu0 0.0
  %1857 = vmatpush1.msra.mxu0 0.0
  %1858 = vmatprep.subr.mxu0 0.0
  %1859 = vmatpush1.msra.mxu0 0.0
  %1860 = vmatprep.subr.mxu0 0.0
  %1861 = vmatpush1.msra.mxu0 0.0
  %1862 = vmatprep.subr.mxu0 0.0
  %1863 = vmatpush1.msra.mxu0 0.0
  %1864 = vmatprep.subr.mxu0 0.0
  %1865 = vmatpush1.msra.mxu0 0.0
  %1866 = vmatprep.subr.mxu0 0.0
  %1867 = vmatpush1.msra.mxu0 0.0
  %1868 = vmatprep.subr.mxu0 0.0
  %1869 = vmatpush1.msra.mxu0 0.0
  %1870 = vmatprep.subr.mxu0 0.0
  %1871 = vmatpush1.msra.mxu0 0.0
  %1872 = vmatprep.subr.mxu0 0.0
  %1873 = vmatpush1.msra.mxu0 0.0
  %1874 = vmatprep.subr.mxu0 0.0
  %1875 = vmatpush1.msra.mxu0 0.0
  %1876 = vmatprep.subr.mxu0 0.0
  %1877 = vmatpush1.msra.mxu0 0.0
  %1878 = vmatprep.subr.mxu0 0.0
  %1879 = vmatpush1.msra.mxu0 0.0
  %1880 = vmatprep.subr.mxu0 0.0
  %1881 = vmatpush1.msra.mxu0 0.0
  %1882 = vmatprep.subr.mxu0 0.0
  %1883 = vmatpush1.msra.mxu0 0.0
  %1884 = vmatprep.subr.mxu0 0.0
  %1885 = vmatpush1.msra.mxu0 0.0
  %1886 = vmatprep.subr.mxu0 0.0
  %1887 = vmatpush1.msra.mxu0 0.0
  %1888 = vmatprep.subr.mxu0 0.0
  %1889 = vmatpush1.msra.mxu0 0.0
  %1890 = vmatprep.subr.mxu0 0.0
  %1891 = vmatpush1.msra.mxu0 0.0
  %1892 = vmatprep.subr.mxu0 0.0
  %1893 = vmatpush1.msra.mxu0 0.0
  %1894 = vmatprep.subr.mxu0 0.0
  %1895 = vmatpush1.msra.mxu0 0.0
  %1896 = vmatprep.subr.mxu0 0.0
  %1897 = vmatpush1.msra.mxu0 0.0
  %1898 = vmatprep.subr.mxu0 0.0
  %1899 = vmatpush1.msra.mxu0 0.0
  %1900 = vmatprep.subr.mxu0 0.0
  %1901 = vmatpush1.msra.mxu0 0.0
  %1902 = vmatprep.subr.mxu0 0.0
  %1903 = vmatpush1.msra.mxu0 0.0
  %1904 = vmatprep.subr.mxu0 0.0
  %1905 = vmatpush1.msra.mxu0 0.0
  %1906 = vmatprep.subr.mxu0 0.0
  %1907 = vmatpush1.msra.mxu0 0.0
  %1908 = vmatprep.subr.mxu0 0.0
  %1909 = vmatpush1.msra.mxu0 0.0
  %1910 = vmatprep.subr.mxu0 0.0
  %1911 = vmatpush1.msra.mxu0 0.0
  %1912 = vmatprep.subr.mxu0 0.0
  %1913 = vmatpush1.msra.mxu0 0.0
  %1914 = vmatprep.subr.mxu0 0.0
  %1915 = vmatpush1.msra.mxu0 0.0
  %1916 = vmatprep.subr.mxu0 0.0
  %1917 = vmatpush1.msra.mxu0 0.0
  %1918 = vmatprep.mubr.f32.mxu0 0.0
  %1919 = vmatmul.mubr.f32.gmra.mrb[0].mxu0 %v1849
  %v1920 = vpop.f32.mrb[0].mxu0
  %v1921 = vadd.f32 0.0, %v1920
  %v1922 = vpop.f32.mrb[0].mxu0
  %1923 = vdwg.mxu0
  %v1925 = vsel %vm813, %v1530, 0
  %v1928 = vsel %vm1546, %v1540, 0
  %1930 = vmatprep.subr.mxu0 0.0
  %1931 = vmatpush1.msra.mxu0 %v1928
  %1932 = vmatprep.subr.mxu0 0.0
  %1933 = vmatpush1.msra.mxu0 0.0
  %1934 = vmatprep.subr.mxu0 0.0
  %1935 = vmatpush1.msra.mxu0 0.0
  %1936 = vmatprep.subr.mxu0 0.0
  %1937 = vmatpush1.msra.mxu0 0.0
  %1938 = vmatprep.subr.mxu0 0.0
  %1939 = vmatpush1.msra.mxu0 0.0
  %1940 = vmatprep.subr.mxu0 0.0
  %1941 = vmatpush1.msra.mxu0 0.0
  %1942 = vmatprep.subr.mxu0 0.0
  %1943 = vmatpush1.msra.mxu0 0.0
  %1944 = vmatprep.subr.mxu0 0.0
  %1945 = vmatpush1.msra.mxu0 0.0
  %1946 = vmatprep.subr.mxu0 0.0
  %1947 = vmatpush1.msra.mxu0 0.0
  %1948 = vmatprep.subr.mxu0 0.0
  %1949 = vmatpush1.msra.mxu0 0.0
  %1950 = vmatprep.subr.mxu0 0.0
  %1951 = vmatpush1.msra.mxu0 0.0
  %1952 = vmatprep.subr.mxu0 0.0
  %1953 = vmatpush1.msra.mxu0 0.0
  %1954 = vmatprep.subr.mxu0 0.0
  %1955 = vmatpush1.msra.mxu0 0.0
  %1956 = vmatprep.subr.mxu0 0.0
  %1957 = vmatpush1.msra.mxu0 0.0
  %1958 = vmatprep.subr.mxu0 0.0
  %1959 = vmatpush1.msra.mxu0 0.0
  %1960 = vmatprep.subr.mxu0 0.0
  %1961 = vmatpush1.msra.mxu0 0.0
  %1962 = vmatprep.subr.mxu0 0.0
  %1963 = vmatpush1.msra.mxu0 0.0
  %1964 = vmatprep.subr.mxu0 0.0
  %1965 = vmatpush1.msra.mxu0 0.0
  %1966 = vmatprep.subr.mxu0 0.0
  %1967 = vmatpush1.msra.mxu0 0.0
  %1968 = vmatprep.subr.mxu0 0.0
  %1969 = vmatpush1.msra.mxu0 0.0
  %1970 = vmatprep.subr.mxu0 0.0
  %1971 = vmatpush1.msra.mxu0 0.0
  %1972 = vmatprep.subr.mxu0 0.0
  %1973 = vmatpush1.msra.mxu0 0.0
  %1974 = vmatprep.subr.mxu0 0.0
  %1975 = vmatpush1.msra.mxu0 0.0
  %1976 = vmatprep.subr.mxu0 0.0
  %1977 = vmatpush1.msra.mxu0 0.0
  %1978 = vmatprep.subr.mxu0 0.0
  %1979 = vmatpush1.msra.mxu0 0.0
  %1980 = vmatprep.subr.mxu0 0.0
  %1981 = vmatpush1.msra.mxu0 0.0
  %1982 = vmatprep.subr.mxu0 0.0
  %1983 = vmatpush1.msra.mxu0 0.0
  %1984 = vmatprep.subr.mxu0 0.0
  %1985 = vmatpush1.msra.mxu0 0.0
  %1986 = vmatprep.subr.mxu0 0.0
  %1987 = vmatpush1.msra.mxu0 0.0
  %1988 = vmatprep.subr.mxu0 0.0
  %1989 = vmatpush1.msra.mxu0 0.0
  %1990 = vmatprep.subr.mxu0 0.0
  %1991 = vmatpush1.msra.mxu0 0.0
  %1992 = vmatprep.subr.mxu0 0.0
  %1993 = vmatpush1.msra.mxu0 0.0
  %1994 = vmatprep.mubr.f32.mxu0 0.0
  %1995 = vmatmul.mubr.f32.gmra.mrb[0].mxu0 %v1925
  %v1996 = vpop.f32.mrb[0].mxu0
  %v1997 = vadd.f32 0.0, %v1996
  %v1998 = vpop.f32.mrb[0].mxu0
  %1999 = vdwg.mxu0
  %v2001 = vsel %vm813, %v1532, 0
  %v2004 = vsel %vm1546, %v1541, 0
  %2006 = vmatprep.subr.mxu0 0.0
  %2007 = vmatpush1.msra.mxu0 %v2004
  %2008 = vmatprep.subr.mxu0 0.0
  %2009 = vmatpush1.msra.mxu0 0.0
  %2010 = vmatprep.subr.mxu0 0.0
  %2011 = vmatpush1.msra.mxu0 0.0
  %2012 = vmatprep.subr.mxu0 0.0
  %2013 = vmatpush1.msra.mxu0 0.0
  %2014 = vmatprep.subr.mxu0 0.0
  %2015 = vmatpush1.msra.mxu0 0.0
  %2016 = vmatprep.subr.mxu0 0.0
  %2017 = vmatpush1.msra.mxu0 0.0
  %2018 = vmatprep.subr.mxu0 0.0
  %2019 = vmatpush1.msra.mxu0 0.0
  %2020 = vmatprep.subr.mxu0 0.0
  %2021 = vmatpush1.msra.mxu0 0.0
  %2022 = vmatprep.subr.mxu0 0.0
  %2023 = vmatpush1.msra.mxu0 0.0
  %2024 = vmatprep.subr.mxu0 0.0
  %2025 = vmatpush1.msra.mxu0 0.0
  %2026 = vmatprep.subr.mxu0 0.0
  %2027 = vmatpush1.msra.mxu0 0.0
  %2028 = vmatprep.subr.mxu0 0.0
  %2029 = vmatpush1.msra.mxu0 0.0
  %2030 = vmatprep.subr.mxu0 0.0
  %2031 = vmatpush1.msra.mxu0 0.0
  %2032 = vmatprep.subr.mxu0 0.0
  %2033 = vmatpush1.msra.mxu0 0.0
  %2034 = vmatprep.subr.mxu0 0.0
  %2035 = vmatpush1.msra.mxu0 0.0
  %2036 = vmatprep.subr.mxu0 0.0
  %2037 = vmatpush1.msra.mxu0 0.0
  %2038 = vmatprep.subr.mxu0 0.0
  %2039 = vmatpush1.msra.mxu0 0.0
  %2040 = vmatprep.subr.mxu0 0.0
  %2041 = vmatpush1.msra.mxu0 0.0
  %2042 = vmatprep.subr.mxu0 0.0
  %2043 = vmatpush1.msra.mxu0 0.0
  %2044 = vmatprep.subr.mxu0 0.0
  %2045 = vmatpush1.msra.mxu0 0.0
  %2046 = vmatprep.subr.mxu0 0.0
  %2047 = vmatpush1.msra.mxu0 0.0
  %2048 = vmatprep.subr.mxu0 0.0
  %2049 = vmatpush1.msra.mxu0 0.0
  %2050 = vmatprep.subr.mxu0 0.0
  %2051 = vmatpush1.msra.mxu0 0.0
  %2052 = vmatprep.subr.mxu0 0.0
  %2053 = vmatpush1.msra.mxu0 0.0
  %2054 = vmatprep.subr.mxu0 0.0
  %2055 = vmatpush1.msra.mxu0 0.0
  %2056 = vmatprep.subr.mxu0 0.0
  %2057 = vmatpush1.msra.mxu0 0.0
  %2058 = vmatprep.subr.mxu0 0.0
  %2059 = vmatpush1.msra.mxu0 0.0
  %2060 = vmatprep.subr.mxu0 0.0
  %2061 = vmatpush1.msra.mxu0 0.0
  %2062 = vmatprep.subr.mxu0 0.0
  %2063 = vmatpush1.msra.mxu0 0.0
  %2064 = vmatprep.subr.mxu0 0.0
  %2065 = vmatpush1.msra.mxu0 0.0
  %2066 = vmatprep.subr.mxu0 0.0
  %2067 = vmatpush1.msra.mxu0 0.0
  %2068 = vmatprep.subr.mxu0 0.0
  %2069 = vmatpush1.msra.mxu0 0.0
  %2070 = vmatprep.mubr.f32.mxu0 0.0
  %2071 = vmatmul.mubr.f32.gmra.mrb[0].mxu0 %v2001
  %v2072 = vpop.f32.mrb[0].mxu0
  %v2073 = vadd.f32 0.0, %v2072
  %v2074 = vpop.f32.mrb[0].mxu0
  %2075 = vdwg.mxu0
  %v2077 = vsel %vm813, %v1534, 0
  %v2080 = vsel %vm1546, %v1542, 0
  %2082 = vmatprep.subr.mxu0 0.0
  %2083 = vmatpush1.msra.mxu0 %v2080
  %2084 = vmatprep.subr.mxu0 0.0
  %2085 = vmatpush1.msra.mxu0 0.0
  %2086 = vmatprep.subr.mxu0 0.0
  %2087 = vmatpush1.msra.mxu0 0.0
  %2088 = vmatprep.subr.mxu0 0.0
  %2089 = vmatpush1.msra.mxu0 0.0
  %2090 = vmatprep.subr.mxu0 0.0
  %2091 = vmatpush1.msra.mxu0 0.0
  %2092 = vmatprep.subr.mxu0 0.0
  %2093 = vmatpush1.msra.mxu0 0.0
  %2094 = vmatprep.subr.mxu0 0.0
  %2095 = vmatpush1.msra.mxu0 0.0
  %2096 = vmatprep.subr.mxu0 0.0
  %2097 = vmatpush1.msra.mxu0 0.0
  %2098 = vmatprep.subr.mxu0 0.0
  %2099 = vmatpush1.msra.mxu0 0.0
  %2100 = vmatprep.subr.mxu0 0.0
  %2101 = vmatpush1.msra.mxu0 0.0
  %2102 = vmatprep.subr.mxu0 0.0
  %2103 = vmatpush1.msra.mxu0 0.0
  %2104 = vmatprep.subr.mxu0 0.0
  %2105 = vmatpush1.msra.mxu0 0.0
  %2106 = vmatprep.subr.mxu0 0.0
  %2107 = vmatpush1.msra.mxu0 0.0
  %2108 = vmatprep.subr.mxu0 0.0
  %2109 = vmatpush1.msra.mxu0 0.0
  %2110 = vmatprep.subr.mxu0 0.0
  %2111 = vmatpush1.msra.mxu0 0.0
  %2112 = vmatprep.subr.mxu0 0.0
  %2113 = vmatpush1.msra.mxu0 0.0
  %2114 = vmatprep.subr.mxu0 0.0
  %2115 = vmatpush1.msra.mxu0 0.0
  %2116 = vmatprep.subr.mxu0 0.0
  %2117 = vmatpush1.msra.mxu0 0.0
  %2118 = vmatprep.subr.mxu0 0.0
  %2119 = vmatpush1.msra.mxu0 0.0
  %2120 = vmatprep.subr.mxu0 0.0
  %2121 = vmatpush1.msra.mxu0 0.0
  %2122 = vmatprep.subr.mxu0 0.0
  %2123 = vmatpush1.msra.mxu0 0.0
  %2124 = vmatprep.subr.mxu0 0.0
  %2125 = vmatpush1.msra.mxu0 0.0
  %2126 = vmatprep.subr.mxu0 0.0
  %2127 = vmatpush1.msra.mxu0 0.0
  %2128 = vmatprep.subr.mxu0 0.0
  %2129 = vmatpush1.msra.mxu0 0.0
  %2130 = vmatprep.subr.mxu0 0.0
  %2131 = vmatpush1.msra.mxu0 0.0
  %2132 = vmatprep.subr.mxu0 0.0
  %2133 = vmatpush1.msra.mxu0 0.0
  %2134 = vmatprep.subr.mxu0 0.0
  %2135 = vmatpush1.msra.mxu0 0.0
  %2136 = vmatprep.subr.mxu0 0.0
  %2137 = vmatpush1.msra.mxu0 0.0
  %2138 = vmatprep.subr.mxu0 0.0
  %2139 = vmatpush1.msra.mxu0 0.0
  %2140 = vmatprep.subr.mxu0 0.0
  %2141 = vmatpush1.msra.mxu0 0.0
  %2142 = vmatprep.subr.mxu0 0.0
  %2143 = vmatpush1.msra.mxu0 0.0
  %2144 = vmatprep.subr.mxu0 0.0
  %2145 = vmatpush1.msra.mxu0 0.0
  %2146 = vmatprep.mubr.f32.mxu0 0.0
  %2147 = vmatmul.mubr.f32.gmra.mrb[0].mxu0 %v2077
  %v2148 = vpop.f32.mrb[0].mxu0
  %v2149 = vadd.f32 0.0, %v2148
  %v2150 = vpop.f32.mrb[0].mxu0
  %2151 = vdwg.mxu0
  %vm2152 = vcmask 253952
  %2153 = vst.msk [vmem:[%s5] sm:$0x1] %vm2152, %v1617
  %2154 = vst.msk [vmem:[%s5 + $0x1] sm:$0x1] %vm2152, %v1693
  %2155 = vst.msk [vmem:[%s5 + $0x2] sm:$0x1] %vm2152, %v1769
  %2156 = vst.msk [vmem:[%s5 + $0x3] sm:$0x1] %vm2152, %v1845
  %2157 = vst.msk [vmem:[%s5 + $0x4] sm:$0x1] %vm2152, %v1921
  %2158 = vst.msk [vmem:[%s5 + $0x5] sm:$0x1] %vm2152, %v1997
  %2159 = vst.msk [vmem:[%s5 + $0x6] sm:$0x1] %vm2152, %v2073
  %2160 = vst.msk [vmem:[%s5 + $0x7] sm:$0x1] %vm2152, %v2149
  // Predicated region
  $region22: #{_lambda_.45} parent=0 // pred_check
    _
  $region23: #{_lambda_.45} parent=0 // pred_check_branch
    %2162 = sbr.rel (0) target = $region25
  $region24: #{_lambda_.45} parent=0 // pred_region
    _
  $region25: #{_lambda_.45} parent=0 // pred_fallthru
    _
  // Predicated region
  $region26: #{_lambda_.45} parent=0 // pred_check
    _
  $region27: #{_lambda_.45} parent=0 // pred_check_branch
    %2164 = sbr.rel (0) target = $region29
  $region28: #{_lambda_.45} parent=0 // pred_region
    _
  $region29: #{_lambda_.45} parent=0 // pred_fallthru
    _

// kernel: _lambda_.35
$region0: #{_lambda_.35}
  #allocation0 [shape = 'u32[]', space=smem, size = 0x4, offset = 0x4, fixed_abs, tag = 'smem constant byte address 0x4 - core index']
  #allocation1 [shape = 'u32[144,128]{1,0:T(1,128)}', space=vmem, size = 0x12000, scoped, tag = 'internal scratch']
  #allocation2 [shape = 'f32[1,1]{1,0:T(1,128)S(1)}', space=vmem, size = 0x200, scoped, tag = 'scoped memory for _lambda_.35']
  %s0 = inlined_call_operand.vmem [shape: bf16[8,32], index: 0, kind: input, shape index: {}]
  %s1 = inlined_call_operand.vmem [shape: bf16[32,1], index: 1, kind: input, shape index: {}]
  %s2 = inlined_call_operand.<no memory space> [shape: f32[1,1], index: 2, kind: input, shape index: {}]
  %s3 = inlined_call_operand.vmem [shape: f32[8,1], index: 3, kind: output, shape index: {}]
  %s4 = sld [smem:[#allocation0]]
  $region22: #{_lambda_.35} parent=0
    _
  %s6 = ssub.s32 1, %s4
  %s7 = scalar_select 0, %s6, %s4
  %v8 = vstv %s2
  %9 = vst [vmem:[#allocation2] sm:$0x1] %v8
  // Predicated region
  $region2: #{_lambda_.35} parent=0 // pred_check
    _
  $region3: #{_lambda_.35} parent=0 // pred_check_branch
    %11 = sbr.rel (0) target = $region5
  $region4: #{_lambda_.35} parent=0 // pred_region
    _
  $region5: #{_lambda_.35} parent=0 // pred_fallthru
    _
  // Predicated region
  $region6: #{_lambda_.35} parent=0 // pred_check
    _
  $region7: #{_lambda_.35} parent=0 // pred_check_branch
    %13 = sbr.rel (0) target = $region9
  $region8: #{_lambda_.35} parent=0 // pred_region
    _
  $region9: #{_lambda_.35} parent=0 // pred_fallthru
    _
  // Predicated region
  $region10: #{_lambda_.35} parent=0 // pred_check
    _
  $region11: #{_lambda_.35} parent=0 // pred_check_branch
    %15 = sbr.rel (0) target = $region13
  $region12: #{_lambda_.35} parent=0 // pred_region
    _
  $region13: #{_lambda_.35} parent=0 // pred_fallthru
    _
  %v17 = vld [vmem:[%s0] sm:$0xf]
  %v18 = vld [vmem:[%s1] sm:$0xf]
  %v19 = vld [vmem:[%s1 + $0x4] sm:$0xf]
  %v20 = vld [vmem:[%s1 + $0x8] sm:$0xf]
  %v21 = vld [vmem:[%s1 + $0xc] sm:$0xf]
  %v22 = vld [vmem:[#allocation2] sm:$0x1]
  %v24 = vlaneseq
  %v25 = vshrl.u32 %v24, 7
  %v26 = vsub.s32 0, %v25
  %v27 = vrot.slane %v22, %v26
  %v33 = vunpack.c.l.b16 %v18
  %v34 = vunpack.c.l.b16 %v19
  %v35 = vunpack.c.l.b16 %v20
  %v36 = vunpack.c.l.b16 %v21
  %v37 = vpack.c.b16 %v34, %v33
  %v38 = vpack.c.b16 %v36, %v35
  %vm41 = vcmask 261120
  %v43 = vsel %vm41, %v17, 0
  %45 = vmatprep.subr.bf16.mxu0 0
  %46 = vmatpush1.bf16.msra.mxu0 %v37
  %47 = vmatprep.subr.bf16.mxu0 0
  %48 = vmatpush1.bf16.msra.mxu0 %v38
  %49 = vmatprep.subr.bf16.mxu0 0
  %50 = vmatpush1.bf16.msra.mxu0 0
  %51 = vmatprep.subr.bf16.mxu0 0
  %52 = vmatpush1.bf16.msra.mxu0 0
  %53 = vmatprep.subr.bf16.mxu0 0
  %54 = vmatpush1.bf16.msra.mxu0 0
  %55 = vmatprep.subr.bf16.mxu0 0
  %56 = vmatpush1.bf16.msra.mxu0 0
  %57 = vmatprep.subr.bf16.mxu0 0
  %58 = vmatpush1.bf16.msra.mxu0 0
  %59 = vmatprep.subr.bf16.mxu0 0
  %60 = vmatpush1.bf16.msra.mxu0 0
  %61 = vmatprep.subr.bf16.mxu0 0
  %62 = vmatpush1.bf16.msra.mxu0 0
  %63 = vmatprep.subr.bf16.mxu0 0
  %64 = vmatpush1.bf16.msra.mxu0 0
  %65 = vmatprep.subr.bf16.mxu0 0
  %66 = vmatpush1.bf16.msra.mxu0 0
  %67 = vmatprep.subr.bf16.mxu0 0
  %68 = vmatpush1.bf16.msra.mxu0 0
  %69 = vmatprep.subr.bf16.mxu0 0
  %70 = vmatpush1.bf16.msra.mxu0 0
  %71 = vmatprep.subr.bf16.mxu0 0
  %72 = vmatpush1.bf16.msra.mxu0 0
  %73 = vmatprep.subr.bf16.mxu0 0
  %74 = vmatpush1.bf16.msra.mxu0 0
  %75 = vmatprep.subr.bf16.mxu0 0
  %76 = vmatpush1.bf16.msra.mxu0 0
  %77 = vmatprep.mubr.bf16.mxu0 0
  %78 = vmatmul.mubr.bf16.gmra.mrb[0].mxu0 %v43
  %v79 = vpop.f32.mrb[0].mxu0
  %v80 = vadd.f32 %v27, %v79
  %v81 = vpop.f32.mrb[0].mxu0
  %v82 = vpop.f32.mrb[0].mxu0
  %v83 = vpop.f32.mrb[0].mxu0
  %84 = vdwg.mxu0
  %vm85 = vcmask 7168
  %86 = vst.msk [vmem:[%s3] sm:$0xff] %vm85, %v80
  // Predicated region
  $region14: #{_lambda_.35} parent=0 // pred_check
    _
  $region15: #{_lambda_.35} parent=0 // pred_check_branch
    %88 = sbr.rel (0) target = $region17
  $region16: #{_lambda_.35} parent=0 // pred_region
    _
  $region17: #{_lambda_.35} parent=0 // pred_fallthru
    _
  // Predicated region
  $region18: #{_lambda_.35} parent=0 // pred_check
    _
  $region19: #{_lambda_.35} parent=0 // pred_check_branch
    %90 = sbr.rel (0) target = $region21
  $region20: #{_lambda_.35} parent=0 // pred_region
    _
  $region21: #{_lambda_.35} parent=0 // pred_fallthru
    _

// kernel: _lambda_.38
$region0: #{_lambda_.38}
  #allocation0 [shape = 'u32[]', space=smem, size = 0x4, offset = 0x4, fixed_abs, tag = 'smem constant byte address 0x4 - core index']
  #allocation1 [shape = 'u32[144,128]{1,0:T(1,128)}', space=vmem, size = 0x12000, scoped, tag = 'internal scratch']
  #allocation2 [shape = 'f32[1,1]{1,0:T(1,128)S(1)}', space=vmem, size = 0x200, scoped, tag = 'scoped memory for _lambda_.38']
  %s0 = inlined_call_operand.vmem [shape: bf16[8,64], index: 0, kind: input, shape index: {}]
  %s1 = inlined_call_operand.vmem [shape: bf16[64,128], index: 1, kind: input, shape index: {}]
  %s2 = inlined_call_operand.vmem [shape: f32[1,128], index: 2, kind: input, shape index: {}]
  %s3 = inlined_call_operand.vmem [shape: bf16[128,1], index: 3, kind: input, shape index: {}]
  %s4 = inlined_call_operand.<no memory space> [shape: f32[1,1], index: 4, kind: input, shape index: {}]
  %s5 = inlined_call_operand.vmem [shape: f32[8,1], index: 5, kind: output, shape index: {}]
  %s6 = sld [smem:[#allocation0]]
  $region30: #{_lambda_.38} parent=0
    _
  %s8 = ssub.s32 1, %s6
  %s9 = scalar_select 0, %s8, %s6
  %v10 = vstv %s4
  %11 = vst [vmem:[#allocation2] sm:$0x1] %v10
  // Predicated region
  $region2: #{_lambda_.38} parent=0 // pred_check
    _
  $region3: #{_lambda_.38} parent=0 // pred_check_branch
    %13 = sbr.rel (0) target = $region5
  $region4: #{_lambda_.38} parent=0 // pred_region
    _
  $region5: #{_lambda_.38} parent=0 // pred_fallthru
    _
  // Predicated region
  $region6: #{_lambda_.38} parent=0 // pred_check
    _
  $region7: #{_lambda_.38} parent=0 // pred_check_branch
    %15 = sbr.rel (0) target = $region9
  $region8: #{_lambda_.38} parent=0 // pred_region
    _
  $region9: #{_lambda_.38} parent=0 // pred_fallthru
    _
  // Predicated region
  $region10: #{_lambda_.38} parent=0 // pred_check
    _
  $region11: #{_lambda_.38} parent=0 // pred_check_branch
    %17 = sbr.rel (0) target = $region13
  $region12: #{_lambda_.38} parent=0 // pred_region
    _
  $region13: #{_lambda_.38} parent=0 // pred_fallthru
    _
  // Predicated region
  $region14: #{_lambda_.38} parent=0 // pred_check
    _
  $region15: #{_lambda_.38} parent=0 // pred_check_branch
    %19 = sbr.rel (0) target = $region17
  $region16: #{_lambda_.38} parent=0 // pred_region
    _
  $region17: #{_lambda_.38} parent=0 // pred_fallthru
    _
  // Predicated region
  $region18: #{_lambda_.38} parent=0 // pred_check
    _
  $region19: #{_lambda_.38} parent=0 // pred_check_branch
    %21 = sbr.rel (0) target = $region21
  $region20: #{_lambda_.38} parent=0 // pred_region
    _
  $region21: #{_lambda_.38} parent=0 // pred_fallthru
    _
  %v23 = vld [vmem:[%s0] sm:$0xf]
  %v24 = vld [vmem:[%s1] sm:$0xf]
  %v25 = vld [vmem:[%s1 + $0x4] sm:$0xf]
  %v26 = vld [vmem:[%s1 + $0x8] sm:$0xf]
  %v27 = vld [vmem:[%s1 + $0xc] sm:$0xf]
  %v28 = vld [vmem:[%s1 + $0x10] sm:$0xf]
  %v29 = vld [vmem:[%s1 + $0x14] sm:$0xf]
  %v30 = vld [vmem:[%s1 + $0x18] sm:$0xf]
  %v31 = vld [vmem:[%s1 + $0x1c] sm:$0xf]
  %v32 = vld [vmem:[%s2] sm:$0x1]
  %v34 = vlaneseq
  %v35 = vshrl.u32 %v34, 7
  %v36 = vsub.s32 0, %v35
  %v37 = vrot.slane %v32, %v36
  %v47 = vunpack.c.l.b16 %v24
  %v48 = vunpack.c.l.b16 %v25
  %v49 = vunpack.c.l.b16 %v26
  %v50 = vunpack.c.l.b16 %v27
  %v51 = vunpack.c.l.b16 %v28
  %v52 = vunpack.c.l.b16 %v29
  %v53 = vunpack.c.l.b16 %v30
  %v54 = vunpack.c.l.b16 %v31
  %v55 = vpack.c.b16 %v48, %v47
  %v56 = vpack.c.b16 %v50, %v49
  %v57 = vpack.c.b16 %v52, %v51
  %v58 = vpack.c.b16 %v54, %v53
  %vm63 = vcmask 523264
  %v65 = vsel %vm63, %v23, 0
  %67 = vmatprep.subr.bf16.mxu0 0
  %68 = vmatpush1.bf16.msra.mxu0 %v55
  %69 = vmatprep.subr.bf16.mxu0 0
  %70 = vmatpush1.bf16.msra.mxu0 %v56
  %71 = vmatprep.subr.bf16.mxu0 0
  %72 = vmatpush1.bf16.msra.mxu0 %v57
  %73 = vmatprep.subr.bf16.mxu0 0
  %74 = vmatpush1.bf16.msra.mxu0 %v58
  %75 = vmatprep.subr.bf16.mxu0 0
  %76 = vmatpush1.bf16.msra.mxu0 0
  %77 = vmatprep.subr.bf16.mxu0 0
  %78 = vmatpush1.bf16.msra.mxu0 0
  %79 = vmatprep.subr.bf16.mxu0 0
  %80 = vmatpush1.bf16.msra.mxu0 0
  %81 = vmatprep.subr.bf16.mxu0 0
  %82 = vmatpush1.bf16.msra.mxu0 0
  %83 = vmatprep.subr.bf16.mxu0 0
  %84 = vmatpush1.bf16.msra.mxu0 0
  %85 = vmatprep.subr.bf16.mxu0 0
  %86 = vmatpush1.bf16.msra.mxu0 0
  %87 = vmatprep.subr.bf16.mxu0 0
  %88 = vmatpush1.bf16.msra.mxu0 0
  %89 = vmatprep.subr.bf16.mxu0 0
  %90 = vmatpush1.bf16.msra.mxu0 0
  %91 = vmatprep.subr.bf16.mxu0 0
  %92 = vmatpush1.bf16.msra.mxu0 0
  %93 = vmatprep.subr.bf16.mxu0 0
  %94 = vmatpush1.bf16.msra.mxu0 0
  %95 = vmatprep.subr.bf16.mxu0 0
  %96 = vmatpush1.bf16.msra.mxu0 0
  %97 = vmatprep.subr.bf16.mxu0 0
  %98 = vmatpush1.bf16.msra.mxu0 0
  %99 = vmatprep.mubr.bf16.mxu0 0
  %100 = vmatmul.mubr.bf16.gmra.mrb[0].mxu0 %v65
  %v101 = vpop.f32.mrb[0].mxu0
  %v102 = vadd.f32 %v37, %v101
  %v103 = vpop.f32.mrb[0].mxu0
  %v104 = vpop.f32.mrb[0].mxu0
  %v105 = vpop.f32.mrb[0].mxu0
  %106 = vdwg.mxu0
  %v107 = vtanh.pop %v102
  %v108 = vpack.c.bf16 %v107, %v107
  %v109 = vld [vmem:[%s3] sm:$0xf]
  %v110 = vld [vmem:[%s3 + $0x4] sm:$0xf]
  %v111 = vld [vmem:[%s3 + $0x8] sm:$0xf]
  %v112 = vld [vmem:[%s3 + $0xc] sm:$0xf]
  %v113 = vld [vmem:[%s3 + $0x10] sm:$0xf]
  %v114 = vld [vmem:[%s3 + $0x14] sm:$0xf]
  %v115 = vld [vmem:[%s3 + $0x18] sm:$0xf]
  %v116 = vld [vmem:[%s3 + $0x1c] sm:$0xf]
  %v117 = vld [vmem:[%s3 + $0x20] sm:$0xf]
  %v118 = vld [vmem:[%s3 + $0x24] sm:$0xf]
  %v119 = vld [vmem:[%s3 + $0x28] sm:$0xf]
  %v120 = vld [vmem:[%s3 + $0x2c] sm:$0xf]
  %v121 = vld [vmem:[%s3 + $0x30] sm:$0xf]
  %v122 = vld [vmem:[%s3 + $0x34] sm:$0xf]
  %v123 = vld [vmem:[%s3 + $0x38] sm:$0xf]
  %v124 = vld [vmem:[%s3 + $0x3c] sm:$0xf]
  %v125 = vld [vmem:[#allocation2] sm:$0x1]
  %v127 = vlaneseq
  %v128 = vshrl.u32 %v127, 7
  %v129 = vsub.s32 0, %v128
  %v130 = vrot.slane %v125, %v129
  %v148 = vunpack.c.l.b16 %v109
  %v149 = vunpack.c.l.b16 %v110
  %v150 = vunpack.c.l.b16 %v111
  %v151 = vunpack.c.l.b16 %v112
  %v152 = vunpack.c.l.b16 %v113
  %v153 = vunpack.c.l.b16 %v114
  %v154 = vunpack.c.l.b16 %v115
  %v155 = vunpack.c.l.b16 %v116
  %v156 = vunpack.c.l.b16 %v117
  %v157 = vunpack.c.l.b16 %v118
  %v158 = vunpack.c.l.b16 %v119
  %v159 = vunpack.c.l.b16 %v120
  %v160 = vunpack.c.l.b16 %v121
  %v161 = vunpack.c.l.b16 %v122
  %v162 = vunpack.c.l.b16 %v123
  %v163 = vunpack.c.l.b16 %v124
  %v164 = vpack.c.b16 %v149, %v148
  %v165 = vpack.c.b16 %v151, %v150
  %v166 = vpack.c.b16 %v153, %v152
  %v167 = vpack.c.b16 %v155, %v154
  %v168 = vpack.c.b16 %v157, %v156
  %v169 = vpack.c.b16 %v159, %v158
  %v170 = vpack.c.b16 %v161, %v160
  %v171 = vpack.c.b16 %v163, %v162
  %180 = vmatprep.subr.bf16.mxu0 0
  %181 = vmatpush1.bf16.msra.mxu0 %v164
  %182 = vmatprep.subr.bf16.mxu0 0
  %183 = vmatpush1.bf16.msra.mxu0 %v165
  %184 = vmatprep.subr.bf16.mxu0 0
  %185 = vmatpush1.bf16.msra.mxu0 %v166
  %186 = vmatprep.subr.bf16.mxu0 0
  %187 = vmatpush1.bf16.msra.mxu0 %v167
  %188 = vmatprep.subr.bf16.mxu0 0
  %189 = vmatpush1.bf16.msra.mxu0 %v168
  %190 = vmatprep.subr.bf16.mxu0 0
  %191 = vmatpush1.bf16.msra.mxu0 %v169
  %192 = vmatprep.subr.bf16.mxu0 0
  %193 = vmatpush1.bf16.msra.mxu0 %v170
  %194 = vmatprep.subr.bf16.mxu0 0
  %195 = vmatpush1.bf16.msra.mxu0 %v171
  %196 = vmatprep.subr.bf16.mxu0 0
  %197 = vmatpush1.bf16.msra.mxu0 0
  %198 = vmatprep.subr.bf16.mxu0 0
  %199 = vmatpush1.bf16.msra.mxu0 0
  %200 = vmatprep.subr.bf16.mxu0 0
  %201 = vmatpush1.bf16.msra.mxu0 0
  %202 = vmatprep.subr.bf16.mxu0 0
  %203 = vmatpush1.bf16.msra.mxu0 0
  %204 = vmatprep.subr.bf16.mxu0 0
  %205 = vmatpush1.bf16.msra.mxu0 0
  %206 = vmatprep.subr.bf16.mxu0 0
  %207 = vmatpush1.bf16.msra.mxu0 0
  %208 = vmatprep.subr.bf16.mxu0 0
  %209 = vmatpush1.bf16.msra.mxu0 0
  %210 = vmatprep.subr.bf16.mxu0 0
  %211 = vmatpush1.bf16.msra.mxu0 0
  %212 = vmatprep.mubr.bf16.mxu0 0
  %213 = vmatmul.mubr.bf16.gmra.mrb[0].mxu0 %v108
  %v214 = vpop.f32.mrb[0].mxu0
  %v215 = vadd.f32 %v130, %v214
  %v216 = vpop.f32.mrb[0].mxu0
  %v217 = vpop.f32.mrb[0].mxu0
  %v218 = vpop.f32.mrb[0].mxu0
  %219 = vdwg.mxu0
  %vm220 = vcmask 7168
  %221 = vst.msk [vmem:[%s5] sm:$0xff] %vm220, %v215
  // Predicated region
  $region22: #{_lambda_.38} parent=0 // pred_check
    _
  $region23: #{_lambda_.38} parent=0 // pred_check_branch
    %223 = sbr.rel (0) target = $region25
  $region24: #{_lambda_.38} parent=0 // pred_region
    _
  $region25: #{_lambda_.38} parent=0 // pred_fallthru
    _
  // Predicated region
  $region26: #{_lambda_.38} parent=0 // pred_check
    _
  $region27: #{_lambda_.38} parent=0 // pred_check_branch
    %225 = sbr.rel (0) target = $region29
  $region28: #{_lambda_.38} parent=0 // pred_region
    _
  $region29: #{_lambda_.38} parent=0 // pred_fallthru
    _

// kernel: _lambda_.39
$region0: #{_lambda_.39}
  #allocation0 [shape = 'u32[]', space=smem, size = 0x4, offset = 0x4, fixed_abs, tag = 'smem constant byte address 0x4 - core index']
  #allocation1 [shape = 'u32[144,128]{1,0:T(1,128)}', space=vmem, size = 0x12000, scoped, tag = 'internal scratch']
  %s0 = inlined_call_operand.vmem [shape: f32[8,1,2], index: 0, kind: input, shape index: {}]
  %s1 = inlined_call_operand.vmem [shape: f32[8,2,64], index: 1, kind: input, shape index: {}]
  %s2 = inlined_call_operand.vmem [shape: f32[8,1,64], index: 2, kind: output, shape index: {}]
  %s3 = sld [smem:[#allocation0]]
  $region18: #{_lambda_.39} parent=0
    _
  %s5 = ssub.s32 1, %s3
  %s6 = scalar_select 0, %s5, %s3
  // Predicated region
  $region2: #{_lambda_.39} parent=0 // pred_check
    _
  $region3: #{_lambda_.39} parent=0 // pred_check_branch
    %8 = sbr.rel (0) target = $region5
  $region4: #{_lambda_.39} parent=0 // pred_region
    _
  $region5: #{_lambda_.39} parent=0 // pred_fallthru
    _
  // Predicated region
  $region6: #{_lambda_.39} parent=0 // pred_check
    _
  $region7: #{_lambda_.39} parent=0 // pred_check_branch
    %10 = sbr.rel (0) target = $region9
  $region8: #{_lambda_.39} parent=0 // pred_region
    _
  $region9: #{_lambda_.39} parent=0 // pred_fallthru
    _
  %v11 = vld [vmem:[%s0] sm:$0x1]
  %v12 = vld [vmem:[%s0 + $0x1] sm:$0x1]
  %v13 = vld [vmem:[%s0 + $0x2] sm:$0x1]
  %v14 = vld [vmem:[%s0 + $0x3] sm:$0x1]
  %v15 = vld [vmem:[%s0 + $0x4] sm:$0x1]
  %v16 = vld [vmem:[%s0 + $0x5] sm:$0x1]
  %v17 = vld [vmem:[%s0 + $0x6] sm:$0x1]
  %v18 = vld [vmem:[%s0 + $0x7] sm:$0x1]
  %vm19 = vcmask 8192
  %v20 = vsel %vm19, %v11, -inf
  %21 = vmax.xlane.f32.xlu0 %v20
  %v22 = vpop.xlane.xlu0 %21
  %v23 = vsel %vm19, %v12, -inf
  %24 = vmax.xlane.f32.xlu0 %v23
  %v25 = vpop.xlane.xlu0 %24
  %v26 = vsel %vm19, %v13, -inf
  %27 = vmax.xlane.f32.xlu0 %v26
  %v28 = vpop.xlane.xlu0 %27
  %v29 = vsel %vm19, %v14, -inf
  %30 = vmax.xlane.f32.xlu0 %v29
  %v31 = vpop.xlane.xlu0 %30
  %v32 = vsel %vm19, %v15, -inf
  %33 = vmax.xlane.f32.xlu0 %v32
  %v34 = vpop.xlane.xlu0 %33
  %v35 = vsel %vm19, %v16, -inf
  %36 = vmax.xlane.f32.xlu0 %v35
  %v37 = vpop.xlane.xlu0 %36
  %v38 = vsel %vm19, %v17, -inf
  %39 = vmax.xlane.f32.xlu0 %v38
  %v40 = vpop.xlane.xlu0 %39
  %v41 = vsel %vm19, %v18, -inf
  %42 = vmax.xlane.f32.xlu0 %v41
  %v43 = vpop.xlane.xlu0 %42
  %v44 = vsub.f32 %v11, %v22
  %v45 = vsub.f32 %v12, %v25
  %v46 = vsub.f32 %v13, %v28
  %v47 = vsub.f32 %v14, %v31
  %v48 = vsub.f32 %v15, %v34
  %v49 = vsub.f32 %v16, %v37
  %v50 = vsub.f32 %v17, %v40
  %v51 = vsub.f32 %v18, %v43
  %v52 = vmul.f32 %v44, 1.442695
  %v53 = vpow.pop %v52
  %v54 = vmul.f32 %v45, 1.442695
  %v55 = vpow.pop %v54
  %v56 = vmul.f32 %v46, 1.442695
  %v57 = vpow.pop %v56
  %v58 = vmul.f32 %v47, 1.442695
  %v59 = vpow.pop %v58
  %v60 = vmul.f32 %v48, 1.442695
  %v61 = vpow.pop %v60
  %v62 = vmul.f32 %v49, 1.442695
  %v63 = vpow.pop %v62
  %v64 = vmul.f32 %v50, 1.442695
  %v65 = vpow.pop %v64
  %v66 = vmul.f32 %v51, 1.442695
  %v67 = vpow.pop %v66
  %v68 = vsel %vm19, %v53, 0.0
  %69 = vadd.xlane.f32.xlu0 %v68
  %v70 = vpop.xlane.xlu0 %69
  %v71 = vsel %vm19, %v55, 0.0
  %72 = vadd.xlane.f32.xlu0 %v71
  %v73 = vpop.xlane.xlu0 %72
  %v74 = vsel %vm19, %v57, 0.0
  %75 = vadd.xlane.f32.xlu0 %v74
  %v76 = vpop.xlane.xlu0 %75
  %v77 = vsel %vm19, %v59, 0.0
  %78 = vadd.xlane.f32.xlu0 %v77
  %v79 = vpop.xlane.xlu0 %78
  %v80 = vsel %vm19, %v61, 0.0
  %81 = vadd.xlane.f32.xlu0 %v80
  %v82 = vpop.xlane.xlu0 %81
  %v83 = vsel %vm19, %v63, 0.0
  %84 = vadd.xlane.f32.xlu0 %v83
  %v85 = vpop.xlane.xlu0 %84
  %v86 = vsel %vm19, %v65, 0.0
  %87 = vadd.xlane.f32.xlu0 %v86
  %v88 = vpop.xlane.xlu0 %87
  %v89 = vsel %vm19, %v67, 0.0
  %90 = vadd.xlane.f32.xlu0 %v89
  %v91 = vpop.xlane.xlu0 %90
  %v92 = vrcp.pop %v70
  %v93 = vmul.f32 %v53, %v92
  %v94 = vrcp.pop %v73
  %v95 = vmul.f32 %v55, %v94
  %v96 = vrcp.pop %v76
  %v97 = vmul.f32 %v57, %v96
  %v98 = vrcp.pop %v79
  %v99 = vmul.f32 %v59, %v98
  %v100 = vrcp.pop %v82
  %v101 = vmul.f32 %v61, %v100
  %v102 = vrcp.pop %v85
  %v103 = vmul.f32 %v63, %v102
  %v104 = vrcp.pop %v88
  %v105 = vmul.f32 %v65, %v104
  %v106 = vrcp.pop %v91
  %v107 = vmul.f32 %v67, %v106
  %v108 = vld [vmem:[%s1] sm:$0x3]
  %v109 = vld [vmem:[%s1 + $0x2] sm:$0x3]
  %v110 = vld [vmem:[%s1 + $0x4] sm:$0x3]
  %v111 = vld [vmem:[%s1 + $0x6] sm:$0x3]
  %v112 = vld [vmem:[%s1 + $0x8] sm:$0x3]
  %v113 = vld [vmem:[%s1 + $0xa] sm:$0x3]
  %v114 = vld [vmem:[%s1 + $0xc] sm:$0x3]
  %v115 = vld [vmem:[%s1 + $0xe] sm:$0x3]
  %vm116 = vcmask 15360
  %v118 = vsel %vm116, %v93, 0
  %vm120 = vcmask 1041408
  %v122 = vsel %vm120, %v108, 0
  %124 = vmatprep.subr.mxu0 0.0
  %125 = vmatpush1.msra.mxu0 %v122
  %126 = vmatprep.subr.mxu0 0.0
  %127 = vmatpush1.msra.mxu0 0.0
  %128 = vmatprep.subr.mxu0 0.0
  %129 = vmatpush1.msra.mxu0 0.0
  %130 = vmatprep.subr.mxu0 0.0
  %131 = vmatpush1.msra.mxu0 0.0
  %132 = vmatprep.subr.mxu0 0.0
  %133 = vmatpush1.msra.mxu0 0.0
  %134 = vmatprep.subr.mxu0 0.0
  %135 = vmatpush1.msra.mxu0 0.0
  %136 = vmatprep.subr.mxu0 0.0
  %137 = vmatpush1.msra.mxu0 0.0
  %138 = vmatprep.subr.mxu0 0.0
  %139 = vmatpush1.msra.mxu0 0.0
  %140 = vmatprep.subr.mxu0 0.0
  %141 = vmatpush1.msra.mxu0 0.0
  %142 = vmatprep.subr.mxu0 0.0
  %143 = vmatpush1.msra.mxu0 0.0
  %144 = vmatprep.subr.mxu0 0.0
  %145 = vmatpush1.msra.mxu0 0.0
  %146 = vmatprep.subr.mxu0 0.0
  %147 = vmatpush1.msra.mxu0 0.0
  %148 = vmatprep.subr.mxu0 0.0
  %149 = vmatpush1.msra.mxu0 0.0
  %150 = vmatprep.subr.mxu0 0.0
  %151 = vmatpush1.msra.mxu0 0.0
  %152 = vmatprep.subr.mxu0 0.0
  %153 = vmatpush1.msra.mxu0 0.0
  %154 = vmatprep.subr.mxu0 0.0
  %155 = vmatpush1.msra.mxu0 0.0
  %156 = vmatprep.subr.mxu0 0.0
  %157 = vmatpush1.msra.mxu0 0.0
  %158 = vmatprep.subr.mxu0 0.0
  %159 = vmatpush1.msra.mxu0 0.0
  %160 = vmatprep.subr.mxu0 0.0
  %161 = vmatpush1.msra.mxu0 0.0
  %162 = vmatprep.subr.mxu0 0.0
  %163 = vmatpush1.msra.mxu0 0.0
  %164 = vmatprep.subr.mxu0 0.0
  %165 = vmatpush1.msra.mxu0 0.0
  %166 = vmatprep.subr.mxu0 0.0
  %167 = vmatpush1.msra.mxu0 0.0
  %168 = vmatprep.subr.mxu0 0.0
  %169 = vmatpush1.msra.mxu0 0.0
  %170 = vmatprep.subr.mxu0 0.0
  %171 = vmatpush1.msra.mxu0 0.0
  %172 = vmatprep.subr.mxu0 0.0
  %173 = vmatpush1.msra.mxu0 0.0
  %174 = vmatprep.subr.mxu0 0.0
  %175 = vmatpush1.msra.mxu0 0.0
  %176 = vmatprep.subr.mxu0 0.0
  %177 = vmatpush1.msra.mxu0 0.0
  %178 = vmatprep.subr.mxu0 0.0
  %179 = vmatpush1.msra.mxu0 0.0
  %180 = vmatprep.subr.mxu0 0.0
  %181 = vmatpush1.msra.mxu0 0.0
  %182 = vmatprep.subr.mxu0 0.0
  %183 = vmatpush1.msra.mxu0 0.0
  %184 = vmatprep.subr.mxu0 0.0
  %185 = vmatpush1.msra.mxu0 0.0
  %186 = vmatprep.subr.mxu0 0.0
  %187 = vmatpush1.msra.mxu0 0.0
  %188 = vmatprep.mubr.f32.mxu0 0.0
  %189 = vmatmul.mubr.f32.gmra.mrb[0].mxu0 %v118
  %v190 = vpop.f32.mrb[0].mxu0
  %v191 = vadd.f32 0.0, %v190
  %v192 = vpop.f32.mrb[0].mxu0
  %193 = vdwg.mxu0
  %v195 = vsel %vm116, %v95, 0
  %v198 = vsel %vm120, %v109, 0
  %200 = vmatprep.subr.mxu0 0.0
  %201 = vmatpush1.msra.mxu0 %v198
  %202 = vmatprep.subr.mxu0 0.0
  %203 = vmatpush1.msra.mxu0 0.0
  %204 = vmatprep.subr.mxu0 0.0
  %205 = vmatpush1.msra.mxu0 0.0
  %206 = vmatprep.subr.mxu0 0.0
  %207 = vmatpush1.msra.mxu0 0.0
  %208 = vmatprep.subr.mxu0 0.0
  %209 = vmatpush1.msra.mxu0 0.0
  %210 = vmatprep.subr.mxu0 0.0
  %211 = vmatpush1.msra.mxu0 0.0
  %212 = vmatprep.subr.mxu0 0.0
  %213 = vmatpush1.msra.mxu0 0.0
  %214 = vmatprep.subr.mxu0 0.0
  %215 = vmatpush1.msra.mxu0 0.0
  %216 = vmatprep.subr.mxu0 0.0
  %217 = vmatpush1.msra.mxu0 0.0
  %218 = vmatprep.subr.mxu0 0.0
  %219 = vmatpush1.msra.mxu0 0.0
  %220 = vmatprep.subr.mxu0 0.0
  %221 = vmatpush1.msra.mxu0 0.0
  %222 = vmatprep.subr.mxu0 0.0
  %223 = vmatpush1.msra.mxu0 0.0
  %224 = vmatprep.subr.mxu0 0.0
  %225 = vmatpush1.msra.mxu0 0.0
  %226 = vmatprep.subr.mxu0 0.0
  %227 = vmatpush1.msra.mxu0 0.0
  %228 = vmatprep.subr.mxu0 0.0
  %229 = vmatpush1.msra.mxu0 0.0
  %230 = vmatprep.subr.mxu0 0.0
  %231 = vmatpush1.msra.mxu0 0.0
  %232 = vmatprep.subr.mxu0 0.0
  %233 = vmatpush1.msra.mxu0 0.0
  %234 = vmatprep.subr.mxu0 0.0
  %235 = vmatpush1.msra.mxu0 0.0
  %236 = vmatprep.subr.mxu0 0.0
  %237 = vmatpush1.msra.mxu0 0.0
  %238 = vmatprep.subr.mxu0 0.0
  %239 = vmatpush1.msra.mxu0 0.0
  %240 = vmatprep.subr.mxu0 0.0
  %241 = vmatpush1.msra.mxu0 0.0
  %242 = vmatprep.subr.mxu0 0.0
  %243 = vmatpush1.msra.mxu0 0.0
  %244 = vmatprep.subr.mxu0 0.0
  %245 = vmatpush1.msra.mxu0 0.0
  %246 = vmatprep.subr.mxu0 0.0
  %247 = vmatpush1.msra.mxu0 0.0
  %248 = vmatprep.subr.mxu0 0.0
  %249 = vmatpush1.msra.mxu0 0.0
  %250 = vmatprep.subr.mxu0 0.0
  %251 = vmatpush1.msra.mxu0 0.0
  %252 = vmatprep.subr.mxu0 0.0
  %253 = vmatpush1.msra.mxu0 0.0
  %254 = vmatprep.subr.mxu0 0.0
  %255 = vmatpush1.msra.mxu0 0.0
  %256 = vmatprep.subr.mxu0 0.0
  %257 = vmatpush1.msra.mxu0 0.0
  %258 = vmatprep.subr.mxu0 0.0
  %259 = vmatpush1.msra.mxu0 0.0
  %260 = vmatprep.subr.mxu0 0.0
  %261 = vmatpush1.msra.mxu0 0.0
  %262 = vmatprep.subr.mxu0 0.0
  %263 = vmatpush1.msra.mxu0 0.0
  %264 = vmatprep.mubr.f32.mxu0 0.0
  %265 = vmatmul.mubr.f32.gmra.mrb[0].mxu0 %v195
  %v266 = vpop.f32.mrb[0].mxu0
  %v267 = vadd.f32 0.0, %v266
  %v268 = vpop.f32.mrb[0].mxu0
  %269 = vdwg.mxu0
  %v271 = vsel %vm116, %v97, 0
  %v274 = vsel %vm120, %v110, 0
  %276 = vmatprep.subr.mxu0 0.0
  %277 = vmatpush1.msra.mxu0 %v274
  %278 = vmatprep.subr.mxu0 0.0
  %279 = vmatpush1.msra.mxu0 0.0
  %280 = vmatprep.subr.mxu0 0.0
  %281 = vmatpush1.msra.mxu0 0.0
  %282 = vmatprep.subr.mxu0 0.0
  %283 = vmatpush1.msra.mxu0 0.0
  %284 = vmatprep.subr.mxu0 0.0
  %285 = vmatpush1.msra.mxu0 0.0
  %286 = vmatprep.subr.mxu0 0.0
  %287 = vmatpush1.msra.mxu0 0.0
  %288 = vmatprep.subr.mxu0 0.0
  %289 = vmatpush1.msra.mxu0 0.0
  %290 = vmatprep.subr.mxu0 0.0
  %291 = vmatpush1.msra.mxu0 0.0
  %292 = vmatprep.subr.mxu0 0.0
  %293 = vmatpush1.msra.mxu0 0.0
  %294 = vmatprep.subr.mxu0 0.0
  %295 = vmatpush1.msra.mxu0 0.0
  %296 = vmatprep.subr.mxu0 0.0
  %297 = vmatpush1.msra.mxu0 0.0
  %298 = vmatprep.subr.mxu0 0.0
  %299 = vmatpush1.msra.mxu0 0.0
  %300 = vmatprep.subr.mxu0 0.0
  %301 = vmatpush1.msra.mxu0 0.0
  %302 = vmatprep.subr.mxu0 0.0
  %303 = vmatpush1.msra.mxu0 0.0
  %304 = vmatprep.subr.mxu0 0.0
  %305 = vmatpush1.msra.mxu0 0.0
  %306 = vmatprep.subr.mxu0 0.0
  %307 = vmatpush1.msra.mxu0 0.0
  %308 = vmatprep.subr.mxu0 0.0
  %309 = vmatpush1.msra.mxu0 0.0
  %310 = vmatprep.subr.mxu0 0.0
  %311 = vmatpush1.msra.mxu0 0.0
  %312 = vmatprep.subr.mxu0 0.0
  %313 = vmatpush1.msra.mxu0 0.0
  %314 = vmatprep.subr.mxu0 0.0
  %315 = vmatpush1.msra.mxu0 0.0
  %316 = vmatprep.subr.mxu0 0.0
  %317 = vmatpush1.msra.mxu0 0.0
  %318 = vmatprep.subr.mxu0 0.0
  %319 = vmatpush1.msra.mxu0 0.0
  %320 = vmatprep.subr.mxu0 0.0
  %321 = vmatpush1.msra.mxu0 0.0
  %322 = vmatprep.subr.mxu0 0.0
  %323 = vmatpush1.msra.mxu0 0.0
  %324 = vmatprep.subr.mxu0 0.0
  %325 = vmatpush1.msra.mxu0 0.0
  %326 = vmatprep.subr.mxu0 0.0
  %327 = vmatpush1.msra.mxu0 0.0
  %328 = vmatprep.subr.mxu0 0.0
  %329 = vmatpush1.msra.mxu0 0.0
  %330 = vmatprep.subr.mxu0 0.0
  %331 = vmatpush1.msra.mxu0 0.0
  %332 = vmatprep.subr.mxu0 0.0
  %333 = vmatpush1.msra.mxu0 0.0
  %334 = vmatprep.subr.mxu0 0.0
  %335 = vmatpush1.msra.mxu0 0.0
  %336 = vmatprep.subr.mxu0 0.0
  %337 = vmatpush1.msra.mxu0 0.0
  %338 = vmatprep.subr.mxu0 0.0
  %339 = vmatpush1.msra.mxu0 0.0
  %340 = vmatprep.mubr.f32.mxu0 0.0
  %341 = vmatmul.mubr.f32.gmra.mrb[0].mxu0 %v271
  %v342 = vpop.f32.mrb[0].mxu0
  %v343 = vadd.f32 0.0, %v342
  %v344 = vpop.f32.mrb[0].mxu0
  %345 = vdwg.mxu0
  %v347 = vsel %vm116, %v99, 0
  %v350 = vsel %vm120, %v111, 0
  %352 = vmatprep.subr.mxu0 0.0
  %353 = vmatpush1.msra.mxu0 %v350
  %354 = vmatprep.subr.mxu0 0.0
  %355 = vmatpush1.msra.mxu0 0.0
  %356 = vmatprep.subr.mxu0 0.0
  %357 = vmatpush1.msra.mxu0 0.0
  %358 = vmatprep.subr.mxu0 0.0
  %359 = vmatpush1.msra.mxu0 0.0
  %360 = vmatprep.subr.mxu0 0.0
  %361 = vmatpush1.msra.mxu0 0.0
  %362 = vmatprep.subr.mxu0 0.0
  %363 = vmatpush1.msra.mxu0 0.0
  %364 = vmatprep.subr.mxu0 0.0
  %365 = vmatpush1.msra.mxu0 0.0
  %366 = vmatprep.subr.mxu0 0.0
  %367 = vmatpush1.msra.mxu0 0.0
  %368 = vmatprep.subr.mxu0 0.0
  %369 = vmatpush1.msra.mxu0 0.0
  %370 = vmatprep.subr.mxu0 0.0
  %371 = vmatpush1.msra.mxu0 0.0
  %372 = vmatprep.subr.mxu0 0.0
  %373 = vmatpush1.msra.mxu0 0.0
  %374 = vmatprep.subr.mxu0 0.0
  %375 = vmatpush1.msra.mxu0 0.0
  %376 = vmatprep.subr.mxu0 0.0
  %377 = vmatpush1.msra.mxu0 0.0
  %378 = vmatprep.subr.mxu0 0.0
  %379 = vmatpush1.msra.mxu0 0.0
  %380 = vmatprep.subr.mxu0 0.0
  %381 = vmatpush1.msra.mxu0 0.0
  %382 = vmatprep.subr.mxu0 0.0
  %383 = vmatpush1.msra.mxu0 0.0
  %384 = vmatprep.subr.mxu0 0.0
  %385 = vmatpush1.msra.mxu0 0.0
  %386 = vmatprep.subr.mxu0 0.0
  %387 = vmatpush1.msra.mxu0 0.0
  %388 = vmatprep.subr.mxu0 0.0
  %389 = vmatpush1.msra.mxu0 0.0
  %390 = vmatprep.subr.mxu0 0.0
  %391 = vmatpush1.msra.mxu0 0.0
  %392 = vmatprep.subr.mxu0 0.0
  %393 = vmatpush1.msra.mxu0 0.0
  %394 = vmatprep.subr.mxu0 0.0
  %395 = vmatpush1.msra.mxu0 0.0
  %396 = vmatprep.subr.mxu0 0.0
  %397 = vmatpush1.msra.mxu0 0.0
  %398 = vmatprep.subr.mxu0 0.0
  %399 = vmatpush1.msra.mxu0 0.0
  %400 = vmatprep.subr.mxu0 0.0
  %401 = vmatpush1.msra.mxu0 0.0
  %402 = vmatprep.subr.mxu0 0.0
  %403 = vmatpush1.msra.mxu0 0.0
  %404 = vmatprep.subr.mxu0 0.0
  %405 = vmatpush1.msra.mxu0 0.0
  %406 = vmatprep.subr.mxu0 0.0
  %407 = vmatpush1.msra.mxu0 0.0
  %408 = vmatprep.subr.mxu0 0.0
  %409 = vmatpush1.msra.mxu0 0.0
  %410 = vmatprep.subr.mxu0 0.0
  %411 = vmatpush1.msra.mxu0 0.0
  %412 = vmatprep.subr.mxu0 0.0
  %413 = vmatpush1.msra.mxu0 0.0
  %414 = vmatprep.subr.mxu0 0.0
  %415 = vmatpush1.msra.mxu0 0.0
  %416 = vmatprep.mubr.f32.mxu0 0.0
  %417 = vmatmul.mubr.f32.gmra.mrb[0].mxu0 %v347
  %v418 = vpop.f32.mrb[0].mxu0
  %v419 = vadd.f32 0.0, %v418
  %v420 = vpop.f32.mrb[0].mxu0
  %421 = vdwg.mxu0
  %v423 = vsel %vm116, %v101, 0
  %v426 = vsel %vm120, %v112, 0
  %428 = vmatprep.subr.mxu0 0.0
  %429 = vmatpush1.msra.mxu0 %v426
  %430 = vmatprep.subr.mxu0 0.0
  %431 = vmatpush1.msra.mxu0 0.0
  %432 = vmatprep.subr.mxu0 0.0
  %433 = vmatpush1.msra.mxu0 0.0
  %434 = vmatprep.subr.mxu0 0.0
  %435 = vmatpush1.msra.mxu0 0.0
  %436 = vmatprep.subr.mxu0 0.0
  %437 = vmatpush1.msra.mxu0 0.0
  %438 = vmatprep.subr.mxu0 0.0
  %439 = vmatpush1.msra.mxu0 0.0
  %440 = vmatprep.subr.mxu0 0.0
  %441 = vmatpush1.msra.mxu0 0.0
  %442 = vmatprep.subr.mxu0 0.0
  %443 = vmatpush1.msra.mxu0 0.0
  %444 = vmatprep.subr.mxu0 0.0
  %445 = vmatpush1.msra.mxu0 0.0
  %446 = vmatprep.subr.mxu0 0.0
  %447 = vmatpush1.msra.mxu0 0.0
  %448 = vmatprep.subr.mxu0 0.0
  %449 = vmatpush1.msra.mxu0 0.0
  %450 = vmatprep.subr.mxu0 0.0
  %451 = vmatpush1.msra.mxu0 0.0
  %452 = vmatprep.subr.mxu0 0.0
  %453 = vmatpush1.msra.mxu0 0.0
  %454 = vmatprep.subr.mxu0 0.0
  %455 = vmatpush1.msra.mxu0 0.0
  %456 = vmatprep.subr.mxu0 0.0
  %457 = vmatpush1.msra.mxu0 0.0
  %458 = vmatprep.subr.mxu0 0.0
  %459 = vmatpush1.msra.mxu0 0.0
  %460 = vmatprep.subr.mxu0 0.0
  %461 = vmatpush1.msra.mxu0 0.0
  %462 = vmatprep.subr.mxu0 0.0
  %463 = vmatpush1.msra.mxu0 0.0
  %464 = vmatprep.subr.mxu0 0.0
  %465 = vmatpush1.msra.mxu0 0.0
  %466 = vmatprep.subr.mxu0 0.0
  %467 = vmatpush1.msra.mxu0 0.0
  %468 = vmatprep.subr.mxu0 0.0
  %469 = vmatpush1.msra.mxu0 0.0
  %470 = vmatprep.subr.mxu0 0.0
  %471 = vmatpush1.msra.mxu0 0.0
  %472 = vmatprep.subr.mxu0 0.0
  %473 = vmatpush1.msra.mxu0 0.0
  %474 = vmatprep.subr.mxu0 0.0
  %475 = vmatpush1.msra.mxu0 0.0
  %476 = vmatprep.subr.mxu0 0.0
  %477 = vmatpush1.msra.mxu0 0.0
  %478 = vmatprep.subr.mxu0 0.0
  %479 = vmatpush1.msra.mxu0 0.0
  %480 = vmatprep.subr.mxu0 0.0
  %481 = vmatpush1.msra.mxu0 0.0
  %482 = vmatprep.subr.mxu0 0.0
  %483 = vmatpush1.msra.mxu0 0.0
  %484 = vmatprep.subr.mxu0 0.0
  %485 = vmatpush1.msra.mxu0 0.0
  %486 = vmatprep.subr.mxu0 0.0
  %487 = vmatpush1.msra.mxu0 0.0
  %488 = vmatprep.subr.mxu0 0.0
  %489 = vmatpush1.msra.mxu0 0.0
  %490 = vmatprep.subr.mxu0 0.0
  %491 = vmatpush1.msra.mxu0 0.0
  %492 = vmatprep.mubr.f32.mxu0 0.0
  %493 = vmatmul.mubr.f32.gmra.mrb[0].mxu0 %v423
  %v494 = vpop.f32.mrb[0].mxu0
  %v495 = vadd.f32 0.0, %v494
  %v496 = vpop.f32.mrb[0].mxu0
  %497 = vdwg.mxu0
  %v499 = vsel %vm116, %v103, 0
  %v502 = vsel %vm120, %v113, 0
  %504 = vmatprep.subr.mxu0 0.0
  %505 = vmatpush1.msra.mxu0 %v502
  %506 = vmatprep.subr.mxu0 0.0
  %507 = vmatpush1.msra.mxu0 0.0
  %508 = vmatprep.subr.mxu0 0.0
  %509 = vmatpush1.msra.mxu0 0.0
  %510 = vmatprep.subr.mxu0 0.0
  %511 = vmatpush1.msra.mxu0 0.0
  %512 = vmatprep.subr.mxu0 0.0
  %513 = vmatpush1.msra.mxu0 0.0
  %514 = vmatprep.subr.mxu0 0.0
  %515 = vmatpush1.msra.mxu0 0.0
  %516 = vmatprep.subr.mxu0 0.0
  %517 = vmatpush1.msra.mxu0 0.0
  %518 = vmatprep.subr.mxu0 0.0
  %519 = vmatpush1.msra.mxu0 0.0
  %520 = vmatprep.subr.mxu0 0.0
  %521 = vmatpush1.msra.mxu0 0.0
  %522 = vmatprep.subr.mxu0 0.0
  %523 = vmatpush1.msra.mxu0 0.0
  %524 = vmatprep.subr.mxu0 0.0
  %525 = vmatpush1.msra.mxu0 0.0
  %526 = vmatprep.subr.mxu0 0.0
  %527 = vmatpush1.msra.mxu0 0.0
  %528 = vmatprep.subr.mxu0 0.0
  %529 = vmatpush1.msra.mxu0 0.0
  %530 = vmatprep.subr.mxu0 0.0
  %531 = vmatpush1.msra.mxu0 0.0
  %532 = vmatprep.subr.mxu0 0.0
  %533 = vmatpush1.msra.mxu0 0.0
  %534 = vmatprep.subr.mxu0 0.0
  %535 = vmatpush1.msra.mxu0 0.0
  %536 = vmatprep.subr.mxu0 0.0
  %537 = vmatpush1.msra.mxu0 0.0
  %538 = vmatprep.subr.mxu0 0.0
  %539 = vmatpush1.msra.mxu0 0.0
  %540 = vmatprep.subr.mxu0 0.0
  %541 = vmatpush1.msra.mxu0 0.0
  %542 = vmatprep.subr.mxu0 0.0
  %543 = vmatpush1.msra.mxu0 0.0
  %544 = vmatprep.subr.mxu0 0.0
  %545 = vmatpush1.msra.mxu0 0.0
  %546 = vmatprep.subr.mxu0 0.0
  %547 = vmatpush1.msra.mxu0 0.0
  %548 = vmatprep.subr.mxu0 0.0
  %549 = vmatpush1.msra.mxu0 0.0
  %550 = vmatprep.subr.mxu0 0.0
  %551 = vmatpush1.msra.mxu0 0.0
  %552 = vmatprep.subr.mxu0 0.0
  %553 = vmatpush1.msra.mxu0 0.0
  %554 = vmatprep.subr.mxu0 0.0
  %555 = vmatpush1.msra.mxu0 0.0
  %556 = vmatprep.subr.mxu0 0.0
  %557 = vmatpush1.msra.mxu0 0.0
  %558 = vmatprep.subr.mxu0 0.0
  %559 = vmatpush1.msra.mxu0 0.0
  %560 = vmatprep.subr.mxu0 0.0
  %561 = vmatpush1.msra.mxu0 0.0
  %562 = vmatprep.subr.mxu0 0.0
  %563 = vmatpush1.msra.mxu0 0.0
  %564 = vmatprep.subr.mxu0 0.0
  %565 = vmatpush1.msra.mxu0 0.0
  %566 = vmatprep.subr.mxu0 0.0
  %567 = vmatpush1.msra.mxu0 0.0
  %568 = vmatprep.mubr.f32.mxu0 0.0
  %569 = vmatmul.mubr.f32.gmra.mrb[0].mxu0 %v499
  %v570 = vpop.f32.mrb[0].mxu0
  %v571 = vadd.f32 0.0, %v570
  %v572 = vpop.f32.mrb[0].mxu0
  %573 = vdwg.mxu0
  %v575 = vsel %vm116, %v105, 0
  %v578 = vsel %vm120, %v114, 0
  %580 = vmatprep.subr.mxu0 0.0
  %581 = vmatpush1.msra.mxu0 %v578
  %582 = vmatprep.subr.mxu0 0.0
  %583 = vmatpush1.msra.mxu0 0.0
  %584 = vmatprep.subr.mxu0 0.0
  %585 = vmatpush1.msra.mxu0 0.0
  %586 = vmatprep.subr.mxu0 0.0
  %587 = vmatpush1.msra.mxu0 0.0
  %588 = vmatprep.subr.mxu0 0.0
  %589 = vmatpush1.msra.mxu0 0.0
  %590 = vmatprep.subr.mxu0 0.0
  %591 = vmatpush1.msra.mxu0 0.0
  %592 = vmatprep.subr.mxu0 0.0
  %593 = vmatpush1.msra.mxu0 0.0
  %594 = vmatprep.subr.mxu0 0.0
  %595 = vmatpush1.msra.mxu0 0.0
  %596 = vmatprep.subr.mxu0 0.0
  %597 = vmatpush1.msra.mxu0 0.0
  %598 = vmatprep.subr.mxu0 0.0
  %599 = vmatpush1.msra.mxu0 0.0
  %600 = vmatprep.subr.mxu0 0.0
  %601 = vmatpush1.msra.mxu0 0.0
  %602 = vmatprep.subr.mxu0 0.0
  %603 = vmatpush1.msra.mxu0 0.0
  %604 = vmatprep.subr.mxu0 0.0
  %605 = vmatpush1.msra.mxu0 0.0
  %606 = vmatprep.subr.mxu0 0.0
  %607 = vmatpush1.msra.mxu0 0.0
  %608 = vmatprep.subr.mxu0 0.0
  %609 = vmatpush1.msra.mxu0 0.0
  %610 = vmatprep.subr.mxu0 0.0
  %611 = vmatpush1.msra.mxu0 0.0
  %612 = vmatprep.subr.mxu0 0.0
  %613 = vmatpush1.msra.mxu0 0.0
  %614 = vmatprep.subr.mxu0 0.0
  %615 = vmatpush1.msra.mxu0 0.0
  %616 = vmatprep.subr.mxu0 0.0
  %617 = vmatpush1.msra.mxu0 0.0
  %618 = vmatprep.subr.mxu0 0.0
  %619 = vmatpush1.msra.mxu0 0.0
  %620 = vmatprep.subr.mxu0 0.0
  %621 = vmatpush1.msra.mxu0 0.0
  %622 = vmatprep.subr.mxu0 0.0
  %623 = vmatpush1.msra.mxu0 0.0
  %624 = vmatprep.subr.mxu0 0.0
  %625 = vmatpush1.msra.mxu0 0.0
  %626 = vmatprep.subr.mxu0 0.0
  %627 = vmatpush1.msra.mxu0 0.0
  %628 = vmatprep.subr.mxu0 0.0
  %629 = vmatpush1.msra.mxu0 0.0
  %630 = vmatprep.subr.mxu0 0.0
  %631 = vmatpush1.msra.mxu0 0.0
  %632 = vmatprep.subr.mxu0 0.0
  %633 = vmatpush1.msra.mxu0 0.0
  %634 = vmatprep.subr.mxu0 0.0
  %635 = vmatpush1.msra.mxu0 0.0
  %636 = vmatprep.subr.mxu0 0.0
  %637 = vmatpush1.msra.mxu0 0.0
  %638 = vmatprep.subr.mxu0 0.0
  %639 = vmatpush1.msra.mxu0 0.0
  %640 = vmatprep.subr.mxu0 0.0
  %641 = vmatpush1.msra.mxu0 0.0
  %642 = vmatprep.subr.mxu0 0.0
  %643 = vmatpush1.msra.mxu0 0.0
  %644 = vmatprep.mubr.f32.mxu0 0.0
  %645 = vmatmul.mubr.f32.gmra.mrb[0].mxu0 %v575
  %v646 = vpop.f32.mrb[0].mxu0
  %v647 = vadd.f32 0.0, %v646
  %v648 = vpop.f32.mrb[0].mxu0
  %649 = vdwg.mxu0
  %v651 = vsel %vm116, %v107, 0
  %v654 = vsel %vm120, %v115, 0
  %656 = vmatprep.subr.mxu0 0.0
  %657 = vmatpush1.msra.mxu0 %v654
  %658 = vmatprep.subr.mxu0 0.0
  %659 = vmatpush1.msra.mxu0 0.0
  %660 = vmatprep.subr.mxu0 0.0
  %661 = vmatpush1.msra.mxu0 0.0
  %662 = vmatprep.subr.mxu0 0.0
  %663 = vmatpush1.msra.mxu0 0.0
  %664 = vmatprep.subr.mxu0 0.0
  %665 = vmatpush1.msra.mxu0 0.0
  %666 = vmatprep.subr.mxu0 0.0
  %667 = vmatpush1.msra.mxu0 0.0
  %668 = vmatprep.subr.mxu0 0.0
  %669 = vmatpush1.msra.mxu0 0.0
  %670 = vmatprep.subr.mxu0 0.0
  %671 = vmatpush1.msra.mxu0 0.0
  %672 = vmatprep.subr.mxu0 0.0
  %673 = vmatpush1.msra.mxu0 0.0
  %674 = vmatprep.subr.mxu0 0.0
  %675 = vmatpush1.msra.mxu0 0.0
  %676 = vmatprep.subr.mxu0 0.0
  %677 = vmatpush1.msra.mxu0 0.0
  %678 = vmatprep.subr.mxu0 0.0
  %679 = vmatpush1.msra.mxu0 0.0
  %680 = vmatprep.subr.mxu0 0.0
  %681 = vmatpush1.msra.mxu0 0.0
  %682 = vmatprep.subr.mxu0 0.0
  %683 = vmatpush1.msra.mxu0 0.0
  %684 = vmatprep.subr.mxu0 0.0
  %685 = vmatpush1.msra.mxu0 0.0
  %686 = vmatprep.subr.mxu0 0.0
  %687 = vmatpush1.msra.mxu0 0.0
  %688 = vmatprep.subr.mxu0 0.0
  %689 = vmatpush1.msra.mxu0 0.0
  %690 = vmatprep.subr.mxu0 0.0
  %691 = vmatpush1.msra.mxu0 0.0
  %692 = vmatprep.subr.mxu0 0.0
  %693 = vmatpush1.msra.mxu0 0.0
  %694 = vmatprep.subr.mxu0 0.0
  %695 = vmatpush1.msra.mxu0 0.0
  %696 = vmatprep.subr.mxu0 0.0
  %697 = vmatpush1.msra.mxu0 0.0
  %698 = vmatprep.subr.mxu0 0.0
  %699 = vmatpush1.msra.mxu0 0.0
  %700 = vmatprep.subr.mxu0 0.0
  %701 = vmatpush1.msra.mxu0 0.0
  %702 = vmatprep.subr.mxu0 0.0
  %703 = vmatpush1.msra.mxu0 0.0
  %704 = vmatprep.subr.mxu0 0.0
  %705 = vmatpush1.msra.mxu0 0.0
  %706 = vmatprep.subr.mxu0 0.0
  %707 = vmatpush1.msra.mxu0 0.0
  %708 = vmatprep.subr.mxu0 0.0
  %709 = vmatpush1.msra.mxu0 0.0
  %710 = vmatprep.subr.mxu0 0.0
  %711 = vmatpush1.msra.mxu0 0.0
  %712 = vmatprep.subr.mxu0 0.0
  %713 = vmatpush1.msra.mxu0 0.0
  %714 = vmatprep.subr.mxu0 0.0
  %715 = vmatpush1.msra.mxu0 0.0
  %716 = vmatprep.subr.mxu0 0.0
  %717 = vmatpush1.msra.mxu0 0.0
  %718 = vmatprep.subr.mxu0 0.0
  %719 = vmatpush1.msra.mxu0 0.0
  %720 = vmatprep.mubr.f32.mxu0 0.0
  %721 = vmatmul.mubr.f32.gmra.mrb[0].mxu0 %v651
  %v722 = vpop.f32.mrb[0].mxu0
  %v723 = vadd.f32 0.0, %v722
  %v724 = vpop.f32.mrb[0].mxu0
  %725 = vdwg.mxu0
  %vm726 = vcmask 516096
  %727 = vst.msk [vmem:[%s2] sm:$0x1] %vm726, %v191
  %728 = vst.msk [vmem:[%s2 + $0x1] sm:$0x1] %vm726, %v267
  %729 = vst.msk [vmem:[%s2 + $0x2] sm:$0x1] %vm726, %v343
  %730 = vst.msk [vmem:[%s2 + $0x3] sm:$0x1] %vm726, %v419
  %731 = vst.msk [vmem:[%s2 + $0x4] sm:$0x1] %vm726, %v495
  %732 = vst.msk [vmem:[%s2 + $0x5] sm:$0x1] %vm726, %v571
  %733 = vst.msk [vmem:[%s2 + $0x6] sm:$0x1] %vm726, %v647
  %734 = vst.msk [vmem:[%s2 + $0x7] sm:$0x1] %vm726, %v723
  // Predicated region
  $region10: #{_lambda_.39} parent=0 // pred_check
    _
  $region11: #{_lambda_.39} parent=0 // pred_check_branch
    %736 = sbr.rel (0) target = $region13
  $region12: #{_lambda_.39} parent=0 // pred_region
    _
  $region13: #{_lambda_.39} parent=0 // pred_fallthru
    _
  // Predicated region
  $region14: #{_lambda_.39} parent=0 // pred_check
    _
  $region15: #{_lambda_.39} parent=0 // pred_check_branch
    %738 = sbr.rel (0) target = $region17
  $region16: #{_lambda_.39} parent=0 // pred_region
    _
  $region17: #{_lambda_.39} parent=0 // pred_fallthru
    _

// kernel: _lambda_.37
$region0: #{_lambda_.37}
  #allocation0 [shape = 'u32[]', space=smem, size = 0x4, offset = 0x4, fixed_abs, tag = 'smem constant byte address 0x4 - core index']
  #allocation1 [shape = 'u32[144,128]{1,0:T(1,128)}', space=vmem, size = 0x12000, scoped, tag = 'internal scratch']
  %s0 = inlined_call_operand.vmem [shape: f32[8,1,2], index: 0, kind: input, shape index: {}]
  %s1 = inlined_call_operand.vmem [shape: f32[8,1,1], index: 1, kind: input, shape index: {}]
  %s2 = inlined_call_operand.vmem [shape: f32[8,2,128], index: 2, kind: input, shape index: {}]
  %s3 = inlined_call_operand.vmem [shape: f32[8,1,128], index: 3, kind: input, shape index: {}]
  %s4 = inlined_call_operand.vmem [shape: f32[8,2,32], index: 4, kind: input, shape index: {}]
  %s5 = inlined_call_operand.vmem [shape: f32[8,1,32], index: 5, kind: output, shape index: {}]
  %s6 = sld [smem:[#allocation0]]
  $region30: #{_lambda_.37} parent=0
    _
  %s8 = ssub.s32 1, %s6
  %s9 = scalar_select 0, %s8, %s6
  // Predicated region
  $region2: #{_lambda_.37} parent=0 // pred_check
    _
  $region3: #{_lambda_.37} parent=0 // pred_check_branch
    %11 = sbr.rel (0) target = $region5
  $region4: #{_lambda_.37} parent=0 // pred_region
    _
  $region5: #{_lambda_.37} parent=0 // pred_fallthru
    _
  // Predicated region
  $region6: #{_lambda_.37} parent=0 // pred_check
    _
  $region7: #{_lambda_.37} parent=0 // pred_check_branch
    %13 = sbr.rel (0) target = $region9
  $region8: #{_lambda_.37} parent=0 // pred_region
    _
  $region9: #{_lambda_.37} parent=0 // pred_fallthru
    _
  // Predicated region
  $region10: #{_lambda_.37} parent=0 // pred_check
    _
  $region11: #{_lambda_.37} parent=0 // pred_check_branch
    %15 = sbr.rel (0) target = $region13
  $region12: #{_lambda_.37} parent=0 // pred_region
    _
  $region13: #{_lambda_.37} parent=0 // pred_fallthru
    _
  // Predicated region
  $region14: #{_lambda_.37} parent=0 // pred_check
    _
  $region15: #{_lambda_.37} parent=0 // pred_check_branch
    %17 = sbr.rel (0) target = $region17
  $region16: #{_lambda_.37} parent=0 // pred_region
    _
  $region17: #{_lambda_.37} parent=0 // pred_fallthru
    _
  // Predicated region
  $region18: #{_lambda_.37} parent=0 // pred_check
    _
  $region19: #{_lambda_.37} parent=0 // pred_check_branch
    %19 = sbr.rel (0) target = $region21
  $region20: #{_lambda_.37} parent=0 // pred_region
    _
  $region21: #{_lambda_.37} parent=0 // pred_fallthru
    _
  %v20 = vld [vmem:[%s2] sm:$0x3]
  %v21 = vld [vmem:[%s2 + $0x2] sm:$0x3]
  %v22 = vld [vmem:[%s2 + $0x4] sm:$0x3]
  %v23 = vld [vmem:[%s2 + $0x6] sm:$0x3]
  %v24 = vld [vmem:[%s2 + $0x8] sm:$0x3]
  %v25 = vld [vmem:[%s2 + $0xa] sm:$0x3]
  %v26 = vld [vmem:[%s2 + $0xc] sm:$0x3]
  %v27 = vld [vmem:[%s2 + $0xe] sm:$0x3]
  %v28 = vld [vmem:[%s3] sm:$0x1]
  %v29 = vld [vmem:[%s3 + $0x1] sm:$0x1]
  %v30 = vld [vmem:[%s3 + $0x2] sm:$0x1]
  %v31 = vld [vmem:[%s3 + $0x3] sm:$0x1]
  %v32 = vld [vmem:[%s3 + $0x4] sm:$0x1]
  %v33 = vld [vmem:[%s3 + $0x5] sm:$0x1]
  %v34 = vld [vmem:[%s3 + $0x6] sm:$0x1]
  %v35 = vld [vmem:[%s3 + $0x7] sm:$0x1]
  %v44 = vlaneseq
  %v45 = vshrl.u32 %v44, 7
  %v46 = vsub.s32 0, %v45
  %v47 = vrot.slane %v28, %v46
  %v48 = vlaneseq
  %v49 = vshrl.u32 %v48, 7
  %v50 = vsub.s32 0, %v49
  %v51 = vrot.slane %v29, %v50
  %v52 = vlaneseq
  %v53 = vshrl.u32 %v52, 7
  %v54 = vsub.s32 0, %v53
  %v55 = vrot.slane %v30, %v54
  %v56 = vlaneseq
  %v57 = vshrl.u32 %v56, 7
  %v58 = vsub.s32 0, %v57
  %v59 = vrot.slane %v31, %v58
  %v60 = vlaneseq
  %v61 = vshrl.u32 %v60, 7
  %v62 = vsub.s32 0, %v61
  %v63 = vrot.slane %v32, %v62
  %v64 = vlaneseq
  %v65 = vshrl.u32 %v64, 7
  %v66 = vsub.s32 0, %v65
  %v67 = vrot.slane %v33, %v66
  %v68 = vlaneseq
  %v69 = vshrl.u32 %v68, 7
  %v70 = vsub.s32 0, %v69
  %v71 = vrot.slane %v34, %v70
  %v72 = vlaneseq
  %v73 = vshrl.u32 %v72, 7
  %v74 = vsub.s32 0, %v73
  %v75 = vrot.slane %v35, %v74
  %84 = vmatprep.subr.mxu0 0.0
  %85 = vmatpush1.xpose.msra.mxu0 %v47
  %86 = vmatprep.subr.mxu0 0.0
  %87 = vmatpush1.xpose.msra.mxu0 0.0
  %88 = vmatprep.subr.mxu0 0.0
  %89 = vmatpush1.xpose.msra.mxu0 0.0
  %90 = vmatprep.subr.mxu0 0.0
  %91 = vmatpush1.xpose.msra.mxu0 0.0
  %92 = vmatprep.subr.mxu0 0.0
  %93 = vmatpush1.xpose.msra.mxu0 0.0
  %94 = vmatprep.subr.mxu0 0.0
  %95 = vmatpush1.xpose.msra.mxu0 0.0
  %96 = vmatprep.subr.mxu0 0.0
  %97 = vmatpush1.xpose.msra.mxu0 0.0
  %98 = vmatprep.subr.mxu0 0.0
  %99 = vmatpush1.xpose.msra.mxu0 0.0
  %100 = vmatprep.subr.mxu0 0.0
  %101 = vmatpush1.xpose.msra.mxu0 0.0
  %102 = vmatprep.subr.mxu0 0.0
  %103 = vmatpush1.xpose.msra.mxu0 0.0
  %104 = vmatprep.subr.mxu0 0.0
  %105 = vmatpush1.xpose.msra.mxu0 0.0
  %106 = vmatprep.subr.mxu0 0.0
  %107 = vmatpush1.xpose.msra.mxu0 0.0
  %108 = vmatprep.subr.mxu0 0.0
  %109 = vmatpush1.xpose.msra.mxu0 0.0
  %110 = vmatprep.subr.mxu0 0.0
  %111 = vmatpush1.xpose.msra.mxu0 0.0
  %112 = vmatprep.subr.mxu0 0.0
  %113 = vmatpush1.xpose.msra.mxu0 0.0
  %114 = vmatprep.subr.mxu0 0.0
  %115 = vmatpush1.xpose.msra.mxu0 0.0
  %116 = vmatprep.subr.mxu0 0.0
  %117 = vmatpush1.xpose.msra.mxu0 0.0
  %118 = vmatprep.subr.mxu0 0.0
  %119 = vmatpush1.xpose.msra.mxu0 0.0
  %120 = vmatprep.subr.mxu0 0.0
  %121 = vmatpush1.xpose.msra.mxu0 0.0
  %122 = vmatprep.subr.mxu0 0.0
  %123 = vmatpush1.xpose.msra.mxu0 0.0
  %124 = vmatprep.subr.mxu0 0.0
  %125 = vmatpush1.xpose.msra.mxu0 0.0
  %126 = vmatprep.subr.mxu0 0.0
  %127 = vmatpush1.xpose.msra.mxu0 0.0
  %128 = vmatprep.subr.mxu0 0.0
  %129 = vmatpush1.xpose.msra.mxu0 0.0
  %130 = vmatprep.subr.mxu0 0.0
  %131 = vmatpush1.xpose.msra.mxu0 0.0
  %132 = vmatprep.subr.mxu0 0.0
  %133 = vmatpush1.xpose.msra.mxu0 0.0
  %134 = vmatprep.subr.mxu0 0.0
  %135 = vmatpush1.xpose.msra.mxu0 0.0
  %136 = vmatprep.subr.mxu0 0.0
  %137 = vmatpush1.xpose.msra.mxu0 0.0
  %138 = vmatprep.subr.mxu0 0.0
  %139 = vmatpush1.xpose.msra.mxu0 0.0
  %140 = vmatprep.subr.mxu0 0.0
  %141 = vmatpush1.xpose.msra.mxu0 0.0
  %142 = vmatprep.subr.mxu0 0.0
  %143 = vmatpush1.xpose.msra.mxu0 0.0
  %144 = vmatprep.subr.mxu0 0.0
  %145 = vmatpush1.xpose.msra.mxu0 0.0
  %146 = vmatprep.subr.mxu0 0.0
  %147 = vmatpush1.xpose.msra.mxu0 0.0
  %148 = vmatprep.mubr.f32.mxu0 0.0
  %149 = vmatmul.mubr.f32.gmra.mrb[0].mxu0 %v20
  %v150 = vpop.f32.mrb[0].mxu0
  %v151 = vadd.f32 0.0, %v150
  %v152 = vpop.f32.mrb[0].mxu0
  %153 = vdwg.mxu0
  %154 = vmatprep.subr.mxu0 0.0
  %155 = vmatpush1.xpose.msra.mxu0 %v51
  %156 = vmatprep.subr.mxu0 0.0
  %157 = vmatpush1.xpose.msra.mxu0 0.0
  %158 = vmatprep.subr.mxu0 0.0
  %159 = vmatpush1.xpose.msra.mxu0 0.0
  %160 = vmatprep.subr.mxu0 0.0
  %161 = vmatpush1.xpose.msra.mxu0 0.0
  %162 = vmatprep.subr.mxu0 0.0
  %163 = vmatpush1.xpose.msra.mxu0 0.0
  %164 = vmatprep.subr.mxu0 0.0
  %165 = vmatpush1.xpose.msra.mxu0 0.0
  %166 = vmatprep.subr.mxu0 0.0
  %167 = vmatpush1.xpose.msra.mxu0 0.0
  %168 = vmatprep.subr.mxu0 0.0
  %169 = vmatpush1.xpose.msra.mxu0 0.0
  %170 = vmatprep.subr.mxu0 0.0
  %171 = vmatpush1.xpose.msra.mxu0 0.0
  %172 = vmatprep.subr.mxu0 0.0
  %173 = vmatpush1.xpose.msra.mxu0 0.0
  %174 = vmatprep.subr.mxu0 0.0
  %175 = vmatpush1.xpose.msra.mxu0 0.0
  %176 = vmatprep.subr.mxu0 0.0
  %177 = vmatpush1.xpose.msra.mxu0 0.0
  %178 = vmatprep.subr.mxu0 0.0
  %179 = vmatpush1.xpose.msra.mxu0 0.0
  %180 = vmatprep.subr.mxu0 0.0
  %181 = vmatpush1.xpose.msra.mxu0 0.0
  %182 = vmatprep.subr.mxu0 0.0
  %183 = vmatpush1.xpose.msra.mxu0 0.0
  %184 = vmatprep.subr.mxu0 0.0
  %185 = vmatpush1.xpose.msra.mxu0 0.0
  %186 = vmatprep.subr.mxu0 0.0
  %187 = vmatpush1.xpose.msra.mxu0 0.0
  %188 = vmatprep.subr.mxu0 0.0
  %189 = vmatpush1.xpose.msra.mxu0 0.0
  %190 = vmatprep.subr.mxu0 0.0
  %191 = vmatpush1.xpose.msra.mxu0 0.0
  %192 = vmatprep.subr.mxu0 0.0
  %193 = vmatpush1.xpose.msra.mxu0 0.0
  %194 = vmatprep.subr.mxu0 0.0
  %195 = vmatpush1.xpose.msra.mxu0 0.0
  %196 = vmatprep.subr.mxu0 0.0
  %197 = vmatpush1.xpose.msra.mxu0 0.0
  %198 = vmatprep.subr.mxu0 0.0
  %199 = vmatpush1.xpose.msra.mxu0 0.0
  %200 = vmatprep.subr.mxu0 0.0
  %201 = vmatpush1.xpose.msra.mxu0 0.0
  %202 = vmatprep.subr.mxu0 0.0
  %203 = vmatpush1.xpose.msra.mxu0 0.0
  %204 = vmatprep.subr.mxu0 0.0
  %205 = vmatpush1.xpose.msra.mxu0 0.0
  %206 = vmatprep.subr.mxu0 0.0
  %207 = vmatpush1.xpose.msra.mxu0 0.0
  %208 = vmatprep.subr.mxu0 0.0
  %209 = vmatpush1.xpose.msra.mxu0 0.0
  %210 = vmatprep.subr.mxu0 0.0
  %211 = vmatpush1.xpose.msra.mxu0 0.0
  %212 = vmatprep.subr.mxu0 0.0
  %213 = vmatpush1.xpose.msra.mxu0 0.0
  %214 = vmatprep.subr.mxu0 0.0
  %215 = vmatpush1.xpose.msra.mxu0 0.0
  %216 = vmatprep.subr.mxu0 0.0
  %217 = vmatpush1.xpose.msra.mxu0 0.0
  %218 = vmatprep.mubr.f32.mxu0 0.0
  %219 = vmatmul.mubr.f32.gmra.mrb[0].mxu0 %v21
  %v220 = vpop.f32.mrb[0].mxu0
  %v221 = vadd.f32 0.0, %v220
  %v222 = vpop.f32.mrb[0].mxu0
  %223 = vdwg.mxu0
  %224 = vmatprep.subr.mxu0 0.0
  %225 = vmatpush1.xpose.msra.mxu0 %v55
  %226 = vmatprep.subr.mxu0 0.0
  %227 = vmatpush1.xpose.msra.mxu0 0.0
  %228 = vmatprep.subr.mxu0 0.0
  %229 = vmatpush1.xpose.msra.mxu0 0.0
  %230 = vmatprep.subr.mxu0 0.0
  %231 = vmatpush1.xpose.msra.mxu0 0.0
  %232 = vmatprep.subr.mxu0 0.0
  %233 = vmatpush1.xpose.msra.mxu0 0.0
  %234 = vmatprep.subr.mxu0 0.0
  %235 = vmatpush1.xpose.msra.mxu0 0.0
  %236 = vmatprep.subr.mxu0 0.0
  %237 = vmatpush1.xpose.msra.mxu0 0.0
  %238 = vmatprep.subr.mxu0 0.0
  %239 = vmatpush1.xpose.msra.mxu0 0.0
  %240 = vmatprep.subr.mxu0 0.0
  %241 = vmatpush1.xpose.msra.mxu0 0.0
  %242 = vmatprep.subr.mxu0 0.0
  %243 = vmatpush1.xpose.msra.mxu0 0.0
  %244 = vmatprep.subr.mxu0 0.0
  %245 = vmatpush1.xpose.msra.mxu0 0.0
  %246 = vmatprep.subr.mxu0 0.0
  %247 = vmatpush1.xpose.msra.mxu0 0.0
  %248 = vmatprep.subr.mxu0 0.0
  %249 = vmatpush1.xpose.msra.mxu0 0.0
  %250 = vmatprep.subr.mxu0 0.0
  %251 = vmatpush1.xpose.msra.mxu0 0.0
  %252 = vmatprep.subr.mxu0 0.0
  %253 = vmatpush1.xpose.msra.mxu0 0.0
  %254 = vmatprep.subr.mxu0 0.0
  %255 = vmatpush1.xpose.msra.mxu0 0.0
  %256 = vmatprep.subr.mxu0 0.0
  %257 = vmatpush1.xpose.msra.mxu0 0.0
  %258 = vmatprep.subr.mxu0 0.0
  %259 = vmatpush1.xpose.msra.mxu0 0.0
  %260 = vmatprep.subr.mxu0 0.0
  %261 = vmatpush1.xpose.msra.mxu0 0.0
  %262 = vmatprep.subr.mxu0 0.0
  %263 = vmatpush1.xpose.msra.mxu0 0.0
  %264 = vmatprep.subr.mxu0 0.0
  %265 = vmatpush1.xpose.msra.mxu0 0.0
  %266 = vmatprep.subr.mxu0 0.0
  %267 = vmatpush1.xpose.msra.mxu0 0.0
  %268 = vmatprep.subr.mxu0 0.0
  %269 = vmatpush1.xpose.msra.mxu0 0.0
  %270 = vmatprep.subr.mxu0 0.0
  %271 = vmatpush1.xpose.msra.mxu0 0.0
  %272 = vmatprep.subr.mxu0 0.0
  %273 = vmatpush1.xpose.msra.mxu0 0.0
  %274 = vmatprep.subr.mxu0 0.0
  %275 = vmatpush1.xpose.msra.mxu0 0.0
  %276 = vmatprep.subr.mxu0 0.0
  %277 = vmatpush1.xpose.msra.mxu0 0.0
  %278 = vmatprep.subr.mxu0 0.0
  %279 = vmatpush1.xpose.msra.mxu0 0.0
  %280 = vmatprep.subr.mxu0 0.0
  %281 = vmatpush1.xpose.msra.mxu0 0.0
  %282 = vmatprep.subr.mxu0 0.0
  %283 = vmatpush1.xpose.msra.mxu0 0.0
  %284 = vmatprep.subr.mxu0 0.0
  %285 = vmatpush1.xpose.msra.mxu0 0.0
  %286 = vmatprep.subr.mxu0 0.0
  %287 = vmatpush1.xpose.msra.mxu0 0.0
  %288 = vmatprep.mubr.f32.mxu0 0.0
  %289 = vmatmul.mubr.f32.gmra.mrb[0].mxu0 %v22
  %v290 = vpop.f32.mrb[0].mxu0
  %v291 = vadd.f32 0.0, %v290
  %v292 = vpop.f32.mrb[0].mxu0
  %293 = vdwg.mxu0
  %294 = vmatprep.subr.mxu0 0.0
  %295 = vmatpush1.xpose.msra.mxu0 %v59
  %296 = vmatprep.subr.mxu0 0.0
  %297 = vmatpush1.xpose.msra.mxu0 0.0
  %298 = vmatprep.subr.mxu0 0.0
  %299 = vmatpush1.xpose.msra.mxu0 0.0
  %300 = vmatprep.subr.mxu0 0.0
  %301 = vmatpush1.xpose.msra.mxu0 0.0
  %302 = vmatprep.subr.mxu0 0.0
  %303 = vmatpush1.xpose.msra.mxu0 0.0
  %304 = vmatprep.subr.mxu0 0.0
  %305 = vmatpush1.xpose.msra.mxu0 0.0
  %306 = vmatprep.subr.mxu0 0.0
  %307 = vmatpush1.xpose.msra.mxu0 0.0
  %308 = vmatprep.subr.mxu0 0.0
  %309 = vmatpush1.xpose.msra.mxu0 0.0
  %310 = vmatprep.subr.mxu0 0.0
  %311 = vmatpush1.xpose.msra.mxu0 0.0
  %312 = vmatprep.subr.mxu0 0.0
  %313 = vmatpush1.xpose.msra.mxu0 0.0
  %314 = vmatprep.subr.mxu0 0.0
  %315 = vmatpush1.xpose.msra.mxu0 0.0
  %316 = vmatprep.subr.mxu0 0.0
  %317 = vmatpush1.xpose.msra.mxu0 0.0
  %318 = vmatprep.subr.mxu0 0.0
  %319 = vmatpush1.xpose.msra.mxu0 0.0
  %320 = vmatprep.subr.mxu0 0.0
  %321 = vmatpush1.xpose.msra.mxu0 0.0
  %322 = vmatprep.subr.mxu0 0.0
  %323 = vmatpush1.xpose.msra.mxu0 0.0
  %324 = vmatprep.subr.mxu0 0.0
  %325 = vmatpush1.xpose.msra.mxu0 0.0
  %326 = vmatprep.subr.mxu0 0.0
  %327 = vmatpush1.xpose.msra.mxu0 0.0
  %328 = vmatprep.subr.mxu0 0.0
  %329 = vmatpush1.xpose.msra.mxu0 0.0
  %330 = vmatprep.subr.mxu0 0.0
  %331 = vmatpush1.xpose.msra.mxu0 0.0
  %332 = vmatprep.subr.mxu0 0.0
  %333 = vmatpush1.xpose.msra.mxu0 0.0
  %334 = vmatprep.subr.mxu0 0.0
  %335 = vmatpush1.xpose.msra.mxu0 0.0
  %336 = vmatprep.subr.mxu0 0.0
  %337 = vmatpush1.xpose.msra.mxu0 0.0
  %338 = vmatprep.subr.mxu0 0.0
  %339 = vmatpush1.xpose.msra.mxu0 0.0
  %340 = vmatprep.subr.mxu0 0.0
  %341 = vmatpush1.xpose.msra.mxu0 0.0
  %342 = vmatprep.subr.mxu0 0.0
  %343 = vmatpush1.xpose.msra.mxu0 0.0
  %344 = vmatprep.subr.mxu0 0.0
  %345 = vmatpush1.xpose.msra.mxu0 0.0
  %346 = vmatprep.subr.mxu0 0.0
  %347 = vmatpush1.xpose.msra.mxu0 0.0
  %348 = vmatprep.subr.mxu0 0.0
  %349 = vmatpush1.xpose.msra.mxu0 0.0
  %350 = vmatprep.subr.mxu0 0.0
  %351 = vmatpush1.xpose.msra.mxu0 0.0
  %352 = vmatprep.subr.mxu0 0.0
  %353 = vmatpush1.xpose.msra.mxu0 0.0
  %354 = vmatprep.subr.mxu0 0.0
  %355 = vmatpush1.xpose.msra.mxu0 0.0
  %356 = vmatprep.subr.mxu0 0.0
  %357 = vmatpush1.xpose.msra.mxu0 0.0
  %358 = vmatprep.mubr.f32.mxu0 0.0
  %359 = vmatmul.mubr.f32.gmra.mrb[0].mxu0 %v23
  %v360 = vpop.f32.mrb[0].mxu0
  %v361 = vadd.f32 0.0, %v360
  %v362 = vpop.f32.mrb[0].mxu0
  %363 = vdwg.mxu0
  %364 = vmatprep.subr.mxu0 0.0
  %365 = vmatpush1.xpose.msra.mxu0 %v63
  %366 = vmatprep.subr.mxu0 0.0
  %367 = vmatpush1.xpose.msra.mxu0 0.0
  %368 = vmatprep.subr.mxu0 0.0
  %369 = vmatpush1.xpose.msra.mxu0 0.0
  %370 = vmatprep.subr.mxu0 0.0
  %371 = vmatpush1.xpose.msra.mxu0 0.0
  %372 = vmatprep.subr.mxu0 0.0
  %373 = vmatpush1.xpose.msra.mxu0 0.0
  %374 = vmatprep.subr.mxu0 0.0
  %375 = vmatpush1.xpose.msra.mxu0 0.0
  %376 = vmatprep.subr.mxu0 0.0
  %377 = vmatpush1.xpose.msra.mxu0 0.0
  %378 = vmatprep.subr.mxu0 0.0
  %379 = vmatpush1.xpose.msra.mxu0 0.0
  %380 = vmatprep.subr.mxu0 0.0
  %381 = vmatpush1.xpose.msra.mxu0 0.0
  %382 = vmatprep.subr.mxu0 0.0
  %383 = vmatpush1.xpose.msra.mxu0 0.0
  %384 = vmatprep.subr.mxu0 0.0
  %385 = vmatpush1.xpose.msra.mxu0 0.0
  %386 = vmatprep.subr.mxu0 0.0
  %387 = vmatpush1.xpose.msra.mxu0 0.0
  %388 = vmatprep.subr.mxu0 0.0
  %389 = vmatpush1.xpose.msra.mxu0 0.0
  %390 = vmatprep.subr.mxu0 0.0
  %391 = vmatpush1.xpose.msra.mxu0 0.0
  %392 = vmatprep.subr.mxu0 0.0
  %393 = vmatpush1.xpose.msra.mxu0 0.0
  %394 = vmatprep.subr.mxu0 0.0
  %395 = vmatpush1.xpose.msra.mxu0 0.0
  %396 = vmatprep.subr.mxu0 0.0
  %397 = vmatpush1.xpose.msra.mxu0 0.0
  %398 = vmatprep.subr.mxu0 0.0
  %399 = vmatpush1.xpose.msra.mxu0 0.0
  %400 = vmatprep.subr.mxu0 0.0
  %401 = vmatpush1.xpose.msra.mxu0 0.0
  %402 = vmatprep.subr.mxu0 0.0
  %403 = vmatpush1.xpose.msra.mxu0 0.0
  %404 = vmatprep.subr.mxu0 0.0
  %405 = vmatpush1.xpose.msra.mxu0 0.0
  %406 = vmatprep.subr.mxu0 0.0
  %407 = vmatpush1.xpose.msra.mxu0 0.0
  %408 = vmatprep.subr.mxu0 0.0
  %409 = vmatpush1.xpose.msra.mxu0 0.0
  %410 = vmatprep.subr.mxu0 0.0
  %411 = vmatpush1.xpose.msra.mxu0 0.0
  %412 = vmatprep.subr.mxu0 0.0
  %413 = vmatpush1.xpose.msra.mxu0 0.0
  %414 = vmatprep.subr.mxu0 0.0
  %415 = vmatpush1.xpose.msra.mxu0 0.0
  %416 = vmatprep.subr.mxu0 0.0
  %417 = vmatpush1.xpose.msra.mxu0 0.0
  %418 = vmatprep.subr.mxu0 0.0
  %419 = vmatpush1.xpose.msra.mxu0 0.0
  %420 = vmatprep.subr.mxu0 0.0
  %421 = vmatpush1.xpose.msra.mxu0 0.0
  %422 = vmatprep.subr.mxu0 0.0
  %423 = vmatpush1.xpose.msra.mxu0 0.0
  %424 = vmatprep.subr.mxu0 0.0
  %425 = vmatpush1.xpose.msra.mxu0 0.0
  %426 = vmatprep.subr.mxu0 0.0
  %427 = vmatpush1.xpose.msra.mxu0 0.0
  %428 = vmatprep.mubr.f32.mxu0 0.0
  %429 = vmatmul.mubr.f32.gmra.mrb[0].mxu0 %v24
  %v430 = vpop.f32.mrb[0].mxu0
  %v431 = vadd.f32 0.0, %v430
  %v432 = vpop.f32.mrb[0].mxu0
  %433 = vdwg.mxu0
  %434 = vmatprep.subr.mxu0 0.0
  %435 = vmatpush1.xpose.msra.mxu0 %v67
  %436 = vmatprep.subr.mxu0 0.0
  %437 = vmatpush1.xpose.msra.mxu0 0.0
  %438 = vmatprep.subr.mxu0 0.0
  %439 = vmatpush1.xpose.msra.mxu0 0.0
  %440 = vmatprep.subr.mxu0 0.0
  %441 = vmatpush1.xpose.msra.mxu0 0.0
  %442 = vmatprep.subr.mxu0 0.0
  %443 = vmatpush1.xpose.msra.mxu0 0.0
  %444 = vmatprep.subr.mxu0 0.0
  %445 = vmatpush1.xpose.msra.mxu0 0.0
  %446 = vmatprep.subr.mxu0 0.0
  %447 = vmatpush1.xpose.msra.mxu0 0.0
  %448 = vmatprep.subr.mxu0 0.0
  %449 = vmatpush1.xpose.msra.mxu0 0.0
  %450 = vmatprep.subr.mxu0 0.0
  %451 = vmatpush1.xpose.msra.mxu0 0.0
  %452 = vmatprep.subr.mxu0 0.0
  %453 = vmatpush1.xpose.msra.mxu0 0.0
  %454 = vmatprep.subr.mxu0 0.0
  %455 = vmatpush1.xpose.msra.mxu0 0.0
  %456 = vmatprep.subr.mxu0 0.0
  %457 = vmatpush1.xpose.msra.mxu0 0.0
  %458 = vmatprep.subr.mxu0 0.0
  %459 = vmatpush1.xpose.msra.mxu0 0.0
  %460 = vmatprep.subr.mxu0 0.0
  %461 = vmatpush1.xpose.msra.mxu0 0.0
  %462 = vmatprep.subr.mxu0 0.0
  %463 = vmatpush1.xpose.msra.mxu0 0.0
  %464 = vmatprep.subr.mxu0 0.0
  %465 = vmatpush1.xpose.msra.mxu0 0.0
  %466 = vmatprep.subr.mxu0 0.0
  %467 = vmatpush1.xpose.msra.mxu0 0.0
  %468 = vmatprep.subr.mxu0 0.0
  %469 = vmatpush1.xpose.msra.mxu0 0.0
  %470 = vmatprep.subr.mxu0 0.0
  %471 = vmatpush1.xpose.msra.mxu0 0.0
  %472 = vmatprep.subr.mxu0 0.0
  %473 = vmatpush1.xpose.msra.mxu0 0.0
  %474 = vmatprep.subr.mxu0 0.0
  %475 = vmatpush1.xpose.msra.mxu0 0.0
  %476 = vmatprep.subr.mxu0 0.0
  %477 = vmatpush1.xpose.msra.mxu0 0.0
  %478 = vmatprep.subr.mxu0 0.0
  %479 = vmatpush1.xpose.msra.mxu0 0.0
  %480 = vmatprep.subr.mxu0 0.0
  %481 = vmatpush1.xpose.msra.mxu0 0.0
  %482 = vmatprep.subr.mxu0 0.0
  %483 = vmatpush1.xpose.msra.mxu0 0.0
  %484 = vmatprep.subr.mxu0 0.0
  %485 = vmatpush1.xpose.msra.mxu0 0.0
  %486 = vmatprep.subr.mxu0 0.0
  %487 = vmatpush1.xpose.msra.mxu0 0.0
  %488 = vmatprep.subr.mxu0 0.0
  %489 = vmatpush1.xpose.msra.mxu0 0.0
  %490 = vmatprep.subr.mxu0 0.0
  %491 = vmatpush1.xpose.msra.mxu0 0.0
  %492 = vmatprep.subr.mxu0 0.0
  %493 = vmatpush1.xpose.msra.mxu0 0.0
  %494 = vmatprep.subr.mxu0 0.0
  %495 = vmatpush1.xpose.msra.mxu0 0.0
  %496 = vmatprep.subr.mxu0 0.0
  %497 = vmatpush1.xpose.msra.mxu0 0.0
  %498 = vmatprep.mubr.f32.mxu0 0.0
  %499 = vmatmul.mubr.f32.gmra.mrb[0].mxu0 %v25
  %v500 = vpop.f32.mrb[0].mxu0
  %v501 = vadd.f32 0.0, %v500
  %v502 = vpop.f32.mrb[0].mxu0
  %503 = vdwg.mxu0
  %504 = vmatprep.subr.mxu0 0.0
  %505 = vmatpush1.xpose.msra.mxu0 %v71
  %506 = vmatprep.subr.mxu0 0.0
  %507 = vmatpush1.xpose.msra.mxu0 0.0
  %508 = vmatprep.subr.mxu0 0.0
  %509 = vmatpush1.xpose.msra.mxu0 0.0
  %510 = vmatprep.subr.mxu0 0.0
  %511 = vmatpush1.xpose.msra.mxu0 0.0
  %512 = vmatprep.subr.mxu0 0.0
  %513 = vmatpush1.xpose.msra.mxu0 0.0
  %514 = vmatprep.subr.mxu0 0.0
  %515 = vmatpush1.xpose.msra.mxu0 0.0
  %516 = vmatprep.subr.mxu0 0.0
  %517 = vmatpush1.xpose.msra.mxu0 0.0
  %518 = vmatprep.subr.mxu0 0.0
  %519 = vmatpush1.xpose.msra.mxu0 0.0
  %520 = vmatprep.subr.mxu0 0.0
  %521 = vmatpush1.xpose.msra.mxu0 0.0
  %522 = vmatprep.subr.mxu0 0.0
  %523 = vmatpush1.xpose.msra.mxu0 0.0
  %524 = vmatprep.subr.mxu0 0.0
  %525 = vmatpush1.xpose.msra.mxu0 0.0
  %526 = vmatprep.subr.mxu0 0.0
  %527 = vmatpush1.xpose.msra.mxu0 0.0
  %528 = vmatprep.subr.mxu0 0.0
  %529 = vmatpush1.xpose.msra.mxu0 0.0
  %530 = vmatprep.subr.mxu0 0.0
  %531 = vmatpush1.xpose.msra.mxu0 0.0
  %532 = vmatprep.subr.mxu0 0.0
  %533 = vmatpush1.xpose.msra.mxu0 0.0
  %534 = vmatprep.subr.mxu0 0.0
  %535 = vmatpush1.xpose.msra.mxu0 0.0
  %536 = vmatprep.subr.mxu0 0.0
  %537 = vmatpush1.xpose.msra.mxu0 0.0
  %538 = vmatprep.subr.mxu0 0.0
  %539 = vmatpush1.xpose.msra.mxu0 0.0
  %540 = vmatprep.subr.mxu0 0.0
  %541 = vmatpush1.xpose.msra.mxu0 0.0
  %542 = vmatprep.subr.mxu0 0.0
  %543 = vmatpush1.xpose.msra.mxu0 0.0
  %544 = vmatprep.subr.mxu0 0.0
  %545 = vmatpush1.xpose.msra.mxu0 0.0
  %546 = vmatprep.subr.mxu0 0.0
  %547 = vmatpush1.xpose.msra.mxu0 0.0
  %548 = vmatprep.subr.mxu0 0.0
  %549 = vmatpush1.xpose.msra.mxu0 0.0
  %550 = vmatprep.subr.mxu0 0.0
  %551 = vmatpush1.xpose.msra.mxu0 0.0
  %552 = vmatprep.subr.mxu0 0.0
  %553 = vmatpush1.xpose.msra.mxu0 0.0
  %554 = vmatprep.subr.mxu0 0.0
  %555 = vmatpush1.xpose.msra.mxu0 0.0
  %556 = vmatprep.subr.mxu0 0.0
  %557 = vmatpush1.xpose.msra.mxu0 0.0
  %558 = vmatprep.subr.mxu0 0.0
  %559 = vmatpush1.xpose.msra.mxu0 0.0
  %560 = vmatprep.subr.mxu0 0.0
  %561 = vmatpush1.xpose.msra.mxu0 0.0
  %562 = vmatprep.subr.mxu0 0.0
  %563 = vmatpush1.xpose.msra.mxu0 0.0
  %564 = vmatprep.subr.mxu0 0.0
  %565 = vmatpush1.xpose.msra.mxu0 0.0
  %566 = vmatprep.subr.mxu0 0.0
  %567 = vmatpush1.xpose.msra.mxu0 0.0
  %568 = vmatprep.mubr.f32.mxu0 0.0
  %569 = vmatmul.mubr.f32.gmra.mrb[0].mxu0 %v26
  %v570 = vpop.f32.mrb[0].mxu0
  %v571 = vadd.f32 0.0, %v570
  %v572 = vpop.f32.mrb[0].mxu0
  %573 = vdwg.mxu0
  %574 = vmatprep.subr.mxu0 0.0
  %575 = vmatpush1.xpose.msra.mxu0 %v75
  %576 = vmatprep.subr.mxu0 0.0
  %577 = vmatpush1.xpose.msra.mxu0 0.0
  %578 = vmatprep.subr.mxu0 0.0
  %579 = vmatpush1.xpose.msra.mxu0 0.0
  %580 = vmatprep.subr.mxu0 0.0
  %581 = vmatpush1.xpose.msra.mxu0 0.0
  %582 = vmatprep.subr.mxu0 0.0
  %583 = vmatpush1.xpose.msra.mxu0 0.0
  %584 = vmatprep.subr.mxu0 0.0
  %585 = vmatpush1.xpose.msra.mxu0 0.0
  %586 = vmatprep.subr.mxu0 0.0
  %587 = vmatpush1.xpose.msra.mxu0 0.0
  %588 = vmatprep.subr.mxu0 0.0
  %589 = vmatpush1.xpose.msra.mxu0 0.0
  %590 = vmatprep.subr.mxu0 0.0
  %591 = vmatpush1.xpose.msra.mxu0 0.0
  %592 = vmatprep.subr.mxu0 0.0
  %593 = vmatpush1.xpose.msra.mxu0 0.0
  %594 = vmatprep.subr.mxu0 0.0
  %595 = vmatpush1.xpose.msra.mxu0 0.0
  %596 = vmatprep.subr.mxu0 0.0
  %597 = vmatpush1.xpose.msra.mxu0 0.0
  %598 = vmatprep.subr.mxu0 0.0
  %599 = vmatpush1.xpose.msra.mxu0 0.0
  %600 = vmatprep.subr.mxu0 0.0
  %601 = vmatpush1.xpose.msra.mxu0 0.0
  %602 = vmatprep.subr.mxu0 0.0
  %603 = vmatpush1.xpose.msra.mxu0 0.0
  %604 = vmatprep.subr.mxu0 0.0
  %605 = vmatpush1.xpose.msra.mxu0 0.0
  %606 = vmatprep.subr.mxu0 0.0
  %607 = vmatpush1.xpose.msra.mxu0 0.0
  %608 = vmatprep.subr.mxu0 0.0
  %609 = vmatpush1.xpose.msra.mxu0 0.0
  %610 = vmatprep.subr.mxu0 0.0
  %611 = vmatpush1.xpose.msra.mxu0 0.0
  %612 = vmatprep.subr.mxu0 0.0
  %613 = vmatpush1.xpose.msra.mxu0 0.0
  %614 = vmatprep.subr.mxu0 0.0
  %615 = vmatpush1.xpose.msra.mxu0 0.0
  %616 = vmatprep.subr.mxu0 0.0
  %617 = vmatpush1.xpose.msra.mxu0 0.0
  %618 = vmatprep.subr.mxu0 0.0
  %619 = vmatpush1.xpose.msra.mxu0 0.0
  %620 = vmatprep.subr.mxu0 0.0
  %621 = vmatpush1.xpose.msra.mxu0 0.0
  %622 = vmatprep.subr.mxu0 0.0
  %623 = vmatpush1.xpose.msra.mxu0 0.0
  %624 = vmatprep.subr.mxu0 0.0
  %625 = vmatpush1.xpose.msra.mxu0 0.0
  %626 = vmatprep.subr.mxu0 0.0
  %627 = vmatpush1.xpose.msra.mxu0 0.0
  %628 = vmatprep.subr.mxu0 0.0
  %629 = vmatpush1.xpose.msra.mxu0 0.0
  %630 = vmatprep.subr.mxu0 0.0
  %631 = vmatpush1.xpose.msra.mxu0 0.0
  %632 = vmatprep.subr.mxu0 0.0
  %633 = vmatpush1.xpose.msra.mxu0 0.0
  %634 = vmatprep.subr.mxu0 0.0
  %635 = vmatpush1.xpose.msra.mxu0 0.0
  %636 = vmatprep.subr.mxu0 0.0
  %637 = vmatpush1.xpose.msra.mxu0 0.0
  %638 = vmatprep.mubr.f32.mxu0 0.0
  %639 = vmatmul.mubr.f32.gmra.mrb[0].mxu0 %v27
  %v640 = vpop.f32.mrb[0].mxu0
  %v641 = vadd.f32 0.0, %v640
  %v642 = vpop.f32.mrb[0].mxu0
  %643 = vdwg.mxu0
  %vm644 = vcmask 9216
  %v645 = vsel %vm644, %v151, -inf
  %646 = vmax.xlane.f32.xlu0 %v645
  %v647 = vpop.xlane.xlu0 %646
  %v648 = vsel %vm644, %v221, -inf
  %649 = vmax.xlane.f32.xlu0 %v648
  %v650 = vpop.xlane.xlu0 %649
  %v651 = vsel %vm644, %v291, -inf
  %652 = vmax.xlane.f32.xlu0 %v651
  %v653 = vpop.xlane.xlu0 %652
  %v654 = vsel %vm644, %v361, -inf
  %655 = vmax.xlane.f32.xlu0 %v654
  %v656 = vpop.xlane.xlu0 %655
  %v657 = vsel %vm644, %v431, -inf
  %658 = vmax.xlane.f32.xlu0 %v657
  %v659 = vpop.xlane.xlu0 %658
  %v660 = vsel %vm644, %v501, -inf
  %661 = vmax.xlane.f32.xlu0 %v660
  %v662 = vpop.xlane.xlu0 %661
  %v663 = vsel %vm644, %v571, -inf
  %664 = vmax.xlane.f32.xlu0 %v663
  %v665 = vpop.xlane.xlu0 %664
  %v666 = vsel %vm644, %v641, -inf
  %667 = vmax.xlane.f32.xlu0 %v666
  %v668 = vpop.xlane.xlu0 %667
  %v669 = vsub.f32 %v151, %v647
  %v670 = vsub.f32 %v221, %v650
  %v671 = vsub.f32 %v291, %v653
  %v672 = vsub.f32 %v361, %v656
  %v673 = vsub.f32 %v431, %v659
  %v674 = vsub.f32 %v501, %v662
  %v675 = vsub.f32 %v571, %v665
  %v676 = vsub.f32 %v641, %v668
  %v677 = vmul.f32 %v669, 1.442695
  %v678 = vpow.pop %v677
  %v679 = vmul.f32 %v670, 1.442695
  %v680 = vpow.pop %v679
  %v681 = vmul.f32 %v671, 1.442695
  %v682 = vpow.pop %v681
  %v683 = vmul.f32 %v672, 1.442695
  %v684 = vpow.pop %v683
  %v685 = vmul.f32 %v673, 1.442695
  %v686 = vpow.pop %v685
  %v687 = vmul.f32 %v674, 1.442695
  %v688 = vpow.pop %v687
  %v689 = vmul.f32 %v675, 1.442695
  %v690 = vpow.pop %v689
  %v691 = vmul.f32 %v676, 1.442695
  %v692 = vpow.pop %v691
  %v693 = vsel %vm644, %v678, 0.0
  %694 = vadd.xlane.f32.xlu0 %v693
  %v695 = vpop.xlane.xlu0 %694
  %v696 = vsel %vm644, %v680, 0.0
  %697 = vadd.xlane.f32.xlu0 %v696
  %v698 = vpop.xlane.xlu0 %697
  %v699 = vsel %vm644, %v682, 0.0
  %700 = vadd.xlane.f32.xlu0 %v699
  %v701 = vpop.xlane.xlu0 %700
  %v702 = vsel %vm644, %v684, 0.0
  %703 = vadd.xlane.f32.xlu0 %v702
  %v704 = vpop.xlane.xlu0 %703
  %v705 = vsel %vm644, %v686, 0.0
  %706 = vadd.xlane.f32.xlu0 %v705
  %v707 = vpop.xlane.xlu0 %706
  %v708 = vsel %vm644, %v688, 0.0
  %709 = vadd.xlane.f32.xlu0 %v708
  %v710 = vpop.xlane.xlu0 %709
  %v711 = vsel %vm644, %v690, 0.0
  %712 = vadd.xlane.f32.xlu0 %v711
  %v713 = vpop.xlane.xlu0 %712
  %v714 = vsel %vm644, %v692, 0.0
  %715 = vadd.xlane.f32.xlu0 %v714
  %v716 = vpop.xlane.xlu0 %715
  %v717 = vrcp.pop %v695
  %v718 = vmul.f32 %v678, %v717
  %v719 = vrcp.pop %v698
  %v720 = vmul.f32 %v680, %v719
  %v721 = vrcp.pop %v701
  %v722 = vmul.f32 %v682, %v721
  %v723 = vrcp.pop %v704
  %v724 = vmul.f32 %v684, %v723
  %v725 = vrcp.pop %v707
  %v726 = vmul.f32 %v686, %v725
  %v727 = vrcp.pop %v710
  %v728 = vmul.f32 %v688, %v727
  %v729 = vrcp.pop %v713
  %v730 = vmul.f32 %v690, %v729
  %v731 = vrcp.pop %v716
  %v732 = vmul.f32 %v692, %v731
  %v733 = vld [vmem:[%s1] sm:$0x1]
  %v734 = vld [vmem:[%s1 + $0x1] sm:$0x1]
  %v735 = vld [vmem:[%s1 + $0x2] sm:$0x1]
  %v736 = vld [vmem:[%s1 + $0x3] sm:$0x1]
  %v737 = vld [vmem:[%s1 + $0x4] sm:$0x1]
  %v738 = vld [vmem:[%s1 + $0x5] sm:$0x1]
  %v739 = vld [vmem:[%s1 + $0x6] sm:$0x1]
  %v740 = vld [vmem:[%s1 + $0x7] sm:$0x1]
  %742 = vset.pattern.permute.xlu0 0
  %743 = vperm.xlu0 %742, %v733
  %v744 = vpop.permute.xlu0 %743
  %v746 = vlaneseq
  %v747 = vshrl.u32 %v746, 7
  %v748 = vsub.s32 0, %v747
  %v749 = vrot.slane %v744, %v748
  %751 = vset.pattern.permute.xlu0 0
  %752 = vperm.xlu0 %751, %v734
  %v753 = vpop.permute.xlu0 %752
  %v755 = vlaneseq
  %v756 = vshrl.u32 %v755, 7
  %v757 = vsub.s32 0, %v756
  %v758 = vrot.slane %v753, %v757
  %760 = vset.pattern.permute.xlu0 0
  %761 = vperm.xlu0 %760, %v735
  %v762 = vpop.permute.xlu0 %761
  %v764 = vlaneseq
  %v765 = vshrl.u32 %v764, 7
  %v766 = vsub.s32 0, %v765
  %v767 = vrot.slane %v762, %v766
  %769 = vset.pattern.permute.xlu0 0
  %770 = vperm.xlu0 %769, %v736
  %v771 = vpop.permute.xlu0 %770
  %v773 = vlaneseq
  %v774 = vshrl.u32 %v773, 7
  %v775 = vsub.s32 0, %v774
  %v776 = vrot.slane %v771, %v775
  %778 = vset.pattern.permute.xlu0 0
  %779 = vperm.xlu0 %778, %v737
  %v780 = vpop.permute.xlu0 %779
  %v782 = vlaneseq
  %v783 = vshrl.u32 %v782, 7
  %v784 = vsub.s32 0, %v783
  %v785 = vrot.slane %v780, %v784
  %787 = vset.pattern.permute.xlu0 0
  %788 = vperm.xlu0 %787, %v738
  %v789 = vpop.permute.xlu0 %788
  %v791 = vlaneseq
  %v792 = vshrl.u32 %v791, 7
  %v793 = vsub.s32 0, %v792
  %v794 = vrot.slane %v789, %v793
  %796 = vset.pattern.permute.xlu0 0
  %797 = vperm.xlu0 %796, %v739
  %v798 = vpop.permute.xlu0 %797
  %v800 = vlaneseq
  %v801 = vshrl.u32 %v800, 7
  %v802 = vsub.s32 0, %v801
  %v803 = vrot.slane %v798, %v802
  %805 = vset.pattern.permute.xlu0 0
  %806 = vperm.xlu0 %805, %v740
  %v807 = vpop.permute.xlu0 %806
  %v809 = vlaneseq
  %v810 = vshrl.u32 %v809, 7
  %v811 = vsub.s32 0, %v810
  %v812 = vrot.slane %v807, %v811
  %vm813 = vcmask 15360
  %v815 = vsel %vm813, %v749, 0
  %v818 = vsel %vm813, %v718, 0
  %820 = vmatprep.subr.mxu0 0.0
  %821 = vmatpush1.xpose.msra.mxu0 %v818
  %822 = vmatprep.subr.mxu0 0.0
  %823 = vmatpush1.xpose.msra.mxu0 0.0
  %824 = vmatprep.subr.mxu0 0.0
  %825 = vmatpush1.xpose.msra.mxu0 0.0
  %826 = vmatprep.subr.mxu0 0.0
  %827 = vmatpush1.xpose.msra.mxu0 0.0
  %828 = vmatprep.subr.mxu0 0.0
  %829 = vmatpush1.xpose.msra.mxu0 0.0
  %830 = vmatprep.subr.mxu0 0.0
  %831 = vmatpush1.xpose.msra.mxu0 0.0
  %832 = vmatprep.subr.mxu0 0.0
  %833 = vmatpush1.xpose.msra.mxu0 0.0
  %834 = vmatprep.subr.mxu0 0.0
  %835 = vmatpush1.xpose.msra.mxu0 0.0
  %836 = vmatprep.subr.mxu0 0.0
  %837 = vmatpush1.xpose.msra.mxu0 0.0
  %838 = vmatprep.subr.mxu0 0.0
  %839 = vmatpush1.xpose.msra.mxu0 0.0
  %840 = vmatprep.subr.mxu0 0.0
  %841 = vmatpush1.xpose.msra.mxu0 0.0
  %842 = vmatprep.subr.mxu0 0.0
  %843 = vmatpush1.xpose.msra.mxu0 0.0
  %844 = vmatprep.subr.mxu0 0.0
  %845 = vmatpush1.xpose.msra.mxu0 0.0
  %846 = vmatprep.subr.mxu0 0.0
  %847 = vmatpush1.xpose.msra.mxu0 0.0
  %848 = vmatprep.subr.mxu0 0.0
  %849 = vmatpush1.xpose.msra.mxu0 0.0
  %850 = vmatprep.subr.mxu0 0.0
  %851 = vmatpush1.xpose.msra.mxu0 0.0
  %852 = vmatprep.subr.mxu0 0.0
  %853 = vmatpush1.xpose.msra.mxu0 0.0
  %854 = vmatprep.subr.mxu0 0.0
  %855 = vmatpush1.xpose.msra.mxu0 0.0
  %856 = vmatprep.subr.mxu0 0.0
  %857 = vmatpush1.xpose.msra.mxu0 0.0
  %858 = vmatprep.subr.mxu0 0.0
  %859 = vmatpush1.xpose.msra.mxu0 0.0
  %860 = vmatprep.subr.mxu0 0.0
  %861 = vmatpush1.xpose.msra.mxu0 0.0
  %862 = vmatprep.subr.mxu0 0.0
  %863 = vmatpush1.xpose.msra.mxu0 0.0
  %864 = vmatprep.subr.mxu0 0.0
  %865 = vmatpush1.xpose.msra.mxu0 0.0
  %866 = vmatprep.subr.mxu0 0.0
  %867 = vmatpush1.xpose.msra.mxu0 0.0
  %868 = vmatprep.subr.mxu0 0.0
  %869 = vmatpush1.xpose.msra.mxu0 0.0
  %870 = vmatprep.subr.mxu0 0.0
  %871 = vmatpush1.xpose.msra.mxu0 0.0
  %872 = vmatprep.subr.mxu0 0.0
  %873 = vmatpush1.xpose.msra.mxu0 0.0
  %874 = vmatprep.subr.mxu0 0.0
  %875 = vmatpush1.xpose.msra.mxu0 0.0
  %876 = vmatprep.subr.mxu0 0.0
  %877 = vmatpush1.xpose.msra.mxu0 0.0
  %878 = vmatprep.subr.mxu0 0.0
  %879 = vmatpush1.xpose.msra.mxu0 0.0
  %880 = vmatprep.subr.mxu0 0.0
  %881 = vmatpush1.xpose.msra.mxu0 0.0
  %882 = vmatprep.subr.mxu0 0.0
  %883 = vmatpush1.xpose.msra.mxu0 0.0
  %884 = vmatprep.mubr.f32.mxu0 0.0
  %885 = vmatmul.mubr.f32.gmra.mrb[0].mxu0 %v815
  %v886 = vpop.f32.mrb[0].mxu0
  %v887 = vadd.f32 0.0, %v886
  %v888 = vpop.f32.mrb[0].mxu0
  %889 = vdwg.mxu0
  %v891 = vsel %vm813, %v758, 0
  %v894 = vsel %vm813, %v720, 0
  %896 = vmatprep.subr.mxu0 0.0
  %897 = vmatpush1.xpose.msra.mxu0 %v894
  %898 = vmatprep.subr.mxu0 0.0
  %899 = vmatpush1.xpose.msra.mxu0 0.0
  %900 = vmatprep.subr.mxu0 0.0
  %901 = vmatpush1.xpose.msra.mxu0 0.0
  %902 = vmatprep.subr.mxu0 0.0
  %903 = vmatpush1.xpose.msra.mxu0 0.0
  %904 = vmatprep.subr.mxu0 0.0
  %905 = vmatpush1.xpose.msra.mxu0 0.0
  %906 = vmatprep.subr.mxu0 0.0
  %907 = vmatpush1.xpose.msra.mxu0 0.0
  %908 = vmatprep.subr.mxu0 0.0
  %909 = vmatpush1.xpose.msra.mxu0 0.0
  %910 = vmatprep.subr.mxu0 0.0
  %911 = vmatpush1.xpose.msra.mxu0 0.0
  %912 = vmatprep.subr.mxu0 0.0
  %913 = vmatpush1.xpose.msra.mxu0 0.0
  %914 = vmatprep.subr.mxu0 0.0
  %915 = vmatpush1.xpose.msra.mxu0 0.0
  %916 = vmatprep.subr.mxu0 0.0
  %917 = vmatpush1.xpose.msra.mxu0 0.0
  %918 = vmatprep.subr.mxu0 0.0
  %919 = vmatpush1.xpose.msra.mxu0 0.0
  %920 = vmatprep.subr.mxu0 0.0
  %921 = vmatpush1.xpose.msra.mxu0 0.0
  %922 = vmatprep.subr.mxu0 0.0
  %923 = vmatpush1.xpose.msra.mxu0 0.0
  %924 = vmatprep.subr.mxu0 0.0
  %925 = vmatpush1.xpose.msra.mxu0 0.0
  %926 = vmatprep.subr.mxu0 0.0
  %927 = vmatpush1.xpose.msra.mxu0 0.0
  %928 = vmatprep.subr.mxu0 0.0
  %929 = vmatpush1.xpose.msra.mxu0 0.0
  %930 = vmatprep.subr.mxu0 0.0
  %931 = vmatpush1.xpose.msra.mxu0 0.0
  %932 = vmatprep.subr.mxu0 0.0
  %933 = vmatpush1.xpose.msra.mxu0 0.0
  %934 = vmatprep.subr.mxu0 0.0
  %935 = vmatpush1.xpose.msra.mxu0 0.0
  %936 = vmatprep.subr.mxu0 0.0
  %937 = vmatpush1.xpose.msra.mxu0 0.0
  %938 = vmatprep.subr.mxu0 0.0
  %939 = vmatpush1.xpose.msra.mxu0 0.0
  %940 = vmatprep.subr.mxu0 0.0
  %941 = vmatpush1.xpose.msra.mxu0 0.0
  %942 = vmatprep.subr.mxu0 0.0
  %943 = vmatpush1.xpose.msra.mxu0 0.0
  %944 = vmatprep.subr.mxu0 0.0
  %945 = vmatpush1.xpose.msra.mxu0 0.0
  %946 = vmatprep.subr.mxu0 0.0
  %947 = vmatpush1.xpose.msra.mxu0 0.0
  %948 = vmatprep.subr.mxu0 0.0
  %949 = vmatpush1.xpose.msra.mxu0 0.0
  %950 = vmatprep.subr.mxu0 0.0
  %951 = vmatpush1.xpose.msra.mxu0 0.0
  %952 = vmatprep.subr.mxu0 0.0
  %953 = vmatpush1.xpose.msra.mxu0 0.0
  %954 = vmatprep.subr.mxu0 0.0
  %955 = vmatpush1.xpose.msra.mxu0 0.0
  %956 = vmatprep.subr.mxu0 0.0
  %957 = vmatpush1.xpose.msra.mxu0 0.0
  %958 = vmatprep.subr.mxu0 0.0
  %959 = vmatpush1.xpose.msra.mxu0 0.0
  %960 = vmatprep.mubr.f32.mxu0 0.0
  %961 = vmatmul.mubr.f32.gmra.mrb[0].mxu0 %v891
  %v962 = vpop.f32.mrb[0].mxu0
  %v963 = vadd.f32 0.0, %v962
  %v964 = vpop.f32.mrb[0].mxu0
  %965 = vdwg.mxu0
  %v967 = vsel %vm813, %v767, 0
  %v970 = vsel %vm813, %v722, 0
  %972 = vmatprep.subr.mxu0 0.0
  %973 = vmatpush1.xpose.msra.mxu0 %v970
  %974 = vmatprep.subr.mxu0 0.0
  %975 = vmatpush1.xpose.msra.mxu0 0.0
  %976 = vmatprep.subr.mxu0 0.0
  %977 = vmatpush1.xpose.msra.mxu0 0.0
  %978 = vmatprep.subr.mxu0 0.0
  %979 = vmatpush1.xpose.msra.mxu0 0.0
  %980 = vmatprep.subr.mxu0 0.0
  %981 = vmatpush1.xpose.msra.mxu0 0.0
  %982 = vmatprep.subr.mxu0 0.0
  %983 = vmatpush1.xpose.msra.mxu0 0.0
  %984 = vmatprep.subr.mxu0 0.0
  %985 = vmatpush1.xpose.msra.mxu0 0.0
  %986 = vmatprep.subr.mxu0 0.0
  %987 = vmatpush1.xpose.msra.mxu0 0.0
  %988 = vmatprep.subr.mxu0 0.0
  %989 = vmatpush1.xpose.msra.mxu0 0.0
  %990 = vmatprep.subr.mxu0 0.0
  %991 = vmatpush1.xpose.msra.mxu0 0.0
  %992 = vmatprep.subr.mxu0 0.0
  %993 = vmatpush1.xpose.msra.mxu0 0.0
  %994 = vmatprep.subr.mxu0 0.0
  %995 = vmatpush1.xpose.msra.mxu0 0.0
  %996 = vmatprep.subr.mxu0 0.0
  %997 = vmatpush1.xpose.msra.mxu0 0.0
  %998 = vmatprep.subr.mxu0 0.0
  %999 = vmatpush1.xpose.msra.mxu0 0.0
  %1000 = vmatprep.subr.mxu0 0.0
  %1001 = vmatpush1.xpose.msra.mxu0 0.0
  %1002 = vmatprep.subr.mxu0 0.0
  %1003 = vmatpush1.xpose.msra.mxu0 0.0
  %1004 = vmatprep.subr.mxu0 0.0
  %1005 = vmatpush1.xpose.msra.mxu0 0.0
  %1006 = vmatprep.subr.mxu0 0.0
  %1007 = vmatpush1.xpose.msra.mxu0 0.0
  %1008 = vmatprep.subr.mxu0 0.0
  %1009 = vmatpush1.xpose.msra.mxu0 0.0
  %1010 = vmatprep.subr.mxu0 0.0
  %1011 = vmatpush1.xpose.msra.mxu0 0.0
  %1012 = vmatprep.subr.mxu0 0.0
  %1013 = vmatpush1.xpose.msra.mxu0 0.0
  %1014 = vmatprep.subr.mxu0 0.0
  %1015 = vmatpush1.xpose.msra.mxu0 0.0
  %1016 = vmatprep.subr.mxu0 0.0
  %1017 = vmatpush1.xpose.msra.mxu0 0.0
  %1018 = vmatprep.subr.mxu0 0.0
  %1019 = vmatpush1.xpose.msra.mxu0 0.0
  %1020 = vmatprep.subr.mxu0 0.0
  %1021 = vmatpush1.xpose.msra.mxu0 0.0
  %1022 = vmatprep.subr.mxu0 0.0
  %1023 = vmatpush1.xpose.msra.mxu0 0.0
  %1024 = vmatprep.subr.mxu0 0.0
  %1025 = vmatpush1.xpose.msra.mxu0 0.0
  %1026 = vmatprep.subr.mxu0 0.0
  %1027 = vmatpush1.xpose.msra.mxu0 0.0
  %1028 = vmatprep.subr.mxu0 0.0
  %1029 = vmatpush1.xpose.msra.mxu0 0.0
  %1030 = vmatprep.subr.mxu0 0.0
  %1031 = vmatpush1.xpose.msra.mxu0 0.0
  %1032 = vmatprep.subr.mxu0 0.0
  %1033 = vmatpush1.xpose.msra.mxu0 0.0
  %1034 = vmatprep.subr.mxu0 0.0
  %1035 = vmatpush1.xpose.msra.mxu0 0.0
  %1036 = vmatprep.mubr.f32.mxu0 0.0
  %1037 = vmatmul.mubr.f32.gmra.mrb[0].mxu0 %v967
  %v1038 = vpop.f32.mrb[0].mxu0
  %v1039 = vadd.f32 0.0, %v1038
  %v1040 = vpop.f32.mrb[0].mxu0
  %1041 = vdwg.mxu0
  %v1043 = vsel %vm813, %v776, 0
  %v1046 = vsel %vm813, %v724, 0
  %1048 = vmatprep.subr.mxu0 0.0
  %1049 = vmatpush1.xpose.msra.mxu0 %v1046
  %1050 = vmatprep.subr.mxu0 0.0
  %1051 = vmatpush1.xpose.msra.mxu0 0.0
  %1052 = vmatprep.subr.mxu0 0.0
  %1053 = vmatpush1.xpose.msra.mxu0 0.0
  %1054 = vmatprep.subr.mxu0 0.0
  %1055 = vmatpush1.xpose.msra.mxu0 0.0
  %1056 = vmatprep.subr.mxu0 0.0
  %1057 = vmatpush1.xpose.msra.mxu0 0.0
  %1058 = vmatprep.subr.mxu0 0.0
  %1059 = vmatpush1.xpose.msra.mxu0 0.0
  %1060 = vmatprep.subr.mxu0 0.0
  %1061 = vmatpush1.xpose.msra.mxu0 0.0
  %1062 = vmatprep.subr.mxu0 0.0
  %1063 = vmatpush1.xpose.msra.mxu0 0.0
  %1064 = vmatprep.subr.mxu0 0.0
  %1065 = vmatpush1.xpose.msra.mxu0 0.0
  %1066 = vmatprep.subr.mxu0 0.0
  %1067 = vmatpush1.xpose.msra.mxu0 0.0
  %1068 = vmatprep.subr.mxu0 0.0
  %1069 = vmatpush1.xpose.msra.mxu0 0.0
  %1070 = vmatprep.subr.mxu0 0.0
  %1071 = vmatpush1.xpose.msra.mxu0 0.0
  %1072 = vmatprep.subr.mxu0 0.0
  %1073 = vmatpush1.xpose.msra.mxu0 0.0
  %1074 = vmatprep.subr.mxu0 0.0
  %1075 = vmatpush1.xpose.msra.mxu0 0.0
  %1076 = vmatprep.subr.mxu0 0.0
  %1077 = vmatpush1.xpose.msra.mxu0 0.0
  %1078 = vmatprep.subr.mxu0 0.0
  %1079 = vmatpush1.xpose.msra.mxu0 0.0
  %1080 = vmatprep.subr.mxu0 0.0
  %1081 = vmatpush1.xpose.msra.mxu0 0.0
  %1082 = vmatprep.subr.mxu0 0.0
  %1083 = vmatpush1.xpose.msra.mxu0 0.0
  %1084 = vmatprep.subr.mxu0 0.0
  %1085 = vmatpush1.xpose.msra.mxu0 0.0
  %1086 = vmatprep.subr.mxu0 0.0
  %1087 = vmatpush1.xpose.msra.mxu0 0.0
  %1088 = vmatprep.subr.mxu0 0.0
  %1089 = vmatpush1.xpose.msra.mxu0 0.0
  %1090 = vmatprep.subr.mxu0 0.0
  %1091 = vmatpush1.xpose.msra.mxu0 0.0
  %1092 = vmatprep.subr.mxu0 0.0
  %1093 = vmatpush1.xpose.msra.mxu0 0.0
  %1094 = vmatprep.subr.mxu0 0.0
  %1095 = vmatpush1.xpose.msra.mxu0 0.0
  %1096 = vmatprep.subr.mxu0 0.0
  %1097 = vmatpush1.xpose.msra.mxu0 0.0
  %1098 = vmatprep.subr.mxu0 0.0
  %1099 = vmatpush1.xpose.msra.mxu0 0.0
  %1100 = vmatprep.subr.mxu0 0.0
  %1101 = vmatpush1.xpose.msra.mxu0 0.0
  %1102 = vmatprep.subr.mxu0 0.0
  %1103 = vmatpush1.xpose.msra.mxu0 0.0
  %1104 = vmatprep.subr.mxu0 0.0
  %1105 = vmatpush1.xpose.msra.mxu0 0.0
  %1106 = vmatprep.subr.mxu0 0.0
  %1107 = vmatpush1.xpose.msra.mxu0 0.0
  %1108 = vmatprep.subr.mxu0 0.0
  %1109 = vmatpush1.xpose.msra.mxu0 0.0
  %1110 = vmatprep.subr.mxu0 0.0
  %1111 = vmatpush1.xpose.msra.mxu0 0.0
  %1112 = vmatprep.mubr.f32.mxu0 0.0
  %1113 = vmatmul.mubr.f32.gmra.mrb[0].mxu0 %v1043
  %v1114 = vpop.f32.mrb[0].mxu0
  %v1115 = vadd.f32 0.0, %v1114
  %v1116 = vpop.f32.mrb[0].mxu0
  %1117 = vdwg.mxu0
  %v1119 = vsel %vm813, %v785, 0
  %v1122 = vsel %vm813, %v726, 0
  %1124 = vmatprep.subr.mxu0 0.0
  %1125 = vmatpush1.xpose.msra.mxu0 %v1122
  %1126 = vmatprep.subr.mxu0 0.0
  %1127 = vmatpush1.xpose.msra.mxu0 0.0
  %1128 = vmatprep.subr.mxu0 0.0
  %1129 = vmatpush1.xpose.msra.mxu0 0.0
  %1130 = vmatprep.subr.mxu0 0.0
  %1131 = vmatpush1.xpose.msra.mxu0 0.0
  %1132 = vmatprep.subr.mxu0 0.0
  %1133 = vmatpush1.xpose.msra.mxu0 0.0
  %1134 = vmatprep.subr.mxu0 0.0
  %1135 = vmatpush1.xpose.msra.mxu0 0.0
  %1136 = vmatprep.subr.mxu0 0.0
  %1137 = vmatpush1.xpose.msra.mxu0 0.0
  %1138 = vmatprep.subr.mxu0 0.0
  %1139 = vmatpush1.xpose.msra.mxu0 0.0
  %1140 = vmatprep.subr.mxu0 0.0
  %1141 = vmatpush1.xpose.msra.mxu0 0.0
  %1142 = vmatprep.subr.mxu0 0.0
  %1143 = vmatpush1.xpose.msra.mxu0 0.0
  %1144 = vmatprep.subr.mxu0 0.0
  %1145 = vmatpush1.xpose.msra.mxu0 0.0
  %1146 = vmatprep.subr.mxu0 0.0
  %1147 = vmatpush1.xpose.msra.mxu0 0.0
  %1148 = vmatprep.subr.mxu0 0.0
  %1149 = vmatpush1.xpose.msra.mxu0 0.0
  %1150 = vmatprep.subr.mxu0 0.0
  %1151 = vmatpush1.xpose.msra.mxu0 0.0
  %1152 = vmatprep.subr.mxu0 0.0
  %1153 = vmatpush1.xpose.msra.mxu0 0.0
  %1154 = vmatprep.subr.mxu0 0.0
  %1155 = vmatpush1.xpose.msra.mxu0 0.0
  %1156 = vmatprep.subr.mxu0 0.0
  %1157 = vmatpush1.xpose.msra.mxu0 0.0
  %1158 = vmatprep.subr.mxu0 0.0
  %1159 = vmatpush1.xpose.msra.mxu0 0.0
  %1160 = vmatprep.subr.mxu0 0.0
  %1161 = vmatpush1.xpose.msra.mxu0 0.0
  %1162 = vmatprep.subr.mxu0 0.0
  %1163 = vmatpush1.xpose.msra.mxu0 0.0
  %1164 = vmatprep.subr.mxu0 0.0
  %1165 = vmatpush1.xpose.msra.mxu0 0.0
  %1166 = vmatprep.subr.mxu0 0.0
  %1167 = vmatpush1.xpose.msra.mxu0 0.0
  %1168 = vmatprep.subr.mxu0 0.0
  %1169 = vmatpush1.xpose.msra.mxu0 0.0
  %1170 = vmatprep.subr.mxu0 0.0
  %1171 = vmatpush1.xpose.msra.mxu0 0.0
  %1172 = vmatprep.subr.mxu0 0.0
  %1173 = vmatpush1.xpose.msra.mxu0 0.0
  %1174 = vmatprep.subr.mxu0 0.0
  %1175 = vmatpush1.xpose.msra.mxu0 0.0
  %1176 = vmatprep.subr.mxu0 0.0
  %1177 = vmatpush1.xpose.msra.mxu0 0.0
  %1178 = vmatprep.subr.mxu0 0.0
  %1179 = vmatpush1.xpose.msra.mxu0 0.0
  %1180 = vmatprep.subr.mxu0 0.0
  %1181 = vmatpush1.xpose.msra.mxu0 0.0
  %1182 = vmatprep.subr.mxu0 0.0
  %1183 = vmatpush1.xpose.msra.mxu0 0.0
  %1184 = vmatprep.subr.mxu0 0.0
  %1185 = vmatpush1.xpose.msra.mxu0 0.0
  %1186 = vmatprep.subr.mxu0 0.0
  %1187 = vmatpush1.xpose.msra.mxu0 0.0
  %1188 = vmatprep.mubr.f32.mxu0 0.0
  %1189 = vmatmul.mubr.f32.gmra.mrb[0].mxu0 %v1119
  %v1190 = vpop.f32.mrb[0].mxu0
  %v1191 = vadd.f32 0.0, %v1190
  %v1192 = vpop.f32.mrb[0].mxu0
  %1193 = vdwg.mxu0
  %v1195 = vsel %vm813, %v794, 0
  %v1198 = vsel %vm813, %v728, 0
  %1200 = vmatprep.subr.mxu0 0.0
  %1201 = vmatpush1.xpose.msra.mxu0 %v1198
  %1202 = vmatprep.subr.mxu0 0.0
  %1203 = vmatpush1.xpose.msra.mxu0 0.0
  %1204 = vmatprep.subr.mxu0 0.0
  %1205 = vmatpush1.xpose.msra.mxu0 0.0
  %1206 = vmatprep.subr.mxu0 0.0
  %1207 = vmatpush1.xpose.msra.mxu0 0.0
  %1208 = vmatprep.subr.mxu0 0.0
  %1209 = vmatpush1.xpose.msra.mxu0 0.0
  %1210 = vmatprep.subr.mxu0 0.0
  %1211 = vmatpush1.xpose.msra.mxu0 0.0
  %1212 = vmatprep.subr.mxu0 0.0
  %1213 = vmatpush1.xpose.msra.mxu0 0.0
  %1214 = vmatprep.subr.mxu0 0.0
  %1215 = vmatpush1.xpose.msra.mxu0 0.0
  %1216 = vmatprep.subr.mxu0 0.0
  %1217 = vmatpush1.xpose.msra.mxu0 0.0
  %1218 = vmatprep.subr.mxu0 0.0
  %1219 = vmatpush1.xpose.msra.mxu0 0.0
  %1220 = vmatprep.subr.mxu0 0.0
  %1221 = vmatpush1.xpose.msra.mxu0 0.0
  %1222 = vmatprep.subr.mxu0 0.0
  %1223 = vmatpush1.xpose.msra.mxu0 0.0
  %1224 = vmatprep.subr.mxu0 0.0
  %1225 = vmatpush1.xpose.msra.mxu0 0.0
  %1226 = vmatprep.subr.mxu0 0.0
  %1227 = vmatpush1.xpose.msra.mxu0 0.0
  %1228 = vmatprep.subr.mxu0 0.0
  %1229 = vmatpush1.xpose.msra.mxu0 0.0
  %1230 = vmatprep.subr.mxu0 0.0
  %1231 = vmatpush1.xpose.msra.mxu0 0.0
  %1232 = vmatprep.subr.mxu0 0.0
  %1233 = vmatpush1.xpose.msra.mxu0 0.0
  %1234 = vmatprep.subr.mxu0 0.0
  %1235 = vmatpush1.xpose.msra.mxu0 0.0
  %1236 = vmatprep.subr.mxu0 0.0
  %1237 = vmatpush1.xpose.msra.mxu0 0.0
  %1238 = vmatprep.subr.mxu0 0.0
  %1239 = vmatpush1.xpose.msra.mxu0 0.0
  %1240 = vmatprep.subr.mxu0 0.0
  %1241 = vmatpush1.xpose.msra.mxu0 0.0
  %1242 = vmatprep.subr.mxu0 0.0
  %1243 = vmatpush1.xpose.msra.mxu0 0.0
  %1244 = vmatprep.subr.mxu0 0.0
  %1245 = vmatpush1.xpose.msra.mxu0 0.0
  %1246 = vmatprep.subr.mxu0 0.0
  %1247 = vmatpush1.xpose.msra.mxu0 0.0
  %1248 = vmatprep.subr.mxu0 0.0
  %1249 = vmatpush1.xpose.msra.mxu0 0.0
  %1250 = vmatprep.subr.mxu0 0.0
  %1251 = vmatpush1.xpose.msra.mxu0 0.0
  %1252 = vmatprep.subr.mxu0 0.0
  %1253 = vmatpush1.xpose.msra.mxu0 0.0
  %1254 = vmatprep.subr.mxu0 0.0
  %1255 = vmatpush1.xpose.msra.mxu0 0.0
  %1256 = vmatprep.subr.mxu0 0.0
  %1257 = vmatpush1.xpose.msra.mxu0 0.0
  %1258 = vmatprep.subr.mxu0 0.0
  %1259 = vmatpush1.xpose.msra.mxu0 0.0
  %1260 = vmatprep.subr.mxu0 0.0
  %1261 = vmatpush1.xpose.msra.mxu0 0.0
  %1262 = vmatprep.subr.mxu0 0.0
  %1263 = vmatpush1.xpose.msra.mxu0 0.0
  %1264 = vmatprep.mubr.f32.mxu0 0.0
  %1265 = vmatmul.mubr.f32.gmra.mrb[0].mxu0 %v1195
  %v1266 = vpop.f32.mrb[0].mxu0
  %v1267 = vadd.f32 0.0, %v1266
  %v1268 = vpop.f32.mrb[0].mxu0
  %1269 = vdwg.mxu0
  %v1271 = vsel %vm813, %v803, 0
  %v1274 = vsel %vm813, %v730, 0
  %1276 = vmatprep.subr.mxu0 0.0
  %1277 = vmatpush1.xpose.msra.mxu0 %v1274
  %1278 = vmatprep.subr.mxu0 0.0
  %1279 = vmatpush1.xpose.msra.mxu0 0.0
  %1280 = vmatprep.subr.mxu0 0.0
  %1281 = vmatpush1.xpose.msra.mxu0 0.0
  %1282 = vmatprep.subr.mxu0 0.0
  %1283 = vmatpush1.xpose.msra.mxu0 0.0
  %1284 = vmatprep.subr.mxu0 0.0
  %1285 = vmatpush1.xpose.msra.mxu0 0.0
  %1286 = vmatprep.subr.mxu0 0.0
  %1287 = vmatpush1.xpose.msra.mxu0 0.0
  %1288 = vmatprep.subr.mxu0 0.0
  %1289 = vmatpush1.xpose.msra.mxu0 0.0
  %1290 = vmatprep.subr.mxu0 0.0
  %1291 = vmatpush1.xpose.msra.mxu0 0.0
  %1292 = vmatprep.subr.mxu0 0.0
  %1293 = vmatpush1.xpose.msra.mxu0 0.0
  %1294 = vmatprep.subr.mxu0 0.0
  %1295 = vmatpush1.xpose.msra.mxu0 0.0
  %1296 = vmatprep.subr.mxu0 0.0
  %1297 = vmatpush1.xpose.msra.mxu0 0.0
  %1298 = vmatprep.subr.mxu0 0.0
  %1299 = vmatpush1.xpose.msra.mxu0 0.0
  %1300 = vmatprep.subr.mxu0 0.0
  %1301 = vmatpush1.xpose.msra.mxu0 0.0
  %1302 = vmatprep.subr.mxu0 0.0
  %1303 = vmatpush1.xpose.msra.mxu0 0.0
  %1304 = vmatprep.subr.mxu0 0.0
  %1305 = vmatpush1.xpose.msra.mxu0 0.0
  %1306 = vmatprep.subr.mxu0 0.0
  %1307 = vmatpush1.xpose.msra.mxu0 0.0
  %1308 = vmatprep.subr.mxu0 0.0
  %1309 = vmatpush1.xpose.msra.mxu0 0.0
  %1310 = vmatprep.subr.mxu0 0.0
  %1311 = vmatpush1.xpose.msra.mxu0 0.0
  %1312 = vmatprep.subr.mxu0 0.0
  %1313 = vmatpush1.xpose.msra.mxu0 0.0
  %1314 = vmatprep.subr.mxu0 0.0
  %1315 = vmatpush1.xpose.msra.mxu0 0.0
  %1316 = vmatprep.subr.mxu0 0.0
  %1317 = vmatpush1.xpose.msra.mxu0 0.0
  %1318 = vmatprep.subr.mxu0 0.0
  %1319 = vmatpush1.xpose.msra.mxu0 0.0
  %1320 = vmatprep.subr.mxu0 0.0
  %1321 = vmatpush1.xpose.msra.mxu0 0.0
  %1322 = vmatprep.subr.mxu0 0.0
  %1323 = vmatpush1.xpose.msra.mxu0 0.0
  %1324 = vmatprep.subr.mxu0 0.0
  %1325 = vmatpush1.xpose.msra.mxu0 0.0
  %1326 = vmatprep.subr.mxu0 0.0
  %1327 = vmatpush1.xpose.msra.mxu0 0.0
  %1328 = vmatprep.subr.mxu0 0.0
  %1329 = vmatpush1.xpose.msra.mxu0 0.0
  %1330 = vmatprep.subr.mxu0 0.0
  %1331 = vmatpush1.xpose.msra.mxu0 0.0
  %1332 = vmatprep.subr.mxu0 0.0
  %1333 = vmatpush1.xpose.msra.mxu0 0.0
  %1334 = vmatprep.subr.mxu0 0.0
  %1335 = vmatpush1.xpose.msra.mxu0 0.0
  %1336 = vmatprep.subr.mxu0 0.0
  %1337 = vmatpush1.xpose.msra.mxu0 0.0
  %1338 = vmatprep.subr.mxu0 0.0
  %1339 = vmatpush1.xpose.msra.mxu0 0.0
  %1340 = vmatprep.mubr.f32.mxu0 0.0
  %1341 = vmatmul.mubr.f32.gmra.mrb[0].mxu0 %v1271
  %v1342 = vpop.f32.mrb[0].mxu0
  %v1343 = vadd.f32 0.0, %v1342
  %v1344 = vpop.f32.mrb[0].mxu0
  %1345 = vdwg.mxu0
  %v1347 = vsel %vm813, %v812, 0
  %v1350 = vsel %vm813, %v732, 0
  %1352 = vmatprep.subr.mxu0 0.0
  %1353 = vmatpush1.xpose.msra.mxu0 %v1350
  %1354 = vmatprep.subr.mxu0 0.0
  %1355 = vmatpush1.xpose.msra.mxu0 0.0
  %1356 = vmatprep.subr.mxu0 0.0
  %1357 = vmatpush1.xpose.msra.mxu0 0.0
  %1358 = vmatprep.subr.mxu0 0.0
  %1359 = vmatpush1.xpose.msra.mxu0 0.0
  %1360 = vmatprep.subr.mxu0 0.0
  %1361 = vmatpush1.xpose.msra.mxu0 0.0
  %1362 = vmatprep.subr.mxu0 0.0
  %1363 = vmatpush1.xpose.msra.mxu0 0.0
  %1364 = vmatprep.subr.mxu0 0.0
  %1365 = vmatpush1.xpose.msra.mxu0 0.0
  %1366 = vmatprep.subr.mxu0 0.0
  %1367 = vmatpush1.xpose.msra.mxu0 0.0
  %1368 = vmatprep.subr.mxu0 0.0
  %1369 = vmatpush1.xpose.msra.mxu0 0.0
  %1370 = vmatprep.subr.mxu0 0.0
  %1371 = vmatpush1.xpose.msra.mxu0 0.0
  %1372 = vmatprep.subr.mxu0 0.0
  %1373 = vmatpush1.xpose.msra.mxu0 0.0
  %1374 = vmatprep.subr.mxu0 0.0
  %1375 = vmatpush1.xpose.msra.mxu0 0.0
  %1376 = vmatprep.subr.mxu0 0.0
  %1377 = vmatpush1.xpose.msra.mxu0 0.0
  %1378 = vmatprep.subr.mxu0 0.0
  %1379 = vmatpush1.xpose.msra.mxu0 0.0
  %1380 = vmatprep.subr.mxu0 0.0
  %1381 = vmatpush1.xpose.msra.mxu0 0.0
  %1382 = vmatprep.subr.mxu0 0.0
  %1383 = vmatpush1.xpose.msra.mxu0 0.0
  %1384 = vmatprep.subr.mxu0 0.0
  %1385 = vmatpush1.xpose.msra.mxu0 0.0
  %1386 = vmatprep.subr.mxu0 0.0
  %1387 = vmatpush1.xpose.msra.mxu0 0.0
  %1388 = vmatprep.subr.mxu0 0.0
  %1389 = vmatpush1.xpose.msra.mxu0 0.0
  %1390 = vmatprep.subr.mxu0 0.0
  %1391 = vmatpush1.xpose.msra.mxu0 0.0
  %1392 = vmatprep.subr.mxu0 0.0
  %1393 = vmatpush1.xpose.msra.mxu0 0.0
  %1394 = vmatprep.subr.mxu0 0.0
  %1395 = vmatpush1.xpose.msra.mxu0 0.0
  %1396 = vmatprep.subr.mxu0 0.0
  %1397 = vmatpush1.xpose.msra.mxu0 0.0
  %1398 = vmatprep.subr.mxu0 0.0
  %1399 = vmatpush1.xpose.msra.mxu0 0.0
  %1400 = vmatprep.subr.mxu0 0.0
  %1401 = vmatpush1.xpose.msra.mxu0 0.0
  %1402 = vmatprep.subr.mxu0 0.0
  %1403 = vmatpush1.xpose.msra.mxu0 0.0
  %1404 = vmatprep.subr.mxu0 0.0
  %1405 = vmatpush1.xpose.msra.mxu0 0.0
  %1406 = vmatprep.subr.mxu0 0.0
  %1407 = vmatpush1.xpose.msra.mxu0 0.0
  %1408 = vmatprep.subr.mxu0 0.0
  %1409 = vmatpush1.xpose.msra.mxu0 0.0
  %1410 = vmatprep.subr.mxu0 0.0
  %1411 = vmatpush1.xpose.msra.mxu0 0.0
  %1412 = vmatprep.subr.mxu0 0.0
  %1413 = vmatpush1.xpose.msra.mxu0 0.0
  %1414 = vmatprep.subr.mxu0 0.0
  %1415 = vmatpush1.xpose.msra.mxu0 0.0
  %1416 = vmatprep.mubr.f32.mxu0 0.0
  %1417 = vmatmul.mubr.f32.gmra.mrb[0].mxu0 %v1347
  %v1418 = vpop.f32.mrb[0].mxu0
  %v1419 = vadd.f32 0.0, %v1418
  %v1420 = vpop.f32.mrb[0].mxu0
  %1421 = vdwg.mxu0
  %v1422 = vld [vmem:[%s0] sm:$0x1]
  %v1423 = vld [vmem:[%s0 + $0x1] sm:$0x1]
  %v1424 = vld [vmem:[%s0 + $0x2] sm:$0x1]
  %v1425 = vld [vmem:[%s0 + $0x3] sm:$0x1]
  %v1426 = vld [vmem:[%s0 + $0x4] sm:$0x1]
  %v1427 = vld [vmem:[%s0 + $0x5] sm:$0x1]
  %v1428 = vld [vmem:[%s0 + $0x6] sm:$0x1]
  %v1429 = vld [vmem:[%s0 + $0x7] sm:$0x1]
  %v1430 = vmul.f32 %v887, 0.01
  %v1431 = vmul.f32 %v963, 0.01
  %v1432 = vmul.f32 %v1039, 0.01
  %v1433 = vmul.f32 %v1115, 0.01
  %v1434 = vmul.f32 %v1191, 0.01
  %v1435 = vmul.f32 %v1267, 0.01
  %v1436 = vmul.f32 %v1343, 0.01
  %v1437 = vmul.f32 %v1419, 0.01
  %v1438 = vadd.f32 %v1422, %v1430
  %v1439 = vadd.f32 %v1423, %v1431
  %v1440 = vadd.f32 %v1424, %v1432
  %v1441 = vadd.f32 %v1425, %v1433
  %v1442 = vadd.f32 %v1426, %v1434
  %v1443 = vadd.f32 %v1427, %v1435
  %v1444 = vadd.f32 %v1428, %v1436
  %v1445 = vadd.f32 %v1429, %v1437
  %vm1446 = vcmask 8192
  %v1447 = vsel %vm1446, %v1438, -inf
  %1448 = vmax.xlane.f32.xlu0 %v1447
  %v1449 = vpop.xlane.xlu0 %1448
  %v1450 = vsel %vm1446, %v1439, -inf
  %1451 = vmax.xlane.f32.xlu0 %v1450
  %v1452 = vpop.xlane.xlu0 %1451
  %v1453 = vsel %vm1446, %v1440, -inf
  %1454 = vmax.xlane.f32.xlu0 %v1453
  %v1455 = vpop.xlane.xlu0 %1454
  %v1456 = vsel %vm1446, %v1441, -inf
  %1457 = vmax.xlane.f32.xlu0 %v1456
  %v1458 = vpop.xlane.xlu0 %1457
  %v1459 = vsel %vm1446, %v1442, -inf
  %1460 = vmax.xlane.f32.xlu0 %v1459
  %v1461 = vpop.xlane.xlu0 %1460
  %v1462 = vsel %vm1446, %v1443, -inf
  %1463 = vmax.xlane.f32.xlu0 %v1462
  %v1464 = vpop.xlane.xlu0 %1463
  %v1465 = vsel %vm1446, %v1444, -inf
  %1466 = vmax.xlane.f32.xlu0 %v1465
  %v1467 = vpop.xlane.xlu0 %1466
  %v1468 = vsel %vm1446, %v1445, -inf
  %1469 = vmax.xlane.f32.xlu0 %v1468
  %v1470 = vpop.xlane.xlu0 %1469
  %v1471 = vsub.f32 %v1438, %v1449
  %v1472 = vsub.f32 %v1439, %v1452
  %v1473 = vsub.f32 %v1440, %v1455
  %v1474 = vsub.f32 %v1441, %v1458
  %v1475 = vsub.f32 %v1442, %v1461
  %v1476 = vsub.f32 %v1443, %v1464
  %v1477 = vsub.f32 %v1444, %v1467
  %v1478 = vsub.f32 %v1445, %v1470
  %v1479 = vmul.f32 %v1471, 1.442695
  %v1480 = vpow.pop %v1479
  %v1481 = vmul.f32 %v1472, 1.442695
  %v1482 = vpow.pop %v1481
  %v1483 = vmul.f32 %v1473, 1.442695
  %v1484 = vpow.pop %v1483
  %v1485 = vmul.f32 %v1474, 1.442695
  %v1486 = vpow.pop %v1485
  %v1487 = vmul.f32 %v1475, 1.442695
  %v1488 = vpow.pop %v1487
  %v1489 = vmul.f32 %v1476, 1.442695
  %v1490 = vpow.pop %v1489
  %v1491 = vmul.f32 %v1477, 1.442695
  %v1492 = vpow.pop %v1491
  %v1493 = vmul.f32 %v1478, 1.442695
  %v1494 = vpow.pop %v1493
  %v1495 = vsel %vm1446, %v1480, 0.0
  %1496 = vadd.xlane.f32.xlu0 %v1495
  %v1497 = vpop.xlane.xlu0 %1496
  %v1498 = vsel %vm1446, %v1482, 0.0
  %1499 = vadd.xlane.f32.xlu0 %v1498
  %v1500 = vpop.xlane.xlu0 %1499
  %v1501 = vsel %vm1446, %v1484, 0.0
  %1502 = vadd.xlane.f32.xlu0 %v1501
  %v1503 = vpop.xlane.xlu0 %1502
  %v1504 = vsel %vm1446, %v1486, 0.0
  %1505 = vadd.xlane.f32.xlu0 %v1504
  %v1506 = vpop.xlane.xlu0 %1505
  %v1507 = vsel %vm1446, %v1488, 0.0
  %1508 = vadd.xlane.f32.xlu0 %v1507
  %v1509 = vpop.xlane.xlu0 %1508
  %v1510 = vsel %vm1446, %v1490, 0.0
  %1511 = vadd.xlane.f32.xlu0 %v1510
  %v1512 = vpop.xlane.xlu0 %1511
  %v1513 = vsel %vm1446, %v1492, 0.0
  %1514 = vadd.xlane.f32.xlu0 %v1513
  %v1515 = vpop.xlane.xlu0 %1514
  %v1516 = vsel %vm1446, %v1494, 0.0
  %1517 = vadd.xlane.f32.xlu0 %v1516
  %v1518 = vpop.xlane.xlu0 %1517
  %v1519 = vrcp.pop %v1497
  %v1520 = vmul.f32 %v1480, %v1519
  %v1521 = vrcp.pop %v1500
  %v1522 = vmul.f32 %v1482, %v1521
  %v1523 = vrcp.pop %v1503
  %v1524 = vmul.f32 %v1484, %v1523
  %v1525 = vrcp.pop %v1506
  %v1526 = vmul.f32 %v1486, %v1525
  %v1527 = vrcp.pop %v1509
  %v1528 = vmul.f32 %v1488, %v1527
  %v1529 = vrcp.pop %v1512
  %v1530 = vmul.f32 %v1490, %v1529
  %v1531 = vrcp.pop %v1515
  %v1532 = vmul.f32 %v1492, %v1531
  %v1533 = vrcp.pop %v1518
  %v1534 = vmul.f32 %v1494, %v1533
  %v1535 = vld [vmem:[%s4] sm:$0x3]
  %v1536 = vld [vmem:[%s4 + $0x2] sm:$0x3]
  %v1537 = vld [vmem:[%s4 + $0x4] sm:$0x3]
  %v1538 = vld [vmem:[%s4 + $0x6] sm:$0x3]
  %v1539 = vld [vmem:[%s4 + $0x8] sm:$0x3]
  %v1540 = vld [vmem:[%s4 + $0xa] sm:$0x3]
  %v1541 = vld [vmem:[%s4 + $0xc] sm:$0x3]
  %v1542 = vld [vmem:[%s4 + $0xe] sm:$0x3]
  %v1544 = vsel %vm813, %v1520, 0
  %vm1546 = vcmask 1041408
  %v1548 = vsel %vm1546, %v1535, 0
  %1550 = vmatprep.subr.mxu0 0.0
  %1551 = vmatpush1.msra.mxu0 %v1548
  %1552 = vmatprep.subr.mxu0 0.0
  %1553 = vmatpush1.msra.mxu0 0.0
  %1554 = vmatprep.subr.mxu0 0.0
  %1555 = vmatpush1.msra.mxu0 0.0
  %1556 = vmatprep.subr.mxu0 0.0
  %1557 = vmatpush1.msra.mxu0 0.0
  %1558 = vmatprep.subr.mxu0 0.0
  %1559 = vmatpush1.msra.mxu0 0.0
  %1560 = vmatprep.subr.mxu0 0.0
  %1561 = vmatpush1.msra.mxu0 0.0
  %1562 = vmatprep.subr.mxu0 0.0
  %1563 = vmatpush1.msra.mxu0 0.0
  %1564 = vmatprep.subr.mxu0 0.0
  %1565 = vmatpush1.msra.mxu0 0.0
  %1566 = vmatprep.subr.mxu0 0.0
  %1567 = vmatpush1.msra.mxu0 0.0
  %1568 = vmatprep.subr.mxu0 0.0
  %1569 = vmatpush1.msra.mxu0 0.0
  %1570 = vmatprep.subr.mxu0 0.0
  %1571 = vmatpush1.msra.mxu0 0.0
  %1572 = vmatprep.subr.mxu0 0.0
  %1573 = vmatpush1.msra.mxu0 0.0
  %1574 = vmatprep.subr.mxu0 0.0
  %1575 = vmatpush1.msra.mxu0 0.0
  %1576 = vmatprep.subr.mxu0 0.0
  %1577 = vmatpush1.msra.mxu0 0.0
  %1578 = vmatprep.subr.mxu0 0.0
  %1579 = vmatpush1.msra.mxu0 0.0
  %1580 = vmatprep.subr.mxu0 0.0
  %1581 = vmatpush1.msra.mxu0 0.0
  %1582 = vmatprep.subr.mxu0 0.0
  %1583 = vmatpush1.msra.mxu0 0.0
  %1584 = vmatprep.subr.mxu0 0.0
  %1585 = vmatpush1.msra.mxu0 0.0
  %1586 = vmatprep.subr.mxu0 0.0
  %1587 = vmatpush1.msra.mxu0 0.0
  %1588 = vmatprep.subr.mxu0 0.0
  %1589 = vmatpush1.msra.mxu0 0.0
  %1590 = vmatprep.subr.mxu0 0.0
  %1591 = vmatpush1.msra.mxu0 0.0
  %1592 = vmatprep.subr.mxu0 0.0
  %1593 = vmatpush1.msra.mxu0 0.0
  %1594 = vmatprep.subr.mxu0 0.0
  %1595 = vmatpush1.msra.mxu0 0.0
  %1596 = vmatprep.subr.mxu0 0.0
  %1597 = vmatpush1.msra.mxu0 0.0
  %1598 = vmatprep.subr.mxu0 0.0
  %1599 = vmatpush1.msra.mxu0 0.0
  %1600 = vmatprep.subr.mxu0 0.0
  %1601 = vmatpush1.msra.mxu0 0.0
  %1602 = vmatprep.subr.mxu0 0.0
  %1603 = vmatpush1.msra.mxu0 0.0
  %1604 = vmatprep.subr.mxu0 0.0
  %1605 = vmatpush1.msra.mxu0 0.0
  %1606 = vmatprep.subr.mxu0 0.0
  %1607 = vmatpush1.msra.mxu0 0.0
  %1608 = vmatprep.subr.mxu0 0.0
  %1609 = vmatpush1.msra.mxu0 0.0
  %1610 = vmatprep.subr.mxu0 0.0
  %1611 = vmatpush1.msra.mxu0 0.0
  %1612 = vmatprep.subr.mxu0 0.0
  %1613 = vmatpush1.msra.mxu0 0.0
  %1614 = vmatprep.mubr.f32.mxu0 0.0
  %1615 = vmatmul.mubr.f32.gmra.mrb[0].mxu0 %v1544
  %v1616 = vpop.f32.mrb[0].mxu0
  %v1617 = vadd.f32 0.0, %v1616
  %v1618 = vpop.f32.mrb[0].mxu0
  %1619 = vdwg.mxu0
  %v1621 = vsel %vm813, %v1522, 0
  %v1624 = vsel %vm1546, %v1536, 0
  %1626 = vmatprep.subr.mxu0 0.0
  %1627 = vmatpush1.msra.mxu0 %v1624
  %1628 = vmatprep.subr.mxu0 0.0
  %1629 = vmatpush1.msra.mxu0 0.0
  %1630 = vmatprep.subr.mxu0 0.0
  %1631 = vmatpush1.msra.mxu0 0.0
  %1632 = vmatprep.subr.mxu0 0.0
  %1633 = vmatpush1.msra.mxu0 0.0
  %1634 = vmatprep.subr.mxu0 0.0
  %1635 = vmatpush1.msra.mxu0 0.0
  %1636 = vmatprep.subr.mxu0 0.0
  %1637 = vmatpush1.msra.mxu0 0.0
  %1638 = vmatprep.subr.mxu0 0.0
  %1639 = vmatpush1.msra.mxu0 0.0
  %1640 = vmatprep.subr.mxu0 0.0
  %1641 = vmatpush1.msra.mxu0 0.0
  %1642 = vmatprep.subr.mxu0 0.0
  %1643 = vmatpush1.msra.mxu0 0.0
  %1644 = vmatprep.subr.mxu0 0.0
  %1645 = vmatpush1.msra.mxu0 0.0
  %1646 = vmatprep.subr.mxu0 0.0
  %1647 = vmatpush1.msra.mxu0 0.0
  %1648 = vmatprep.subr.mxu0 0.0
  %1649 = vmatpush1.msra.mxu0 0.0
  %1650 = vmatprep.subr.mxu0 0.0
  %1651 = vmatpush1.msra.mxu0 0.0
  %1652 = vmatprep.subr.mxu0 0.0
  %1653 = vmatpush1.msra.mxu0 0.0
  %1654 = vmatprep.subr.mxu0 0.0
  %1655 = vmatpush1.msra.mxu0 0.0
  %1656 = vmatprep.subr.mxu0 0.0
  %1657 = vmatpush1.msra.mxu0 0.0
  %1658 = vmatprep.subr.mxu0 0.0
  %1659 = vmatpush1.msra.mxu0 0.0
  %1660 = vmatprep.subr.mxu0 0.0
  %1661 = vmatpush1.msra.mxu0 0.0
  %1662 = vmatprep.subr.mxu0 0.0
  %1663 = vmatpush1.msra.mxu0 0.0
  %1664 = vmatprep.subr.mxu0 0.0
  %1665 = vmatpush1.msra.mxu0 0.0
  %1666 = vmatprep.subr.mxu0 0.0
  %1667 = vmatpush1.msra.mxu0 0.0
  %1668 = vmatprep.subr.mxu0 0.0
  %1669 = vmatpush1.msra.mxu0 0.0
  %1670 = vmatprep.subr.mxu0 0.0
  %1671 = vmatpush1.msra.mxu0 0.0
  %1672 = vmatprep.subr.mxu0 0.0
  %1673 = vmatpush1.msra.mxu0 0.0
  %1674 = vmatprep.subr.mxu0 0.0
  %1675 = vmatpush1.msra.mxu0 0.0
  %1676 = vmatprep.subr.mxu0 0.0
  %1677 = vmatpush1.msra.mxu0 0.0
  %1678 = vmatprep.subr.mxu0 0.0
  %1679 = vmatpush1.msra.mxu0 0.0
  %1680 = vmatprep.subr.mxu0 0.0
  %1681 = vmatpush1.msra.mxu0 0.0
  %1682 = vmatprep.subr.mxu0 0.0
  %1683 = vmatpush1.msra.mxu0 0.0
  %1684 = vmatprep.subr.mxu0 0.0
  %1685 = vmatpush1.msra.mxu0 0.0
  %1686 = vmatprep.subr.mxu0 0.0
  %1687 = vmatpush1.msra.mxu0 0.0
  %1688 = vmatprep.subr.mxu0 0.0
  %1689 = vmatpush1.msra.mxu0 0.0
  %1690 = vmatprep.mubr.f32.mxu0 0.0
  %1691 = vmatmul.mubr.f32.gmra.mrb[0].mxu0 %v1621
  %v1692 = vpop.f32.mrb[0].mxu0
  %v1693 = vadd.f32 0.0, %v1692
  %v1694 = vpop.f32.mrb[0].mxu0
  %1695 = vdwg.mxu0
  %v1697 = vsel %vm813, %v1524, 0
  %v1700 = vsel %vm1546, %v1537, 0
  %1702 = vmatprep.subr.mxu0 0.0
  %1703 = vmatpush1.msra.mxu0 %v1700
  %1704 = vmatprep.subr.mxu0 0.0
  %1705 = vmatpush1.msra.mxu0 0.0
  %1706 = vmatprep.subr.mxu0 0.0
  %1707 = vmatpush1.msra.mxu0 0.0
  %1708 = vmatprep.subr.mxu0 0.0
  %1709 = vmatpush1.msra.mxu0 0.0
  %1710 = vmatprep.subr.mxu0 0.0
  %1711 = vmatpush1.msra.mxu0 0.0
  %1712 = vmatprep.subr.mxu0 0.0
  %1713 = vmatpush1.msra.mxu0 0.0
  %1714 = vmatprep.subr.mxu0 0.0
  %1715 = vmatpush1.msra.mxu0 0.0
  %1716 = vmatprep.subr.mxu0 0.0
  %1717 = vmatpush1.msra.mxu0 0.0
  %1718 = vmatprep.subr.mxu0 0.0
  %1719 = vmatpush1.msra.mxu0 0.0
  %1720 = vmatprep.subr.mxu0 0.0
  %1721 = vmatpush1.msra.mxu0 0.0
  %1722 = vmatprep.subr.mxu0 0.0
  %1723 = vmatpush1.msra.mxu0 0.0
  %1724 = vmatprep.subr.mxu0 0.0
  %1725 = vmatpush1.msra.mxu0 0.0
  %1726 = vmatprep.subr.mxu0 0.0
  %1727 = vmatpush1.msra.mxu0 0.0
  %1728 = vmatprep.subr.mxu0 0.0
  %1729 = vmatpush1.msra.mxu0 0.0
  %1730 = vmatprep.subr.mxu0 0.0
  %1731 = vmatpush1.msra.mxu0 0.0
  %1732 = vmatprep.subr.mxu0 0.0
  %1733 = vmatpush1.msra.mxu0 0.0
  %1734 = vmatprep.subr.mxu0 0.0
  %1735 = vmatpush1.msra.mxu0 0.0
  %1736 = vmatprep.subr.mxu0 0.0
  %1737 = vmatpush1.msra.mxu0 0.0
  %1738 = vmatprep.subr.mxu0 0.0
  %1739 = vmatpush1.msra.mxu0 0.0
  %1740 = vmatprep.subr.mxu0 0.0
  %1741 = vmatpush1.msra.mxu0 0.0
  %1742 = vmatprep.subr.mxu0 0.0
  %1743 = vmatpush1.msra.mxu0 0.0
  %1744 = vmatprep.subr.mxu0 0.0
  %1745 = vmatpush1.msra.mxu0 0.0
  %1746 = vmatprep.subr.mxu0 0.0
  %1747 = vmatpush1.msra.mxu0 0.0
  %1748 = vmatprep.subr.mxu0 0.0
  %1749 = vmatpush1.msra.mxu0 0.0
  %1750 = vmatprep.subr.mxu0 0.0
  %1751 = vmatpush1.msra.mxu0 0.0
  %1752 = vmatprep.subr.mxu0 0.0
  %1753 = vmatpush1.msra.mxu0 0.0
  %1754 = vmatprep.subr.mxu0 0.0
  %1755 = vmatpush1.msra.mxu0 0.0
  %1756 = vmatprep.subr.mxu0 0.0
  %1757 = vmatpush1.msra.mxu0 0.0
  %1758 = vmatprep.subr.mxu0 0.0
  %1759 = vmatpush1.msra.mxu0 0.0
  %1760 = vmatprep.subr.mxu0 0.0
  %1761 = vmatpush1.msra.mxu0 0.0
  %1762 = vmatprep.subr.mxu0 0.0
  %1763 = vmatpush1.msra.mxu0 0.0
  %1764 = vmatprep.subr.mxu0 0.0
  %1765 = vmatpush1.msra.mxu0 0.0
  %1766 = vmatprep.mubr.f32.mxu0 0.0
  %1767 = vmatmul.mubr.f32.gmra.mrb[0].mxu0 %v1697
  %v1768 = vpop.f32.mrb[0].mxu0
  %v1769 = vadd.f32 0.0, %v1768
  %v1770 = vpop.f32.mrb[0].mxu0
  %1771 = vdwg.mxu0
  %v1773 = vsel %vm813, %v1526, 0
  %v1776 = vsel %vm1546, %v1538, 0
  %1778 = vmatprep.subr.mxu0 0.0
  %1779 = vmatpush1.msra.mxu0 %v1776
  %1780 = vmatprep.subr.mxu0 0.0
  %1781 = vmatpush1.msra.mxu0 0.0
  %1782 = vmatprep.subr.mxu0 0.0
  %1783 = vmatpush1.msra.mxu0 0.0
  %1784 = vmatprep.subr.mxu0 0.0
  %1785 = vmatpush1.msra.mxu0 0.0
  %1786 = vmatprep.subr.mxu0 0.0
  %1787 = vmatpush1.msra.mxu0 0.0
  %1788 = vmatprep.subr.mxu0 0.0
  %1789 = vmatpush1.msra.mxu0 0.0
  %1790 = vmatprep.subr.mxu0 0.0
  %1791 = vmatpush1.msra.mxu0 0.0
  %1792 = vmatprep.subr.mxu0 0.0
  %1793 = vmatpush1.msra.mxu0 0.0
  %1794 = vmatprep.subr.mxu0 0.0
  %1795 = vmatpush1.msra.mxu0 0.0
  %1796 = vmatprep.subr.mxu0 0.0
  %1797 = vmatpush1.msra.mxu0 0.0
  %1798 = vmatprep.subr.mxu0 0.0
  %1799 = vmatpush1.msra.mxu0 0.0
  %1800 = vmatprep.subr.mxu0 0.0
  %1801 = vmatpush1.msra.mxu0 0.0
  %1802 = vmatprep.subr.mxu0 0.0
  %1803 = vmatpush1.msra.mxu0 0.0
  %1804 = vmatprep.subr.mxu0 0.0
  %1805 = vmatpush1.msra.mxu0 0.0
  %1806 = vmatprep.subr.mxu0 0.0
  %1807 = vmatpush1.msra.mxu0 0.0
  %1808 = vmatprep.subr.mxu0 0.0
  %1809 = vmatpush1.msra.mxu0 0.0
  %1810 = vmatprep.subr.mxu0 0.0
  %1811 = vmatpush1.msra.mxu0 0.0
  %1812 = vmatprep.subr.mxu0 0.0
  %1813 = vmatpush1.msra.mxu0 0.0
  %1814 = vmatprep.subr.mxu0 0.0
  %1815 = vmatpush1.msra.mxu0 0.0
  %1816 = vmatprep.subr.mxu0 0.0
  %1817 = vmatpush1.msra.mxu0 0.0
  %1818 = vmatprep.subr.mxu0 0.0
  %1819 = vmatpush1.msra.mxu0 0.0
  %1820 = vmatprep.subr.mxu0 0.0
  %1821 = vmatpush1.msra.mxu0 0.0
  %1822 = vmatprep.subr.mxu0 0.0
  %1823 = vmatpush1.msra.mxu0 0.0
  %1824 = vmatprep.subr.mxu0 0.0
  %1825 = vmatpush1.msra.mxu0 0.0
  %1826 = vmatprep.subr.mxu0 0.0
  %1827 = vmatpush1.msra.mxu0 0.0
  %1828 = vmatprep.subr.mxu0 0.0
  %1829 = vmatpush1.msra.mxu0 0.0
  %1830 = vmatprep.subr.mxu0 0.0
  %1831 = vmatpush1.msra.mxu0 0.0
  %1832 = vmatprep.subr.mxu0 0.0
  %1833 = vmatpush1.msra.mxu0 0.0
  %1834 = vmatprep.subr.mxu0 0.0
  %1835 = vmatpush1.msra.mxu0 0.0
  %1836 = vmatprep.subr.mxu0 0.0
  %1837 = vmatpush1.msra.mxu0 0.0
  %1838 = vmatprep.subr.mxu0 0.0
  %1839 = vmatpush1.msra.mxu0 0.0
  %1840 = vmatprep.subr.mxu0 0.0
  %1841 = vmatpush1.msra.mxu0 0.0
  %1842 = vmatprep.mubr.f32.mxu0 0.0
  %1843 = vmatmul.mubr.f32.gmra.mrb[0].mxu0 %v1773
  %v1844 = vpop.f32.mrb[0].mxu0
  %v1845 = vadd.f32 0.0, %v1844
  %v1846 = vpop.f32.mrb[0].mxu0
  %1847 = vdwg.mxu0
  %v1849 = vsel %vm813, %v1528, 0
  %v1852 = vsel %vm1546, %v1539, 0
  %1854 = vmatprep.subr.mxu0 0.0
  %1855 = vmatpush1.msra.mxu0 %v1852
  %1856 = vmatprep.subr.mxu0 0.0
  %1857 = vmatpush1.msra.mxu0 0.0
  %1858 = vmatprep.subr.mxu0 0.0
  %1859 = vmatpush1.msra.mxu0 0.0
  %1860 = vmatprep.subr.mxu0 0.0
  %1861 = vmatpush1.msra.mxu0 0.0
  %1862 = vmatprep.subr.mxu0 0.0
  %1863 = vmatpush1.msra.mxu0 0.0
  %1864 = vmatprep.subr.mxu0 0.0
  %1865 = vmatpush1.msra.mxu0 0.0
  %1866 = vmatprep.subr.mxu0 0.0
  %1867 = vmatpush1.msra.mxu0 0.0
  %1868 = vmatprep.subr.mxu0 0.0
  %1869 = vmatpush1.msra.mxu0 0.0
  %1870 = vmatprep.subr.mxu0 0.0
  %1871 = vmatpush1.msra.mxu0 0.0
  %1872 = vmatprep.subr.mxu0 0.0
  %1873 = vmatpush1.msra.mxu0 0.0
  %1874 = vmatprep.subr.mxu0 0.0
  %1875 = vmatpush1.msra.mxu0 0.0
  %1876 = vmatprep.subr.mxu0 0.0
  %1877 = vmatpush1.msra.mxu0 0.0
  %1878 = vmatprep.subr.mxu0 0.0
  %1879 = vmatpush1.msra.mxu0 0.0
  %1880 = vmatprep.subr.mxu0 0.0
  %1881 = vmatpush1.msra.mxu0 0.0
  %1882 = vmatprep.subr.mxu0 0.0
  %1883 = vmatpush1.msra.mxu0 0.0
  %1884 = vmatprep.subr.mxu0 0.0
  %1885 = vmatpush1.msra.mxu0 0.0
  %1886 = vmatprep.subr.mxu0 0.0
  %1887 = vmatpush1.msra.mxu0 0.0
  %1888 = vmatprep.subr.mxu0 0.0
  %1889 = vmatpush1.msra.mxu0 0.0
  %1890 = vmatprep.subr.mxu0 0.0
  %1891 = vmatpush1.msra.mxu0 0.0
  %1892 = vmatprep.subr.mxu0 0.0
  %1893 = vmatpush1.msra.mxu0 0.0
  %1894 = vmatprep.subr.mxu0 0.0
  %1895 = vmatpush1.msra.mxu0 0.0
  %1896 = vmatprep.subr.mxu0 0.0
  %1897 = vmatpush1.msra.mxu0 0.0
  %1898 = vmatprep.subr.mxu0 0.0
  %1899 = vmatpush1.msra.mxu0 0.0
  %1900 = vmatprep.subr.mxu0 0.0
  %1901 = vmatpush1.msra.mxu0 0.0
  %1902 = vmatprep.subr.mxu0 0.0
  %1903 = vmatpush1.msra.mxu0 0.0
  %1904 = vmatprep.subr.mxu0 0.0
  %1905 = vmatpush1.msra.mxu0 0.0
  %1906 = vmatprep.subr.mxu0 0.0
  %1907 = vmatpush1.msra.mxu0 0.0
  %1908 = vmatprep.subr.mxu0 0.0
  %1909 = vmatpush1.msra.mxu0 0.0
  %1910 = vmatprep.subr.mxu0 0.0
  %1911 = vmatpush1.msra.mxu0 0.0
  %1912 = vmatprep.subr.mxu0 0.0
  %1913 = vmatpush1.msra.mxu0 0.0
  %1914 = vmatprep.subr.mxu0 0.0
  %1915 = vmatpush1.msra.mxu0 0.0
  %1916 = vmatprep.subr.mxu0 0.0
  %1917 = vmatpush1.msra.mxu0 0.0
  %1918 = vmatprep.mubr.f32.mxu0 0.0
  %1919 = vmatmul.mubr.f32.gmra.mrb[0].mxu0 %v1849
  %v1920 = vpop.f32.mrb[0].mxu0
  %v1921 = vadd.f32 0.0, %v1920
  %v1922 = vpop.f32.mrb[0].mxu0
  %1923 = vdwg.mxu0
  %v1925 = vsel %vm813, %v1530, 0
  %v1928 = vsel %vm1546, %v1540, 0
  %1930 = vmatprep.subr.mxu0 0.0
  %1931 = vmatpush1.msra.mxu0 %v1928
  %1932 = vmatprep.subr.mxu0 0.0
  %1933 = vmatpush1.msra.mxu0 0.0
  %1934 = vmatprep.subr.mxu0 0.0
  %1935 = vmatpush1.msra.mxu0 0.0
  %1936 = vmatprep.subr.mxu0 0.0
  %1937 = vmatpush1.msra.mxu0 0.0
  %1938 = vmatprep.subr.mxu0 0.0
  %1939 = vmatpush1.msra.mxu0 0.0
  %1940 = vmatprep.subr.mxu0 0.0
  %1941 = vmatpush1.msra.mxu0 0.0
  %1942 = vmatprep.subr.mxu0 0.0
  %1943 = vmatpush1.msra.mxu0 0.0
  %1944 = vmatprep.subr.mxu0 0.0
  %1945 = vmatpush1.msra.mxu0 0.0
  %1946 = vmatprep.subr.mxu0 0.0
  %1947 = vmatpush1.msra.mxu0 0.0
  %1948 = vmatprep.subr.mxu0 0.0
  %1949 = vmatpush1.msra.mxu0 0.0
  %1950 = vmatprep.subr.mxu0 0.0
  %1951 = vmatpush1.msra.mxu0 0.0
  %1952 = vmatprep.subr.mxu0 0.0
  %1953 = vmatpush1.msra.mxu0 0.0
  %1954 = vmatprep.subr.mxu0 0.0
  %1955 = vmatpush1.msra.mxu0 0.0
  %1956 = vmatprep.subr.mxu0 0.0
  %1957 = vmatpush1.msra.mxu0 0.0
  %1958 = vmatprep.subr.mxu0 0.0
  %1959 = vmatpush1.msra.mxu0 0.0
  %1960 = vmatprep.subr.mxu0 0.0
  %1961 = vmatpush1.msra.mxu0 0.0
  %1962 = vmatprep.subr.mxu0 0.0
  %1963 = vmatpush1.msra.mxu0 0.0
  %1964 = vmatprep.subr.mxu0 0.0
  %1965 = vmatpush1.msra.mxu0 0.0
  %1966 = vmatprep.subr.mxu0 0.0
  %1967 = vmatpush1.msra.mxu0 0.0
  %1968 = vmatprep.subr.mxu0 0.0
  %1969 = vmatpush1.msra.mxu0 0.0
  %1970 = vmatprep.subr.mxu0 0.0
  %1971 = vmatpush1.msra.mxu0 0.0
  %1972 = vmatprep.subr.mxu0 0.0
  %1973 = vmatpush1.msra.mxu0 0.0
  %1974 = vmatprep.subr.mxu0 0.0
  %1975 = vmatpush1.msra.mxu0 0.0
  %1976 = vmatprep.subr.mxu0 0.0
  %1977 = vmatpush1.msra.mxu0 0.0
  %1978 = vmatprep.subr.mxu0 0.0
  %1979 = vmatpush1.msra.mxu0 0.0
  %1980 = vmatprep.subr.mxu0 0.0
  %1981 = vmatpush1.msra.mxu0 0.0
  %1982 = vmatprep.subr.mxu0 0.0
  %1983 = vmatpush1.msra.mxu0 0.0
  %1984 = vmatprep.subr.mxu0 0.0
  %1985 = vmatpush1.msra.mxu0 0.0
  %1986 = vmatprep.subr.mxu0 0.0
  %1987 = vmatpush1.msra.mxu0 0.0
  %1988 = vmatprep.subr.mxu0 0.0
  %1989 = vmatpush1.msra.mxu0 0.0
  %1990 = vmatprep.subr.mxu0 0.0
  %1991 = vmatpush1.msra.mxu0 0.0
  %1992 = vmatprep.subr.mxu0 0.0
  %1993 = vmatpush1.msra.mxu0 0.0
  %1994 = vmatprep.mubr.f32.mxu0 0.0
  %1995 = vmatmul.mubr.f32.gmra.mrb[0].mxu0 %v1925
  %v1996 = vpop.f32.mrb[0].mxu0
  %v1997 = vadd.f32 0.0, %v1996
  %v1998 = vpop.f32.mrb[0].mxu0
  %1999 = vdwg.mxu0
  %v2001 = vsel %vm813, %v1532, 0
  %v2004 = vsel %vm1546, %v1541, 0
  %2006 = vmatprep.subr.mxu0 0.0
  %2007 = vmatpush1.msra.mxu0 %v2004
  %2008 = vmatprep.subr.mxu0 0.0
  %2009 = vmatpush1.msra.mxu0 0.0
  %2010 = vmatprep.subr.mxu0 0.0
  %2011 = vmatpush1.msra.mxu0 0.0
  %2012 = vmatprep.subr.mxu0 0.0
  %2013 = vmatpush1.msra.mxu0 0.0
  %2014 = vmatprep.subr.mxu0 0.0
  %2015 = vmatpush1.msra.mxu0 0.0
  %2016 = vmatprep.subr.mxu0 0.0
  %2017 = vmatpush1.msra.mxu0 0.0
  %2018 = vmatprep.subr.mxu0 0.0
  %2019 = vmatpush1.msra.mxu0 0.0
  %2020 = vmatprep.subr.mxu0 0.0
  %2021 = vmatpush1.msra.mxu0 0.0
  %2022 = vmatprep.subr.mxu0 0.0
  %2023 = vmatpush1.msra.mxu0 0.0
  %2024 = vmatprep.subr.mxu0 0.0
  %2025 = vmatpush1.msra.mxu0 0.0
  %2026 = vmatprep.subr.mxu0 0.0
  %2027 = vmatpush1.msra.mxu0 0.0
  %2028 = vmatprep.subr.mxu0 0.0
  %2029 = vmatpush1.msra.mxu0 0.0
  %2030 = vmatprep.subr.mxu0 0.0
  %2031 = vmatpush1.msra.mxu0 0.0
  %2032 = vmatprep.subr.mxu0 0.0
  %2033 = vmatpush1.msra.mxu0 0.0
  %2034 = vmatprep.subr.mxu0 0.0
  %2035 = vmatpush1.msra.mxu0 0.0
  %2036 = vmatprep.subr.mxu0 0.0
  %2037 = vmatpush1.msra.mxu0 0.0
  %2038 = vmatprep.subr.mxu0 0.0
  %2039 = vmatpush1.msra.mxu0 0.0
  %2040 = vmatprep.subr.mxu0 0.0
  %2041 = vmatpush1.msra.mxu0 0.0
  %2042 = vmatprep.subr.mxu0 0.0
  %2043 = vmatpush1.msra.mxu0 0.0
  %2044 = vmatprep.subr.mxu0 0.0
  %2045 = vmatpush1.msra.mxu0 0.0
  %2046 = vmatprep.subr.mxu0 0.0
  %2047 = vmatpush1.msra.mxu0 0.0
  %2048 = vmatprep.subr.mxu0 0.0
  %2049 = vmatpush1.msra.mxu0 0.0
  %2050 = vmatprep.subr.mxu0 0.0
  %2051 = vmatpush1.msra.mxu0 0.0
  %2052 = vmatprep.subr.mxu0 0.0
  %2053 = vmatpush1.msra.mxu0 0.0
  %2054 = vmatprep.subr.mxu0 0.0
  %2055 = vmatpush1.msra.mxu0 0.0
  %2056 = vmatprep.subr.mxu0 0.0
  %2057 = vmatpush1.msra.mxu0 0.0
  %2058 = vmatprep.subr.mxu0 0.0
  %2059 = vmatpush1.msra.mxu0 0.0
  %2060 = vmatprep.subr.mxu0 0.0
  %2061 = vmatpush1.msra.mxu0 0.0
  %2062 = vmatprep.subr.mxu0 0.0
  %2063 = vmatpush1.msra.mxu0 0.0
  %2064 = vmatprep.subr.mxu0 0.0
  %2065 = vmatpush1.msra.mxu0 0.0
  %2066 = vmatprep.subr.mxu0 0.0
  %2067 = vmatpush1.msra.mxu0 0.0
  %2068 = vmatprep.subr.mxu0 0.0
  %2069 = vmatpush1.msra.mxu0 0.0
  %2070 = vmatprep.mubr.f32.mxu0 0.0
  %2071 = vmatmul.mubr.f32.gmra.mrb[0].mxu0 %v2001
  %v2072 = vpop.f32.mrb[0].mxu0
  %v2073 = vadd.f32 0.0, %v2072
  %v2074 = vpop.f32.mrb[0].mxu0
  %2075 = vdwg.mxu0
  %v2077 = vsel %vm813, %v1534, 0
  %v2080 = vsel %vm1546, %v1542, 0
  %2082 = vmatprep.subr.mxu0 0.0
  %2083 = vmatpush1.msra.mxu0 %v2080
  %2084 = vmatprep.subr.mxu0 0.0
  %2085 = vmatpush1.msra.mxu0 0.0
  %2086 = vmatprep.subr.mxu0 0.0
  %2087 = vmatpush1.msra.mxu0 0.0
  %2088 = vmatprep.subr.mxu0 0.0
  %2089 = vmatpush1.msra.mxu0 0.0
  %2090 = vmatprep.subr.mxu0 0.0
  %2091 = vmatpush1.msra.mxu0 0.0
  %2092 = vmatprep.subr.mxu0 0.0
  %2093 = vmatpush1.msra.mxu0 0.0
  %2094 = vmatprep.subr.mxu0 0.0
  %2095 = vmatpush1.msra.mxu0 0.0
  %2096 = vmatprep.subr.mxu0 0.0
  %2097 = vmatpush1.msra.mxu0 0.0
  %2098 = vmatprep.subr.mxu0 0.0
  %2099 = vmatpush1.msra.mxu0 0.0
  %2100 = vmatprep.subr.mxu0 0.0
  %2101 = vmatpush1.msra.mxu0 0.0
  %2102 = vmatprep.subr.mxu0 0.0
  %2103 = vmatpush1.msra.mxu0 0.0
  %2104 = vmatprep.subr.mxu0 0.0
  %2105 = vmatpush1.msra.mxu0 0.0
  %2106 = vmatprep.subr.mxu0 0.0
  %2107 = vmatpush1.msra.mxu0 0.0
  %2108 = vmatprep.subr.mxu0 0.0
  %2109 = vmatpush1.msra.mxu0 0.0
  %2110 = vmatprep.subr.mxu0 0.0
  %2111 = vmatpush1.msra.mxu0 0.0
  %2112 = vmatprep.subr.mxu0 0.0
  %2113 = vmatpush1.msra.mxu0 0.0
  %2114 = vmatprep.subr.mxu0 0.0
  %2115 = vmatpush1.msra.mxu0 0.0
  %2116 = vmatprep.subr.mxu0 0.0
  %2117 = vmatpush1.msra.mxu0 0.0
  %2118 = vmatprep.subr.mxu0 0.0
  %2119 = vmatpush1.msra.mxu0 0.0
  %2120 = vmatprep.subr.mxu0 0.0
  %2121 = vmatpush1.msra.mxu0 0.0
  %2122 = vmatprep.subr.mxu0 0.0
  %2123 = vmatpush1.msra.mxu0 0.0
  %2124 = vmatprep.subr.mxu0 0.0
  %2125 = vmatpush1.msra.mxu0 0.0
  %2126 = vmatprep.subr.mxu0 0.0
  %2127 = vmatpush1.msra.mxu0 0.0
  %2128 = vmatprep.subr.mxu0 0.0
  %2129 = vmatpush1.msra.mxu0 0.0
  %2130 = vmatprep.subr.mxu0 0.0
  %2131 = vmatpush1.msra.mxu0 0.0
  %2132 = vmatprep.subr.mxu0 0.0
  %2133 = vmatpush1.msra.mxu0 0.0
  %2134 = vmatprep.subr.mxu0 0.0
  %2135 = vmatpush1.msra.mxu0 0.0
  %2136 = vmatprep.subr.mxu0 0.0
  %2137 = vmatpush1.msra.mxu0 0.0
  %2138 = vmatprep.subr.mxu0 0.0
  %2139 = vmatpush1.msra.mxu0 0.0
  %2140 = vmatprep.subr.mxu0 0.0
  %2141 = vmatpush1.msra.mxu0 0.0
  %2142 = vmatprep.subr.mxu0 0.0
  %2143 = vmatpush1.msra.mxu0 0.0
  %2144 = vmatprep.subr.mxu0 0.0
  %2145 = vmatpush1.msra.mxu0 0.0
  %2146 = vmatprep.mubr.f32.mxu0 0.0
  %2147 = vmatmul.mubr.f32.gmra.mrb[0].mxu0 %v2077
  %v2148 = vpop.f32.mrb[0].mxu0
  %v2149 = vadd.f32 0.0, %v2148
  %v2150 = vpop.f32.mrb[0].mxu0
  %2151 = vdwg.mxu0
  %vm2152 = vcmask 253952
  %2153 = vst.msk [vmem:[%s5] sm:$0x1] %vm2152, %v1617
  %2154 = vst.msk [vmem:[%s5 + $0x1] sm:$0x1] %vm2152, %v1693
  %2155 = vst.msk [vmem:[%s5 + $0x2] sm:$0x1] %vm2152, %v1769
  %2156 = vst.msk [vmem:[%s5 + $0x3] sm:$0x1] %vm2152, %v1845
  %2157 = vst.msk [vmem:[%s5 + $0x4] sm:$0x1] %vm2152, %v1921
  %2158 = vst.msk [vmem:[%s5 + $0x5] sm:$0x1] %vm2152, %v1997
  %2159 = vst.msk [vmem:[%s5 + $0x6] sm:$0x1] %vm2152, %v2073
  %2160 = vst.msk [vmem:[%s5 + $0x7] sm:$0x1] %vm2152, %v2149
  // Predicated region
  $region22: #{_lambda_.37} parent=0 // pred_check
    _
  $region23: #{_lambda_.37} parent=0 // pred_check_branch
    %2162 = sbr.rel (0) target = $region25
  $region24: #{_lambda_.37} parent=0 // pred_region
    _
  $region25: #{_lambda_.37} parent=0 // pred_fallthru
    _
  // Predicated region
  $region26: #{_lambda_.37} parent=0 // pred_check
    _
  $region27: #{_lambda_.37} parent=0 // pred_check_branch
    %2164 = sbr.rel (0) target = $region29
  $region28: #{_lambda_.37} parent=0 // pred_region
    _
  $region29: #{_lambda_.37} parent=0 // pred_fallthru
    _

// kernel: mul.9
$region0: #{mul.9}
  #allocation0 [shape = 's32[1]{0}', space=sflag, size = 0x4, scoped, tag = 'scoped memory for mul.9']
  %s0 = inlined_call_operand.vmem [shape: f32[4], index: 0, kind: input, shape index: {}]
  %s1 = inlined_call_operand.vmem [shape: f32[4], index: 1, kind: input, shape index: {}]
  %s2 = inlined_call_operand.vmem [shape: f32[4], index: 2, kind: output, shape index: {}]
  %v3 = vld [vmem:[%s0] sm:$0x1]
  %v4 = vld [vmem:[%s1] sm:$0x1]
  %5 = xla_tuple %v3, %v4
  %6 = xla_tuple %5
  %v7 = vmul.f32 %v3, %v4
  %8 = xla_tuple %v7
  %9 = vst [vmem:[%s2] sm:$0x1] %v7

</llo_original>
